<compile_context>
chip_gen: v7x
topology: tpu7x:2x2x1
jax: 0.10.0
libtpu: 0.0.40
codegen_flags: <defaults>
</compile_context>

<pallas_src>
import jax
import jax.numpy as jnp
from jax.experimental import pallas as pl
from jax.experimental.pallas import tpu as pltpu

BN_EPS = 1e-5
BN_SCALE = float(1.0 / (1.0 + BN_EPS) ** 0.5)

# Shape chain for H = W = 64:
#   64 -(conv0 7x7 s2 p3)-> 32 -(maxpool 3 s2)-> 15 -> 8 -> 4 -> 2 -> avgpool.


# ----------------------------------------------------------------------------
# XLA-side stem preprocessing: phase-ordered im2col patches for the 7x7/s2
# conv, built with stride-4 slices (rows ordered (py, px, i, j) with
# oy = 2i+py, ox = 2j+px), so NO big transpose is needed and the in-kernel
# maxpool taps become static unit-stride slices.
# ----------------------------------------------------------------------------
def _stem_patches(x):
    B = x.shape[0]
    xp = jnp.pad(x.astype(jnp.float32), ((0, 0), (3, 3), (3, 3)))      # (B,70,70)
    phases = []
    for py in range(2):
        for px in range(2):
            taps = [
                xp[:, 2 * py + dy:2 * py + dy + 61:4,
                      2 * px + dx:2 * px + dx + 61:4]                  # (B,16,16)
                for dy in range(7) for dx in range(7)
            ]
            phases.append(jnp.stack(taps, axis=-1))                    # (B,16,16,49)
    a0 = jnp.stack(phases, axis=1)                                     # (B,4,16,16,49)
    return a0.reshape(B, 4 * 16 * 16, 49).astype(jnp.bfloat16)         # (B,1024,49)


# ----------------------------------------------------------------------------
# Single fused kernel: one grid step = one image.
# ----------------------------------------------------------------------------
def _fused_kernel(a0_ref, w0_ref,
                  w11_ref, w12_ref, w1s_ref,
                  w21_ref, w22_ref, w2s_ref,
                  w31_ref, w32_ref, w3s_ref,
                  out_ref,
                  in1_ref, hp1_ref, in2_ref, hp2_ref, in3_ref, hp3_ref):
    bf16 = jnp.bfloat16
    f32 = jnp.float32

    # Zero the padded-activation scratches so their 1-pixel borders are the
    # conv zero-padding.  Whole-buffer fills total ~70 KB (a handful of vector
    # stores) and are done every grid step so the kernel stays correct when
    # the "parallel" batch axis is split across TensorCores.
    for r in (in1_ref, hp1_ref, in2_ref, hp2_ref, in3_ref, hp3_ref):
        r[...] = jnp.zeros(r.shape, r.dtype)

    # ---- stem: conv0 (+folded BN) as ONE MXU matmul, ReLU, fused 3x3/s2
    # maxpool on the in-register result (rows are phase-ordered (py,px,i,j)).
    y0 = jnp.dot(a0_ref[0], w0_ref[...], preferred_element_type=f32)   # (1024,16)
    y0 = jnp.maximum(y0, 0.0).reshape(2, 2, 16, 16, 16)
    m = None
    for dy in range(3):
        for dx in range(3):
            t = y0[dy % 2, dx % 2,
                   dy // 2:dy // 2 + 15,
                   dx // 2:dx // 2 + 15, :]
            m = t if m is None else jnp.maximum(m, t)
    in1_ref[1:16, 1:16, :] = m                                         # (15,15,16)

    # ---- one fused residual block:
    #   conv1(3x3,s2)+BN+ReLU -> conv2(3x3,s1)+BN, 1x1/s2 shortcut(+BN),
    #   residual add, ReLU.  All convs are per-tap accumulated MXU matmuls;
    #   the shortcut is a 10th accumulate into conv2's f32 accumulator.
    def block(inp_ref, hp_ref, w1_ref, w2_ref, ws_ref, OH, Cin, Cout):
        M = OH * OH
        acc = jnp.zeros((M, Cout), f32)
        for dy in range(3):
            for dx in range(3):
                lhs = inp_ref[pl.ds(dy, OH, stride=2),
                              pl.ds(dx, OH, stride=2), :]              # (OH,OH,Cin)
                acc = acc + jnp.dot(lhs.reshape(M, Cin).astype(bf16),
                                    w1_ref[dy * 3 + dx],
                                    preferred_element_type=f32)
        hp_ref[1:OH + 1, 1:OH + 1, :] = jnp.maximum(acc, 0.0).reshape(OH, OH, Cout)

        acc2 = jnp.zeros((M, Cout), f32)
        for dy in range(3):
            for dx in range(3):
                lhs = hp_ref[dy:dy + OH, dx:dx + OH, :]                # (OH,OH,Cout)
                acc2 = acc2 + jnp.dot(lhs.reshape(M, Cout).astype(bf16),
                                      w2_ref[dy * 3 + dx],
                                      preferred_element_type=f32)
        sc = inp_ref[pl.ds(1, OH, stride=2), pl.ds(1, OH, stride=2), :]
        acc2 = acc2 + jnp.dot(sc.reshape(M, Cin).astype(bf16), ws_ref[...],
                              preferred_element_type=f32)
        return jnp.maximum(acc2, 0.0)                                  # (M,Cout) f32

    y1 = block(in1_ref, hp1_ref, w11_ref, w12_ref, w1s_ref, 8, 16, 32)
    in2_ref[1:9, 1:9, :] = y1.reshape(8, 8, 32)

    y2 = block(in2_ref, hp2_ref, w21_ref, w22_ref, w2s_ref, 4, 32, 64)
    in3_ref[1:5, 1:5, :] = y2.reshape(4, 4, 64)

    y3 = block(in3_ref, hp3_ref, w31_ref, w32_ref, w3s_ref, 2, 64, 128)

    # fused AdaptiveAvgPool2d(1) + flatten; (1,1,128) is a lane-dense store.
    out_ref[...] = jnp.mean(y3, axis=0).reshape(1, 1, 128)


def _full_spec(a):
    nd = a.ndim
    return pl.BlockSpec(a.shape, lambda b, _n=nd: (0,) * _n)


@jax.jit
def residual_block2d_forward(x, params):
    B, H, W = x.shape
    assert H == 64 and W == 64, "kernel is specialized to 64x64 inputs"

    a0 = _stem_patches(x)                                              # (B,1024,49)

    weights = [params["w0"]]
    for li in (1, 2, 3):
        lp = params[f"layer{li}"]
        weights += [lp["w1"], lp["w2"], lp["ws"]]

    in_specs = [pl.BlockSpec((1, 1024, 49), lambda b: (b, 0, 0))]
    in_specs += [_full_spec(w) for w in weights]

    out = pl.pallas_call(
        _fused_kernel,
        grid=(B,),
        in_specs=in_specs,
        out_specs=pl.BlockSpec((1, 1, 128), lambda b: (b, 0, 0)),
        out_shape=jax.ShapeDtypeStruct((B, 1, 128), jnp.float32),
        scratch_shapes=[
            pltpu.VMEM((17, 17, 16), jnp.float32),   # block1 padded input
            pltpu.VMEM((10, 10, 32), jnp.float32),   # block1 conv2 padded input
            pltpu.VMEM((10, 10, 32), jnp.float32),   # block2 padded input
            pltpu.VMEM((6, 6, 64), jnp.float32),     # block2 conv2 padded input
            pltpu.VMEM((6, 6, 64), jnp.float32),     # block3 padded input
            pltpu.VMEM((4, 4, 128), jnp.float32),    # block3 conv2 padded input
        ],
        compiler_params=pltpu.CompilerParams(dimension_semantics=("parallel",)),
    )(a0, *weights)
    return out.reshape(B, 128)


# ----------------------------------------------------------------------------
# Parameters: kaiming_normal(fan_out, relu) conv weights, converted once at
# init into per-tap matmul layout with the eval-mode BN scale folded in (bf16).
# ----------------------------------------------------------------------------
def _kaiming_conv(key, cout, cin, kh, kw):
    fan_out = cout * kh * kw
    std = (2.0 / fan_out) ** 0.5
    return jax.random.normal(key, (cout, cin, kh, kw), jnp.float32) * std


def _fold(w, taps):
    cout, cin, kh, kw = w.shape
    wt = jnp.transpose(w, (2, 3, 1, 0))                 # (kh, kw, cin, cout)
    if taps == 1:
        wt = wt.reshape(cin, cout)                      # 1x1 shortcut
    elif cin == 1:
        wt = wt.reshape(kh * kw, cout)                  # stem 7x7
    else:
        wt = wt.reshape(kh * kw, cin, cout)             # 3x3: (9, Cin, Cout)
    return (wt * BN_SCALE).astype(jnp.bfloat16)


def init_params(seed=42):
    keys = jax.random.split(jax.random.PRNGKey(seed), 16)
    params = {"w0": _fold(_kaiming_conv(keys[0], 16, 1, 7, 7), taps=49)}
    chans = [(16, 32), (32, 64), (64, 128)]
    ki = 1
    for li, (cin, cout) in enumerate(chans, start=1):
        params[f"layer{li}"] = {
            "w1": _fold(_kaiming_conv(keys[ki + 0], cout, cin, 3, 3), taps=9),
            "w2": _fold(_kaiming_conv(keys[ki + 1], cout, cout, 3, 3), taps=9),
            "ws": _fold(_kaiming_conv(keys[ki + 2], cout, cin, 1, 1), taps=1),
        }
        ki += 3
    return params


# ----------------------------------------------------------------------------
if __name__ == "__main__":
    params = init_params(seed=42)
    x = jax.random.normal(jax.random.PRNGKey(0), (2, 64, 64), jnp.float32)
    out = jax.block_until_ready(residual_block2d_forward(x, params))
    assert out.shape == (2, 128), out.shape
    print("KERNEL_OK")
</pallas_src>

<mosaic_0001>
module attributes {stable_mosaic.version = 11 : i64} {
  func.func @_fused_kernel(%arg0: i32, %arg1: memref<1x1024x49xbf16, #tpu.memory_space<vmem>>, %arg2: memref<49x16xbf16, #tpu.memory_space<vmem>>, %arg3: memref<9x16x32xbf16, #tpu.memory_space<vmem>>, %arg4: memref<9x32x32xbf16, #tpu.memory_space<vmem>>, %arg5: memref<16x32xbf16, #tpu.memory_space<vmem>>, %arg6: memref<9x32x64xbf16, #tpu.memory_space<vmem>>, %arg7: memref<9x64x64xbf16, #tpu.memory_space<vmem>>, %arg8: memref<32x64xbf16, #tpu.memory_space<vmem>>, %arg9: memref<9x64x128xbf16, #tpu.memory_space<vmem>>, %arg10: memref<9x128x128xbf16, #tpu.memory_space<vmem>>, %arg11: memref<64x128xbf16, #tpu.memory_space<vmem>>, %arg12: memref<1x1x128xf32, #tpu.memory_space<vmem>>, %arg13: memref<17x17x16xf32, #tpu.memory_space<vmem>>, %arg14: memref<10x10x32xf32, #tpu.memory_space<vmem>>, %arg15: memref<10x10x32xf32, #tpu.memory_space<vmem>>, %arg16: memref<6x6x64xf32, #tpu.memory_space<vmem>>, %arg17: memref<6x6x64xf32, #tpu.memory_space<vmem>>, %arg18: memref<4x4x128xf32, #tpu.memory_space<vmem>>) attributes {dimension_semantics = [#tpu.dimension_semantics<parallel>], iteration_bounds = array<i64: 2>, scalar_prefetch = 0 : i64, scratch_operands = 6 : i64, tpu.core_type = #tpu.core_type<tc>, window_params = [{transform_indices = @transform_0, window_bounds = array<i64: 1, 1024, 49>}, {pipeline_mode = #tpu.pipeline_mode<synchronous>, transform_indices = @transform_1, window_bounds = array<i64: 49, 16>}, {pipeline_mode = #tpu.pipeline_mode<synchronous>, transform_indices = @transform_2, window_bounds = array<i64: 9, 16, 32>}, {pipeline_mode = #tpu.pipeline_mode<synchronous>, transform_indices = @transform_3, window_bounds = array<i64: 9, 32, 32>}, {pipeline_mode = #tpu.pipeline_mode<synchronous>, transform_indices = @transform_4, window_bounds = array<i64: 16, 32>}, {pipeline_mode = #tpu.pipeline_mode<synchronous>, transform_indices = @transform_5, window_bounds = array<i64: 9, 32, 64>}, {pipeline_mode = #tpu.pipeline_mode<synchronous>, transform_indices = @transform_6, window_bounds = array<i64: 9, 64, 64>}, {pipeline_mode = #tpu.pipeline_mode<synchronous>, transform_indices = @transform_7, window_bounds = array<i64: 32, 64>}, {pipeline_mode = #tpu.pipeline_mode<synchronous>, transform_indices = @transform_8, window_bounds = array<i64: 9, 64, 128>}, {pipeline_mode = #tpu.pipeline_mode<synchronous>, transform_indices = @transform_9, window_bounds = array<i64: 9, 128, 128>}, {pipeline_mode = #tpu.pipeline_mode<synchronous>, transform_indices = @transform_10, window_bounds = array<i64: 64, 128>}, {transform_indices = @transform_11, window_bounds = array<i64: 1, 1, 128>}]} {
    %cst = arith.constant 0.000000e+00 : f32
    %0 = vector.broadcast %cst : f32 to vector<17x17x16xf32>
    %c0 = arith.constant 0 : index
    %c0_0 = arith.constant 0 : index
    %c0_1 = arith.constant 0 : index
    %1 = vector.load %arg13[%c0, %c0_0, %c0_1] : memref<17x17x16xf32, #tpu.memory_space<vmem>>, vector<17x17x16xf32>
    tpu.vector_store %arg13[%c0, %c0_0, %c0_1], %0 {strides = array<i32>} : memref<17x17x16xf32, #tpu.memory_space<vmem>>, vector<17x17x16xf32>,
    %cst_2 = arith.constant 0.000000e+00 : f32
    %2 = vector.broadcast %cst_2 : f32 to vector<10x10x32xf32>
    %c0_3 = arith.constant 0 : index
    %c0_4 = arith.constant 0 : index
    %c0_5 = arith.constant 0 : index
    %3 = vector.load %arg14[%c0_3, %c0_4, %c0_5] : memref<10x10x32xf32, #tpu.memory_space<vmem>>, vector<10x10x32xf32>
    tpu.vector_store %arg14[%c0_3, %c0_4, %c0_5], %2 {strides = array<i32>} : memref<10x10x32xf32, #tpu.memory_space<vmem>>, vector<10x10x32xf32>,
    %cst_6 = arith.constant 0.000000e+00 : f32
    %4 = vector.broadcast %cst_6 : f32 to vector<10x10x32xf32>
    %c0_7 = arith.constant 0 : index
    %c0_8 = arith.constant 0 : index
    %c0_9 = arith.constant 0 : index
    %5 = vector.load %arg15[%c0_7, %c0_8, %c0_9] : memref<10x10x32xf32, #tpu.memory_space<vmem>>, vector<10x10x32xf32>
    tpu.vector_store %arg15[%c0_7, %c0_8, %c0_9], %4 {strides = array<i32>} : memref<10x10x32xf32, #tpu.memory_space<vmem>>, vector<10x10x32xf32>,
    %cst_10 = arith.constant 0.000000e+00 : f32
    %6 = vector.broadcast %cst_10 : f32 to vector<6x6x64xf32>
    %c0_11 = arith.constant 0 : index
    %c0_12 = arith.constant 0 : index
    %c0_13 = arith.constant 0 : index
    %7 = vector.load %arg16[%c0_11, %c0_12, %c0_13] : memref<6x6x64xf32, #tpu.memory_space<vmem>>, vector<6x6x64xf32>
    tpu.vector_store %arg16[%c0_11, %c0_12, %c0_13], %6 {strides = array<i32>} : memref<6x6x64xf32, #tpu.memory_space<vmem>>, vector<6x6x64xf32>,
    %cst_14 = arith.constant 0.000000e+00 : f32
    %8 = vector.broadcast %cst_14 : f32 to vector<6x6x64xf32>
    %c0_15 = arith.constant 0 : index
    %c0_16 = arith.constant 0 : index
    %c0_17 = arith.constant 0 : index
    %9 = vector.load %arg17[%c0_15, %c0_16, %c0_17] : memref<6x6x64xf32, #tpu.memory_space<vmem>>, vector<6x6x64xf32>
    tpu.vector_store %arg17[%c0_15, %c0_16, %c0_17], %8 {strides = array<i32>} : memref<6x6x64xf32, #tpu.memory_space<vmem>>, vector<6x6x64xf32>,
    %cst_18 = arith.constant 0.000000e+00 : f32
    %10 = vector.broadcast %cst_18 : f32 to vector<4x4x128xf32>
    %c0_19 = arith.constant 0 : index
    %c0_20 = arith.constant 0 : index
    %c0_21 = arith.constant 0 : index
    %11 = vector.load %arg18[%c0_19, %c0_20, %c0_21] : memref<4x4x128xf32, #tpu.memory_space<vmem>>, vector<4x4x128xf32>
    tpu.vector_store %arg18[%c0_19, %c0_20, %c0_21], %10 {strides = array<i32>} : memref<4x4x128xf32, #tpu.memory_space<vmem>>, vector<4x4x128xf32>,
    %c0_22 = arith.constant 0 : index
    %c0_23 = arith.constant 0 : index
    %c0_24 = arith.constant 0 : index
    %12 = vector.load %arg1[%c0_22, %c0_23, %c0_24] : memref<1x1024x49xbf16, #tpu.memory_space<vmem>>, vector<1x1024x49xbf16>
    %13 = vector.shape_cast %12 : vector<1x1024x49xbf16> to vector<1024x49xbf16>
    %c0_25 = arith.constant 0 : index
    %c0_26 = arith.constant 0 : index
    %14 = vector.load %arg2[%c0_25, %c0_26] : memref<49x16xbf16, #tpu.memory_space<vmem>>, vector<49x16xbf16>
    %cst_27 = arith.constant dense<0.000000e+00> : vector<1024x16xf32>
    %15 = tpu.matmul %13, %14, %cst_27 {dimension_numbers = #tpu.dot_dimension_numbers<[1], [0], [0], [1], [0, 0, 1, 1], [], []>} : vector<1024x49xbf16>, vector<49x16xbf16>, vector<1024x16xf32> -> vector<1024x16xf32>
    %cst_28 = arith.constant 0.000000e+00 : f32
    %16 = vector.broadcast %cst_28 : f32 to vector<1024x16xf32>
    %17 = arith.maximumf %15, %16 : vector<1024x16xf32>
    %18 = vector.shape_cast %17 : vector<1024x16xf32> to vector<2x2x16x16x16xf32>
    %19 = vector.extract_strided_slice %18 {offsets = [0, 0, 0, 0, 0], sizes = [1, 1, 15, 15, 16], strides = [1, 1, 1, 1, 1]} : vector<2x2x16x16x16xf32> to vector<1x1x15x15x16xf32>
    %20 = vector.shape_cast %19 : vector<1x1x15x15x16xf32> to vector<15x15x16xf32>
    %21 = vector.extract_strided_slice %18 {offsets = [0, 1, 0, 0, 0], sizes = [1, 1, 15, 15, 16], strides = [1, 1, 1, 1, 1]} : vector<2x2x16x16x16xf32> to vector<1x1x15x15x16xf32>
    %22 = vector.shape_cast %21 : vector<1x1x15x15x16xf32> to vector<15x15x16xf32>
    %23 = arith.maximumf %20, %22 : vector<15x15x16xf32>
    %24 = vector.extract_strided_slice %18 {offsets = [0, 0, 0, 1, 0], sizes = [1, 1, 15, 15, 16], strides = [1, 1, 1, 1, 1]} : vector<2x2x16x16x16xf32> to vector<1x1x15x15x16xf32>
    %25 = vector.shape_cast %24 : vector<1x1x15x15x16xf32> to vector<15x15x16xf32>
    %26 = arith.maximumf %23, %25 : vector<15x15x16xf32>
    %27 = vector.extract_strided_slice %18 {offsets = [1, 0, 0, 0, 0], sizes = [1, 1, 15, 15, 16], strides = [1, 1, 1, 1, 1]} : vector<2x2x16x16x16xf32> to vector<1x1x15x15x16xf32>
    %28 = vector.shape_cast %27 : vector<1x1x15x15x16xf32> to vector<15x15x16xf32>
    %29 = arith.maximumf %26, %28 : vector<15x15x16xf32>
    %30 = vector.extract_strided_slice %18 {offsets = [1, 1, 0, 0, 0], sizes = [1, 1, 15, 15, 16], strides = [1, 1, 1, 1, 1]} : vector<2x2x16x16x16xf32> to vector<1x1x15x15x16xf32>
    %31 = vector.shape_cast %30 : vector<1x1x15x15x16xf32> to vector<15x15x16xf32>
    %32 = arith.maximumf %29, %31 : vector<15x15x16xf32>
    %33 = vector.extract_strided_slice %18 {offsets = [1, 0, 0, 1, 0], sizes = [1, 1, 15, 15, 16], strides = [1, 1, 1, 1, 1]} : vector<2x2x16x16x16xf32> to vector<1x1x15x15x16xf32>
    %34 = vector.shape_cast %33 : vector<1x1x15x15x16xf32> to vector<15x15x16xf32>
    %35 = arith.maximumf %32, %34 : vector<15x15x16xf32>
    %36 = vector.extract_strided_slice %18 {offsets = [0, 0, 1, 0, 0], sizes = [1, 1, 15, 15, 16], strides = [1, 1, 1, 1, 1]} : vector<2x2x16x16x16xf32> to vector<1x1x15x15x16xf32>
    %37 = vector.shape_cast %36 : vector<1x1x15x15x16xf32> to vector<15x15x16xf32>
    %38 = arith.maximumf %35, %37 : vector<15x15x16xf32>
    %39 = vector.extract_strided_slice %18 {offsets = [0, 1, 1, 0, 0], sizes = [1, 1, 15, 15, 16], strides = [1, 1, 1, 1, 1]} : vector<2x2x16x16x16xf32> to vector<1x1x15x15x16xf32>
    %40 = vector.shape_cast %39 : vector<1x1x15x15x16xf32> to vector<15x15x16xf32>
    %41 = arith.maximumf %38, %40 : vector<15x15x16xf32>
    %42 = vector.extract_strided_slice %18 {offsets = [0, 0, 1, 1, 0], sizes = [1, 1, 15, 15, 16], strides = [1, 1, 1, 1, 1]} : vector<2x2x16x16x16xf32> to vector<1x1x15x15x16xf32>
    %43 = vector.shape_cast %42 : vector<1x1x15x15x16xf32> to vector<15x15x16xf32>
    %44 = arith.maximumf %41, %43 : vector<15x15x16xf32>
    %c1 = arith.constant 1 : index
    %c1_29 = arith.constant 1 : index
    %c0_30 = arith.constant 0 : index
    %45 = vector.load %arg13[%c1, %c1_29, %c0_30] : memref<17x17x16xf32, #tpu.memory_space<vmem>>, vector<15x15x16xf32>
    tpu.vector_store %arg13[%c1, %c1_29, %c0_30], %44 {strides = array<i32>} : memref<17x17x16xf32, #tpu.memory_space<vmem>>, vector<15x15x16xf32>,
    %cst_31 = arith.constant 0.000000e+00 : f32
    %46 = vector.broadcast %cst_31 : f32 to vector<64x32xf32>
    %c0_32 = arith.constant 0 : index
    %c0_33 = arith.constant 0 : index
    %c0_34 = arith.constant 0 : index
    %47 = tpu.strided_load %arg13[%c0_32, %c0_33, %c0_34] {strides = array<i32: 2, 2, 1>} : memref<17x17x16xf32, #tpu.memory_space<vmem>>, vector<8x8x16xf32>
    %48 = vector.shape_cast %47 : vector<8x8x16xf32> to vector<64x16xf32>
    %49 = arith.truncf %48 : vector<64x16xf32> to vector<64x16xbf16>
    %c0_35 = arith.constant 0 : index
    %c0_36 = arith.constant 0 : index
    %c0_37 = arith.constant 0 : index
    %50 = vector.load %arg3[%c0_35, %c0_36, %c0_37] : memref<9x16x32xbf16, #tpu.memory_space<vmem>>, vector<1x16x32xbf16>
    %51 = vector.shape_cast %50 : vector<1x16x32xbf16> to vector<16x32xbf16>
    %cst_38 = arith.constant dense<0.000000e+00> : vector<64x32xf32>
    %52 = tpu.matmul %49, %51, %cst_38 {dimension_numbers = #tpu.dot_dimension_numbers<[1], [0], [0], [1], [0, 0, 1, 1], [], []>} : vector<64x16xbf16>, vector<16x32xbf16>, vector<64x32xf32> -> vector<64x32xf32>
    %53 = arith.addf %46, %52 : vector<64x32xf32>
    %c0_39 = arith.constant 0 : index
    %c1_40 = arith.constant 1 : index
    %c0_41 = arith.constant 0 : index
    %54 = tpu.strided_load %arg13[%c0_39, %c1_40, %c0_41] {strides = array<i32: 2, 2, 1>} : memref<17x17x16xf32, #tpu.memory_space<vmem>>, vector<8x8x16xf32>
    %55 = vector.shape_cast %54 : vector<8x8x16xf32> to vector<64x16xf32>
    %56 = arith.truncf %55 : vector<64x16xf32> to vector<64x16xbf16>
    %c1_42 = arith.constant 1 : index
    %c0_43 = arith.constant 0 : index
    %c0_44 = arith.constant 0 : index
    %57 = vector.load %arg3[%c1_42, %c0_43, %c0_44] : memref<9x16x32xbf16, #tpu.memory_space<vmem>>, vector<1x16x32xbf16>
    %58 = vector.shape_cast %57 : vector<1x16x32xbf16> to vector<16x32xbf16>
    %cst_45 = arith.constant dense<0.000000e+00> : vector<64x32xf32>
    %59 = tpu.matmul %56, %58, %cst_45 {dimension_numbers = #tpu.dot_dimension_numbers<[1], [0], [0], [1], [0, 0, 1, 1], [], []>} : vector<64x16xbf16>, vector<16x32xbf16>, vector<64x32xf32> -> vector<64x32xf32>
    %60 = arith.addf %53, %59 : vector<64x32xf32>
    %c0_46 = arith.constant 0 : index
    %c2 = arith.constant 2 : index
    %c0_47 = arith.constant 0 : index
    %61 = tpu.strided_load %arg13[%c0_46, %c2, %c0_47] {strides = array<i32: 2, 2, 1>} : memref<17x17x16xf32, #tpu.memory_space<vmem>>, vector<8x8x16xf32>
    %62 = vector.shape_cast %61 : vector<8x8x16xf32> to vector<64x16xf32>
    %63 = arith.truncf %62 : vector<64x16xf32> to vector<64x16xbf16>
    %c2_48 = arith.constant 2 : index
    %c0_49 = arith.constant 0 : index
    %c0_50 = arith.constant 0 : index
    %64 = vector.load %arg3[%c2_48, %c0_49, %c0_50] : memref<9x16x32xbf16, #tpu.memory_space<vmem>>, vector<1x16x32xbf16>
    %65 = vector.shape_cast %64 : vector<1x16x32xbf16> to vector<16x32xbf16>
    %cst_51 = arith.constant dense<0.000000e+00> : vector<64x32xf32>
    %66 = tpu.matmul %63, %65, %cst_51 {dimension_numbers = #tpu.dot_dimension_numbers<[1], [0], [0], [1], [0, 0, 1, 1], [], []>} : vector<64x16xbf16>, vector<16x32xbf16>, vector<64x32xf32> -> vector<64x32xf32>
    %67 = arith.addf %60, %66 : vector<64x32xf32>
    %c1_52 = arith.constant 1 : index
    %c0_53 = arith.constant 0 : index
    %c0_54 = arith.constant 0 : index
    %68 = tpu.strided_load %arg13[%c1_52, %c0_53, %c0_54] {strides = array<i32: 2, 2, 1>} : memref<17x17x16xf32, #tpu.memory_space<vmem>>, vector<8x8x16xf32>
    %69 = vector.shape_cast %68 : vector<8x8x16xf32> to vector<64x16xf32>
    %70 = arith.truncf %69 : vector<64x16xf32> to vector<64x16xbf16>
    %c3 = arith.constant 3 : index
    %c0_55 = arith.constant 0 : index
    %c0_56 = arith.constant 0 : index
    %71 = vector.load %arg3[%c3, %c0_55, %c0_56] : memref<9x16x32xbf16, #tpu.memory_space<vmem>>, vector<1x16x32xbf16>
    %72 = vector.shape_cast %71 : vector<1x16x32xbf16> to vector<16x32xbf16>
    %cst_57 = arith.constant dense<0.000000e+00> : vector<64x32xf32>
    %73 = tpu.matmul %70, %72, %cst_57 {dimension_numbers = #tpu.dot_dimension_numbers<[1], [0], [0], [1], [0, 0, 1, 1], [], []>} : vector<64x16xbf16>, vector<16x32xbf16>, vector<64x32xf32> -> vector<64x32xf32>
    %74 = arith.addf %67, %73 : vector<64x32xf32>
    %c1_58 = arith.constant 1 : index
    %c1_59 = arith.constant 1 : index
    %c0_60 = arith.constant 0 : index
    %75 = tpu.strided_load %arg13[%c1_58, %c1_59, %c0_60] {strides = array<i32: 2, 2, 1>} : memref<17x17x16xf32, #tpu.memory_space<vmem>>, vector<8x8x16xf32>
    %76 = vector.shape_cast %75 : vector<8x8x16xf32> to vector<64x16xf32>
    %77 = arith.truncf %76 : vector<64x16xf32> to vector<64x16xbf16>
    %c4 = arith.constant 4 : index
    %c0_61 = arith.constant 0 : index
    %c0_62 = arith.constant 0 : index
    %78 = vector.load %arg3[%c4, %c0_61, %c0_62] : memref<9x16x32xbf16, #tpu.memory_space<vmem>>, vector<1x16x32xbf16>
    %79 = vector.shape_cast %78 : vector<1x16x32xbf16> to vector<16x32xbf16>
    %cst_63 = arith.constant dense<0.000000e+00> : vector<64x32xf32>
    %80 = tpu.matmul %77, %79, %cst_63 {dimension_numbers = #tpu.dot_dimension_numbers<[1], [0], [0], [1], [0, 0, 1, 1], [], []>} : vector<64x16xbf16>, vector<16x32xbf16>, vector<64x32xf32> -> vector<64x32xf32>
    %81 = arith.addf %74, %80 : vector<64x32xf32>
    %c1_64 = arith.constant 1 : index
    %c2_65 = arith.constant 2 : index
    %c0_66 = arith.constant 0 : index
    %82 = tpu.strided_load %arg13[%c1_64, %c2_65, %c0_66] {strides = array<i32: 2, 2, 1>} : memref<17x17x16xf32, #tpu.memory_space<vmem>>, vector<8x8x16xf32>
    %83 = vector.shape_cast %82 : vector<8x8x16xf32> to vector<64x16xf32>
    %84 = arith.truncf %83 : vector<64x16xf32> to vector<64x16xbf16>
    %c5 = arith.constant 5 : index
    %c0_67 = arith.constant 0 : index
    %c0_68 = arith.constant 0 : index
    %85 = vector.load %arg3[%c5, %c0_67, %c0_68] : memref<9x16x32xbf16, #tpu.memory_space<vmem>>, vector<1x16x32xbf16>
    %86 = vector.shape_cast %85 : vector<1x16x32xbf16> to vector<16x32xbf16>
    %cst_69 = arith.constant dense<0.000000e+00> : vector<64x32xf32>
    %87 = tpu.matmul %84, %86, %cst_69 {dimension_numbers = #tpu.dot_dimension_numbers<[1], [0], [0], [1], [0, 0, 1, 1], [], []>} : vector<64x16xbf16>, vector<16x32xbf16>, vector<64x32xf32> -> vector<64x32xf32>
    %88 = arith.addf %81, %87 : vector<64x32xf32>
    %c2_70 = arith.constant 2 : index
    %c0_71 = arith.constant 0 : index
    %c0_72 = arith.constant 0 : index
    %89 = tpu.strided_load %arg13[%c2_70, %c0_71, %c0_72] {strides = array<i32: 2, 2, 1>} : memref<17x17x16xf32, #tpu.memory_space<vmem>>, vector<8x8x16xf32>
    %90 = vector.shape_cast %89 : vector<8x8x16xf32> to vector<64x16xf32>
    %91 = arith.truncf %90 : vector<64x16xf32> to vector<64x16xbf16>
    %c6 = arith.constant 6 : index
    %c0_73 = arith.constant 0 : index
    %c0_74 = arith.constant 0 : index
    %92 = vector.load %arg3[%c6, %c0_73, %c0_74] : memref<9x16x32xbf16, #tpu.memory_space<vmem>>, vector<1x16x32xbf16>
    %93 = vector.shape_cast %92 : vector<1x16x32xbf16> to vector<16x32xbf16>
    %cst_75 = arith.constant dense<0.000000e+00> : vector<64x32xf32>
    %94 = tpu.matmul %91, %93, %cst_75 {dimension_numbers = #tpu.dot_dimension_numbers<[1], [0], [0], [1], [0, 0, 1, 1], [], []>} : vector<64x16xbf16>, vector<16x32xbf16>, vector<64x32xf32> -> vector<64x32xf32>
    %95 = arith.addf %88, %94 : vector<64x32xf32>
    %c2_76 = arith.constant 2 : index
    %c1_77 = arith.constant 1 : index
    %c0_78 = arith.constant 0 : index
    %96 = tpu.strided_load %arg13[%c2_76, %c1_77, %c0_78] {strides = array<i32: 2, 2, 1>} : memref<17x17x16xf32, #tpu.memory_space<vmem>>, vector<8x8x16xf32>
    %97 = vector.shape_cast %96 : vector<8x8x16xf32> to vector<64x16xf32>
    %98 = arith.truncf %97 : vector<64x16xf32> to vector<64x16xbf16>
    %c7 = arith.constant 7 : index
    %c0_79 = arith.constant 0 : index
    %c0_80 = arith.constant 0 : index
    %99 = vector.load %arg3[%c7, %c0_79, %c0_80] : memref<9x16x32xbf16, #tpu.memory_space<vmem>>, vector<1x16x32xbf16>
    %100 = vector.shape_cast %99 : vector<1x16x32xbf16> to vector<16x32xbf16>
    %cst_81 = arith.constant dense<0.000000e+00> : vector<64x32xf32>
    %101 = tpu.matmul %98, %100, %cst_81 {dimension_numbers = #tpu.dot_dimension_numbers<[1], [0], [0], [1], [0, 0, 1, 1], [], []>} : vector<64x16xbf16>, vector<16x32xbf16>, vector<64x32xf32> -> vector<64x32xf32>
    %102 = arith.addf %95, %101 : vector<64x32xf32>
    %c2_82 = arith.constant 2 : index
    %c2_83 = arith.constant 2 : index
    %c0_84 = arith.constant 0 : index
    %103 = tpu.strided_load %arg13[%c2_82, %c2_83, %c0_84] {strides = array<i32: 2, 2, 1>} : memref<17x17x16xf32, #tpu.memory_space<vmem>>, vector<8x8x16xf32>
    %104 = vector.shape_cast %103 : vector<8x8x16xf32> to vector<64x16xf32>
    %105 = arith.truncf %104 : vector<64x16xf32> to vector<64x16xbf16>
    %c8 = arith.constant 8 : index
    %c0_85 = arith.constant 0 : index
    %c0_86 = arith.constant 0 : index
    %106 = vector.load %arg3[%c8, %c0_85, %c0_86] : memref<9x16x32xbf16, #tpu.memory_space<vmem>>, vector<1x16x32xbf16>
    %107 = vector.shape_cast %106 : vector<1x16x32xbf16> to vector<16x32xbf16>
    %cst_87 = arith.constant dense<0.000000e+00> : vector<64x32xf32>
    %108 = tpu.matmul %105, %107, %cst_87 {dimension_numbers = #tpu.dot_dimension_numbers<[1], [0], [0], [1], [0, 0, 1, 1], [], []>} : vector<64x16xbf16>, vector<16x32xbf16>, vector<64x32xf32> -> vector<64x32xf32>
    %109 = arith.addf %102, %108 : vector<64x32xf32>
    %cst_88 = arith.constant 0.000000e+00 : f32
    %110 = vector.broadcast %cst_88 : f32 to vector<64x32xf32>
    %111 = arith.maximumf %109, %110 : vector<64x32xf32>
    %112 = vector.shape_cast %111 : vector<64x32xf32> to vector<8x8x32xf32>
    %c1_89 = arith.constant 1 : index
    %c1_90 = arith.constant 1 : index
    %c0_91 = arith.constant 0 : index
    %113 = vector.load %arg14[%c1_89, %c1_90, %c0_91] : memref<10x10x32xf32, #tpu.memory_space<vmem>>, vector<8x8x32xf32>
    tpu.vector_store %arg14[%c1_89, %c1_90, %c0_91], %112 {strides = array<i32>} : memref<10x10x32xf32, #tpu.memory_space<vmem>>, vector<8x8x32xf32>,
    %cst_92 = arith.constant 0.000000e+00 : f32
    %114 = vector.broadcast %cst_92 : f32 to vector<64x32xf32>
    %c0_93 = arith.constant 0 : index
    %c0_94 = arith.constant 0 : index
    %c0_95 = arith.constant 0 : index
    %115 = vector.load %arg14[%c0_93, %c0_94, %c0_95] : memref<10x10x32xf32, #tpu.memory_space<vmem>>, vector<8x8x32xf32>
    %116 = vector.shape_cast %115 : vector<8x8x32xf32> to vector<64x32xf32>
    %117 = arith.truncf %116 : vector<64x32xf32> to vector<64x32xbf16>
    %c0_96 = arith.constant 0 : index
    %c0_97 = arith.constant 0 : index
    %c0_98 = arith.constant 0 : index
    %118 = vector.load %arg4[%c0_96, %c0_97, %c0_98] : memref<9x32x32xbf16, #tpu.memory_space<vmem>>, vector<1x32x32xbf16>
    %119 = vector.shape_cast %118 : vector<1x32x32xbf16> to vector<32x32xbf16>
    %cst_99 = arith.constant dense<0.000000e+00> : vector<64x32xf32>
    %120 = tpu.matmul %117, %119, %cst_99 {dimension_numbers = #tpu.dot_dimension_numbers<[1], [0], [0], [1], [0, 0, 1, 1], [], []>} : vector<64x32xbf16>, vector<32x32xbf16>, vector<64x32xf32> -> vector<64x32xf32>
    %121 = arith.addf %114, %120 : vector<64x32xf32>
    %c0_100 = arith.constant 0 : index
    %c1_101 = arith.constant 1 : index
    %c0_102 = arith.constant 0 : index
    %122 = vector.load %arg14[%c0_100, %c1_101, %c0_102] : memref<10x10x32xf32, #tpu.memory_space<vmem>>, vector<8x8x32xf32>
    %123 = vector.shape_cast %122 : vector<8x8x32xf32> to vector<64x32xf32>
    %124 = arith.truncf %123 : vector<64x32xf32> to vector<64x32xbf16>
    %c1_103 = arith.constant 1 : index
    %c0_104 = arith.constant 0 : index
    %c0_105 = arith.constant 0 : index
    %125 = vector.load %arg4[%c1_103, %c0_104, %c0_105] : memref<9x32x32xbf16, #tpu.memory_space<vmem>>, vector<1x32x32xbf16>
    %126 = vector.shape_cast %125 : vector<1x32x32xbf16> to vector<32x32xbf16>
    %cst_106 = arith.constant dense<0.000000e+00> : vector<64x32xf32>
    %127 = tpu.matmul %124, %126, %cst_106 {dimension_numbers = #tpu.dot_dimension_numbers<[1], [0], [0], [1], [0, 0, 1, 1], [], []>} : vector<64x32xbf16>, vector<32x32xbf16>, vector<64x32xf32> -> vector<64x32xf32>
    %128 = arith.addf %121, %127 : vector<64x32xf32>
    %c0_107 = arith.constant 0 : index
    %c2_108 = arith.constant 2 : index
    %c0_109 = arith.constant 0 : index
    %129 = vector.load %arg14[%c0_107, %c2_108, %c0_109] : memref<10x10x32xf32, #tpu.memory_space<vmem>>, vector<8x8x32xf32>
    %130 = vector.shape_cast %129 : vector<8x8x32xf32> to vector<64x32xf32>
    %131 = arith.truncf %130 : vector<64x32xf32> to vector<64x32xbf16>
    %c2_110 = arith.constant 2 : index
    %c0_111 = arith.constant 0 : index
    %c0_112 = arith.constant 0 : index
    %132 = vector.load %arg4[%c2_110, %c0_111, %c0_112] : memref<9x32x32xbf16, #tpu.memory_space<vmem>>, vector<1x32x32xbf16>
    %133 = vector.shape_cast %132 : vector<1x32x32xbf16> to vector<32x32xbf16>
    %cst_113 = arith.constant dense<0.000000e+00> : vector<64x32xf32>
    %134 = tpu.matmul %131, %133, %cst_113 {dimension_numbers = #tpu.dot_dimension_numbers<[1], [0], [0], [1], [0, 0, 1, 1], [], []>} : vector<64x32xbf16>, vector<32x32xbf16>, vector<64x32xf32> -> vector<64x32xf32>
    %135 = arith.addf %128, %134 : vector<64x32xf32>
    %c1_114 = arith.constant 1 : index
    %c0_115 = arith.constant 0 : index
    %c0_116 = arith.constant 0 : index
    %136 = vector.load %arg14[%c1_114, %c0_115, %c0_116] : memref<10x10x32xf32, #tpu.memory_space<vmem>>, vector<8x8x32xf32>
    %137 = vector.shape_cast %136 : vector<8x8x32xf32> to vector<64x32xf32>
    %138 = arith.truncf %137 : vector<64x32xf32> to vector<64x32xbf16>
    %c3_117 = arith.constant 3 : index
    %c0_118 = arith.constant 0 : index
    %c0_119 = arith.constant 0 : index
    %139 = vector.load %arg4[%c3_117, %c0_118, %c0_119] : memref<9x32x32xbf16, #tpu.memory_space<vmem>>, vector<1x32x32xbf16>
    %140 = vector.shape_cast %139 : vector<1x32x32xbf16> to vector<32x32xbf16>
    %cst_120 = arith.constant dense<0.000000e+00> : vector<64x32xf32>
    %141 = tpu.matmul %138, %140, %cst_120 {dimension_numbers = #tpu.dot_dimension_numbers<[1], [0], [0], [1], [0, 0, 1, 1], [], []>} : vector<64x32xbf16>, vector<32x32xbf16>, vector<64x32xf32> -> vector<64x32xf32>
    %142 = arith.addf %135, %141 : vector<64x32xf32>
    %c1_121 = arith.constant 1 : index
    %c1_122 = arith.constant 1 : index
    %c0_123 = arith.constant 0 : index
    %143 = vector.load %arg14[%c1_121, %c1_122, %c0_123] : memref<10x10x32xf32, #tpu.memory_space<vmem>>, vector<8x8x32xf32>
    %144 = vector.shape_cast %143 : vector<8x8x32xf32> to vector<64x32xf32>
    %145 = arith.truncf %144 : vector<64x32xf32> to vector<64x32xbf16>
    %c4_124 = arith.constant 4 : index
    %c0_125 = arith.constant 0 : index
    %c0_126 = arith.constant 0 : index
    %146 = vector.load %arg4[%c4_124, %c0_125, %c0_126] : memref<9x32x32xbf16, #tpu.memory_space<vmem>>, vector<1x32x32xbf16>
    %147 = vector.shape_cast %146 : vector<1x32x32xbf16> to vector<32x32xbf16>
    %cst_127 = arith.constant dense<0.000000e+00> : vector<64x32xf32>
    %148 = tpu.matmul %145, %147, %cst_127 {dimension_numbers = #tpu.dot_dimension_numbers<[1], [0], [0], [1], [0, 0, 1, 1], [], []>} : vector<64x32xbf16>, vector<32x32xbf16>, vector<64x32xf32> -> vector<64x32xf32>
    %149 = arith.addf %142, %148 : vector<64x32xf32>
    %c1_128 = arith.constant 1 : index
    %c2_129 = arith.constant 2 : index
    %c0_130 = arith.constant 0 : index
    %150 = vector.load %arg14[%c1_128, %c2_129, %c0_130] : memref<10x10x32xf32, #tpu.memory_space<vmem>>, vector<8x8x32xf32>
    %151 = vector.shape_cast %150 : vector<8x8x32xf32> to vector<64x32xf32>
    %152 = arith.truncf %151 : vector<64x32xf32> to vector<64x32xbf16>
    %c5_131 = arith.constant 5 : index
    %c0_132 = arith.constant 0 : index
    %c0_133 = arith.constant 0 : index
    %153 = vector.load %arg4[%c5_131, %c0_132, %c0_133] : memref<9x32x32xbf16, #tpu.memory_space<vmem>>, vector<1x32x32xbf16>
    %154 = vector.shape_cast %153 : vector<1x32x32xbf16> to vector<32x32xbf16>
    %cst_134 = arith.constant dense<0.000000e+00> : vector<64x32xf32>
    %155 = tpu.matmul %152, %154, %cst_134 {dimension_numbers = #tpu.dot_dimension_numbers<[1], [0], [0], [1], [0, 0, 1, 1], [], []>} : vector<64x32xbf16>, vector<32x32xbf16>, vector<64x32xf32> -> vector<64x32xf32>
    %156 = arith.addf %149, %155 : vector<64x32xf32>
    %c2_135 = arith.constant 2 : index
    %c0_136 = arith.constant 0 : index
    %c0_137 = arith.constant 0 : index
    %157 = vector.load %arg14[%c2_135, %c0_136, %c0_137] : memref<10x10x32xf32, #tpu.memory_space<vmem>>, vector<8x8x32xf32>
    %158 = vector.shape_cast %157 : vector<8x8x32xf32> to vector<64x32xf32>
    %159 = arith.truncf %158 : vector<64x32xf32> to vector<64x32xbf16>
    %c6_138 = arith.constant 6 : index
    %c0_139 = arith.constant 0 : index
    %c0_140 = arith.constant 0 : index
    %160 = vector.load %arg4[%c6_138, %c0_139, %c0_140] : memref<9x32x32xbf16, #tpu.memory_space<vmem>>, vector<1x32x32xbf16>
    %161 = vector.shape_cast %160 : vector<1x32x32xbf16> to vector<32x32xbf16>
    %cst_141 = arith.constant dense<0.000000e+00> : vector<64x32xf32>
    %162 = tpu.matmul %159, %161, %cst_141 {dimension_numbers = #tpu.dot_dimension_numbers<[1], [0], [0], [1], [0, 0, 1, 1], [], []>} : vector<64x32xbf16>, vector<32x32xbf16>, vector<64x32xf32> -> vector<64x32xf32>
    %163 = arith.addf %156, %162 : vector<64x32xf32>
    %c2_142 = arith.constant 2 : index
    %c1_143 = arith.constant 1 : index
    %c0_144 = arith.constant 0 : index
    %164 = vector.load %arg14[%c2_142, %c1_143, %c0_144] : memref<10x10x32xf32, #tpu.memory_space<vmem>>, vector<8x8x32xf32>
    %165 = vector.shape_cast %164 : vector<8x8x32xf32> to vector<64x32xf32>
    %166 = arith.truncf %165 : vector<64x32xf32> to vector<64x32xbf16>
    %c7_145 = arith.constant 7 : index
    %c0_146 = arith.constant 0 : index
    %c0_147 = arith.constant 0 : index
    %167 = vector.load %arg4[%c7_145, %c0_146, %c0_147] : memref<9x32x32xbf16, #tpu.memory_space<vmem>>, vector<1x32x32xbf16>
    %168 = vector.shape_cast %167 : vector<1x32x32xbf16> to vector<32x32xbf16>
    %cst_148 = arith.constant dense<0.000000e+00> : vector<64x32xf32>
    %169 = tpu.matmul %166, %168, %cst_148 {dimension_numbers = #tpu.dot_dimension_numbers<[1], [0], [0], [1], [0, 0, 1, 1], [], []>} : vector<64x32xbf16>, vector<32x32xbf16>, vector<64x32xf32> -> vector<64x32xf32>
    %170 = arith.addf %163, %169 : vector<64x32xf32>
    %c2_149 = arith.constant 2 : index
    %c2_150 = arith.constant 2 : index
    %c0_151 = arith.constant 0 : index
    %171 = vector.load %arg14[%c2_149, %c2_150, %c0_151] : memref<10x10x32xf32, #tpu.memory_space<vmem>>, vector<8x8x32xf32>
    %172 = vector.shape_cast %171 : vector<8x8x32xf32> to vector<64x32xf32>
    %173 = arith.truncf %172 : vector<64x32xf32> to vector<64x32xbf16>
    %c8_152 = arith.constant 8 : index
    %c0_153 = arith.constant 0 : index
    %c0_154 = arith.constant 0 : index
    %174 = vector.load %arg4[%c8_152, %c0_153, %c0_154] : memref<9x32x32xbf16, #tpu.memory_space<vmem>>, vector<1x32x32xbf16>
    %175 = vector.shape_cast %174 : vector<1x32x32xbf16> to vector<32x32xbf16>
    %cst_155 = arith.constant dense<0.000000e+00> : vector<64x32xf32>
    %176 = tpu.matmul %173, %175, %cst_155 {dimension_numbers = #tpu.dot_dimension_numbers<[1], [0], [0], [1], [0, 0, 1, 1], [], []>} : vector<64x32xbf16>, vector<32x32xbf16>, vector<64x32xf32> -> vector<64x32xf32>
    %177 = arith.addf %170, %176 : vector<64x32xf32>
    %c1_156 = arith.constant 1 : index
    %c1_157 = arith.constant 1 : index
    %c0_158 = arith.constant 0 : index
    %178 = tpu.strided_load %arg13[%c1_156, %c1_157, %c0_158] {strides = array<i32: 2, 2, 1>} : memref<17x17x16xf32, #tpu.memory_space<vmem>>, vector<8x8x16xf32>
    %179 = vector.shape_cast %178 : vector<8x8x16xf32> to vector<64x16xf32>
    %180 = arith.truncf %179 : vector<64x16xf32> to vector<64x16xbf16>
    %c0_159 = arith.constant 0 : index
    %c0_160 = arith.constant 0 : index
    %181 = vector.load %arg5[%c0_159, %c0_160] : memref<16x32xbf16, #tpu.memory_space<vmem>>, vector<16x32xbf16>
    %cst_161 = arith.constant dense<0.000000e+00> : vector<64x32xf32>
    %182 = tpu.matmul %180, %181, %cst_161 {dimension_numbers = #tpu.dot_dimension_numbers<[1], [0], [0], [1], [0, 0, 1, 1], [], []>} : vector<64x16xbf16>, vector<16x32xbf16>, vector<64x32xf32> -> vector<64x32xf32>
    %183 = arith.addf %177, %182 : vector<64x32xf32>
    %cst_162 = arith.constant 0.000000e+00 : f32
    %184 = vector.broadcast %cst_162 : f32 to vector<64x32xf32>
    %185 = arith.maximumf %183, %184 : vector<64x32xf32>
    %186 = vector.shape_cast %185 : vector<64x32xf32> to vector<8x8x32xf32>
    %c1_163 = arith.constant 1 : index
    %c1_164 = arith.constant 1 : index
    %c0_165 = arith.constant 0 : index
    %187 = vector.load %arg15[%c1_163, %c1_164, %c0_165] : memref<10x10x32xf32, #tpu.memory_space<vmem>>, vector<8x8x32xf32>
    tpu.vector_store %arg15[%c1_163, %c1_164, %c0_165], %186 {strides = array<i32>} : memref<10x10x32xf32, #tpu.memory_space<vmem>>, vector<8x8x32xf32>,
    %cst_166 = arith.constant 0.000000e+00 : f32
    %188 = vector.broadcast %cst_166 : f32 to vector<16x64xf32>
    %c0_167 = arith.constant 0 : index
    %c0_168 = arith.constant 0 : index
    %c0_169 = arith.constant 0 : index
    %189 = tpu.strided_load %arg15[%c0_167, %c0_168, %c0_169] {strides = array<i32: 2, 2, 1>} : memref<10x10x32xf32, #tpu.memory_space<vmem>>, vector<4x4x32xf32>
    %190 = vector.shape_cast %189 : vector<4x4x32xf32> to vector<16x32xf32>
    %191 = arith.truncf %190 : vector<16x32xf32> to vector<16x32xbf16>
    %c0_170 = arith.constant 0 : index
    %c0_171 = arith.constant 0 : index
    %c0_172 = arith.constant 0 : index
    %192 = vector.load %arg6[%c0_170, %c0_171, %c0_172] : memref<9x32x64xbf16, #tpu.memory_space<vmem>>, vector<1x32x64xbf16>
    %193 = vector.shape_cast %192 : vector<1x32x64xbf16> to vector<32x64xbf16>
    %cst_173 = arith.constant dense<0.000000e+00> : vector<16x64xf32>
    %194 = tpu.matmul %191, %193, %cst_173 {dimension_numbers = #tpu.dot_dimension_numbers<[1], [0], [0], [1], [0, 0, 1, 1], [], []>} : vector<16x32xbf16>, vector<32x64xbf16>, vector<16x64xf32> -> vector<16x64xf32>
    %195 = arith.addf %188, %194 : vector<16x64xf32>
    %c0_174 = arith.constant 0 : index
    %c1_175 = arith.constant 1 : index
    %c0_176 = arith.constant 0 : index
    %196 = tpu.strided_load %arg15[%c0_174, %c1_175, %c0_176] {strides = array<i32: 2, 2, 1>} : memref<10x10x32xf32, #tpu.memory_space<vmem>>, vector<4x4x32xf32>
    %197 = vector.shape_cast %196 : vector<4x4x32xf32> to vector<16x32xf32>
    %198 = arith.truncf %197 : vector<16x32xf32> to vector<16x32xbf16>
    %c1_177 = arith.constant 1 : index
    %c0_178 = arith.constant 0 : index
    %c0_179 = arith.constant 0 : index
    %199 = vector.load %arg6[%c1_177, %c0_178, %c0_179] : memref<9x32x64xbf16, #tpu.memory_space<vmem>>, vector<1x32x64xbf16>
    %200 = vector.shape_cast %199 : vector<1x32x64xbf16> to vector<32x64xbf16>
    %cst_180 = arith.constant dense<0.000000e+00> : vector<16x64xf32>
    %201 = tpu.matmul %198, %200, %cst_180 {dimension_numbers = #tpu.dot_dimension_numbers<[1], [0], [0], [1], [0, 0, 1, 1], [], []>} : vector<16x32xbf16>, vector<32x64xbf16>, vector<16x64xf32> -> vector<16x64xf32>
    %202 = arith.addf %195, %201 : vector<16x64xf32>
    %c0_181 = arith.constant 0 : index
    %c2_182 = arith.constant 2 : index
    %c0_183 = arith.constant 0 : index
    %203 = tpu.strided_load %arg15[%c0_181, %c2_182, %c0_183] {strides = array<i32: 2, 2, 1>} : memref<10x10x32xf32, #tpu.memory_space<vmem>>, vector<4x4x32xf32>
    %204 = vector.shape_cast %203 : vector<4x4x32xf32> to vector<16x32xf32>
    %205 = arith.truncf %204 : vector<16x32xf32> to vector<16x32xbf16>
    %c2_184 = arith.constant 2 : index
    %c0_185 = arith.constant 0 : index
    %c0_186 = arith.constant 0 : index
    %206 = vector.load %arg6[%c2_184, %c0_185, %c0_186] : memref<9x32x64xbf16, #tpu.memory_space<vmem>>, vector<1x32x64xbf16>
    %207 = vector.shape_cast %206 : vector<1x32x64xbf16> to vector<32x64xbf16>
    %cst_187 = arith.constant dense<0.000000e+00> : vector<16x64xf32>
    %208 = tpu.matmul %205, %207, %cst_187 {dimension_numbers = #tpu.dot_dimension_numbers<[1], [0], [0], [1], [0, 0, 1, 1], [], []>} : vector<16x32xbf16>, vector<32x64xbf16>, vector<16x64xf32> -> vector<16x64xf32>
    %209 = arith.addf %202, %208 : vector<16x64xf32>
    %c1_188 = arith.constant 1 : index
    %c0_189 = arith.constant 0 : index
    %c0_190 = arith.constant 0 : index
    %210 = tpu.strided_load %arg15[%c1_188, %c0_189, %c0_190] {strides = array<i32: 2, 2, 1>} : memref<10x10x32xf32, #tpu.memory_space<vmem>>, vector<4x4x32xf32>
    %211 = vector.shape_cast %210 : vector<4x4x32xf32> to vector<16x32xf32>
    %212 = arith.truncf %211 : vector<16x32xf32> to vector<16x32xbf16>
    %c3_191 = arith.constant 3 : index
    %c0_192 = arith.constant 0 : index
    %c0_193 = arith.constant 0 : index
    %213 = vector.load %arg6[%c3_191, %c0_192, %c0_193] : memref<9x32x64xbf16, #tpu.memory_space<vmem>>, vector<1x32x64xbf16>
    %214 = vector.shape_cast %213 : vector<1x32x64xbf16> to vector<32x64xbf16>
    %cst_194 = arith.constant dense<0.000000e+00> : vector<16x64xf32>
    %215 = tpu.matmul %212, %214, %cst_194 {dimension_numbers = #tpu.dot_dimension_numbers<[1], [0], [0], [1], [0, 0, 1, 1], [], []>} : vector<16x32xbf16>, vector<32x64xbf16>, vector<16x64xf32> -> vector<16x64xf32>
    %216 = arith.addf %209, %215 : vector<16x64xf32>
    %c1_195 = arith.constant 1 : index
    %c1_196 = arith.constant 1 : index
    %c0_197 = arith.constant 0 : index
    %217 = tpu.strided_load %arg15[%c1_195, %c1_196, %c0_197] {strides = array<i32: 2, 2, 1>} : memref<10x10x32xf32, #tpu.memory_space<vmem>>, vector<4x4x32xf32>
    %218 = vector.shape_cast %217 : vector<4x4x32xf32> to vector<16x32xf32>
    %219 = arith.truncf %218 : vector<16x32xf32> to vector<16x32xbf16>
    %c4_198 = arith.constant 4 : index
    %c0_199 = arith.constant 0 : index
    %c0_200 = arith.constant 0 : index
    %220 = vector.load %arg6[%c4_198, %c0_199, %c0_200] : memref<9x32x64xbf16, #tpu.memory_space<vmem>>, vector<1x32x64xbf16>
    %221 = vector.shape_cast %220 : vector<1x32x64xbf16> to vector<32x64xbf16>
    %cst_201 = arith.constant dense<0.000000e+00> : vector<16x64xf32>
    %222 = tpu.matmul %219, %221, %cst_201 {dimension_numbers = #tpu.dot_dimension_numbers<[1], [0], [0], [1], [0, 0, 1, 1], [], []>} : vector<16x32xbf16>, vector<32x64xbf16>, vector<16x64xf32> -> vector<16x64xf32>
    %223 = arith.addf %216, %222 : vector<16x64xf32>
    %c1_202 = arith.constant 1 : index
    %c2_203 = arith.constant 2 : index
    %c0_204 = arith.constant 0 : index
    %224 = tpu.strided_load %arg15[%c1_202, %c2_203, %c0_204] {strides = array<i32: 2, 2, 1>} : memref<10x10x32xf32, #tpu.memory_space<vmem>>, vector<4x4x32xf32>
    %225 = vector.shape_cast %224 : vector<4x4x32xf32> to vector<16x32xf32>
    %226 = arith.truncf %225 : vector<16x32xf32> to vector<16x32xbf16>
    %c5_205 = arith.constant 5 : index
    %c0_206 = arith.constant 0 : index
    %c0_207 = arith.constant 0 : index
    %227 = vector.load %arg6[%c5_205, %c0_206, %c0_207] : memref<9x32x64xbf16, #tpu.memory_space<vmem>>, vector<1x32x64xbf16>
    %228 = vector.shape_cast %227 : vector<1x32x64xbf16> to vector<32x64xbf16>
    %cst_208 = arith.constant dense<0.000000e+00> : vector<16x64xf32>
    %229 = tpu.matmul %226, %228, %cst_208 {dimension_numbers = #tpu.dot_dimension_numbers<[1], [0], [0], [1], [0, 0, 1, 1], [], []>} : vector<16x32xbf16>, vector<32x64xbf16>, vector<16x64xf32> -> vector<16x64xf32>
    %230 = arith.addf %223, %229 : vector<16x64xf32>
    %c2_209 = arith.constant 2 : index
    %c0_210 = arith.constant 0 : index
    %c0_211 = arith.constant 0 : index
    %231 = tpu.strided_load %arg15[%c2_209, %c0_210, %c0_211] {strides = array<i32: 2, 2, 1>} : memref<10x10x32xf32, #tpu.memory_space<vmem>>, vector<4x4x32xf32>
    %232 = vector.shape_cast %231 : vector<4x4x32xf32> to vector<16x32xf32>
    %233 = arith.truncf %232 : vector<16x32xf32> to vector<16x32xbf16>
    %c6_212 = arith.constant 6 : index
    %c0_213 = arith.constant 0 : index
    %c0_214 = arith.constant 0 : index
    %234 = vector.load %arg6[%c6_212, %c0_213, %c0_214] : memref<9x32x64xbf16, #tpu.memory_space<vmem>>, vector<1x32x64xbf16>
    %235 = vector.shape_cast %234 : vector<1x32x64xbf16> to vector<32x64xbf16>
    %cst_215 = arith.constant dense<0.000000e+00> : vector<16x64xf32>
    %236 = tpu.matmul %233, %235, %cst_215 {dimension_numbers = #tpu.dot_dimension_numbers<[1], [0], [0], [1], [0, 0, 1, 1], [], []>} : vector<16x32xbf16>, vector<32x64xbf16>, vector<16x64xf32> -> vector<16x64xf32>
    %237 = arith.addf %230, %236 : vector<16x64xf32>
    %c2_216 = arith.constant 2 : index
    %c1_217 = arith.constant 1 : index
    %c0_218 = arith.constant 0 : index
    %238 = tpu.strided_load %arg15[%c2_216, %c1_217, %c0_218] {strides = array<i32: 2, 2, 1>} : memref<10x10x32xf32, #tpu.memory_space<vmem>>, vector<4x4x32xf32>
    %239 = vector.shape_cast %238 : vector<4x4x32xf32> to vector<16x32xf32>
    %240 = arith.truncf %239 : vector<16x32xf32> to vector<16x32xbf16>
    %c7_219 = arith.constant 7 : index
    %c0_220 = arith.constant 0 : index
    %c0_221 = arith.constant 0 : index
    %241 = vector.load %arg6[%c7_219, %c0_220, %c0_221] : memref<9x32x64xbf16, #tpu.memory_space<vmem>>, vector<1x32x64xbf16>
    %242 = vector.shape_cast %241 : vector<1x32x64xbf16> to vector<32x64xbf16>
    %cst_222 = arith.constant dense<0.000000e+00> : vector<16x64xf32>
    %243 = tpu.matmul %240, %242, %cst_222 {dimension_numbers = #tpu.dot_dimension_numbers<[1], [0], [0], [1], [0, 0, 1, 1], [], []>} : vector<16x32xbf16>, vector<32x64xbf16>, vector<16x64xf32> -> vector<16x64xf32>
    %244 = arith.addf %237, %243 : vector<16x64xf32>
    %c2_223 = arith.constant 2 : index
    %c2_224 = arith.constant 2 : index
    %c0_225 = arith.constant 0 : index
    %245 = tpu.strided_load %arg15[%c2_223, %c2_224, %c0_225] {strides = array<i32: 2, 2, 1>} : memref<10x10x32xf32, #tpu.memory_space<vmem>>, vector<4x4x32xf32>
    %246 = vector.shape_cast %245 : vector<4x4x32xf32> to vector<16x32xf32>
    %247 = arith.truncf %246 : vector<16x32xf32> to vector<16x32xbf16>
    %c8_226 = arith.constant 8 : index
    %c0_227 = arith.constant 0 : index
    %c0_228 = arith.constant 0 : index
    %248 = vector.load %arg6[%c8_226, %c0_227, %c0_228] : memref<9x32x64xbf16, #tpu.memory_space<vmem>>, vector<1x32x64xbf16>
    %249 = vector.shape_cast %248 : vector<1x32x64xbf16> to vector<32x64xbf16>
    %cst_229 = arith.constant dense<0.000000e+00> : vector<16x64xf32>
    %250 = tpu.matmul %247, %249, %cst_229 {dimension_numbers = #tpu.dot_dimension_numbers<[1], [0], [0], [1], [0, 0, 1, 1], [], []>} : vector<16x32xbf16>, vector<32x64xbf16>, vector<16x64xf32> -> vector<16x64xf32>
    %251 = arith.addf %244, %250 : vector<16x64xf32>
    %cst_230 = arith.constant 0.000000e+00 : f32
    %252 = vector.broadcast %cst_230 : f32 to vector<16x64xf32>
    %253 = arith.maximumf %251, %252 : vector<16x64xf32>
    %254 = vector.shape_cast %253 : vector<16x64xf32> to vector<4x4x64xf32>
    %c1_231 = arith.constant 1 : index
    %c1_232 = arith.constant 1 : index
    %c0_233 = arith.constant 0 : index
    %255 = vector.load %arg16[%c1_231, %c1_232, %c0_233] : memref<6x6x64xf32, #tpu.memory_space<vmem>>, vector<4x4x64xf32>
    tpu.vector_store %arg16[%c1_231, %c1_232, %c0_233], %254 {strides = array<i32>} : memref<6x6x64xf32, #tpu.memory_space<vmem>>, vector<4x4x64xf32>,
    %cst_234 = arith.constant 0.000000e+00 : f32
    %256 = vector.broadcast %cst_234 : f32 to vector<16x64xf32>
    %c0_235 = arith.constant 0 : index
    %c0_236 = arith.constant 0 : index
    %c0_237 = arith.constant 0 : index
    %257 = vector.load %arg16[%c0_235, %c0_236, %c0_237] : memref<6x6x64xf32, #tpu.memory_space<vmem>>, vector<4x4x64xf32>
    %258 = vector.shape_cast %257 : vector<4x4x64xf32> to vector<16x64xf32>
    %259 = arith.truncf %258 : vector<16x64xf32> to vector<16x64xbf16>
    %c0_238 = arith.constant 0 : index
    %c0_239 = arith.constant 0 : index
    %c0_240 = arith.constant 0 : index
    %260 = vector.load %arg7[%c0_238, %c0_239, %c0_240] : memref<9x64x64xbf16, #tpu.memory_space<vmem>>, vector<1x64x64xbf16>
    %261 = vector.shape_cast %260 : vector<1x64x64xbf16> to vector<64x64xbf16>
    %cst_241 = arith.constant dense<0.000000e+00> : vector<16x64xf32>
    %262 = tpu.matmul %259, %261, %cst_241 {dimension_numbers = #tpu.dot_dimension_numbers<[1], [0], [0], [1], [0, 0, 1, 1], [], []>} : vector<16x64xbf16>, vector<64x64xbf16>, vector<16x64xf32> -> vector<16x64xf32>
    %263 = arith.addf %256, %262 : vector<16x64xf32>
    %c0_242 = arith.constant 0 : index
    %c1_243 = arith.constant 1 : index
    %c0_244 = arith.constant 0 : index
    %264 = vector.load %arg16[%c0_242, %c1_243, %c0_244] : memref<6x6x64xf32, #tpu.memory_space<vmem>>, vector<4x4x64xf32>
    %265 = vector.shape_cast %264 : vector<4x4x64xf32> to vector<16x64xf32>
    %266 = arith.truncf %265 : vector<16x64xf32> to vector<16x64xbf16>
    %c1_245 = arith.constant 1 : index
    %c0_246 = arith.constant 0 : index
    %c0_247 = arith.constant 0 : index
    %267 = vector.load %arg7[%c1_245, %c0_246, %c0_247] : memref<9x64x64xbf16, #tpu.memory_space<vmem>>, vector<1x64x64xbf16>
    %268 = vector.shape_cast %267 : vector<1x64x64xbf16> to vector<64x64xbf16>
    %cst_248 = arith.constant dense<0.000000e+00> : vector<16x64xf32>
    %269 = tpu.matmul %266, %268, %cst_248 {dimension_numbers = #tpu.dot_dimension_numbers<[1], [0], [0], [1], [0, 0, 1, 1], [], []>} : vector<16x64xbf16>, vector<64x64xbf16>, vector<16x64xf32> -> vector<16x64xf32>
    %270 = arith.addf %263, %269 : vector<16x64xf32>
    %c0_249 = arith.constant 0 : index
    %c2_250 = arith.constant 2 : index
    %c0_251 = arith.constant 0 : index
    %271 = vector.load %arg16[%c0_249, %c2_250, %c0_251] : memref<6x6x64xf32, #tpu.memory_space<vmem>>, vector<4x4x64xf32>
    %272 = vector.shape_cast %271 : vector<4x4x64xf32> to vector<16x64xf32>
    %273 = arith.truncf %272 : vector<16x64xf32> to vector<16x64xbf16>
    %c2_252 = arith.constant 2 : index
    %c0_253 = arith.constant 0 : index
    %c0_254 = arith.constant 0 : index
    %274 = vector.load %arg7[%c2_252, %c0_253, %c0_254] : memref<9x64x64xbf16, #tpu.memory_space<vmem>>, vector<1x64x64xbf16>
    %275 = vector.shape_cast %274 : vector<1x64x64xbf16> to vector<64x64xbf16>
    %cst_255 = arith.constant dense<0.000000e+00> : vector<16x64xf32>
    %276 = tpu.matmul %273, %275, %cst_255 {dimension_numbers = #tpu.dot_dimension_numbers<[1], [0], [0], [1], [0, 0, 1, 1], [], []>} : vector<16x64xbf16>, vector<64x64xbf16>, vector<16x64xf32> -> vector<16x64xf32>
    %277 = arith.addf %270, %276 : vector<16x64xf32>
    %c1_256 = arith.constant 1 : index
    %c0_257 = arith.constant 0 : index
    %c0_258 = arith.constant 0 : index
    %278 = vector.load %arg16[%c1_256, %c0_257, %c0_258] : memref<6x6x64xf32, #tpu.memory_space<vmem>>, vector<4x4x64xf32>
    %279 = vector.shape_cast %278 : vector<4x4x64xf32> to vector<16x64xf32>
    %280 = arith.truncf %279 : vector<16x64xf32> to vector<16x64xbf16>
    %c3_259 = arith.constant 3 : index
    %c0_260 = arith.constant 0 : index
    %c0_261 = arith.constant 0 : index
    %281 = vector.load %arg7[%c3_259, %c0_260, %c0_261] : memref<9x64x64xbf16, #tpu.memory_space<vmem>>, vector<1x64x64xbf16>
    %282 = vector.shape_cast %281 : vector<1x64x64xbf16> to vector<64x64xbf16>
    %cst_262 = arith.constant dense<0.000000e+00> : vector<16x64xf32>
    %283 = tpu.matmul %280, %282, %cst_262 {dimension_numbers = #tpu.dot_dimension_numbers<[1], [0], [0], [1], [0, 0, 1, 1], [], []>} : vector<16x64xbf16>, vector<64x64xbf16>, vector<16x64xf32> -> vector<16x64xf32>
    %284 = arith.addf %277, %283 : vector<16x64xf32>
    %c1_263 = arith.constant 1 : index
    %c1_264 = arith.constant 1 : index
    %c0_265 = arith.constant 0 : index
    %285 = vector.load %arg16[%c1_263, %c1_264, %c0_265] : memref<6x6x64xf32, #tpu.memory_space<vmem>>, vector<4x4x64xf32>
    %286 = vector.shape_cast %285 : vector<4x4x64xf32> to vector<16x64xf32>
    %287 = arith.truncf %286 : vector<16x64xf32> to vector<16x64xbf16>
    %c4_266 = arith.constant 4 : index
    %c0_267 = arith.constant 0 : index
    %c0_268 = arith.constant 0 : index
    %288 = vector.load %arg7[%c4_266, %c0_267, %c0_268] : memref<9x64x64xbf16, #tpu.memory_space<vmem>>, vector<1x64x64xbf16>
    %289 = vector.shape_cast %288 : vector<1x64x64xbf16> to vector<64x64xbf16>
    %cst_269 = arith.constant dense<0.000000e+00> : vector<16x64xf32>
    %290 = tpu.matmul %287, %289, %cst_269 {dimension_numbers = #tpu.dot_dimension_numbers<[1], [0], [0], [1], [0, 0, 1, 1], [], []>} : vector<16x64xbf16>, vector<64x64xbf16>, vector<16x64xf32> -> vector<16x64xf32>
    %291 = arith.addf %284, %290 : vector<16x64xf32>
    %c1_270 = arith.constant 1 : index
    %c2_271 = arith.constant 2 : index
    %c0_272 = arith.constant 0 : index
    %292 = vector.load %arg16[%c1_270, %c2_271, %c0_272] : memref<6x6x64xf32, #tpu.memory_space<vmem>>, vector<4x4x64xf32>
    %293 = vector.shape_cast %292 : vector<4x4x64xf32> to vector<16x64xf32>
    %294 = arith.truncf %293 : vector<16x64xf32> to vector<16x64xbf16>
    %c5_273 = arith.constant 5 : index
    %c0_274 = arith.constant 0 : index
    %c0_275 = arith.constant 0 : index
    %295 = vector.load %arg7[%c5_273, %c0_274, %c0_275] : memref<9x64x64xbf16, #tpu.memory_space<vmem>>, vector<1x64x64xbf16>
    %296 = vector.shape_cast %295 : vector<1x64x64xbf16> to vector<64x64xbf16>
    %cst_276 = arith.constant dense<0.000000e+00> : vector<16x64xf32>
    %297 = tpu.matmul %294, %296, %cst_276 {dimension_numbers = #tpu.dot_dimension_numbers<[1], [0], [0], [1], [0, 0, 1, 1], [], []>} : vector<16x64xbf16>, vector<64x64xbf16>, vector<16x64xf32> -> vector<16x64xf32>
    %298 = arith.addf %291, %297 : vector<16x64xf32>
    %c2_277 = arith.constant 2 : index
    %c0_278 = arith.constant 0 : index
    %c0_279 = arith.constant 0 : index
    %299 = vector.load %arg16[%c2_277, %c0_278, %c0_279] : memref<6x6x64xf32, #tpu.memory_space<vmem>>, vector<4x4x64xf32>
    %300 = vector.shape_cast %299 : vector<4x4x64xf32> to vector<16x64xf32>
    %301 = arith.truncf %300 : vector<16x64xf32> to vector<16x64xbf16>
    %c6_280 = arith.constant 6 : index
    %c0_281 = arith.constant 0 : index
    %c0_282 = arith.constant 0 : index
    %302 = vector.load %arg7[%c6_280, %c0_281, %c0_282] : memref<9x64x64xbf16, #tpu.memory_space<vmem>>, vector<1x64x64xbf16>
    %303 = vector.shape_cast %302 : vector<1x64x64xbf16> to vector<64x64xbf16>
    %cst_283 = arith.constant dense<0.000000e+00> : vector<16x64xf32>
    %304 = tpu.matmul %301, %303, %cst_283 {dimension_numbers = #tpu.dot_dimension_numbers<[1], [0], [0], [1], [0, 0, 1, 1], [], []>} : vector<16x64xbf16>, vector<64x64xbf16>, vector<16x64xf32> -> vector<16x64xf32>
    %305 = arith.addf %298, %304 : vector<16x64xf32>
    %c2_284 = arith.constant 2 : index
    %c1_285 = arith.constant 1 : index
    %c0_286 = arith.constant 0 : index
    %306 = vector.load %arg16[%c2_284, %c1_285, %c0_286] : memref<6x6x64xf32, #tpu.memory_space<vmem>>, vector<4x4x64xf32>
    %307 = vector.shape_cast %306 : vector<4x4x64xf32> to vector<16x64xf32>
    %308 = arith.truncf %307 : vector<16x64xf32> to vector<16x64xbf16>
    %c7_287 = arith.constant 7 : index
    %c0_288 = arith.constant 0 : index
    %c0_289 = arith.constant 0 : index
    %309 = vector.load %arg7[%c7_287, %c0_288, %c0_289] : memref<9x64x64xbf16, #tpu.memory_space<vmem>>, vector<1x64x64xbf16>
    %310 = vector.shape_cast %309 : vector<1x64x64xbf16> to vector<64x64xbf16>
    %cst_290 = arith.constant dense<0.000000e+00> : vector<16x64xf32>
    %311 = tpu.matmul %308, %310, %cst_290 {dimension_numbers = #tpu.dot_dimension_numbers<[1], [0], [0], [1], [0, 0, 1, 1], [], []>} : vector<16x64xbf16>, vector<64x64xbf16>, vector<16x64xf32> -> vector<16x64xf32>
    %312 = arith.addf %305, %311 : vector<16x64xf32>
    %c2_291 = arith.constant 2 : index
    %c2_292 = arith.constant 2 : index
    %c0_293 = arith.constant 0 : index
    %313 = vector.load %arg16[%c2_291, %c2_292, %c0_293] : memref<6x6x64xf32, #tpu.memory_space<vmem>>, vector<4x4x64xf32>
    %314 = vector.shape_cast %313 : vector<4x4x64xf32> to vector<16x64xf32>
    %315 = arith.truncf %314 : vector<16x64xf32> to vector<16x64xbf16>
    %c8_294 = arith.constant 8 : index
    %c0_295 = arith.constant 0 : index
    %c0_296 = arith.constant 0 : index
    %316 = vector.load %arg7[%c8_294, %c0_295, %c0_296] : memref<9x64x64xbf16, #tpu.memory_space<vmem>>, vector<1x64x64xbf16>
    %317 = vector.shape_cast %316 : vector<1x64x64xbf16> to vector<64x64xbf16>
    %cst_297 = arith.constant dense<0.000000e+00> : vector<16x64xf32>
    %318 = tpu.matmul %315, %317, %cst_297 {dimension_numbers = #tpu.dot_dimension_numbers<[1], [0], [0], [1], [0, 0, 1, 1], [], []>} : vector<16x64xbf16>, vector<64x64xbf16>, vector<16x64xf32> -> vector<16x64xf32>
    %319 = arith.addf %312, %318 : vector<16x64xf32>
    %c1_298 = arith.constant 1 : index
    %c1_299 = arith.constant 1 : index
    %c0_300 = arith.constant 0 : index
    %320 = tpu.strided_load %arg15[%c1_298, %c1_299, %c0_300] {strides = array<i32: 2, 2, 1>} : memref<10x10x32xf32, #tpu.memory_space<vmem>>, vector<4x4x32xf32>
    %321 = vector.shape_cast %320 : vector<4x4x32xf32> to vector<16x32xf32>
    %322 = arith.truncf %321 : vector<16x32xf32> to vector<16x32xbf16>
    %c0_301 = arith.constant 0 : index
    %c0_302 = arith.constant 0 : index
    %323 = vector.load %arg8[%c0_301, %c0_302] : memref<32x64xbf16, #tpu.memory_space<vmem>>, vector<32x64xbf16>
    %cst_303 = arith.constant dense<0.000000e+00> : vector<16x64xf32>
    %324 = tpu.matmul %322, %323, %cst_303 {dimension_numbers = #tpu.dot_dimension_numbers<[1], [0], [0], [1], [0, 0, 1, 1], [], []>} : vector<16x32xbf16>, vector<32x64xbf16>, vector<16x64xf32> -> vector<16x64xf32>
    %325 = arith.addf %319, %324 : vector<16x64xf32>
    %cst_304 = arith.constant 0.000000e+00 : f32
    %326 = vector.broadcast %cst_304 : f32 to vector<16x64xf32>
    %327 = arith.maximumf %325, %326 : vector<16x64xf32>
    %328 = vector.shape_cast %327 : vector<16x64xf32> to vector<4x4x64xf32>
    %c1_305 = arith.constant 1 : index
    %c1_306 = arith.constant 1 : index
    %c0_307 = arith.constant 0 : index
    %329 = vector.load %arg17[%c1_305, %c1_306, %c0_307] : memref<6x6x64xf32, #tpu.memory_space<vmem>>, vector<4x4x64xf32>
    tpu.vector_store %arg17[%c1_305, %c1_306, %c0_307], %328 {strides = array<i32>} : memref<6x6x64xf32, #tpu.memory_space<vmem>>, vector<4x4x64xf32>,
    %cst_308 = arith.constant 0.000000e+00 : f32
    %330 = vector.broadcast %cst_308 : f32 to vector<4x128xf32>
    %c0_309 = arith.constant 0 : index
    %c0_310 = arith.constant 0 : index
    %c0_311 = arith.constant 0 : index
    %331 = tpu.strided_load %arg17[%c0_309, %c0_310, %c0_311] {strides = array<i32: 2, 2, 1>} : memref<6x6x64xf32, #tpu.memory_space<vmem>>, vector<2x2x64xf32>
    %332 = vector.shape_cast %331 : vector<2x2x64xf32> to vector<4x64xf32>
    %333 = arith.truncf %332 : vector<4x64xf32> to vector<4x64xbf16>
    %c0_312 = arith.constant 0 : index
    %c0_313 = arith.constant 0 : index
    %c0_314 = arith.constant 0 : index
    %334 = vector.load %arg9[%c0_312, %c0_313, %c0_314] : memref<9x64x128xbf16, #tpu.memory_space<vmem>>, vector<1x64x128xbf16>
    %335 = vector.shape_cast %334 : vector<1x64x128xbf16> to vector<64x128xbf16>
    %cst_315 = arith.constant dense<0.000000e+00> : vector<4x128xf32>
    %336 = tpu.matmul %333, %335, %cst_315 {dimension_numbers = #tpu.dot_dimension_numbers<[1], [0], [0], [1], [0, 0, 1, 1], [], []>} : vector<4x64xbf16>, vector<64x128xbf16>, vector<4x128xf32> -> vector<4x128xf32>
    %337 = arith.addf %330, %336 : vector<4x128xf32>
    %c0_316 = arith.constant 0 : index
    %c1_317 = arith.constant 1 : index
    %c0_318 = arith.constant 0 : index
    %338 = tpu.strided_load %arg17[%c0_316, %c1_317, %c0_318] {strides = array<i32: 2, 2, 1>} : memref<6x6x64xf32, #tpu.memory_space<vmem>>, vector<2x2x64xf32>
    %339 = vector.shape_cast %338 : vector<2x2x64xf32> to vector<4x64xf32>
    %340 = arith.truncf %339 : vector<4x64xf32> to vector<4x64xbf16>
    %c1_319 = arith.constant 1 : index
    %c0_320 = arith.constant 0 : index
    %c0_321 = arith.constant 0 : index
    %341 = vector.load %arg9[%c1_319, %c0_320, %c0_321] : memref<9x64x128xbf16, #tpu.memory_space<vmem>>, vector<1x64x128xbf16>
    %342 = vector.shape_cast %341 : vector<1x64x128xbf16> to vector<64x128xbf16>
    %cst_322 = arith.constant dense<0.000000e+00> : vector<4x128xf32>
    %343 = tpu.matmul %340, %342, %cst_322 {dimension_numbers = #tpu.dot_dimension_numbers<[1], [0], [0], [1], [0, 0, 1, 1], [], []>} : vector<4x64xbf16>, vector<64x128xbf16>, vector<4x128xf32> -> vector<4x128xf32>
    %344 = arith.addf %337, %343 : vector<4x128xf32>
    %c0_323 = arith.constant 0 : index
    %c2_324 = arith.constant 2 : index
    %c0_325 = arith.constant 0 : index
    %345 = tpu.strided_load %arg17[%c0_323, %c2_324, %c0_325] {strides = array<i32: 2, 2, 1>} : memref<6x6x64xf32, #tpu.memory_space<vmem>>, vector<2x2x64xf32>
    %346 = vector.shape_cast %345 : vector<2x2x64xf32> to vector<4x64xf32>
    %347 = arith.truncf %346 : vector<4x64xf32> to vector<4x64xbf16>
    %c2_326 = arith.constant 2 : index
    %c0_327 = arith.constant 0 : index
    %c0_328 = arith.constant 0 : index
    %348 = vector.load %arg9[%c2_326, %c0_327, %c0_328] : memref<9x64x128xbf16, #tpu.memory_space<vmem>>, vector<1x64x128xbf16>
    %349 = vector.shape_cast %348 : vector<1x64x128xbf16> to vector<64x128xbf16>
    %cst_329 = arith.constant dense<0.000000e+00> : vector<4x128xf32>
    %350 = tpu.matmul %347, %349, %cst_329 {dimension_numbers = #tpu.dot_dimension_numbers<[1], [0], [0], [1], [0, 0, 1, 1], [], []>} : vector<4x64xbf16>, vector<64x128xbf16>, vector<4x128xf32> -> vector<4x128xf32>
    %351 = arith.addf %344, %350 : vector<4x128xf32>
    %c1_330 = arith.constant 1 : index
    %c0_331 = arith.constant 0 : index
    %c0_332 = arith.constant 0 : index
    %352 = tpu.strided_load %arg17[%c1_330, %c0_331, %c0_332] {strides = array<i32: 2, 2, 1>} : memref<6x6x64xf32, #tpu.memory_space<vmem>>, vector<2x2x64xf32>
    %353 = vector.shape_cast %352 : vector<2x2x64xf32> to vector<4x64xf32>
    %354 = arith.truncf %353 : vector<4x64xf32> to vector<4x64xbf16>
    %c3_333 = arith.constant 3 : index
    %c0_334 = arith.constant 0 : index
    %c0_335 = arith.constant 0 : index
    %355 = vector.load %arg9[%c3_333, %c0_334, %c0_335] : memref<9x64x128xbf16, #tpu.memory_space<vmem>>, vector<1x64x128xbf16>
    %356 = vector.shape_cast %355 : vector<1x64x128xbf16> to vector<64x128xbf16>
    %cst_336 = arith.constant dense<0.000000e+00> : vector<4x128xf32>
    %357 = tpu.matmul %354, %356, %cst_336 {dimension_numbers = #tpu.dot_dimension_numbers<[1], [0], [0], [1], [0, 0, 1, 1], [], []>} : vector<4x64xbf16>, vector<64x128xbf16>, vector<4x128xf32> -> vector<4x128xf32>
    %358 = arith.addf %351, %357 : vector<4x128xf32>
    %c1_337 = arith.constant 1 : index
    %c1_338 = arith.constant 1 : index
    %c0_339 = arith.constant 0 : index
    %359 = tpu.strided_load %arg17[%c1_337, %c1_338, %c0_339] {strides = array<i32: 2, 2, 1>} : memref<6x6x64xf32, #tpu.memory_space<vmem>>, vector<2x2x64xf32>
    %360 = vector.shape_cast %359 : vector<2x2x64xf32> to vector<4x64xf32>
    %361 = arith.truncf %360 : vector<4x64xf32> to vector<4x64xbf16>
    %c4_340 = arith.constant 4 : index
    %c0_341 = arith.constant 0 : index
    %c0_342 = arith.constant 0 : index
    %362 = vector.load %arg9[%c4_340, %c0_341, %c0_342] : memref<9x64x128xbf16, #tpu.memory_space<vmem>>, vector<1x64x128xbf16>
    %363 = vector.shape_cast %362 : vector<1x64x128xbf16> to vector<64x128xbf16>
    %cst_343 = arith.constant dense<0.000000e+00> : vector<4x128xf32>
    %364 = tpu.matmul %361, %363, %cst_343 {dimension_numbers = #tpu.dot_dimension_numbers<[1], [0], [0], [1], [0, 0, 1, 1], [], []>} : vector<4x64xbf16>, vector<64x128xbf16>, vector<4x128xf32> -> vector<4x128xf32>
    %365 = arith.addf %358, %364 : vector<4x128xf32>
    %c1_344 = arith.constant 1 : index
    %c2_345 = arith.constant 2 : index
    %c0_346 = arith.constant 0 : index
    %366 = tpu.strided_load %arg17[%c1_344, %c2_345, %c0_346] {strides = array<i32: 2, 2, 1>} : memref<6x6x64xf32, #tpu.memory_space<vmem>>, vector<2x2x64xf32>
    %367 = vector.shape_cast %366 : vector<2x2x64xf32> to vector<4x64xf32>
    %368 = arith.truncf %367 : vector<4x64xf32> to vector<4x64xbf16>
    %c5_347 = arith.constant 5 : index
    %c0_348 = arith.constant 0 : index
    %c0_349 = arith.constant 0 : index
    %369 = vector.load %arg9[%c5_347, %c0_348, %c0_349] : memref<9x64x128xbf16, #tpu.memory_space<vmem>>, vector<1x64x128xbf16>
    %370 = vector.shape_cast %369 : vector<1x64x128xbf16> to vector<64x128xbf16>
    %cst_350 = arith.constant dense<0.000000e+00> : vector<4x128xf32>
    %371 = tpu.matmul %368, %370, %cst_350 {dimension_numbers = #tpu.dot_dimension_numbers<[1], [0], [0], [1], [0, 0, 1, 1], [], []>} : vector<4x64xbf16>, vector<64x128xbf16>, vector<4x128xf32> -> vector<4x128xf32>
    %372 = arith.addf %365, %371 : vector<4x128xf32>
    %c2_351 = arith.constant 2 : index
    %c0_352 = arith.constant 0 : index
    %c0_353 = arith.constant 0 : index
    %373 = tpu.strided_load %arg17[%c2_351, %c0_352, %c0_353] {strides = array<i32: 2, 2, 1>} : memref<6x6x64xf32, #tpu.memory_space<vmem>>, vector<2x2x64xf32>
    %374 = vector.shape_cast %373 : vector<2x2x64xf32> to vector<4x64xf32>
    %375 = arith.truncf %374 : vector<4x64xf32> to vector<4x64xbf16>
    %c6_354 = arith.constant 6 : index
    %c0_355 = arith.constant 0 : index
    %c0_356 = arith.constant 0 : index
    %376 = vector.load %arg9[%c6_354, %c0_355, %c0_356] : memref<9x64x128xbf16, #tpu.memory_space<vmem>>, vector<1x64x128xbf16>
    %377 = vector.shape_cast %376 : vector<1x64x128xbf16> to vector<64x128xbf16>
    %cst_357 = arith.constant dense<0.000000e+00> : vector<4x128xf32>
    %378 = tpu.matmul %375, %377, %cst_357 {dimension_numbers = #tpu.dot_dimension_numbers<[1], [0], [0], [1], [0, 0, 1, 1], [], []>} : vector<4x64xbf16>, vector<64x128xbf16>, vector<4x128xf32> -> vector<4x128xf32>
    %379 = arith.addf %372, %378 : vector<4x128xf32>
    %c2_358 = arith.constant 2 : index
    %c1_359 = arith.constant 1 : index
    %c0_360 = arith.constant 0 : index
    %380 = tpu.strided_load %arg17[%c2_358, %c1_359, %c0_360] {strides = array<i32: 2, 2, 1>} : memref<6x6x64xf32, #tpu.memory_space<vmem>>, vector<2x2x64xf32>
    %381 = vector.shape_cast %380 : vector<2x2x64xf32> to vector<4x64xf32>
    %382 = arith.truncf %381 : vector<4x64xf32> to vector<4x64xbf16>
    %c7_361 = arith.constant 7 : index
    %c0_362 = arith.constant 0 : index
    %c0_363 = arith.constant 0 : index
    %383 = vector.load %arg9[%c7_361, %c0_362, %c0_363] : memref<9x64x128xbf16, #tpu.memory_space<vmem>>, vector<1x64x128xbf16>
    %384 = vector.shape_cast %383 : vector<1x64x128xbf16> to vector<64x128xbf16>
    %cst_364 = arith.constant dense<0.000000e+00> : vector<4x128xf32>
    %385 = tpu.matmul %382, %384, %cst_364 {dimension_numbers = #tpu.dot_dimension_numbers<[1], [0], [0], [1], [0, 0, 1, 1], [], []>} : vector<4x64xbf16>, vector<64x128xbf16>, vector<4x128xf32> -> vector<4x128xf32>
    %386 = arith.addf %379, %385 : vector<4x128xf32>
    %c2_365 = arith.constant 2 : index
    %c2_366 = arith.constant 2 : index
    %c0_367 = arith.constant 0 : index
    %387 = tpu.strided_load %arg17[%c2_365, %c2_366, %c0_367] {strides = array<i32: 2, 2, 1>} : memref<6x6x64xf32, #tpu.memory_space<vmem>>, vector<2x2x64xf32>
    %388 = vector.shape_cast %387 : vector<2x2x64xf32> to vector<4x64xf32>
    %389 = arith.truncf %388 : vector<4x64xf32> to vector<4x64xbf16>
    %c8_368 = arith.constant 8 : index
    %c0_369 = arith.constant 0 : index
    %c0_370 = arith.constant 0 : index
    %390 = vector.load %arg9[%c8_368, %c0_369, %c0_370] : memref<9x64x128xbf16, #tpu.memory_space<vmem>>, vector<1x64x128xbf16>
    %391 = vector.shape_cast %390 : vector<1x64x128xbf16> to vector<64x128xbf16>
    %cst_371 = arith.constant dense<0.000000e+00> : vector<4x128xf32>
    %392 = tpu.matmul %389, %391, %cst_371 {dimension_numbers = #tpu.dot_dimension_numbers<[1], [0], [0], [1], [0, 0, 1, 1], [], []>} : vector<4x64xbf16>, vector<64x128xbf16>, vector<4x128xf32> -> vector<4x128xf32>
    %393 = arith.addf %386, %392 : vector<4x128xf32>
    %cst_372 = arith.constant 0.000000e+00 : f32
    %394 = vector.broadcast %cst_372 : f32 to vector<4x128xf32>
    %395 = arith.maximumf %393, %394 : vector<4x128xf32>
    %396 = vector.shape_cast %395 : vector<4x128xf32> to vector<2x2x128xf32>
    %c1_373 = arith.constant 1 : index
    %c1_374 = arith.constant 1 : index
    %c0_375 = arith.constant 0 : index
    %397 = vector.load %arg18[%c1_373, %c1_374, %c0_375] : memref<4x4x128xf32, #tpu.memory_space<vmem>>, vector<2x2x128xf32>
    tpu.vector_store %arg18[%c1_373, %c1_374, %c0_375], %396 {strides = array<i32>} : memref<4x4x128xf32, #tpu.memory_space<vmem>>, vector<2x2x128xf32>,
    %cst_376 = arith.constant 0.000000e+00 : f32
    %398 = vector.broadcast %cst_376 : f32 to vector<4x128xf32>
    %c0_377 = arith.constant 0 : index
    %c0_378 = arith.constant 0 : index
    %c0_379 = arith.constant 0 : index
    %399 = vector.load %arg18[%c0_377, %c0_378, %c0_379] : memref<4x4x128xf32, #tpu.memory_space<vmem>>, vector<2x2x128xf32>
    %400 = vector.shape_cast %399 : vector<2x2x128xf32> to vector<4x128xf32>
    %401 = arith.truncf %400 : vector<4x128xf32> to vector<4x128xbf16>
    %c0_380 = arith.constant 0 : index
    %c0_381 = arith.constant 0 : index
    %c0_382 = arith.constant 0 : index
    %402 = vector.load %arg10[%c0_380, %c0_381, %c0_382] : memref<9x128x128xbf16, #tpu.memory_space<vmem>>, vector<1x128x128xbf16>
    %403 = vector.shape_cast %402 : vector<1x128x128xbf16> to vector<128x128xbf16>
    %cst_383 = arith.constant dense<0.000000e+00> : vector<4x128xf32>
    %404 = tpu.matmul %401, %403, %cst_383 {dimension_numbers = #tpu.dot_dimension_numbers<[1], [0], [0], [1], [0, 0, 1, 1], [], []>} : vector<4x128xbf16>, vector<128x128xbf16>, vector<4x128xf32> -> vector<4x128xf32>
    %405 = arith.addf %398, %404 : vector<4x128xf32>
    %c0_384 = arith.constant 0 : index
    %c1_385 = arith.constant 1 : index
    %c0_386 = arith.constant 0 : index
    %406 = vector.load %arg18[%c0_384, %c1_385, %c0_386] : memref<4x4x128xf32, #tpu.memory_space<vmem>>, vector<2x2x128xf32>
    %407 = vector.shape_cast %406 : vector<2x2x128xf32> to vector<4x128xf32>
    %408 = arith.truncf %407 : vector<4x128xf32> to vector<4x128xbf16>
    %c1_387 = arith.constant 1 : index
    %c0_388 = arith.constant 0 : index
    %c0_389 = arith.constant 0 : index
    %409 = vector.load %arg10[%c1_387, %c0_388, %c0_389] : memref<9x128x128xbf16, #tpu.memory_space<vmem>>, vector<1x128x128xbf16>
    %410 = vector.shape_cast %409 : vector<1x128x128xbf16> to vector<128x128xbf16>
    %cst_390 = arith.constant dense<0.000000e+00> : vector<4x128xf32>
    %411 = tpu.matmul %408, %410, %cst_390 {dimension_numbers = #tpu.dot_dimension_numbers<[1], [0], [0], [1], [0, 0, 1, 1], [], []>} : vector<4x128xbf16>, vector<128x128xbf16>, vector<4x128xf32> -> vector<4x128xf32>
    %412 = arith.addf %405, %411 : vector<4x128xf32>
    %c0_391 = arith.constant 0 : index
    %c2_392 = arith.constant 2 : index
    %c0_393 = arith.constant 0 : index
    %413 = vector.load %arg18[%c0_391, %c2_392, %c0_393] : memref<4x4x128xf32, #tpu.memory_space<vmem>>, vector<2x2x128xf32>
    %414 = vector.shape_cast %413 : vector<2x2x128xf32> to vector<4x128xf32>
    %415 = arith.truncf %414 : vector<4x128xf32> to vector<4x128xbf16>
    %c2_394 = arith.constant 2 : index
    %c0_395 = arith.constant 0 : index
    %c0_396 = arith.constant 0 : index
    %416 = vector.load %arg10[%c2_394, %c0_395, %c0_396] : memref<9x128x128xbf16, #tpu.memory_space<vmem>>, vector<1x128x128xbf16>
    %417 = vector.shape_cast %416 : vector<1x128x128xbf16> to vector<128x128xbf16>
    %cst_397 = arith.constant dense<0.000000e+00> : vector<4x128xf32>
    %418 = tpu.matmul %415, %417, %cst_397 {dimension_numbers = #tpu.dot_dimension_numbers<[1], [0], [0], [1], [0, 0, 1, 1], [], []>} : vector<4x128xbf16>, vector<128x128xbf16>, vector<4x128xf32> -> vector<4x128xf32>
    %419 = arith.addf %412, %418 : vector<4x128xf32>
    %c1_398 = arith.constant 1 : index
    %c0_399 = arith.constant 0 : index
    %c0_400 = arith.constant 0 : index
    %420 = vector.load %arg18[%c1_398, %c0_399, %c0_400] : memref<4x4x128xf32, #tpu.memory_space<vmem>>, vector<2x2x128xf32>
    %421 = vector.shape_cast %420 : vector<2x2x128xf32> to vector<4x128xf32>
    %422 = arith.truncf %421 : vector<4x128xf32> to vector<4x128xbf16>
    %c3_401 = arith.constant 3 : index
    %c0_402 = arith.constant 0 : index
    %c0_403 = arith.constant 0 : index
    %423 = vector.load %arg10[%c3_401, %c0_402, %c0_403] : memref<9x128x128xbf16, #tpu.memory_space<vmem>>, vector<1x128x128xbf16>
    %424 = vector.shape_cast %423 : vector<1x128x128xbf16> to vector<128x128xbf16>
    %cst_404 = arith.constant dense<0.000000e+00> : vector<4x128xf32>
    %425 = tpu.matmul %422, %424, %cst_404 {dimension_numbers = #tpu.dot_dimension_numbers<[1], [0], [0], [1], [0, 0, 1, 1], [], []>} : vector<4x128xbf16>, vector<128x128xbf16>, vector<4x128xf32> -> vector<4x128xf32>
    %426 = arith.addf %419, %425 : vector<4x128xf32>
    %c1_405 = arith.constant 1 : index
    %c1_406 = arith.constant 1 : index
    %c0_407 = arith.constant 0 : index
    %427 = vector.load %arg18[%c1_405, %c1_406, %c0_407] : memref<4x4x128xf32, #tpu.memory_space<vmem>>, vector<2x2x128xf32>
    %428 = vector.shape_cast %427 : vector<2x2x128xf32> to vector<4x128xf32>
    %429 = arith.truncf %428 : vector<4x128xf32> to vector<4x128xbf16>
    %c4_408 = arith.constant 4 : index
    %c0_409 = arith.constant 0 : index
    %c0_410 = arith.constant 0 : index
    %430 = vector.load %arg10[%c4_408, %c0_409, %c0_410] : memref<9x128x128xbf16, #tpu.memory_space<vmem>>, vector<1x128x128xbf16>
    %431 = vector.shape_cast %430 : vector<1x128x128xbf16> to vector<128x128xbf16>
    %cst_411 = arith.constant dense<0.000000e+00> : vector<4x128xf32>
    %432 = tpu.matmul %429, %431, %cst_411 {dimension_numbers = #tpu.dot_dimension_numbers<[1], [0], [0], [1], [0, 0, 1, 1], [], []>} : vector<4x128xbf16>, vector<128x128xbf16>, vector<4x128xf32> -> vector<4x128xf32>
    %433 = arith.addf %426, %432 : vector<4x128xf32>
    %c1_412 = arith.constant 1 : index
    %c2_413 = arith.constant 2 : index
    %c0_414 = arith.constant 0 : index
    %434 = vector.load %arg18[%c1_412, %c2_413, %c0_414] : memref<4x4x128xf32, #tpu.memory_space<vmem>>, vector<2x2x128xf32>
    %435 = vector.shape_cast %434 : vector<2x2x128xf32> to vector<4x128xf32>
    %436 = arith.truncf %435 : vector<4x128xf32> to vector<4x128xbf16>
    %c5_415 = arith.constant 5 : index
    %c0_416 = arith.constant 0 : index
    %c0_417 = arith.constant 0 : index
    %437 = vector.load %arg10[%c5_415, %c0_416, %c0_417] : memref<9x128x128xbf16, #tpu.memory_space<vmem>>, vector<1x128x128xbf16>
    %438 = vector.shape_cast %437 : vector<1x128x128xbf16> to vector<128x128xbf16>
    %cst_418 = arith.constant dense<0.000000e+00> : vector<4x128xf32>
    %439 = tpu.matmul %436, %438, %cst_418 {dimension_numbers = #tpu.dot_dimension_numbers<[1], [0], [0], [1], [0, 0, 1, 1], [], []>} : vector<4x128xbf16>, vector<128x128xbf16>, vector<4x128xf32> -> vector<4x128xf32>
    %440 = arith.addf %433, %439 : vector<4x128xf32>
    %c2_419 = arith.constant 2 : index
    %c0_420 = arith.constant 0 : index
    %c0_421 = arith.constant 0 : index
    %441 = vector.load %arg18[%c2_419, %c0_420, %c0_421] : memref<4x4x128xf32, #tpu.memory_space<vmem>>, vector<2x2x128xf32>
    %442 = vector.shape_cast %441 : vector<2x2x128xf32> to vector<4x128xf32>
    %443 = arith.truncf %442 : vector<4x128xf32> to vector<4x128xbf16>
    %c6_422 = arith.constant 6 : index
    %c0_423 = arith.constant 0 : index
    %c0_424 = arith.constant 0 : index
    %444 = vector.load %arg10[%c6_422, %c0_423, %c0_424] : memref<9x128x128xbf16, #tpu.memory_space<vmem>>, vector<1x128x128xbf16>
    %445 = vector.shape_cast %444 : vector<1x128x128xbf16> to vector<128x128xbf16>
    %cst_425 = arith.constant dense<0.000000e+00> : vector<4x128xf32>
    %446 = tpu.matmul %443, %445, %cst_425 {dimension_numbers = #tpu.dot_dimension_numbers<[1], [0], [0], [1], [0, 0, 1, 1], [], []>} : vector<4x128xbf16>, vector<128x128xbf16>, vector<4x128xf32> -> vector<4x128xf32>
    %447 = arith.addf %440, %446 : vector<4x128xf32>
    %c2_426 = arith.constant 2 : index
    %c1_427 = arith.constant 1 : index
    %c0_428 = arith.constant 0 : index
    %448 = vector.load %arg18[%c2_426, %c1_427, %c0_428] : memref<4x4x128xf32, #tpu.memory_space<vmem>>, vector<2x2x128xf32>
    %449 = vector.shape_cast %448 : vector<2x2x128xf32> to vector<4x128xf32>
    %450 = arith.truncf %449 : vector<4x128xf32> to vector<4x128xbf16>
    %c7_429 = arith.constant 7 : index
    %c0_430 = arith.constant 0 : index
    %c0_431 = arith.constant 0 : index
    %451 = vector.load %arg10[%c7_429, %c0_430, %c0_431] : memref<9x128x128xbf16, #tpu.memory_space<vmem>>, vector<1x128x128xbf16>
    %452 = vector.shape_cast %451 : vector<1x128x128xbf16> to vector<128x128xbf16>
    %cst_432 = arith.constant dense<0.000000e+00> : vector<4x128xf32>
    %453 = tpu.matmul %450, %452, %cst_432 {dimension_numbers = #tpu.dot_dimension_numbers<[1], [0], [0], [1], [0, 0, 1, 1], [], []>} : vector<4x128xbf16>, vector<128x128xbf16>, vector<4x128xf32> -> vector<4x128xf32>
    %454 = arith.addf %447, %453 : vector<4x128xf32>
    %c2_433 = arith.constant 2 : index
    %c2_434 = arith.constant 2 : index
    %c0_435 = arith.constant 0 : index
    %455 = vector.load %arg18[%c2_433, %c2_434, %c0_435] : memref<4x4x128xf32, #tpu.memory_space<vmem>>, vector<2x2x128xf32>
    %456 = vector.shape_cast %455 : vector<2x2x128xf32> to vector<4x128xf32>
    %457 = arith.truncf %456 : vector<4x128xf32> to vector<4x128xbf16>
    %c8_436 = arith.constant 8 : index
    %c0_437 = arith.constant 0 : index
    %c0_438 = arith.constant 0 : index
    %458 = vector.load %arg10[%c8_436, %c0_437, %c0_438] : memref<9x128x128xbf16, #tpu.memory_space<vmem>>, vector<1x128x128xbf16>
    %459 = vector.shape_cast %458 : vector<1x128x128xbf16> to vector<128x128xbf16>
    %cst_439 = arith.constant dense<0.000000e+00> : vector<4x128xf32>
    %460 = tpu.matmul %457, %459, %cst_439 {dimension_numbers = #tpu.dot_dimension_numbers<[1], [0], [0], [1], [0, 0, 1, 1], [], []>} : vector<4x128xbf16>, vector<128x128xbf16>, vector<4x128xf32> -> vector<4x128xf32>
    %461 = arith.addf %454, %460 : vector<4x128xf32>
    %c1_440 = arith.constant 1 : index
    %c1_441 = arith.constant 1 : index
    %c0_442 = arith.constant 0 : index
    %462 = tpu.strided_load %arg17[%c1_440, %c1_441, %c0_442] {strides = array<i32: 2, 2, 1>} : memref<6x6x64xf32, #tpu.memory_space<vmem>>, vector<2x2x64xf32>
    %463 = vector.shape_cast %462 : vector<2x2x64xf32> to vector<4x64xf32>
    %464 = arith.truncf %463 : vector<4x64xf32> to vector<4x64xbf16>
    %c0_443 = arith.constant 0 : index
    %c0_444 = arith.constant 0 : index
    %465 = vector.load %arg11[%c0_443, %c0_444] : memref<64x128xbf16, #tpu.memory_space<vmem>>, vector<64x128xbf16>
    %cst_445 = arith.constant dense<0.000000e+00> : vector<4x128xf32>
    %466 = tpu.matmul %464, %465, %cst_445 {dimension_numbers = #tpu.dot_dimension_numbers<[1], [0], [0], [1], [0, 0, 1, 1], [], []>} : vector<4x64xbf16>, vector<64x128xbf16>, vector<4x128xf32> -> vector<4x128xf32>
    %467 = arith.addf %461, %466 : vector<4x128xf32>
    %cst_446 = arith.constant 0.000000e+00 : f32
    %468 = vector.broadcast %cst_446 : f32 to vector<4x128xf32>
    %469 = arith.maximumf %467, %468 : vector<4x128xf32>
    %cst_447 = arith.constant dense<0.000000e+00> : vector<128xf32>
    %470 = vector.multi_reduction <add>, %469, %cst_447 [0] : vector<4x128xf32> to vector<128xf32>
    %cst_448 = arith.constant 4.000000e+00 : f32
    %471 = vector.broadcast %cst_448 : f32 to vector<128xf32>
    %472 = arith.divf %470, %471 : vector<128xf32>
    %473 = vector.shape_cast %472 : vector<128xf32> to vector<1x1x128xf32>
    %c0_449 = arith.constant 0 : index
    %c0_450 = arith.constant 0 : index
    %c0_451 = arith.constant 0 : index
    %474 = vector.load %arg12[%c0_449, %c0_450, %c0_451] : memref<1x1x128xf32, #tpu.memory_space<vmem>>, vector<1x1x128xf32>
    tpu.vector_store %arg12[%c0_449, %c0_450, %c0_451], %473 {strides = array<i32>} : memref<1x1x128xf32, #tpu.memory_space<vmem>>, vector<1x1x128xf32>,
    return
  }
  func.func @transform_0(%arg0: i32) -> (i32, i32, i32) {
    %c0_i32 = arith.constant 0 : i32
    %c0_i32_0 = arith.constant 0 : i32
    %c0_i32_1 = arith.constant 0 : i32
    return %arg0, %c0_i32, %c0_i32_0 : i32, i32, i32
  }
  func.func @transform_1(%arg0: i32) -> (i32, i32) {
    %c0_i32 = arith.constant 0 : i32
    %c0_i32_0 = arith.constant 0 : i32
    %c0_i32_1 = arith.constant 0 : i32
    return %c0_i32, %c0_i32_0 : i32, i32
  }
  func.func @transform_2(%arg0: i32) -> (i32, i32, i32) {
    %c0_i32 = arith.constant 0 : i32
    %c0_i32_0 = arith.constant 0 : i32
    %c0_i32_1 = arith.constant 0 : i32
    %c0_i32_2 = arith.constant 0 : i32
    return %c0_i32, %c0_i32_0, %c0_i32_1 : i32, i32, i32
  }
  func.func @transform_3(%arg0: i32) -> (i32, i32, i32) {
    %c0_i32 = arith.constant 0 : i32
    %c0_i32_0 = arith.constant 0 : i32
    %c0_i32_1 = arith.constant 0 : i32
    %c0_i32_2 = arith.constant 0 : i32
    return %c0_i32, %c0_i32_0, %c0_i32_1 : i32, i32, i32
  }
  func.func @transform_4(%arg0: i32) -> (i32, i32) {
    %c0_i32 = arith.constant 0 : i32
    %c0_i32_0 = arith.constant 0 : i32
    %c0_i32_1 = arith.constant 0 : i32
    return %c0_i32, %c0_i32_0 : i32, i32
  }
  func.func @transform_5(%arg0: i32) -> (i32, i32, i32) {
    %c0_i32 = arith.constant 0 : i32
    %c0_i32_0 = arith.constant 0 : i32
    %c0_i32_1 = arith.constant 0 : i32
    %c0_i32_2 = arith.constant 0 : i32
    return %c0_i32, %c0_i32_0, %c0_i32_1 : i32, i32, i32
  }
  func.func @transform_6(%arg0: i32) -> (i32, i32, i32) {
    %c0_i32 = arith.constant 0 : i32
    %c0_i32_0 = arith.constant 0 : i32
    %c0_i32_1 = arith.constant 0 : i32
    %c0_i32_2 = arith.constant 0 : i32
    return %c0_i32, %c0_i32_0, %c0_i32_1 : i32, i32, i32
  }
  func.func @transform_7(%arg0: i32) -> (i32, i32) {
    %c0_i32 = arith.constant 0 : i32
    %c0_i32_0 = arith.constant 0 : i32
    %c0_i32_1 = arith.constant 0 : i32
    return %c0_i32, %c0_i32_0 : i32, i32
  }
  func.func @transform_8(%arg0: i32) -> (i32, i32, i32) {
    %c0_i32 = arith.constant 0 : i32
    %c0_i32_0 = arith.constant 0 : i32
    %c0_i32_1 = arith.constant 0 : i32
    %c0_i32_2 = arith.constant 0 : i32
    return %c0_i32, %c0_i32_0, %c0_i32_1 : i32, i32, i32
  }
  func.func @transform_9(%arg0: i32) -> (i32, i32, i32) {
    %c0_i32 = arith.constant 0 : i32
    %c0_i32_0 = arith.constant 0 : i32
    %c0_i32_1 = arith.constant 0 : i32
    %c0_i32_2 = arith.constant 0 : i32
    return %c0_i32, %c0_i32_0, %c0_i32_1 : i32, i32, i32
  }
  func.func @transform_10(%arg0: i32) -> (i32, i32) {
    %c0_i32 = arith.constant 0 : i32
    %c0_i32_0 = arith.constant 0 : i32
    %c0_i32_1 = arith.constant 0 : i32
    return %c0_i32, %c0_i32_0 : i32, i32
  }
  func.func @transform_11(%arg0: i32) -> (i32, i32, i32) {
    %c0_i32 = arith.constant 0 : i32
    %c0_i32_0 = arith.constant 0 : i32
    %c0_i32_1 = arith.constant 0 : i32
    return %arg0, %c0_i32, %c0_i32_0 : i32, i32, i32
  }
}

</mosaic_0001>

<llo_original>
// kernel: residual_block2d_forward.1
$region0: #{residual_block2d_forward.1}
  #allocation0 [shape = 'u32[]', space=smem, size = 0x4, offset = 0x4, fixed_abs, tag = 'smem constant byte address 0x4 - core index']
  #allocation1 [shape = 'u32[144,128]{1,0:T(1,128)}', space=vmem, size = 0x12000, scoped, tag = 'internal scratch']
  #allocation2 [shape = 'f32[17,17,16]{2,1,0:T(8,128)}', space=vmem, size = 0x33000, scoped, tag = 'scratch operand']
  #allocation3 [shape = 'f32[10,10,32]{2,1,0:T(8,128)}', space=vmem, size = 0x14000, scoped, tag = 'scratch operand']
  #allocation4 [shape = 'f32[10,10,32]{2,1,0:T(8,128)}', space=vmem, size = 0x14000, scoped, tag = 'scratch operand']
  #allocation5 [shape = 'f32[6,6,64]{2,1,0:T(8,128)}', space=vmem, size = 0x6000, scoped, tag = 'scratch operand']
  #allocation6 [shape = 'f32[6,6,64]{2,1,0:T(8,128)}', space=vmem, size = 0x6000, scoped, tag = 'scratch operand']
  #allocation7 [shape = 'f32[4,4,128]{2,1,0:T(4,128)}', space=vmem, size = 0x2000, scoped, tag = 'scratch operand']
  %s0 = inlined_call_operand.vmem [shape: bf16[2,1024,49], index: 0, kind: input, shape index: {}]
  %s1 = inlined_call_operand.vmem [shape: bf16[49,16], index: 1, kind: input, shape index: {}]
  %s2 = inlined_call_operand.vmem [shape: bf16[9,16,32], index: 2, kind: input, shape index: {}]
  %s3 = inlined_call_operand.vmem [shape: bf16[9,32,32], index: 3, kind: input, shape index: {}]
  %s4 = inlined_call_operand.vmem [shape: bf16[16,32], index: 4, kind: input, shape index: {}]
  %s5 = inlined_call_operand.vmem [shape: bf16[9,32,64], index: 5, kind: input, shape index: {}]
  %s6 = inlined_call_operand.vmem [shape: bf16[9,64,64], index: 6, kind: input, shape index: {}]
  %s7 = inlined_call_operand.vmem [shape: bf16[32,64], index: 7, kind: input, shape index: {}]
  %s8 = inlined_call_operand.vmem [shape: bf16[9,64,128], index: 8, kind: input, shape index: {}]
  %s9 = inlined_call_operand.vmem [shape: bf16[9,128,128], index: 9, kind: input, shape index: {}]
  %s10 = inlined_call_operand.vmem [shape: bf16[64,128], index: 10, kind: input, shape index: {}]
  %s11 = inlined_call_operand.hbm [shape: f32[2,1,128], index: 11, kind: output, shape index: {}]
  %s12 = sld [smem:[#allocation0]]
  $region77: #{residual_block2d_forward.1} parent=0
    _
  %s14 = ssub.s32 1, %s12
  %s15 = scalar_select 0, %s14, %s12
  $region1: #{residual_block2d_forward.1} parent=0
    #allocation8 [shape = 'u8[1024]{0}', space=vmem, size = 0x400, scoped, tag = 'output window, operand 0']
    #allocation9 [shape = 's32[2]{0}', space=sflag, size = 0x8, scoped, tag = 'scoped memory for residual_block2d_forward.1']
    %16 = vsyncpa [#allocation9], 0
    %s17 = scalar_lea.sflag [#allocation9], 1
    %18 = vsyncpa %s17, 0
    loop: start=0, step=1, limit=4
    $region2: #{residual_block2d_forward.1} parent=1 // loop_pre_header
      _
    $region3: #{residual_block2d_forward.1} parent=1 // loop_header
      %s20 = sphi 0, %s24
      %p21 = scmp.ge.s32.totalorder %s20, 4
      %s30 = sphi 0, %s32
      %s33 = sphi 0, %s30
      %s34 = sphi 0, %s33
      %s50 = sphi 0, %s34
      %s54 = sphi 0, %s54
      %s56 = sphi 0, %s54
      %s57 = sphi 0, %s56
      %s71 = sphi 0, %s57
      %s75 = sphi 0, %s75
      %s77 = sphi 0, %s75
      %s78 = sphi 0, %s77
      %s92 = sphi 0, %s78
      %s96 = sphi 0, %s96
      %s98 = sphi 0, %s96
      %s99 = sphi 0, %s98
      %s113 = sphi 0, %s99
      %s117 = sphi 0, %s117
      %s119 = sphi 0, %s117
      %s120 = sphi 0, %s119
      %s134 = sphi 0, %s120
      %s138 = sphi 0, %s138
      %s140 = sphi 0, %s138
      %s141 = sphi 0, %s140
      %s155 = sphi 0, %s141
      %s159 = sphi 0, %s159
      %s161 = sphi 0, %s159
      %s162 = sphi 0, %s161
      %s176 = sphi 0, %s162
      %s180 = sphi 0, %s180
      %s182 = sphi 0, %s180
      %s183 = sphi 0, %s182
      %s197 = sphi 0, %s183
      %s201 = sphi 0, %s201
      %s203 = sphi 0, %s201
      %s204 = sphi 0, %s203
      %s218 = sphi 0, %s204
      %s222 = sphi 0, %s222
      %s224 = sphi 0, %s222
      %s225 = sphi 0, %s224
      %s239 = sphi 0, %s225
      %s243 = sphi 0, %s243
      %s245 = sphi 0, %s243
      %s246 = sphi 0, %s245
      %s260 = sphi 0, %s246
      %s266 = sphi 0, %s268
      %s269 = sphi 0, %s266
      %s270 = sphi 0, %s269
      %s286 = sphi 0, %s270
    $region4: #{residual_block2d_forward.1} parent=1 // loop_header_branch
      %23 = sbr.rel (%p21) target = $region8
    $region5: #{residual_block2d_forward.1} parent=1 // loop_body
      %s25 = ssub.s32 %s20, 1
      %s26 = ssub.s32 %s20, 2
      %s27 = sadd.s32 %s20, 1
      %s28 = ssub.s32 %s20, %s27
      %p29 = scmp.eq.s32.totalorder %s28, 0
      %s31 = sadd.s32 %s30, 1
      %s32 = scalar_select %p29, %s30, %s31
      %p35 = pneg %p29
      %p36 = scmp.eq.s32.totalorder %s20, 1
      %p37 = por %p35, %p36
      %p38 = scmp.ne.s32.totalorder %s30, %s33
      %p39 = scmp.eq.s32.totalorder %s20, 0
      %p40 = por %p38, %p39
      %p41 = scmp.ne.s32.totalorder %s30, %s33
      %p42 = scmp.eq.s32.totalorder %s25, 1
      %p43 = por %p41, %p42
      %p44 = scmp.ne.s32.totalorder %s33, %s34
      %p45 = scmp.eq.s32.totalorder %s25, 0
      %p46 = por %p44, %p45
      %p47 = scmp.ne.s32.totalorder %s33, %s34
      %p48 = scmp.eq.s32.totalorder %s26, 1
      %p49 = por %p47, %p48
      %p51 = scmp.ne.s32.totalorder %s34, %s50
      %p52 = scmp.eq.s32.totalorder %s26, 0
      %p53 = por %p51, %p52
      %s55 = sadd.s32 %s54, 1
      %p58 = scmp.eq.s32.totalorder %s20, 1
      %p59 = scmp.ne.s32.totalorder %s54, %s56
      %p60 = scmp.eq.s32.totalorder %s20, 0
      %p61 = por %p59, %p60
      %p62 = scmp.ne.s32.totalorder %s54, %s56
      %p63 = scmp.eq.s32.totalorder %s25, 1
      %p64 = por %p62, %p63
      %p65 = scmp.ne.s32.totalorder %s56, %s57
      %p66 = scmp.eq.s32.totalorder %s25, 0
      %p67 = por %p65, %p66
      %p68 = scmp.ne.s32.totalorder %s56, %s57
      %p69 = scmp.eq.s32.totalorder %s26, 1
      %p70 = por %p68, %p69
      %p72 = scmp.ne.s32.totalorder %s57, %s71
      %p73 = scmp.eq.s32.totalorder %s26, 0
      %p74 = por %p72, %p73
      %s76 = sadd.s32 %s75, 1
      %p79 = scmp.eq.s32.totalorder %s20, 1
      %p80 = scmp.ne.s32.totalorder %s75, %s77
      %p81 = scmp.eq.s32.totalorder %s20, 0
      %p82 = por %p80, %p81
      %p83 = scmp.ne.s32.totalorder %s75, %s77
      %p84 = scmp.eq.s32.totalorder %s25, 1
      %p85 = por %p83, %p84
      %p86 = scmp.ne.s32.totalorder %s77, %s78
      %p87 = scmp.eq.s32.totalorder %s25, 0
      %p88 = por %p86, %p87
      %p89 = scmp.ne.s32.totalorder %s77, %s78
      %p90 = scmp.eq.s32.totalorder %s26, 1
      %p91 = por %p89, %p90
      %p93 = scmp.ne.s32.totalorder %s78, %s92
      %p94 = scmp.eq.s32.totalorder %s26, 0
      %p95 = por %p93, %p94
      %s97 = sadd.s32 %s96, 1
      %p100 = scmp.eq.s32.totalorder %s20, 1
      %p101 = scmp.ne.s32.totalorder %s96, %s98
      %p102 = scmp.eq.s32.totalorder %s20, 0
      %p103 = por %p101, %p102
      %p104 = scmp.ne.s32.totalorder %s96, %s98
      %p105 = scmp.eq.s32.totalorder %s25, 1
      %p106 = por %p104, %p105
      %p107 = scmp.ne.s32.totalorder %s98, %s99
      %p108 = scmp.eq.s32.totalorder %s25, 0
      %p109 = por %p107, %p108
      %p110 = scmp.ne.s32.totalorder %s98, %s99
      %p111 = scmp.eq.s32.totalorder %s26, 1
      %p112 = por %p110, %p111
      %p114 = scmp.ne.s32.totalorder %s99, %s113
      %p115 = scmp.eq.s32.totalorder %s26, 0
      %p116 = por %p114, %p115
      %s118 = sadd.s32 %s117, 1
      %p121 = scmp.eq.s32.totalorder %s20, 1
      %p122 = scmp.ne.s32.totalorder %s117, %s119
      %p123 = scmp.eq.s32.totalorder %s20, 0
      %p124 = por %p122, %p123
      %p125 = scmp.ne.s32.totalorder %s117, %s119
      %p126 = scmp.eq.s32.totalorder %s25, 1
      %p127 = por %p125, %p126
      %p128 = scmp.ne.s32.totalorder %s119, %s120
      %p129 = scmp.eq.s32.totalorder %s25, 0
      %p130 = por %p128, %p129
      %p131 = scmp.ne.s32.totalorder %s119, %s120
      %p132 = scmp.eq.s32.totalorder %s26, 1
      %p133 = por %p131, %p132
      %p135 = scmp.ne.s32.totalorder %s120, %s134
      %p136 = scmp.eq.s32.totalorder %s26, 0
      %p137 = por %p135, %p136
      %s139 = sadd.s32 %s138, 1
      %p142 = scmp.eq.s32.totalorder %s20, 1
      %p143 = scmp.ne.s32.totalorder %s138, %s140
      %p144 = scmp.eq.s32.totalorder %s20, 0
      %p145 = por %p143, %p144
      %p146 = scmp.ne.s32.totalorder %s138, %s140
      %p147 = scmp.eq.s32.totalorder %s25, 1
      %p148 = por %p146, %p147
      %p149 = scmp.ne.s32.totalorder %s140, %s141
      %p150 = scmp.eq.s32.totalorder %s25, 0
      %p151 = por %p149, %p150
      %p152 = scmp.ne.s32.totalorder %s140, %s141
      %p153 = scmp.eq.s32.totalorder %s26, 1
      %p154 = por %p152, %p153
      %p156 = scmp.ne.s32.totalorder %s141, %s155
      %p157 = scmp.eq.s32.totalorder %s26, 0
      %p158 = por %p156, %p157
      %s160 = sadd.s32 %s159, 1
      %p163 = scmp.eq.s32.totalorder %s20, 1
      %p164 = scmp.ne.s32.totalorder %s159, %s161
      %p165 = scmp.eq.s32.totalorder %s20, 0
      %p166 = por %p164, %p165
      %p167 = scmp.ne.s32.totalorder %s159, %s161
      %p168 = scmp.eq.s32.totalorder %s25, 1
      %p169 = por %p167, %p168
      %p170 = scmp.ne.s32.totalorder %s161, %s162
      %p171 = scmp.eq.s32.totalorder %s25, 0
      %p172 = por %p170, %p171
      %p173 = scmp.ne.s32.totalorder %s161, %s162
      %p174 = scmp.eq.s32.totalorder %s26, 1
      %p175 = por %p173, %p174
      %p177 = scmp.ne.s32.totalorder %s162, %s176
      %p178 = scmp.eq.s32.totalorder %s26, 0
      %p179 = por %p177, %p178
      %s181 = sadd.s32 %s180, 1
      %p184 = scmp.eq.s32.totalorder %s20, 1
      %p185 = scmp.ne.s32.totalorder %s180, %s182
      %p186 = scmp.eq.s32.totalorder %s20, 0
      %p187 = por %p185, %p186
      %p188 = scmp.ne.s32.totalorder %s180, %s182
      %p189 = scmp.eq.s32.totalorder %s25, 1
      %p190 = por %p188, %p189
      %p191 = scmp.ne.s32.totalorder %s182, %s183
      %p192 = scmp.eq.s32.totalorder %s25, 0
      %p193 = por %p191, %p192
      %p194 = scmp.ne.s32.totalorder %s182, %s183
      %p195 = scmp.eq.s32.totalorder %s26, 1
      %p196 = por %p194, %p195
      %p198 = scmp.ne.s32.totalorder %s183, %s197
      %p199 = scmp.eq.s32.totalorder %s26, 0
      %p200 = por %p198, %p199
      %s202 = sadd.s32 %s201, 1
      %p205 = scmp.eq.s32.totalorder %s20, 1
      %p206 = scmp.ne.s32.totalorder %s201, %s203
      %p207 = scmp.eq.s32.totalorder %s20, 0
      %p208 = por %p206, %p207
      %p209 = scmp.ne.s32.totalorder %s201, %s203
      %p210 = scmp.eq.s32.totalorder %s25, 1
      %p211 = por %p209, %p210
      %p212 = scmp.ne.s32.totalorder %s203, %s204
      %p213 = scmp.eq.s32.totalorder %s25, 0
      %p214 = por %p212, %p213
      %p215 = scmp.ne.s32.totalorder %s203, %s204
      %p216 = scmp.eq.s32.totalorder %s26, 1
      %p217 = por %p215, %p216
      %p219 = scmp.ne.s32.totalorder %s204, %s218
      %p220 = scmp.eq.s32.totalorder %s26, 0
      %p221 = por %p219, %p220
      %s223 = sadd.s32 %s222, 1
      %p226 = scmp.eq.s32.totalorder %s20, 1
      %p227 = scmp.ne.s32.totalorder %s222, %s224
      %p228 = scmp.eq.s32.totalorder %s20, 0
      %p229 = por %p227, %p228
      %p230 = scmp.ne.s32.totalorder %s222, %s224
      %p231 = scmp.eq.s32.totalorder %s25, 1
      %p232 = por %p230, %p231
      %p233 = scmp.ne.s32.totalorder %s224, %s225
      %p234 = scmp.eq.s32.totalorder %s25, 0
      %p235 = por %p233, %p234
      %p236 = scmp.ne.s32.totalorder %s224, %s225
      %p237 = scmp.eq.s32.totalorder %s26, 1
      %p238 = por %p236, %p237
      %p240 = scmp.ne.s32.totalorder %s225, %s239
      %p241 = scmp.eq.s32.totalorder %s26, 0
      %p242 = por %p240, %p241
      %s244 = sadd.s32 %s243, 1
      %p247 = scmp.eq.s32.totalorder %s20, 1
      %p248 = scmp.ne.s32.totalorder %s243, %s245
      %p249 = scmp.eq.s32.totalorder %s20, 0
      %p250 = por %p248, %p249
      %p251 = scmp.ne.s32.totalorder %s243, %s245
      %p252 = scmp.eq.s32.totalorder %s25, 1
      %p253 = por %p251, %p252
      %p254 = scmp.ne.s32.totalorder %s245, %s246
      %p255 = scmp.eq.s32.totalorder %s25, 0
      %p256 = por %p254, %p255
      %p257 = scmp.ne.s32.totalorder %s245, %s246
      %p258 = scmp.eq.s32.totalorder %s26, 1
      %p259 = por %p257, %p258
      %p261 = scmp.ne.s32.totalorder %s246, %s260
      %p262 = scmp.eq.s32.totalorder %s26, 0
      %p263 = por %p261, %p262
      %s264 = ssub.s32 %s20, %s27
      %p265 = scmp.eq.s32.totalorder %s264, 0
      %s267 = sadd.s32 %s266, 1
      %s268 = scalar_select %p265, %s266, %s267
      %p271 = pneg %p265
      %p272 = scmp.eq.s32.totalorder %s20, 1
      %p273 = por %p271, %p272
      %p274 = scmp.ne.s32.totalorder %s266, %s269
      %p275 = scmp.eq.s32.totalorder %s20, 0
      %p276 = por %p274, %p275
      %p277 = scmp.ne.s32.totalorder %s266, %s269
      %p278 = scmp.eq.s32.totalorder %s25, 1
      %p279 = por %p277, %p278
      %p280 = scmp.ne.s32.totalorder %s269, %s270
      %p281 = scmp.eq.s32.totalorder %s25, 0
      %p282 = por %p280, %p281
      %p283 = scmp.ne.s32.totalorder %s269, %s270
      %p284 = scmp.eq.s32.totalorder %s26, 1
      %p285 = por %p283, %p284
      %p287 = scmp.ne.s32.totalorder %s270, %s286
      %p288 = scmp.eq.s32.totalorder %s26, 0
      %p289 = por %p287, %p288
      %p290 = scmp.le.s32.totalorder 1, %s20
      %p291 = scmp.lt.s32.totalorder %s20, 3
      %p292 = pnand %p290, %p291
      %p293 = pneg %p292
      // Predicated region
      $region9: #{residual_block2d_forward.1} parent=5 // pred_check
        _
      $region10: #{residual_block2d_forward.1} parent=5 // pred_check_branch
        %295 = sbr.rel (%p292) target = $region12
      $region11: #{residual_block2d_forward.1} parent=5 // pred_region
        %s296 = ssub.s32 %s20, 1
        // Predicated region
        $region13: #{residual_block2d_forward.1} parent=11 // pred_check
          %p297 = pneg %p67
        $region14: #{residual_block2d_forward.1} parent=11 // pred_check_branch
          %299 = sbr.rel (%p297) target = $region16
        $region15: #{residual_block2d_forward.1} parent=11 // pred_region
          _
        $region16: #{residual_block2d_forward.1} parent=11 // pred_fallthru
          _
        // Predicated region
        $region17: #{residual_block2d_forward.1} parent=11 // pred_check
          %p300 = pneg %p88
        $region18: #{residual_block2d_forward.1} parent=11 // pred_check_branch
          %302 = sbr.rel (%p300) target = $region20
        $region19: #{residual_block2d_forward.1} parent=11 // pred_region
          _
        $region20: #{residual_block2d_forward.1} parent=11 // pred_fallthru
          _
        // Predicated region
        $region21: #{residual_block2d_forward.1} parent=11 // pred_check
          %p303 = pneg %p109
        $region22: #{residual_block2d_forward.1} parent=11 // pred_check_branch
          %305 = sbr.rel (%p303) target = $region24
        $region23: #{residual_block2d_forward.1} parent=11 // pred_region
          _
        $region24: #{residual_block2d_forward.1} parent=11 // pred_fallthru
          _
        // Predicated region
        $region25: #{residual_block2d_forward.1} parent=11 // pred_check
          %p306 = pneg %p130
        $region26: #{residual_block2d_forward.1} parent=11 // pred_check_branch
          %308 = sbr.rel (%p306) target = $region28
        $region27: #{residual_block2d_forward.1} parent=11 // pred_region
          _
        $region28: #{residual_block2d_forward.1} parent=11 // pred_fallthru
          _
        // Predicated region
        $region29: #{residual_block2d_forward.1} parent=11 // pred_check
          %p309 = pneg %p151
        $region30: #{residual_block2d_forward.1} parent=11 // pred_check_branch
          %311 = sbr.rel (%p309) target = $region32
        $region31: #{residual_block2d_forward.1} parent=11 // pred_region
          _
        $region32: #{residual_block2d_forward.1} parent=11 // pred_fallthru
          _
        // Predicated region
        $region33: #{residual_block2d_forward.1} parent=11 // pred_check
          %p312 = pneg %p172
        $region34: #{residual_block2d_forward.1} parent=11 // pred_check_branch
          %314 = sbr.rel (%p312) target = $region36
        $region35: #{residual_block2d_forward.1} parent=11 // pred_region
          _
        $region36: #{residual_block2d_forward.1} parent=11 // pred_fallthru
          _
        // Predicated region
        $region37: #{residual_block2d_forward.1} parent=11 // pred_check
          %p315 = pneg %p193
        $region38: #{residual_block2d_forward.1} parent=11 // pred_check_branch
          %317 = sbr.rel (%p315) target = $region40
        $region39: #{residual_block2d_forward.1} parent=11 // pred_region
          _
        $region40: #{residual_block2d_forward.1} parent=11 // pred_fallthru
          _
        // Predicated region
        $region41: #{residual_block2d_forward.1} parent=11 // pred_check
          %p318 = pneg %p214
        $region42: #{residual_block2d_forward.1} parent=11 // pred_check_branch
          %320 = sbr.rel (%p318) target = $region44
        $region43: #{residual_block2d_forward.1} parent=11 // pred_region
          _
        $region44: #{residual_block2d_forward.1} parent=11 // pred_fallthru
          _
        // Predicated region
        $region45: #{residual_block2d_forward.1} parent=11 // pred_check
          %p321 = pneg %p235
        $region46: #{residual_block2d_forward.1} parent=11 // pred_check_branch
          %323 = sbr.rel (%p321) target = $region48
        $region47: #{residual_block2d_forward.1} parent=11 // pred_region
          _
        $region48: #{residual_block2d_forward.1} parent=11 // pred_fallthru
          _
        // Predicated region
        $region49: #{residual_block2d_forward.1} parent=11 // pred_check
          %p324 = pneg %p256
        $region50: #{residual_block2d_forward.1} parent=11 // pred_check_branch
          %326 = sbr.rel (%p324) target = $region52
        $region51: #{residual_block2d_forward.1} parent=11 // pred_region
          _
        $region52: #{residual_block2d_forward.1} parent=11 // pred_fallthru
          _
      $region12: #{residual_block2d_forward.1} parent=5 // pred_fallthru
        _
      %p327 = scmp.lt.s32.totalorder %s20, 2
      // Predicated region
      $region53: #{residual_block2d_forward.1} parent=5 // pred_check
        %p328 = pneg %p327
      $region54: #{residual_block2d_forward.1} parent=5 // pred_check_branch
        %330 = sbr.rel (%p328) target = $region56
      $region55: #{residual_block2d_forward.1} parent=5 // pred_region
        // Predicated region
        $region57: #{residual_block2d_forward.1} parent=55 // pred_check
          %p331 = pneg %p40
        $region58: #{residual_block2d_forward.1} parent=55 // pred_check_branch
          %333 = sbr.rel (%p331) target = $region60
        $region59: #{residual_block2d_forward.1} parent=55 // pred_region
          %p334 = scmp.lt.s32.totalorder %s20, 1
          %s335 = scalar_select %p334, %s20, 1
          %s336 = smul.addr %s335, 128
          %s337 = smul.addr %s336, 4
          %s338 = scalar_lea.vmem %s0, %s337
        $region60: #{residual_block2d_forward.1} parent=55 // pred_fallthru
          _
      $region56: #{residual_block2d_forward.1} parent=5 // pred_fallthru
        _
      %p339 = scmp.le.s32.totalorder 1, %s20
      %p340 = scmp.lt.s32.totalorder %s20, 3
      %p341 = pnand %p339, %p340
      %p342 = pneg %p341
      // Predicated region
      $region61: #{residual_block2d_forward.1} parent=5 // pred_check
        _
      $region62: #{residual_block2d_forward.1} parent=5 // pred_check_branch
        %344 = sbr.rel (%p341) target = $region64
      $region63: #{residual_block2d_forward.1} parent=5 // pred_region
        %s345 = ssub.s32 %s20, 1
        %p346 = scmp.lt.s32.totalorder %s25, 1
        %s347 = scalar_select %p346, %s25, 1
        %s348 = smul.addr %s347, 128
        %s349 = smul.addr %s348, 4
        %s350 = scalar_lea.vmem %s0, %s349
        %p351 = pneg %p46
        %p352 = pneg %p43
        %p353 = pneg %p67
        %p354 = pneg %p64
        %p355 = pneg %p88
        %p356 = pneg %p85
        %p357 = pneg %p109
        %p358 = pneg %p106
        %p359 = pneg %p130
        %p360 = pneg %p127
        %p361 = pneg %p151
        %p362 = pneg %p148
        %p363 = pneg %p172
        %p364 = pneg %p169
        %p365 = pneg %p193
        %p366 = pneg %p190
        %p367 = pneg %p214
        %p368 = pneg %p211
        %p369 = pneg %p235
        %p370 = pneg %p232
        %p371 = pneg %p256
        %p372 = pneg %p253
        %p373 = pneg %p282
        %p374 = pneg %p279
        %s375 = sand.u32 %s269, 1
        %s376 = scalar_lea.sflag [#allocation9], %s375
        %s377 = sand.u32 %s269, 1
        %s378 = scalar_lea.vmem [#allocation8], %s377
        %p379 = scmp.lt.s32.totalorder %s25, 1
        %s380 = scalar_select %p379, %s25, 1
        %s381 = smul.addr %s380, 128
        %s382 = smul.addr %s381, 4
        %s383 = scalar_lea.vmem %s0, %s382
        %vm385 = vcmask 130048
        %386 = vst.msk [vmem:[#allocation2] sm:$0xff] %vm385, 0.0
        %387 = vst.msk [vmem:[#allocation2 + $0x8] sm:$0xff] %vm385, 0.0
        %vm388 = vcmask 122880
        %389 = vst.msk [vmem:[#allocation2 + $0x10] sm:$0x1] %vm388, 0.0
        %390 = vst.msk [vmem:[#allocation2 + $0x18] sm:$0xff] %vm385, 0.0
        %391 = vst.msk [vmem:[#allocation2 + $0x20] sm:$0xff] %vm385, 0.0
        %392 = vst.msk [vmem:[#allocation2 + $0x28] sm:$0x1] %vm388, 0.0
        %393 = vst.msk [vmem:[#allocation2 + $0x30] sm:$0xff] %vm385, 0.0
        %394 = vst.msk [vmem:[#allocation2 + $0x38] sm:$0xff] %vm385, 0.0
        %395 = vst.msk [vmem:[#allocation2 + $0x40] sm:$0x1] %vm388, 0.0
        %396 = vst.msk [vmem:[#allocation2 + $0x48] sm:$0xff] %vm385, 0.0
        %397 = vst.msk [vmem:[#allocation2 + $0x50] sm:$0xff] %vm385, 0.0
        %398 = vst.msk [vmem:[#allocation2 + $0x58] sm:$0x1] %vm388, 0.0
        %399 = vst.msk [vmem:[#allocation2 + $0x60] sm:$0xff] %vm385, 0.0
        %400 = vst.msk [vmem:[#allocation2 + $0x68] sm:$0xff] %vm385, 0.0
        %401 = vst.msk [vmem:[#allocation2 + $0x70] sm:$0x1] %vm388, 0.0
        %402 = vst.msk [vmem:[#allocation2 + $0x78] sm:$0xff] %vm385, 0.0
        %403 = vst.msk [vmem:[#allocation2 + $0x80] sm:$0xff] %vm385, 0.0
        %404 = vst.msk [vmem:[#allocation2 + $0x88] sm:$0x1] %vm388, 0.0
        %405 = vst.msk [vmem:[#allocation2 + $0x90] sm:$0xff] %vm385, 0.0
        %406 = vst.msk [vmem:[#allocation2 + $0x98] sm:$0xff] %vm385, 0.0
        %407 = vst.msk [vmem:[#allocation2 + $0xa0] sm:$0x1] %vm388, 0.0
        %408 = vst.msk [vmem:[#allocation2 + $0xa8] sm:$0xff] %vm385, 0.0
        %409 = vst.msk [vmem:[#allocation2 + $0xb0] sm:$0xff] %vm385, 0.0
        %410 = vst.msk [vmem:[#allocation2 + $0xb8] sm:$0x1] %vm388, 0.0
        %411 = vst.msk [vmem:[#allocation2 + $0xc0] sm:$0xff] %vm385, 0.0
        %412 = vst.msk [vmem:[#allocation2 + $0xc8] sm:$0xff] %vm385, 0.0
        %413 = vst.msk [vmem:[#allocation2 + $0xd0] sm:$0x1] %vm388, 0.0
        %414 = vst.msk [vmem:[#allocation2 + $0xd8] sm:$0xff] %vm385, 0.0
        %415 = vst.msk [vmem:[#allocation2 + $0xe0] sm:$0xff] %vm385, 0.0
        %416 = vst.msk [vmem:[#allocation2 + $0xe8] sm:$0x1] %vm388, 0.0
        %417 = vst.msk [vmem:[#allocation2 + $0xf0] sm:$0xff] %vm385, 0.0
        %418 = vst.msk [vmem:[#allocation2 + $0xf8] sm:$0xff] %vm385, 0.0
        %419 = vst.msk [vmem:[#allocation2 + $0x100] sm:$0x1] %vm388, 0.0
        %420 = vst.msk [vmem:[#allocation2 + $0x108] sm:$0xff] %vm385, 0.0
        %421 = vst.msk [vmem:[#allocation2 + $0x110] sm:$0xff] %vm385, 0.0
        %422 = vst.msk [vmem:[#allocation2 + $0x118] sm:$0x1] %vm388, 0.0
        %423 = vst.msk [vmem:[#allocation2 + $0x120] sm:$0xff] %vm385, 0.0
        %424 = vst.msk [vmem:[#allocation2 + $0x128] sm:$0xff] %vm385, 0.0
        %425 = vst.msk [vmem:[#allocation2 + $0x130] sm:$0x1] %vm388, 0.0
        %426 = vst.msk [vmem:[#allocation2 + $0x138] sm:$0xff] %vm385, 0.0
        %427 = vst.msk [vmem:[#allocation2 + $0x140] sm:$0xff] %vm385, 0.0
        %428 = vst.msk [vmem:[#allocation2 + $0x148] sm:$0x1] %vm388, 0.0
        %429 = vst.msk [vmem:[#allocation2 + $0x150] sm:$0xff] %vm385, 0.0
        %430 = vst.msk [vmem:[#allocation2 + $0x158] sm:$0xff] %vm385, 0.0
        %431 = vst.msk [vmem:[#allocation2 + $0x160] sm:$0x1] %vm388, 0.0
        %432 = vst.msk [vmem:[#allocation2 + $0x168] sm:$0xff] %vm385, 0.0
        %433 = vst.msk [vmem:[#allocation2 + $0x170] sm:$0xff] %vm385, 0.0
        %434 = vst.msk [vmem:[#allocation2 + $0x178] sm:$0x1] %vm388, 0.0
        %435 = vst.msk [vmem:[#allocation2 + $0x180] sm:$0xff] %vm385, 0.0
        %436 = vst.msk [vmem:[#allocation2 + $0x188] sm:$0xff] %vm385, 0.0
        %437 = vst.msk [vmem:[#allocation2 + $0x190] sm:$0x1] %vm388, 0.0
        %vm438 = vcmask 261120
        %439 = vst.msk [vmem:[#allocation3] sm:$0xff] %vm438, 0.0
        %vm440 = vcmask 254976
        %441 = vst.msk [vmem:[#allocation3 + $0x8] sm:$0x3] %vm440, 0.0
        %442 = vst.msk [vmem:[#allocation3 + $0x10] sm:$0xff] %vm438, 0.0
        %443 = vst.msk [vmem:[#allocation3 + $0x18] sm:$0x3] %vm440, 0.0
        %444 = vst.msk [vmem:[#allocation3 + $0x20] sm:$0xff] %vm438, 0.0
        %445 = vst.msk [vmem:[#allocation3 + $0x28] sm:$0x3] %vm440, 0.0
        %446 = vst.msk [vmem:[#allocation3 + $0x30] sm:$0xff] %vm438, 0.0
        %447 = vst.msk [vmem:[#allocation3 + $0x38] sm:$0x3] %vm440, 0.0
        %448 = vst.msk [vmem:[#allocation3 + $0x40] sm:$0xff] %vm438, 0.0
        %449 = vst.msk [vmem:[#allocation3 + $0x48] sm:$0x3] %vm440, 0.0
        %450 = vst.msk [vmem:[#allocation3 + $0x50] sm:$0xff] %vm438, 0.0
        %451 = vst.msk [vmem:[#allocation3 + $0x58] sm:$0x3] %vm440, 0.0
        %452 = vst.msk [vmem:[#allocation3 + $0x60] sm:$0xff] %vm438, 0.0
        %453 = vst.msk [vmem:[#allocation3 + $0x68] sm:$0x3] %vm440, 0.0
        %454 = vst.msk [vmem:[#allocation3 + $0x70] sm:$0xff] %vm438, 0.0
        %455 = vst.msk [vmem:[#allocation3 + $0x78] sm:$0x3] %vm440, 0.0
        %456 = vst.msk [vmem:[#allocation3 + $0x80] sm:$0xff] %vm438, 0.0
        %457 = vst.msk [vmem:[#allocation3 + $0x88] sm:$0x3] %vm440, 0.0
        %458 = vst.msk [vmem:[#allocation3 + $0x90] sm:$0xff] %vm438, 0.0
        %459 = vst.msk [vmem:[#allocation3 + $0x98] sm:$0x3] %vm440, 0.0
        %460 = vst.msk [vmem:[#allocation4] sm:$0xff] %vm438, 0.0
        %461 = vst.msk [vmem:[#allocation4 + $0x8] sm:$0x3] %vm440, 0.0
        %462 = vst.msk [vmem:[#allocation4 + $0x10] sm:$0xff] %vm438, 0.0
        %463 = vst.msk [vmem:[#allocation4 + $0x18] sm:$0x3] %vm440, 0.0
        %464 = vst.msk [vmem:[#allocation4 + $0x20] sm:$0xff] %vm438, 0.0
        %465 = vst.msk [vmem:[#allocation4 + $0x28] sm:$0x3] %vm440, 0.0
        %466 = vst.msk [vmem:[#allocation4 + $0x30] sm:$0xff] %vm438, 0.0
        %467 = vst.msk [vmem:[#allocation4 + $0x38] sm:$0x3] %vm440, 0.0
        %468 = vst.msk [vmem:[#allocation4 + $0x40] sm:$0xff] %vm438, 0.0
        %469 = vst.msk [vmem:[#allocation4 + $0x48] sm:$0x3] %vm440, 0.0
        %470 = vst.msk [vmem:[#allocation4 + $0x50] sm:$0xff] %vm438, 0.0
        %471 = vst.msk [vmem:[#allocation4 + $0x58] sm:$0x3] %vm440, 0.0
        %472 = vst.msk [vmem:[#allocation4 + $0x60] sm:$0xff] %vm438, 0.0
        %473 = vst.msk [vmem:[#allocation4 + $0x68] sm:$0x3] %vm440, 0.0
        %474 = vst.msk [vmem:[#allocation4 + $0x70] sm:$0xff] %vm438, 0.0
        %475 = vst.msk [vmem:[#allocation4 + $0x78] sm:$0x3] %vm440, 0.0
        %476 = vst.msk [vmem:[#allocation4 + $0x80] sm:$0xff] %vm438, 0.0
        %477 = vst.msk [vmem:[#allocation4 + $0x88] sm:$0x3] %vm440, 0.0
        %478 = vst.msk [vmem:[#allocation4 + $0x90] sm:$0xff] %vm438, 0.0
        %479 = vst.msk [vmem:[#allocation4 + $0x98] sm:$0x3] %vm440, 0.0
        %vm480 = vcmask 521216
        %481 = vst.msk [vmem:[#allocation5] sm:$0x3f] %vm480, 0.0
        %482 = vst.msk [vmem:[#allocation5 + $0x8] sm:$0x3f] %vm480, 0.0
        %483 = vst.msk [vmem:[#allocation5 + $0x10] sm:$0x3f] %vm480, 0.0
        %484 = vst.msk [vmem:[#allocation5 + $0x18] sm:$0x3f] %vm480, 0.0
        %485 = vst.msk [vmem:[#allocation5 + $0x20] sm:$0x3f] %vm480, 0.0
        %486 = vst.msk [vmem:[#allocation5 + $0x28] sm:$0x3f] %vm480, 0.0
        %487 = vst.msk [vmem:[#allocation6] sm:$0x3f] %vm480, 0.0
        %488 = vst.msk [vmem:[#allocation6 + $0x8] sm:$0x3f] %vm480, 0.0
        %489 = vst.msk [vmem:[#allocation6 + $0x10] sm:$0x3f] %vm480, 0.0
        %490 = vst.msk [vmem:[#allocation6 + $0x18] sm:$0x3f] %vm480, 0.0
        %491 = vst.msk [vmem:[#allocation6 + $0x20] sm:$0x3f] %vm480, 0.0
        %492 = vst.msk [vmem:[#allocation6 + $0x28] sm:$0x3f] %vm480, 0.0
        %493 = vst [vmem:[#allocation7] sm:$0xf] 0.0
        %494 = vst [vmem:[#allocation7 + $0x4] sm:$0xf] 0.0
        %495 = vst [vmem:[#allocation7 + $0x8] sm:$0xf] 0.0
        %496 = vst [vmem:[#allocation7 + $0xc] sm:$0xf] 0.0
        %v497 = vld [vmem:[%s383] sm:$0xf]
        %v498 = vld [vmem:[%s383 + $0x4] sm:$0xf]
        %v499 = vld [vmem:[%s383 + $0x8] sm:$0xf]
        %v500 = vld [vmem:[%s383 + $0xc] sm:$0xf]
        %v501 = vld [vmem:[%s383 + $0x10] sm:$0xf]
        %v502 = vld [vmem:[%s383 + $0x14] sm:$0xf]
        %v503 = vld [vmem:[%s383 + $0x18] sm:$0xf]
        %v504 = vld [vmem:[%s383 + $0x1c] sm:$0xf]
        %v505 = vld [vmem:[%s383 + $0x20] sm:$0xf]
        %v506 = vld [vmem:[%s383 + $0x24] sm:$0xf]
        %v507 = vld [vmem:[%s383 + $0x28] sm:$0xf]
        %v508 = vld [vmem:[%s383 + $0x2c] sm:$0xf]
        %v509 = vld [vmem:[%s383 + $0x30] sm:$0xf]
        %v510 = vld [vmem:[%s383 + $0x34] sm:$0xf]
        %v511 = vld [vmem:[%s383 + $0x38] sm:$0xf]
        %v512 = vld [vmem:[%s383 + $0x3c] sm:$0xf]
        %v513 = vld [vmem:[%s383 + $0x40] sm:$0xf]
        %v514 = vld [vmem:[%s383 + $0x44] sm:$0xf]
        %v515 = vld [vmem:[%s383 + $0x48] sm:$0xf]
        %v516 = vld [vmem:[%s383 + $0x4c] sm:$0xf]
        %v517 = vld [vmem:[%s383 + $0x50] sm:$0xf]
        %v518 = vld [vmem:[%s383 + $0x54] sm:$0xf]
        %v519 = vld [vmem:[%s383 + $0x58] sm:$0xf]
        %v520 = vld [vmem:[%s383 + $0x5c] sm:$0xf]
        %v521 = vld [vmem:[%s383 + $0x60] sm:$0xf]
        %v522 = vld [vmem:[%s383 + $0x64] sm:$0xf]
        %v523 = vld [vmem:[%s383 + $0x68] sm:$0xf]
        %v524 = vld [vmem:[%s383 + $0x6c] sm:$0xf]
        %v525 = vld [vmem:[%s383 + $0x70] sm:$0xf]
        %v526 = vld [vmem:[%s383 + $0x74] sm:$0xf]
        %v527 = vld [vmem:[%s383 + $0x78] sm:$0xf]
        %v528 = vld [vmem:[%s383 + $0x7c] sm:$0xf]
        %v529 = vld [vmem:[%s383 + $0x80] sm:$0xf]
        %v530 = vld [vmem:[%s383 + $0x84] sm:$0xf]
        %v531 = vld [vmem:[%s383 + $0x88] sm:$0xf]
        %v532 = vld [vmem:[%s383 + $0x8c] sm:$0xf]
        %v533 = vld [vmem:[%s383 + $0x90] sm:$0xf]
        %v534 = vld [vmem:[%s383 + $0x94] sm:$0xf]
        %v535 = vld [vmem:[%s383 + $0x98] sm:$0xf]
        %v536 = vld [vmem:[%s383 + $0x9c] sm:$0xf]
        %v537 = vld [vmem:[%s383 + $0xa0] sm:$0xf]
        %v538 = vld [vmem:[%s383 + $0xa4] sm:$0xf]
        %v539 = vld [vmem:[%s383 + $0xa8] sm:$0xf]
        %v540 = vld [vmem:[%s383 + $0xac] sm:$0xf]
        %v541 = vld [vmem:[%s383 + $0xb0] sm:$0xf]
        %v542 = vld [vmem:[%s383 + $0xb4] sm:$0xf]
        %v543 = vld [vmem:[%s383 + $0xb8] sm:$0xf]
        %v544 = vld [vmem:[%s383 + $0xbc] sm:$0xf]
        %v545 = vld [vmem:[%s383 + $0xc0] sm:$0xf]
        %v546 = vld [vmem:[%s383 + $0xc4] sm:$0xf]
        %v547 = vld [vmem:[%s383 + $0xc8] sm:$0xf]
        %v548 = vld [vmem:[%s383 + $0xcc] sm:$0xf]
        %v549 = vld [vmem:[%s383 + $0xd0] sm:$0xf]
        %v550 = vld [vmem:[%s383 + $0xd4] sm:$0xf]
        %v551 = vld [vmem:[%s383 + $0xd8] sm:$0xf]
        %v552 = vld [vmem:[%s383 + $0xdc] sm:$0xf]
        %v553 = vld [vmem:[%s383 + $0xe0] sm:$0xf]
        %v554 = vld [vmem:[%s383 + $0xe4] sm:$0xf]
        %v555 = vld [vmem:[%s383 + $0xe8] sm:$0xf]
        %v556 = vld [vmem:[%s383 + $0xec] sm:$0xf]
        %v557 = vld [vmem:[%s383 + $0xf0] sm:$0xf]
        %v558 = vld [vmem:[%s383 + $0xf4] sm:$0xf]
        %v559 = vld [vmem:[%s383 + $0xf8] sm:$0xf]
        %v560 = vld [vmem:[%s383 + $0xfc] sm:$0xf]
        %v561 = vld [vmem:[%s383 + $0x100] sm:$0xf]
        %v562 = vld [vmem:[%s383 + $0x104] sm:$0xf]
        %v563 = vld [vmem:[%s383 + $0x108] sm:$0xf]
        %v564 = vld [vmem:[%s383 + $0x10c] sm:$0xf]
        %v565 = vld [vmem:[%s383 + $0x110] sm:$0xf]
        %v566 = vld [vmem:[%s383 + $0x114] sm:$0xf]
        %v567 = vld [vmem:[%s383 + $0x118] sm:$0xf]
        %v568 = vld [vmem:[%s383 + $0x11c] sm:$0xf]
        %v569 = vld [vmem:[%s383 + $0x120] sm:$0xf]
        %v570 = vld [vmem:[%s383 + $0x124] sm:$0xf]
        %v571 = vld [vmem:[%s383 + $0x128] sm:$0xf]
        %v572 = vld [vmem:[%s383 + $0x12c] sm:$0xf]
        %v573 = vld [vmem:[%s383 + $0x130] sm:$0xf]
        %v574 = vld [vmem:[%s383 + $0x134] sm:$0xf]
        %v575 = vld [vmem:[%s383 + $0x138] sm:$0xf]
        %v576 = vld [vmem:[%s383 + $0x13c] sm:$0xf]
        %v577 = vld [vmem:[%s383 + $0x140] sm:$0xf]
        %v578 = vld [vmem:[%s383 + $0x144] sm:$0xf]
        %v579 = vld [vmem:[%s383 + $0x148] sm:$0xf]
        %v580 = vld [vmem:[%s383 + $0x14c] sm:$0xf]
        %v581 = vld [vmem:[%s383 + $0x150] sm:$0xf]
        %v582 = vld [vmem:[%s383 + $0x154] sm:$0xf]
        %v583 = vld [vmem:[%s383 + $0x158] sm:$0xf]
        %v584 = vld [vmem:[%s383 + $0x15c] sm:$0xf]
        %v585 = vld [vmem:[%s383 + $0x160] sm:$0xf]
        %v586 = vld [vmem:[%s383 + $0x164] sm:$0xf]
        %v587 = vld [vmem:[%s383 + $0x168] sm:$0xf]
        %v588 = vld [vmem:[%s383 + $0x16c] sm:$0xf]
        %v589 = vld [vmem:[%s383 + $0x170] sm:$0xf]
        %v590 = vld [vmem:[%s383 + $0x174] sm:$0xf]
        %v591 = vld [vmem:[%s383 + $0x178] sm:$0xf]
        %v592 = vld [vmem:[%s383 + $0x17c] sm:$0xf]
        %v593 = vld [vmem:[%s383 + $0x180] sm:$0xf]
        %v594 = vld [vmem:[%s383 + $0x184] sm:$0xf]
        %v595 = vld [vmem:[%s383 + $0x188] sm:$0xf]
        %v596 = vld [vmem:[%s383 + $0x18c] sm:$0xf]
        %v597 = vld [vmem:[%s383 + $0x190] sm:$0xf]
        %v598 = vld [vmem:[%s383 + $0x194] sm:$0xf]
        %v599 = vld [vmem:[%s383 + $0x198] sm:$0xf]
        %v600 = vld [vmem:[%s383 + $0x19c] sm:$0xf]
        %v601 = vld [vmem:[%s383 + $0x1a0] sm:$0xf]
        %v602 = vld [vmem:[%s383 + $0x1a4] sm:$0xf]
        %v603 = vld [vmem:[%s383 + $0x1a8] sm:$0xf]
        %v604 = vld [vmem:[%s383 + $0x1ac] sm:$0xf]
        %v605 = vld [vmem:[%s383 + $0x1b0] sm:$0xf]
        %v606 = vld [vmem:[%s383 + $0x1b4] sm:$0xf]
        %v607 = vld [vmem:[%s383 + $0x1b8] sm:$0xf]
        %v608 = vld [vmem:[%s383 + $0x1bc] sm:$0xf]
        %v609 = vld [vmem:[%s383 + $0x1c0] sm:$0xf]
        %v610 = vld [vmem:[%s383 + $0x1c4] sm:$0xf]
        %v611 = vld [vmem:[%s383 + $0x1c8] sm:$0xf]
        %v612 = vld [vmem:[%s383 + $0x1cc] sm:$0xf]
        %v613 = vld [vmem:[%s383 + $0x1d0] sm:$0xf]
        %v614 = vld [vmem:[%s383 + $0x1d4] sm:$0xf]
        %v615 = vld [vmem:[%s383 + $0x1d8] sm:$0xf]
        %v616 = vld [vmem:[%s383 + $0x1dc] sm:$0xf]
        %v617 = vld [vmem:[%s383 + $0x1e0] sm:$0xf]
        %v618 = vld [vmem:[%s383 + $0x1e4] sm:$0xf]
        %v619 = vld [vmem:[%s383 + $0x1e8] sm:$0xf]
        %v620 = vld [vmem:[%s383 + $0x1ec] sm:$0xf]
        %v621 = vld [vmem:[%s383 + $0x1f0] sm:$0xf]
        %v622 = vld [vmem:[%s383 + $0x1f4] sm:$0xf]
        %v623 = vld [vmem:[%s383 + $0x1f8] sm:$0xf]
        %v624 = vld [vmem:[%s383 + $0x1fc] sm:$0xf]
        %v625 = vld [vmem:[%s1] sm:$0xf]
        %v626 = vld [vmem:[%s1 + $0x4] sm:$0xf]
        %v627 = vld [vmem:[%s1 + $0x8] sm:$0xf]
        %v628 = vld [vmem:[%s1 + $0xc] sm:$0xf]
        %v629 = vld [vmem:[%s1 + $0x10] sm:$0xf]
        %v630 = vld [vmem:[%s1 + $0x14] sm:$0xf]
        %v631 = vld [vmem:[%s1 + $0x18] sm:$0x1]
        %v760 = vunpack.c.l.b16 %v497
        %v761 = vunpack.c.l.b16 %v498
        %v762 = vunpack.c.l.b16 %v499
        %v763 = vunpack.c.l.b16 %v500
        %v764 = vunpack.c.l.b16 %v501
        %v765 = vunpack.c.l.b16 %v502
        %v766 = vunpack.c.l.b16 %v503
        %v767 = vunpack.c.l.b16 %v504
        %v768 = vunpack.c.l.b16 %v505
        %v769 = vunpack.c.l.b16 %v506
        %v770 = vunpack.c.l.b16 %v507
        %v771 = vunpack.c.l.b16 %v508
        %v772 = vunpack.c.l.b16 %v509
        %v773 = vunpack.c.l.b16 %v510
        %v774 = vunpack.c.l.b16 %v511
        %v775 = vunpack.c.l.b16 %v512
        %v776 = vunpack.c.l.b16 %v513
        %v777 = vunpack.c.l.b16 %v514
        %v778 = vunpack.c.l.b16 %v515
        %v779 = vunpack.c.l.b16 %v516
        %v780 = vunpack.c.l.b16 %v517
        %v781 = vunpack.c.l.b16 %v518
        %v782 = vunpack.c.l.b16 %v519
        %v783 = vunpack.c.l.b16 %v520
        %v784 = vunpack.c.l.b16 %v521
        %v785 = vunpack.c.l.b16 %v522
        %v786 = vunpack.c.l.b16 %v523
        %v787 = vunpack.c.l.b16 %v524
        %v788 = vunpack.c.l.b16 %v525
        %v789 = vunpack.c.l.b16 %v526
        %v790 = vunpack.c.l.b16 %v527
        %v791 = vunpack.c.l.b16 %v528
        %v792 = vunpack.c.l.b16 %v529
        %v793 = vunpack.c.l.b16 %v530
        %v794 = vunpack.c.l.b16 %v531
        %v795 = vunpack.c.l.b16 %v532
        %v796 = vunpack.c.l.b16 %v533
        %v797 = vunpack.c.l.b16 %v534
        %v798 = vunpack.c.l.b16 %v535
        %v799 = vunpack.c.l.b16 %v536
        %v800 = vunpack.c.l.b16 %v537
        %v801 = vunpack.c.l.b16 %v538
        %v802 = vunpack.c.l.b16 %v539
        %v803 = vunpack.c.l.b16 %v540
        %v804 = vunpack.c.l.b16 %v541
        %v805 = vunpack.c.l.b16 %v542
        %v806 = vunpack.c.l.b16 %v543
        %v807 = vunpack.c.l.b16 %v544
        %v808 = vunpack.c.l.b16 %v545
        %v809 = vunpack.c.l.b16 %v546
        %v810 = vunpack.c.l.b16 %v547
        %v811 = vunpack.c.l.b16 %v548
        %v812 = vunpack.c.l.b16 %v549
        %v813 = vunpack.c.l.b16 %v550
        %v814 = vunpack.c.l.b16 %v551
        %v815 = vunpack.c.l.b16 %v552
        %v816 = vunpack.c.l.b16 %v553
        %v817 = vunpack.c.l.b16 %v554
        %v818 = vunpack.c.l.b16 %v555
        %v819 = vunpack.c.l.b16 %v556
        %v820 = vunpack.c.l.b16 %v557
        %v821 = vunpack.c.l.b16 %v558
        %v822 = vunpack.c.l.b16 %v559
        %v823 = vunpack.c.l.b16 %v560
        %v824 = vunpack.c.l.b16 %v561
        %v825 = vunpack.c.l.b16 %v562
        %v826 = vunpack.c.l.b16 %v563
        %v827 = vunpack.c.l.b16 %v564
        %v828 = vunpack.c.l.b16 %v565
        %v829 = vunpack.c.l.b16 %v566
        %v830 = vunpack.c.l.b16 %v567
        %v831 = vunpack.c.l.b16 %v568
        %v832 = vunpack.c.l.b16 %v569
        %v833 = vunpack.c.l.b16 %v570
        %v834 = vunpack.c.l.b16 %v571
        %v835 = vunpack.c.l.b16 %v572
        %v836 = vunpack.c.l.b16 %v573
        %v837 = vunpack.c.l.b16 %v574
        %v838 = vunpack.c.l.b16 %v575
        %v839 = vunpack.c.l.b16 %v576
        %v840 = vunpack.c.l.b16 %v577
        %v841 = vunpack.c.l.b16 %v578
        %v842 = vunpack.c.l.b16 %v579
        %v843 = vunpack.c.l.b16 %v580
        %v844 = vunpack.c.l.b16 %v581
        %v845 = vunpack.c.l.b16 %v582
        %v846 = vunpack.c.l.b16 %v583
        %v847 = vunpack.c.l.b16 %v584
        %v848 = vunpack.c.l.b16 %v585
        %v849 = vunpack.c.l.b16 %v586
        %v850 = vunpack.c.l.b16 %v587
        %v851 = vunpack.c.l.b16 %v588
        %v852 = vunpack.c.l.b16 %v589
        %v853 = vunpack.c.l.b16 %v590
        %v854 = vunpack.c.l.b16 %v591
        %v855 = vunpack.c.l.b16 %v592
        %v856 = vunpack.c.l.b16 %v593
        %v857 = vunpack.c.l.b16 %v594
        %v858 = vunpack.c.l.b16 %v595
        %v859 = vunpack.c.l.b16 %v596
        %v860 = vunpack.c.l.b16 %v597
        %v861 = vunpack.c.l.b16 %v598
        %v862 = vunpack.c.l.b16 %v599
        %v863 = vunpack.c.l.b16 %v600
        %v864 = vunpack.c.l.b16 %v601
        %v865 = vunpack.c.l.b16 %v602
        %v866 = vunpack.c.l.b16 %v603
        %v867 = vunpack.c.l.b16 %v604
        %v868 = vunpack.c.l.b16 %v605
        %v869 = vunpack.c.l.b16 %v606
        %v870 = vunpack.c.l.b16 %v607
        %v871 = vunpack.c.l.b16 %v608
        %v872 = vunpack.c.l.b16 %v609
        %v873 = vunpack.c.l.b16 %v610
        %v874 = vunpack.c.l.b16 %v611
        %v875 = vunpack.c.l.b16 %v612
        %v876 = vunpack.c.l.b16 %v613
        %v877 = vunpack.c.l.b16 %v614
        %v878 = vunpack.c.l.b16 %v615
        %v879 = vunpack.c.l.b16 %v616
        %v880 = vunpack.c.l.b16 %v617
        %v881 = vunpack.c.l.b16 %v618
        %v882 = vunpack.c.l.b16 %v619
        %v883 = vunpack.c.l.b16 %v620
        %v884 = vunpack.c.l.b16 %v621
        %v885 = vunpack.c.l.b16 %v622
        %v886 = vunpack.c.l.b16 %v623
        %v887 = vunpack.c.l.b16 %v624
        %v888 = vpack.c.b16 %v761, %v760
        %v889 = vpack.c.b16 %v763, %v762
        %v890 = vpack.c.b16 %v765, %v764
        %v891 = vpack.c.b16 %v767, %v766
        %v892 = vpack.c.b16 %v769, %v768
        %v893 = vpack.c.b16 %v771, %v770
        %v894 = vpack.c.b16 %v773, %v772
        %v895 = vpack.c.b16 %v775, %v774
        %v896 = vpack.c.b16 %v777, %v776
        %v897 = vpack.c.b16 %v779, %v778
        %v898 = vpack.c.b16 %v781, %v780
        %v899 = vpack.c.b16 %v783, %v782
        %v900 = vpack.c.b16 %v785, %v784
        %v901 = vpack.c.b16 %v787, %v786
        %v902 = vpack.c.b16 %v789, %v788
        %v903 = vpack.c.b16 %v791, %v790
        %v904 = vpack.c.b16 %v793, %v792
        %v905 = vpack.c.b16 %v795, %v794
        %v906 = vpack.c.b16 %v797, %v796
        %v907 = vpack.c.b16 %v799, %v798
        %v908 = vpack.c.b16 %v801, %v800
        %v909 = vpack.c.b16 %v803, %v802
        %v910 = vpack.c.b16 %v805, %v804
        %v911 = vpack.c.b16 %v807, %v806
        %v912 = vpack.c.b16 %v809, %v808
        %v913 = vpack.c.b16 %v811, %v810
        %v914 = vpack.c.b16 %v813, %v812
        %v915 = vpack.c.b16 %v815, %v814
        %v916 = vpack.c.b16 %v817, %v816
        %v917 = vpack.c.b16 %v819, %v818
        %v918 = vpack.c.b16 %v821, %v820
        %v919 = vpack.c.b16 %v823, %v822
        %v920 = vpack.c.b16 %v825, %v824
        %v921 = vpack.c.b16 %v827, %v826
        %v922 = vpack.c.b16 %v829, %v828
        %v923 = vpack.c.b16 %v831, %v830
        %v924 = vpack.c.b16 %v833, %v832
        %v925 = vpack.c.b16 %v835, %v834
        %v926 = vpack.c.b16 %v837, %v836
        %v927 = vpack.c.b16 %v839, %v838
        %v928 = vpack.c.b16 %v841, %v840
        %v929 = vpack.c.b16 %v843, %v842
        %v930 = vpack.c.b16 %v845, %v844
        %v931 = vpack.c.b16 %v847, %v846
        %v932 = vpack.c.b16 %v849, %v848
        %v933 = vpack.c.b16 %v851, %v850
        %v934 = vpack.c.b16 %v853, %v852
        %v935 = vpack.c.b16 %v855, %v854
        %v936 = vpack.c.b16 %v857, %v856
        %v937 = vpack.c.b16 %v859, %v858
        %v938 = vpack.c.b16 %v861, %v860
        %v939 = vpack.c.b16 %v863, %v862
        %v940 = vpack.c.b16 %v865, %v864
        %v941 = vpack.c.b16 %v867, %v866
        %v942 = vpack.c.b16 %v869, %v868
        %v943 = vpack.c.b16 %v871, %v870
        %v944 = vpack.c.b16 %v873, %v872
        %v945 = vpack.c.b16 %v875, %v874
        %v946 = vpack.c.b16 %v877, %v876
        %v947 = vpack.c.b16 %v879, %v878
        %v948 = vpack.c.b16 %v881, %v880
        %v949 = vpack.c.b16 %v883, %v882
        %v950 = vpack.c.b16 %v885, %v884
        %v951 = vpack.c.b16 %v887, %v886
        %v959 = vunpack.c.l.b16 %v625
        %v960 = vunpack.c.l.b16 %v626
        %v961 = vunpack.c.l.b16 %v627
        %v962 = vunpack.c.l.b16 %v628
        %v963 = vunpack.c.l.b16 %v629
        %v964 = vunpack.c.l.b16 %v630
        %v965 = vunpack.c.l.b16 %v631
        %v966 = vpack.c.b16 %v960, %v959
        %v967 = vpack.c.b16 %v962, %v961
        %v968 = vpack.c.b16 %v964, %v963
        %v969 = vpack.c.b16 %v965, %v965
        %vm973 = vcmask 400384
        %v975 = vsel %vm973, %v888, 0
        %v978 = vsel %vm973, %v889, 0
        %v981 = vsel %vm973, %v890, 0
        %v984 = vsel %vm973, %v891, 0
        %v987 = vsel %vm973, %v892, 0
        %v990 = vsel %vm973, %v893, 0
        %v993 = vsel %vm973, %v894, 0
        %v996 = vsel %vm973, %v895, 0
        %v999 = vsel %vm973, %v896, 0
        %v1002 = vsel %vm973, %v897, 0
        %v1005 = vsel %vm973, %v898, 0
        %v1008 = vsel %vm973, %v899, 0
        %v1011 = vsel %vm973, %v900, 0
        %v1014 = vsel %vm973, %v901, 0
        %v1017 = vsel %vm973, %v902, 0
        %v1020 = vsel %vm973, %v903, 0
        %v1023 = vsel %vm973, %v904, 0
        %v1026 = vsel %vm973, %v905, 0
        %v1029 = vsel %vm973, %v906, 0
        %v1032 = vsel %vm973, %v907, 0
        %v1035 = vsel %vm973, %v908, 0
        %v1038 = vsel %vm973, %v909, 0
        %v1041 = vsel %vm973, %v910, 0
        %v1044 = vsel %vm973, %v911, 0
        %v1047 = vsel %vm973, %v912, 0
        %v1050 = vsel %vm973, %v913, 0
        %v1053 = vsel %vm973, %v914, 0
        %v1056 = vsel %vm973, %v915, 0
        %v1059 = vsel %vm973, %v916, 0
        %v1062 = vsel %vm973, %v917, 0
        %v1065 = vsel %vm973, %v918, 0
        %v1068 = vsel %vm973, %v919, 0
        %v1071 = vsel %vm973, %v920, 0
        %v1074 = vsel %vm973, %v921, 0
        %v1077 = vsel %vm973, %v922, 0
        %v1080 = vsel %vm973, %v923, 0
        %v1083 = vsel %vm973, %v924, 0
        %v1086 = vsel %vm973, %v925, 0
        %v1089 = vsel %vm973, %v926, 0
        %v1092 = vsel %vm973, %v927, 0
        %v1095 = vsel %vm973, %v928, 0
        %v1098 = vsel %vm973, %v929, 0
        %v1101 = vsel %vm973, %v930, 0
        %v1104 = vsel %vm973, %v931, 0
        %v1107 = vsel %vm973, %v932, 0
        %v1110 = vsel %vm973, %v933, 0
        %v1113 = vsel %vm973, %v934, 0
        %v1116 = vsel %vm973, %v935, 0
        %v1119 = vsel %vm973, %v936, 0
        %v1122 = vsel %vm973, %v937, 0
        %v1125 = vsel %vm973, %v938, 0
        %v1128 = vsel %vm973, %v939, 0
        %v1131 = vsel %vm973, %v940, 0
        %v1134 = vsel %vm973, %v941, 0
        %v1137 = vsel %vm973, %v942, 0
        %v1140 = vsel %vm973, %v943, 0
        %v1143 = vsel %vm973, %v944, 0
        %v1146 = vsel %vm973, %v945, 0
        %v1149 = vsel %vm973, %v946, 0
        %v1152 = vsel %vm973, %v947, 0
        %v1155 = vsel %vm973, %v948, 0
        %v1158 = vsel %vm973, %v949, 0
        %v1161 = vsel %vm973, %v950, 0
        %v1164 = vsel %vm973, %v951, 0
        %vm1166 = vcmask 1040384
        %v1167 = vsel 0, 4294967295, 65535
        %v1168 = vsel %vm1166, %v1167, 0
        %v1170 = vand.u32 %v969, %v1168
        %1172 = vmatprep.subr.bf16.mxu0 0
        %1173 = vmatpush1.bf16.msra.mxu0 %v966
        %1174 = vmatprep.subr.bf16.mxu0 0
        %1175 = vmatpush1.bf16.msra.mxu0 %v967
        %1176 = vmatprep.subr.bf16.mxu0 0
        %1177 = vmatpush1.bf16.msra.mxu0 %v968
        %1178 = vmatprep.subr.bf16.mxu0 0
        %1179 = vmatpush1.bf16.msra.mxu0 %v1170
        %1180 = vmatprep.subr.bf16.mxu0 0
        %1181 = vmatpush1.bf16.msra.mxu0 0
        %1182 = vmatprep.subr.bf16.mxu0 0
        %1183 = vmatpush1.bf16.msra.mxu0 0
        %1184 = vmatprep.subr.bf16.mxu0 0
        %1185 = vmatpush1.bf16.msra.mxu0 0
        %1186 = vmatprep.subr.bf16.mxu0 0
        %1187 = vmatpush1.bf16.msra.mxu0 0
        %1188 = vmatprep.subr.bf16.mxu0 0
        %1189 = vmatpush1.bf16.msra.mxu0 0
        %1190 = vmatprep.subr.bf16.mxu0 0
        %1191 = vmatpush1.bf16.msra.mxu0 0
        %1192 = vmatprep.subr.bf16.mxu0 0
        %1193 = vmatpush1.bf16.msra.mxu0 0
        %1194 = vmatprep.subr.bf16.mxu0 0
        %1195 = vmatpush1.bf16.msra.mxu0 0
        %1196 = vmatprep.subr.bf16.mxu0 0
        %1197 = vmatpush1.bf16.msra.mxu0 0
        %1198 = vmatprep.subr.bf16.mxu0 0
        %1199 = vmatpush1.bf16.msra.mxu0 0
        %1200 = vmatprep.subr.bf16.mxu0 0
        %1201 = vmatpush1.bf16.msra.mxu0 0
        %1202 = vmatprep.subr.bf16.mxu0 0
        %1203 = vmatpush1.bf16.msra.mxu0 0
        %1204 = vmatprep.mubr.bf16.mxu0 0
        %1205 = vmatmul.mubr.bf16.gmra.mrb[0].mxu0 %v975
        %v1206 = vpop.f32.mrb[0].mxu0
        %v1207 = vadd.f32 0.0, %v1206
        %v1208 = vpop.f32.mrb[0].mxu0
        %v1209 = vpop.f32.mrb[0].mxu0
        %v1210 = vadd.f32 0.0, %v1209
        %v1211 = vpop.f32.mrb[0].mxu0
        %1212 = vmatprep.mubr.bf16.mxu0 0
        %1213 = vmatmul.mubr.bf16.gmra.mrb[0].mxu0 %v978
        %v1214 = vpop.f32.mrb[0].mxu0
        %v1215 = vadd.f32 0.0, %v1214
        %v1216 = vpop.f32.mrb[0].mxu0
        %v1217 = vpop.f32.mrb[0].mxu0
        %v1218 = vadd.f32 0.0, %v1217
        %v1219 = vpop.f32.mrb[0].mxu0
        %1220 = vmatprep.mubr.bf16.mxu0 0
        %1221 = vmatmul.mubr.bf16.gmra.mrb[0].mxu0 %v981
        %v1222 = vpop.f32.mrb[0].mxu0
        %v1223 = vadd.f32 0.0, %v1222
        %v1224 = vpop.f32.mrb[0].mxu0
        %v1225 = vpop.f32.mrb[0].mxu0
        %v1226 = vadd.f32 0.0, %v1225
        %v1227 = vpop.f32.mrb[0].mxu0
        %1228 = vmatprep.mubr.bf16.mxu0 0
        %1229 = vmatmul.mubr.bf16.gmra.mrb[0].mxu0 %v984
        %v1230 = vpop.f32.mrb[0].mxu0
        %v1231 = vadd.f32 0.0, %v1230
        %v1232 = vpop.f32.mrb[0].mxu0
        %v1233 = vpop.f32.mrb[0].mxu0
        %v1234 = vadd.f32 0.0, %v1233
        %v1235 = vpop.f32.mrb[0].mxu0
        %1236 = vmatprep.mubr.bf16.mxu0 0
        %1237 = vmatmul.mubr.bf16.gmra.mrb[0].mxu0 %v987
        %v1238 = vpop.f32.mrb[0].mxu0
        %v1239 = vadd.f32 0.0, %v1238
        %v1240 = vpop.f32.mrb[0].mxu0
        %v1241 = vpop.f32.mrb[0].mxu0
        %v1242 = vadd.f32 0.0, %v1241
        %v1243 = vpop.f32.mrb[0].mxu0
        %1244 = vmatprep.mubr.bf16.mxu0 0
        %1245 = vmatmul.mubr.bf16.gmra.mrb[0].mxu0 %v990
        %v1246 = vpop.f32.mrb[0].mxu0
        %v1247 = vadd.f32 0.0, %v1246
        %v1248 = vpop.f32.mrb[0].mxu0
        %v1249 = vpop.f32.mrb[0].mxu0
        %v1250 = vadd.f32 0.0, %v1249
        %v1251 = vpop.f32.mrb[0].mxu0
        %1252 = vmatprep.mubr.bf16.mxu0 0
        %1253 = vmatmul.mubr.bf16.gmra.mrb[0].mxu0 %v993
        %v1254 = vpop.f32.mrb[0].mxu0
        %v1255 = vadd.f32 0.0, %v1254
        %v1256 = vpop.f32.mrb[0].mxu0
        %v1257 = vpop.f32.mrb[0].mxu0
        %v1258 = vadd.f32 0.0, %v1257
        %v1259 = vpop.f32.mrb[0].mxu0
        %1260 = vmatprep.mubr.bf16.mxu0 0
        %1261 = vmatmul.mubr.bf16.gmra.mrb[0].mxu0 %v996
        %v1262 = vpop.f32.mrb[0].mxu0
        %v1263 = vadd.f32 0.0, %v1262
        %v1264 = vpop.f32.mrb[0].mxu0
        %v1265 = vpop.f32.mrb[0].mxu0
        %v1266 = vadd.f32 0.0, %v1265
        %v1267 = vpop.f32.mrb[0].mxu0
        %1268 = vmatprep.mubr.bf16.mxu0 0
        %1269 = vmatmul.mubr.bf16.gmra.mrb[0].mxu0 %v999
        %v1270 = vpop.f32.mrb[0].mxu0
        %v1271 = vadd.f32 0.0, %v1270
        %v1272 = vpop.f32.mrb[0].mxu0
        %v1273 = vpop.f32.mrb[0].mxu0
        %v1274 = vadd.f32 0.0, %v1273
        %v1275 = vpop.f32.mrb[0].mxu0
        %1276 = vmatprep.mubr.bf16.mxu0 0
        %1277 = vmatmul.mubr.bf16.gmra.mrb[0].mxu0 %v1002
        %v1278 = vpop.f32.mrb[0].mxu0
        %v1279 = vadd.f32 0.0, %v1278
        %v1280 = vpop.f32.mrb[0].mxu0
        %v1281 = vpop.f32.mrb[0].mxu0
        %v1282 = vadd.f32 0.0, %v1281
        %v1283 = vpop.f32.mrb[0].mxu0
        %1284 = vmatprep.mubr.bf16.mxu0 0
        %1285 = vmatmul.mubr.bf16.gmra.mrb[0].mxu0 %v1005
        %v1286 = vpop.f32.mrb[0].mxu0
        %v1287 = vadd.f32 0.0, %v1286
        %v1288 = vpop.f32.mrb[0].mxu0
        %v1289 = vpop.f32.mrb[0].mxu0
        %v1290 = vadd.f32 0.0, %v1289
        %v1291 = vpop.f32.mrb[0].mxu0
        %1292 = vmatprep.mubr.bf16.mxu0 0
        %1293 = vmatmul.mubr.bf16.gmra.mrb[0].mxu0 %v1008
        %v1294 = vpop.f32.mrb[0].mxu0
        %v1295 = vadd.f32 0.0, %v1294
        %v1296 = vpop.f32.mrb[0].mxu0
        %v1297 = vpop.f32.mrb[0].mxu0
        %v1298 = vadd.f32 0.0, %v1297
        %v1299 = vpop.f32.mrb[0].mxu0
        %1300 = vmatprep.mubr.bf16.mxu0 0
        %1301 = vmatmul.mubr.bf16.gmra.mrb[0].mxu0 %v1011
        %v1302 = vpop.f32.mrb[0].mxu0
        %v1303 = vadd.f32 0.0, %v1302
        %v1304 = vpop.f32.mrb[0].mxu0
        %v1305 = vpop.f32.mrb[0].mxu0
        %v1306 = vadd.f32 0.0, %v1305
        %v1307 = vpop.f32.mrb[0].mxu0
        %1308 = vmatprep.mubr.bf16.mxu0 0
        %1309 = vmatmul.mubr.bf16.gmra.mrb[0].mxu0 %v1014
        %v1310 = vpop.f32.mrb[0].mxu0
        %v1311 = vadd.f32 0.0, %v1310
        %v1312 = vpop.f32.mrb[0].mxu0
        %v1313 = vpop.f32.mrb[0].mxu0
        %v1314 = vadd.f32 0.0, %v1313
        %v1315 = vpop.f32.mrb[0].mxu0
        %1316 = vmatprep.mubr.bf16.mxu0 0
        %1317 = vmatmul.mubr.bf16.gmra.mrb[0].mxu0 %v1017
        %v1318 = vpop.f32.mrb[0].mxu0
        %v1319 = vadd.f32 0.0, %v1318
        %v1320 = vpop.f32.mrb[0].mxu0
        %v1321 = vpop.f32.mrb[0].mxu0
        %v1322 = vadd.f32 0.0, %v1321
        %v1323 = vpop.f32.mrb[0].mxu0
        %1324 = vmatprep.mubr.bf16.mxu0 0
        %1325 = vmatmul.mubr.bf16.gmra.mrb[0].mxu0 %v1020
        %v1326 = vpop.f32.mrb[0].mxu0
        %v1327 = vadd.f32 0.0, %v1326
        %v1328 = vpop.f32.mrb[0].mxu0
        %v1329 = vpop.f32.mrb[0].mxu0
        %v1330 = vadd.f32 0.0, %v1329
        %v1331 = vpop.f32.mrb[0].mxu0
        %1332 = vmatprep.mubr.bf16.mxu0 0
        %1333 = vmatmul.mubr.bf16.gmra.mrb[0].mxu0 %v1023
        %v1334 = vpop.f32.mrb[0].mxu0
        %v1335 = vadd.f32 0.0, %v1334
        %v1336 = vpop.f32.mrb[0].mxu0
        %v1337 = vpop.f32.mrb[0].mxu0
        %v1338 = vadd.f32 0.0, %v1337
        %v1339 = vpop.f32.mrb[0].mxu0
        %1340 = vmatprep.mubr.bf16.mxu0 0
        %1341 = vmatmul.mubr.bf16.gmra.mrb[0].mxu0 %v1026
        %v1342 = vpop.f32.mrb[0].mxu0
        %v1343 = vadd.f32 0.0, %v1342
        %v1344 = vpop.f32.mrb[0].mxu0
        %v1345 = vpop.f32.mrb[0].mxu0
        %v1346 = vadd.f32 0.0, %v1345
        %v1347 = vpop.f32.mrb[0].mxu0
        %1348 = vmatprep.mubr.bf16.mxu0 0
        %1349 = vmatmul.mubr.bf16.gmra.mrb[0].mxu0 %v1029
        %v1350 = vpop.f32.mrb[0].mxu0
        %v1351 = vadd.f32 0.0, %v1350
        %v1352 = vpop.f32.mrb[0].mxu0
        %v1353 = vpop.f32.mrb[0].mxu0
        %v1354 = vadd.f32 0.0, %v1353
        %v1355 = vpop.f32.mrb[0].mxu0
        %1356 = vmatprep.mubr.bf16.mxu0 0
        %1357 = vmatmul.mubr.bf16.gmra.mrb[0].mxu0 %v1032
        %v1358 = vpop.f32.mrb[0].mxu0
        %v1359 = vadd.f32 0.0, %v1358
        %v1360 = vpop.f32.mrb[0].mxu0
        %v1361 = vpop.f32.mrb[0].mxu0
        %v1362 = vadd.f32 0.0, %v1361
        %v1363 = vpop.f32.mrb[0].mxu0
        %1364 = vmatprep.mubr.bf16.mxu0 0
        %1365 = vmatmul.mubr.bf16.gmra.mrb[0].mxu0 %v1035
        %v1366 = vpop.f32.mrb[0].mxu0
        %v1367 = vadd.f32 0.0, %v1366
        %v1368 = vpop.f32.mrb[0].mxu0
        %v1369 = vpop.f32.mrb[0].mxu0
        %v1370 = vadd.f32 0.0, %v1369
        %v1371 = vpop.f32.mrb[0].mxu0
        %1372 = vmatprep.mubr.bf16.mxu0 0
        %1373 = vmatmul.mubr.bf16.gmra.mrb[0].mxu0 %v1038
        %v1374 = vpop.f32.mrb[0].mxu0
        %v1375 = vadd.f32 0.0, %v1374
        %v1376 = vpop.f32.mrb[0].mxu0
        %v1377 = vpop.f32.mrb[0].mxu0
        %v1378 = vadd.f32 0.0, %v1377
        %v1379 = vpop.f32.mrb[0].mxu0
        %1380 = vmatprep.mubr.bf16.mxu0 0
        %1381 = vmatmul.mubr.bf16.gmra.mrb[0].mxu0 %v1041
        %v1382 = vpop.f32.mrb[0].mxu0
        %v1383 = vadd.f32 0.0, %v1382
        %v1384 = vpop.f32.mrb[0].mxu0
        %v1385 = vpop.f32.mrb[0].mxu0
        %v1386 = vadd.f32 0.0, %v1385
        %v1387 = vpop.f32.mrb[0].mxu0
        %1388 = vmatprep.mubr.bf16.mxu0 0
        %1389 = vmatmul.mubr.bf16.gmra.mrb[0].mxu0 %v1044
        %v1390 = vpop.f32.mrb[0].mxu0
        %v1391 = vadd.f32 0.0, %v1390
        %v1392 = vpop.f32.mrb[0].mxu0
        %v1393 = vpop.f32.mrb[0].mxu0
        %v1394 = vadd.f32 0.0, %v1393
        %v1395 = vpop.f32.mrb[0].mxu0
        %1396 = vmatprep.mubr.bf16.mxu0 0
        %1397 = vmatmul.mubr.bf16.gmra.mrb[0].mxu0 %v1047
        %v1398 = vpop.f32.mrb[0].mxu0
        %v1399 = vadd.f32 0.0, %v1398
        %v1400 = vpop.f32.mrb[0].mxu0
        %v1401 = vpop.f32.mrb[0].mxu0
        %v1402 = vadd.f32 0.0, %v1401
        %v1403 = vpop.f32.mrb[0].mxu0
        %1404 = vmatprep.mubr.bf16.mxu0 0
        %1405 = vmatmul.mubr.bf16.gmra.mrb[0].mxu0 %v1050
        %v1406 = vpop.f32.mrb[0].mxu0
        %v1407 = vadd.f32 0.0, %v1406
        %v1408 = vpop.f32.mrb[0].mxu0
        %v1409 = vpop.f32.mrb[0].mxu0
        %v1410 = vadd.f32 0.0, %v1409
        %v1411 = vpop.f32.mrb[0].mxu0
        %1412 = vmatprep.mubr.bf16.mxu0 0
        %1413 = vmatmul.mubr.bf16.gmra.mrb[0].mxu0 %v1053
        %v1414 = vpop.f32.mrb[0].mxu0
        %v1415 = vadd.f32 0.0, %v1414
        %v1416 = vpop.f32.mrb[0].mxu0
        %v1417 = vpop.f32.mrb[0].mxu0
        %v1418 = vadd.f32 0.0, %v1417
        %v1419 = vpop.f32.mrb[0].mxu0
        %1420 = vmatprep.mubr.bf16.mxu0 0
        %1421 = vmatmul.mubr.bf16.gmra.mrb[0].mxu0 %v1056
        %v1422 = vpop.f32.mrb[0].mxu0
        %v1423 = vadd.f32 0.0, %v1422
        %v1424 = vpop.f32.mrb[0].mxu0
        %v1425 = vpop.f32.mrb[0].mxu0
        %v1426 = vadd.f32 0.0, %v1425
        %v1427 = vpop.f32.mrb[0].mxu0
        %1428 = vmatprep.mubr.bf16.mxu0 0
        %1429 = vmatmul.mubr.bf16.gmra.mrb[0].mxu0 %v1059
        %v1430 = vpop.f32.mrb[0].mxu0
        %v1431 = vadd.f32 0.0, %v1430
        %v1432 = vpop.f32.mrb[0].mxu0
        %v1433 = vpop.f32.mrb[0].mxu0
        %v1434 = vadd.f32 0.0, %v1433
        %v1435 = vpop.f32.mrb[0].mxu0
        %1436 = vmatprep.mubr.bf16.mxu0 0
        %1437 = vmatmul.mubr.bf16.gmra.mrb[0].mxu0 %v1062
        %v1438 = vpop.f32.mrb[0].mxu0
        %v1439 = vadd.f32 0.0, %v1438
        %v1440 = vpop.f32.mrb[0].mxu0
        %v1441 = vpop.f32.mrb[0].mxu0
        %v1442 = vadd.f32 0.0, %v1441
        %v1443 = vpop.f32.mrb[0].mxu0
        %1444 = vmatprep.mubr.bf16.mxu0 0
        %1445 = vmatmul.mubr.bf16.gmra.mrb[0].mxu0 %v1065
        %v1446 = vpop.f32.mrb[0].mxu0
        %v1447 = vadd.f32 0.0, %v1446
        %v1448 = vpop.f32.mrb[0].mxu0
        %v1449 = vpop.f32.mrb[0].mxu0
        %v1450 = vadd.f32 0.0, %v1449
        %v1451 = vpop.f32.mrb[0].mxu0
        %1452 = vmatprep.mubr.bf16.mxu0 0
        %1453 = vmatmul.mubr.bf16.gmra.mrb[0].mxu0 %v1068
        %v1454 = vpop.f32.mrb[0].mxu0
        %v1455 = vadd.f32 0.0, %v1454
        %v1456 = vpop.f32.mrb[0].mxu0
        %v1457 = vpop.f32.mrb[0].mxu0
        %v1458 = vadd.f32 0.0, %v1457
        %v1459 = vpop.f32.mrb[0].mxu0
        %1460 = vmatprep.mubr.bf16.mxu0 0
        %1461 = vmatmul.mubr.bf16.gmra.mrb[0].mxu0 %v1071
        %v1462 = vpop.f32.mrb[0].mxu0
        %v1463 = vadd.f32 0.0, %v1462
        %v1464 = vpop.f32.mrb[0].mxu0
        %v1465 = vpop.f32.mrb[0].mxu0
        %v1466 = vadd.f32 0.0, %v1465
        %v1467 = vpop.f32.mrb[0].mxu0
        %1468 = vmatprep.mubr.bf16.mxu0 0
        %1469 = vmatmul.mubr.bf16.gmra.mrb[0].mxu0 %v1074
        %v1470 = vpop.f32.mrb[0].mxu0
        %v1471 = vadd.f32 0.0, %v1470
        %v1472 = vpop.f32.mrb[0].mxu0
        %v1473 = vpop.f32.mrb[0].mxu0
        %v1474 = vadd.f32 0.0, %v1473
        %v1475 = vpop.f32.mrb[0].mxu0
        %1476 = vmatprep.mubr.bf16.mxu0 0
        %1477 = vmatmul.mubr.bf16.gmra.mrb[0].mxu0 %v1077
        %v1478 = vpop.f32.mrb[0].mxu0
        %v1479 = vadd.f32 0.0, %v1478
        %v1480 = vpop.f32.mrb[0].mxu0
        %v1481 = vpop.f32.mrb[0].mxu0
        %v1482 = vadd.f32 0.0, %v1481
        %v1483 = vpop.f32.mrb[0].mxu0
        %1484 = vmatprep.mubr.bf16.mxu0 0
        %1485 = vmatmul.mubr.bf16.gmra.mrb[0].mxu0 %v1080
        %v1486 = vpop.f32.mrb[0].mxu0
        %v1487 = vadd.f32 0.0, %v1486
        %v1488 = vpop.f32.mrb[0].mxu0
        %v1489 = vpop.f32.mrb[0].mxu0
        %v1490 = vadd.f32 0.0, %v1489
        %v1491 = vpop.f32.mrb[0].mxu0
        %1492 = vmatprep.mubr.bf16.mxu0 0
        %1493 = vmatmul.mubr.bf16.gmra.mrb[0].mxu0 %v1083
        %v1494 = vpop.f32.mrb[0].mxu0
        %v1495 = vadd.f32 0.0, %v1494
        %v1496 = vpop.f32.mrb[0].mxu0
        %v1497 = vpop.f32.mrb[0].mxu0
        %v1498 = vadd.f32 0.0, %v1497
        %v1499 = vpop.f32.mrb[0].mxu0
        %1500 = vmatprep.mubr.bf16.mxu0 0
        %1501 = vmatmul.mubr.bf16.gmra.mrb[0].mxu0 %v1086
        %v1502 = vpop.f32.mrb[0].mxu0
        %v1503 = vadd.f32 0.0, %v1502
        %v1504 = vpop.f32.mrb[0].mxu0
        %v1505 = vpop.f32.mrb[0].mxu0
        %v1506 = vadd.f32 0.0, %v1505
        %v1507 = vpop.f32.mrb[0].mxu0
        %1508 = vmatprep.mubr.bf16.mxu0 0
        %1509 = vmatmul.mubr.bf16.gmra.mrb[0].mxu0 %v1089
        %v1510 = vpop.f32.mrb[0].mxu0
        %v1511 = vadd.f32 0.0, %v1510
        %v1512 = vpop.f32.mrb[0].mxu0
        %v1513 = vpop.f32.mrb[0].mxu0
        %v1514 = vadd.f32 0.0, %v1513
        %v1515 = vpop.f32.mrb[0].mxu0
        %1516 = vmatprep.mubr.bf16.mxu0 0
        %1517 = vmatmul.mubr.bf16.gmra.mrb[0].mxu0 %v1092
        %v1518 = vpop.f32.mrb[0].mxu0
        %v1519 = vadd.f32 0.0, %v1518
        %v1520 = vpop.f32.mrb[0].mxu0
        %v1521 = vpop.f32.mrb[0].mxu0
        %v1522 = vadd.f32 0.0, %v1521
        %v1523 = vpop.f32.mrb[0].mxu0
        %1524 = vmatprep.mubr.bf16.mxu0 0
        %1525 = vmatmul.mubr.bf16.gmra.mrb[0].mxu0 %v1095
        %v1526 = vpop.f32.mrb[0].mxu0
        %v1527 = vadd.f32 0.0, %v1526
        %v1528 = vpop.f32.mrb[0].mxu0
        %v1529 = vpop.f32.mrb[0].mxu0
        %v1530 = vadd.f32 0.0, %v1529
        %v1531 = vpop.f32.mrb[0].mxu0
        %1532 = vmatprep.mubr.bf16.mxu0 0
        %1533 = vmatmul.mubr.bf16.gmra.mrb[0].mxu0 %v1098
        %v1534 = vpop.f32.mrb[0].mxu0
        %v1535 = vadd.f32 0.0, %v1534
        %v1536 = vpop.f32.mrb[0].mxu0
        %v1537 = vpop.f32.mrb[0].mxu0
        %v1538 = vadd.f32 0.0, %v1537
        %v1539 = vpop.f32.mrb[0].mxu0
        %1540 = vmatprep.mubr.bf16.mxu0 0
        %1541 = vmatmul.mubr.bf16.gmra.mrb[0].mxu0 %v1101
        %v1542 = vpop.f32.mrb[0].mxu0
        %v1543 = vadd.f32 0.0, %v1542
        %v1544 = vpop.f32.mrb[0].mxu0
        %v1545 = vpop.f32.mrb[0].mxu0
        %v1546 = vadd.f32 0.0, %v1545
        %v1547 = vpop.f32.mrb[0].mxu0
        %1548 = vmatprep.mubr.bf16.mxu0 0
        %1549 = vmatmul.mubr.bf16.gmra.mrb[0].mxu0 %v1104
        %v1550 = vpop.f32.mrb[0].mxu0
        %v1551 = vadd.f32 0.0, %v1550
        %v1552 = vpop.f32.mrb[0].mxu0
        %v1553 = vpop.f32.mrb[0].mxu0
        %v1554 = vadd.f32 0.0, %v1553
        %v1555 = vpop.f32.mrb[0].mxu0
        %1556 = vmatprep.mubr.bf16.mxu0 0
        %1557 = vmatmul.mubr.bf16.gmra.mrb[0].mxu0 %v1107
        %v1558 = vpop.f32.mrb[0].mxu0
        %v1559 = vadd.f32 0.0, %v1558
        %v1560 = vpop.f32.mrb[0].mxu0
        %v1561 = vpop.f32.mrb[0].mxu0
        %v1562 = vadd.f32 0.0, %v1561
        %v1563 = vpop.f32.mrb[0].mxu0
        %1564 = vmatprep.mubr.bf16.mxu0 0
        %1565 = vmatmul.mubr.bf16.gmra.mrb[0].mxu0 %v1110
        %v1566 = vpop.f32.mrb[0].mxu0
        %v1567 = vadd.f32 0.0, %v1566
        %v1568 = vpop.f32.mrb[0].mxu0
        %v1569 = vpop.f32.mrb[0].mxu0
        %v1570 = vadd.f32 0.0, %v1569
        %v1571 = vpop.f32.mrb[0].mxu0
        %1572 = vmatprep.mubr.bf16.mxu0 0
        %1573 = vmatmul.mubr.bf16.gmra.mrb[0].mxu0 %v1113
        %v1574 = vpop.f32.mrb[0].mxu0
        %v1575 = vadd.f32 0.0, %v1574
        %v1576 = vpop.f32.mrb[0].mxu0
        %v1577 = vpop.f32.mrb[0].mxu0
        %v1578 = vadd.f32 0.0, %v1577
        %v1579 = vpop.f32.mrb[0].mxu0
        %1580 = vmatprep.mubr.bf16.mxu0 0
        %1581 = vmatmul.mubr.bf16.gmra.mrb[0].mxu0 %v1116
        %v1582 = vpop.f32.mrb[0].mxu0
        %v1583 = vpop.f32.mrb[0].mxu0
        %v1584 = vpop.f32.mrb[0].mxu0
        %v1585 = vpop.f32.mrb[0].mxu0
        %1586 = vmatprep.mubr.bf16.mxu0 0
        %1587 = vmatmul.mubr.bf16.gmra.mrb[0].mxu0 %v1119
        %v1588 = vpop.f32.mrb[0].mxu0
        %v1589 = vadd.f32 0.0, %v1588
        %v1590 = vpop.f32.mrb[0].mxu0
        %v1591 = vpop.f32.mrb[0].mxu0
        %v1592 = vadd.f32 0.0, %v1591
        %v1593 = vpop.f32.mrb[0].mxu0
        %1594 = vmatprep.mubr.bf16.mxu0 0
        %1595 = vmatmul.mubr.bf16.gmra.mrb[0].mxu0 %v1122
        %v1596 = vpop.f32.mrb[0].mxu0
        %v1597 = vadd.f32 0.0, %v1596
        %v1598 = vpop.f32.mrb[0].mxu0
        %v1599 = vpop.f32.mrb[0].mxu0
        %v1600 = vadd.f32 0.0, %v1599
        %v1601 = vpop.f32.mrb[0].mxu0
        %1602 = vmatprep.mubr.bf16.mxu0 0
        %1603 = vmatmul.mubr.bf16.gmra.mrb[0].mxu0 %v1125
        %v1604 = vpop.f32.mrb[0].mxu0
        %v1605 = vadd.f32 0.0, %v1604
        %v1606 = vpop.f32.mrb[0].mxu0
        %v1607 = vpop.f32.mrb[0].mxu0
        %v1608 = vadd.f32 0.0, %v1607
        %v1609 = vpop.f32.mrb[0].mxu0
        %1610 = vmatprep.mubr.bf16.mxu0 0
        %1611 = vmatmul.mubr.bf16.gmra.mrb[0].mxu0 %v1128
        %v1612 = vpop.f32.mrb[0].mxu0
        %v1613 = vadd.f32 0.0, %v1612
        %v1614 = vpop.f32.mrb[0].mxu0
        %v1615 = vpop.f32.mrb[0].mxu0
        %v1616 = vadd.f32 0.0, %v1615
        %v1617 = vpop.f32.mrb[0].mxu0
        %1618 = vmatprep.mubr.bf16.mxu0 0
        %1619 = vmatmul.mubr.bf16.gmra.mrb[0].mxu0 %v1131
        %v1620 = vpop.f32.mrb[0].mxu0
        %v1621 = vadd.f32 0.0, %v1620
        %v1622 = vpop.f32.mrb[0].mxu0
        %v1623 = vpop.f32.mrb[0].mxu0
        %v1624 = vadd.f32 0.0, %v1623
        %v1625 = vpop.f32.mrb[0].mxu0
        %1626 = vmatprep.mubr.bf16.mxu0 0
        %1627 = vmatmul.mubr.bf16.gmra.mrb[0].mxu0 %v1134
        %v1628 = vpop.f32.mrb[0].mxu0
        %v1629 = vadd.f32 0.0, %v1628
        %v1630 = vpop.f32.mrb[0].mxu0
        %v1631 = vpop.f32.mrb[0].mxu0
        %v1632 = vadd.f32 0.0, %v1631
        %v1633 = vpop.f32.mrb[0].mxu0
        %1634 = vmatprep.mubr.bf16.mxu0 0
        %1635 = vmatmul.mubr.bf16.gmra.mrb[0].mxu0 %v1137
        %v1636 = vpop.f32.mrb[0].mxu0
        %v1637 = vadd.f32 0.0, %v1636
        %v1638 = vpop.f32.mrb[0].mxu0
        %v1639 = vpop.f32.mrb[0].mxu0
        %v1640 = vadd.f32 0.0, %v1639
        %v1641 = vpop.f32.mrb[0].mxu0
        %1642 = vmatprep.mubr.bf16.mxu0 0
        %1643 = vmatmul.mubr.bf16.gmra.mrb[0].mxu0 %v1140
        %v1644 = vpop.f32.mrb[0].mxu0
        %v1645 = vadd.f32 0.0, %v1644
        %v1646 = vpop.f32.mrb[0].mxu0
        %v1647 = vpop.f32.mrb[0].mxu0
        %v1648 = vadd.f32 0.0, %v1647
        %v1649 = vpop.f32.mrb[0].mxu0
        %1650 = vmatprep.mubr.bf16.mxu0 0
        %1651 = vmatmul.mubr.bf16.gmra.mrb[0].mxu0 %v1143
        %v1652 = vpop.f32.mrb[0].mxu0
        %v1653 = vadd.f32 0.0, %v1652
        %v1654 = vpop.f32.mrb[0].mxu0
        %v1655 = vpop.f32.mrb[0].mxu0
        %v1656 = vadd.f32 0.0, %v1655
        %v1657 = vpop.f32.mrb[0].mxu0
        %1658 = vmatprep.mubr.bf16.mxu0 0
        %1659 = vmatmul.mubr.bf16.gmra.mrb[0].mxu0 %v1146
        %v1660 = vpop.f32.mrb[0].mxu0
        %v1661 = vadd.f32 0.0, %v1660
        %v1662 = vpop.f32.mrb[0].mxu0
        %v1663 = vpop.f32.mrb[0].mxu0
        %v1664 = vadd.f32 0.0, %v1663
        %v1665 = vpop.f32.mrb[0].mxu0
        %1666 = vmatprep.mubr.bf16.mxu0 0
        %1667 = vmatmul.mubr.bf16.gmra.mrb[0].mxu0 %v1149
        %v1668 = vpop.f32.mrb[0].mxu0
        %v1669 = vadd.f32 0.0, %v1668
        %v1670 = vpop.f32.mrb[0].mxu0
        %v1671 = vpop.f32.mrb[0].mxu0
        %v1672 = vadd.f32 0.0, %v1671
        %v1673 = vpop.f32.mrb[0].mxu0
        %1674 = vmatprep.mubr.bf16.mxu0 0
        %1675 = vmatmul.mubr.bf16.gmra.mrb[0].mxu0 %v1152
        %v1676 = vpop.f32.mrb[0].mxu0
        %v1677 = vadd.f32 0.0, %v1676
        %v1678 = vpop.f32.mrb[0].mxu0
        %v1679 = vpop.f32.mrb[0].mxu0
        %v1680 = vadd.f32 0.0, %v1679
        %v1681 = vpop.f32.mrb[0].mxu0
        %1682 = vmatprep.mubr.bf16.mxu0 0
        %1683 = vmatmul.mubr.bf16.gmra.mrb[0].mxu0 %v1155
        %v1684 = vpop.f32.mrb[0].mxu0
        %v1685 = vadd.f32 0.0, %v1684
        %v1686 = vpop.f32.mrb[0].mxu0
        %v1687 = vpop.f32.mrb[0].mxu0
        %v1688 = vadd.f32 0.0, %v1687
        %v1689 = vpop.f32.mrb[0].mxu0
        %1690 = vmatprep.mubr.bf16.mxu0 0
        %1691 = vmatmul.mubr.bf16.gmra.mrb[0].mxu0 %v1158
        %v1692 = vpop.f32.mrb[0].mxu0
        %v1693 = vadd.f32 0.0, %v1692
        %v1694 = vpop.f32.mrb[0].mxu0
        %v1695 = vpop.f32.mrb[0].mxu0
        %v1696 = vadd.f32 0.0, %v1695
        %v1697 = vpop.f32.mrb[0].mxu0
        %1698 = vmatprep.mubr.bf16.mxu0 0
        %1699 = vmatmul.mubr.bf16.gmra.mrb[0].mxu0 %v1161
        %v1700 = vpop.f32.mrb[0].mxu0
        %v1701 = vadd.f32 0.0, %v1700
        %v1702 = vpop.f32.mrb[0].mxu0
        %v1703 = vpop.f32.mrb[0].mxu0
        %v1704 = vadd.f32 0.0, %v1703
        %v1705 = vpop.f32.mrb[0].mxu0
        %1706 = vmatprep.mubr.bf16.mxu0 0
        %1707 = vmatmul.mubr.bf16.gmra.mrb[0].mxu0 %v1164
        %v1708 = vpop.f32.mrb[0].mxu0
        %v1709 = vpop.f32.mrb[0].mxu0
        %v1710 = vpop.f32.mrb[0].mxu0
        %v1711 = vpop.f32.mrb[0].mxu0
        %1712 = vdwg.mxu0
        %v1713 = vmax.f32 %v1207, 0.0
        %v1714 = vmax.f32 %v1210, 0.0
        %v1715 = vmax.f32 %v1215, 0.0
        %v1716 = vmax.f32 %v1218, 0.0
        %v1717 = vmax.f32 %v1223, 0.0
        %v1718 = vmax.f32 %v1226, 0.0
        %v1719 = vmax.f32 %v1231, 0.0
        %v1720 = vmax.f32 %v1234, 0.0
        %v1721 = vmax.f32 %v1239, 0.0
        %v1722 = vmax.f32 %v1242, 0.0
        %v1723 = vmax.f32 %v1247, 0.0
        %v1724 = vmax.f32 %v1250, 0.0
        %v1725 = vmax.f32 %v1255, 0.0
        %v1726 = vmax.f32 %v1258, 0.0
        %v1727 = vmax.f32 %v1263, 0.0
        %v1728 = vmax.f32 %v1266, 0.0
        %v1729 = vmax.f32 %v1271, 0.0
        %v1730 = vmax.f32 %v1274, 0.0
        %v1731 = vmax.f32 %v1279, 0.0
        %v1732 = vmax.f32 %v1282, 0.0
        %v1733 = vmax.f32 %v1287, 0.0
        %v1734 = vmax.f32 %v1290, 0.0
        %v1735 = vmax.f32 %v1295, 0.0
        %v1736 = vmax.f32 %v1298, 0.0
        %v1737 = vmax.f32 %v1303, 0.0
        %v1738 = vmax.f32 %v1306, 0.0
        %v1739 = vmax.f32 %v1311, 0.0
        %v1740 = vmax.f32 %v1314, 0.0
        %v1741 = vmax.f32 %v1319, 0.0
        %v1742 = vmax.f32 %v1322, 0.0
        %v1743 = vmax.f32 %v1327, 0.0
        %v1744 = vmax.f32 %v1330, 0.0
        %v1745 = vmax.f32 %v1335, 0.0
        %v1746 = vmax.f32 %v1338, 0.0
        %v1747 = vmax.f32 %v1343, 0.0
        %v1748 = vmax.f32 %v1346, 0.0
        %v1749 = vmax.f32 %v1351, 0.0
        %v1750 = vmax.f32 %v1354, 0.0
        %v1751 = vmax.f32 %v1359, 0.0
        %v1752 = vmax.f32 %v1362, 0.0
        %v1753 = vmax.f32 %v1367, 0.0
        %v1754 = vmax.f32 %v1370, 0.0
        %v1755 = vmax.f32 %v1375, 0.0
        %v1756 = vmax.f32 %v1378, 0.0
        %v1757 = vmax.f32 %v1383, 0.0
        %v1758 = vmax.f32 %v1386, 0.0
        %v1759 = vmax.f32 %v1391, 0.0
        %v1760 = vmax.f32 %v1394, 0.0
        %v1761 = vmax.f32 %v1399, 0.0
        %v1762 = vmax.f32 %v1402, 0.0
        %v1763 = vmax.f32 %v1407, 0.0
        %v1764 = vmax.f32 %v1410, 0.0
        %v1765 = vmax.f32 %v1415, 0.0
        %v1766 = vmax.f32 %v1418, 0.0
        %v1767 = vmax.f32 %v1423, 0.0
        %v1768 = vmax.f32 %v1426, 0.0
        %v1769 = vmax.f32 %v1431, 0.0
        %v1770 = vmax.f32 %v1434, 0.0
        %v1771 = vmax.f32 %v1439, 0.0
        %v1772 = vmax.f32 %v1442, 0.0
        %v1773 = vmax.f32 %v1447, 0.0
        %v1774 = vmax.f32 %v1450, 0.0
        %v1775 = vmax.f32 %v1455, 0.0
        %v1776 = vmax.f32 %v1458, 0.0
        %v1777 = vmax.f32 %v1463, 0.0
        %v1778 = vmax.f32 %v1466, 0.0
        %v1779 = vmax.f32 %v1471, 0.0
        %v1780 = vmax.f32 %v1474, 0.0
        %v1781 = vmax.f32 %v1479, 0.0
        %v1782 = vmax.f32 %v1482, 0.0
        %v1783 = vmax.f32 %v1487, 0.0
        %v1784 = vmax.f32 %v1490, 0.0
        %v1785 = vmax.f32 %v1495, 0.0
        %v1786 = vmax.f32 %v1498, 0.0
        %v1787 = vmax.f32 %v1503, 0.0
        %v1788 = vmax.f32 %v1506, 0.0
        %v1789 = vmax.f32 %v1511, 0.0
        %v1790 = vmax.f32 %v1514, 0.0
        %v1791 = vmax.f32 %v1519, 0.0
        %v1792 = vmax.f32 %v1522, 0.0
        %v1793 = vmax.f32 %v1527, 0.0
        %v1794 = vmax.f32 %v1530, 0.0
        %v1795 = vmax.f32 %v1535, 0.0
        %v1796 = vmax.f32 %v1538, 0.0
        %v1797 = vmax.f32 %v1543, 0.0
        %v1798 = vmax.f32 %v1546, 0.0
        %v1799 = vmax.f32 %v1551, 0.0
        %v1800 = vmax.f32 %v1554, 0.0
        %v1801 = vmax.f32 %v1559, 0.0
        %v1802 = vmax.f32 %v1562, 0.0
        %v1803 = vmax.f32 %v1567, 0.0
        %v1804 = vmax.f32 %v1570, 0.0
        %v1805 = vmax.f32 %v1575, 0.0
        %v1806 = vmax.f32 %v1578, 0.0
        %v1807 = vmax.f32 %v1589, 0.0
        %v1808 = vmax.f32 %v1592, 0.0
        %v1809 = vmax.f32 %v1597, 0.0
        %v1810 = vmax.f32 %v1600, 0.0
        %v1811 = vmax.f32 %v1605, 0.0
        %v1812 = vmax.f32 %v1608, 0.0
        %v1813 = vmax.f32 %v1613, 0.0
        %v1814 = vmax.f32 %v1616, 0.0
        %v1815 = vmax.f32 %v1621, 0.0
        %v1816 = vmax.f32 %v1624, 0.0
        %v1817 = vmax.f32 %v1629, 0.0
        %v1818 = vmax.f32 %v1632, 0.0
        %v1819 = vmax.f32 %v1637, 0.0
        %v1820 = vmax.f32 %v1640, 0.0
        %v1821 = vmax.f32 %v1645, 0.0
        %v1822 = vmax.f32 %v1648, 0.0
        %v1823 = vmax.f32 %v1653, 0.0
        %v1824 = vmax.f32 %v1656, 0.0
        %v1825 = vmax.f32 %v1661, 0.0
        %v1826 = vmax.f32 %v1664, 0.0
        %v1827 = vmax.f32 %v1669, 0.0
        %v1828 = vmax.f32 %v1672, 0.0
        %v1829 = vmax.f32 %v1677, 0.0
        %v1830 = vmax.f32 %v1680, 0.0
        %v1831 = vmax.f32 %v1685, 0.0
        %v1832 = vmax.f32 %v1688, 0.0
        %v1833 = vmax.f32 %v1693, 0.0
        %v1834 = vmax.f32 %v1696, 0.0
        %v1835 = vmax.f32 %v1701, 0.0
        %v1836 = vmax.f32 %v1704, 0.0
        %v1837 = vmax.f32 %v1713, %v1745
        %v1838 = vmax.f32 %v1714, %v1746
        %v1839 = vmax.f32 %v1715, %v1747
        %v1840 = vmax.f32 %v1716, %v1748
        %v1841 = vmax.f32 %v1717, %v1749
        %v1842 = vmax.f32 %v1718, %v1750
        %v1843 = vmax.f32 %v1719, %v1751
        %v1844 = vmax.f32 %v1720, %v1752
        %v1845 = vmax.f32 %v1721, %v1753
        %v1846 = vmax.f32 %v1722, %v1754
        %v1847 = vmax.f32 %v1723, %v1755
        %v1848 = vmax.f32 %v1724, %v1756
        %v1849 = vmax.f32 %v1725, %v1757
        %v1850 = vmax.f32 %v1726, %v1758
        %v1851 = vmax.f32 %v1727, %v1759
        %v1852 = vmax.f32 %v1728, %v1760
        %v1853 = vmax.f32 %v1729, %v1761
        %v1854 = vmax.f32 %v1730, %v1762
        %v1855 = vmax.f32 %v1731, %v1763
        %v1856 = vmax.f32 %v1732, %v1764
        %v1857 = vmax.f32 %v1733, %v1765
        %v1858 = vmax.f32 %v1734, %v1766
        %v1859 = vmax.f32 %v1735, %v1767
        %v1860 = vmax.f32 %v1736, %v1768
        %v1861 = vmax.f32 %v1737, %v1769
        %v1862 = vmax.f32 %v1738, %v1770
        %v1863 = vmax.f32 %v1739, %v1771
        %v1864 = vmax.f32 %v1740, %v1772
        %v1865 = vmax.f32 %v1741, %v1773
        %v1866 = vmax.f32 %v1742, %v1774
        %vm1897 = vcmask 1046528
        %v1898 = vrot.slane %v1713, 1
        %v1899 = vrot.slane %v1714, 1
        %v1900 = vsel %vm1897, %v1898, %v1899
        %v1901 = vrot.slane %v1715, 1
        %v1902 = vrot.slane %v1716, 1
        %v1903 = vsel %vm1897, %v1901, %v1902
        %v1904 = vrot.slane %v1717, 1
        %v1905 = vrot.slane %v1718, 1
        %v1906 = vsel %vm1897, %v1904, %v1905
        %v1907 = vrot.slane %v1719, 1
        %v1908 = vrot.slane %v1720, 1
        %v1909 = vsel %vm1897, %v1907, %v1908
        %v1910 = vrot.slane %v1721, 1
        %v1911 = vrot.slane %v1722, 1
        %v1912 = vsel %vm1897, %v1910, %v1911
        %v1913 = vrot.slane %v1723, 1
        %v1914 = vrot.slane %v1724, 1
        %v1915 = vsel %vm1897, %v1913, %v1914
        %v1916 = vrot.slane %v1725, 1
        %v1917 = vrot.slane %v1726, 1
        %v1918 = vsel %vm1897, %v1916, %v1917
        %v1919 = vrot.slane %v1727, 1
        %v1920 = vrot.slane %v1728, 1
        %v1921 = vsel %vm1897, %v1919, %v1920
        %v1922 = vrot.slane %v1729, 1
        %v1923 = vrot.slane %v1730, 1
        %v1924 = vsel %vm1897, %v1922, %v1923
        %v1925 = vrot.slane %v1731, 1
        %v1926 = vrot.slane %v1732, 1
        %v1927 = vsel %vm1897, %v1925, %v1926
        %v1928 = vrot.slane %v1733, 1
        %v1929 = vrot.slane %v1734, 1
        %v1930 = vsel %vm1897, %v1928, %v1929
        %v1931 = vrot.slane %v1735, 1
        %v1932 = vrot.slane %v1736, 1
        %v1933 = vsel %vm1897, %v1931, %v1932
        %v1934 = vrot.slane %v1737, 1
        %v1935 = vrot.slane %v1738, 1
        %v1936 = vsel %vm1897, %v1934, %v1935
        %v1937 = vrot.slane %v1739, 1
        %v1938 = vrot.slane %v1740, 1
        %v1939 = vsel %vm1897, %v1937, %v1938
        %v1940 = vrot.slane %v1741, 1
        %v1941 = vrot.slane %v1742, 1
        %v1942 = vsel %vm1897, %v1940, %v1941
        %v1973 = vmax.f32 %v1837, %v1900
        %v1974 = vmax.f32 %v1838, %v1899
        %v1975 = vmax.f32 %v1839, %v1903
        %v1976 = vmax.f32 %v1840, %v1902
        %v1977 = vmax.f32 %v1841, %v1906
        %v1978 = vmax.f32 %v1842, %v1905
        %v1979 = vmax.f32 %v1843, %v1909
        %v1980 = vmax.f32 %v1844, %v1908
        %v1981 = vmax.f32 %v1845, %v1912
        %v1982 = vmax.f32 %v1846, %v1911
        %v1983 = vmax.f32 %v1847, %v1915
        %v1984 = vmax.f32 %v1848, %v1914
        %v1985 = vmax.f32 %v1849, %v1918
        %v1986 = vmax.f32 %v1850, %v1917
        %v1987 = vmax.f32 %v1851, %v1921
        %v1988 = vmax.f32 %v1852, %v1920
        %v1989 = vmax.f32 %v1853, %v1924
        %v1990 = vmax.f32 %v1854, %v1923
        %v1991 = vmax.f32 %v1855, %v1927
        %v1992 = vmax.f32 %v1856, %v1926
        %v1993 = vmax.f32 %v1857, %v1930
        %v1994 = vmax.f32 %v1858, %v1929
        %v1995 = vmax.f32 %v1859, %v1933
        %v1996 = vmax.f32 %v1860, %v1932
        %v1997 = vmax.f32 %v1861, %v1936
        %v1998 = vmax.f32 %v1862, %v1935
        %v1999 = vmax.f32 %v1863, %v1939
        %v2000 = vmax.f32 %v1864, %v1938
        %v2001 = vmax.f32 %v1865, %v1942
        %v2002 = vmax.f32 %v1866, %v1941
        %v2003 = vmax.f32 %v1973, %v1777
        %v2004 = vmax.f32 %v1974, %v1778
        %v2005 = vmax.f32 %v1975, %v1779
        %v2006 = vmax.f32 %v1976, %v1780
        %v2007 = vmax.f32 %v1977, %v1781
        %v2008 = vmax.f32 %v1978, %v1782
        %v2009 = vmax.f32 %v1979, %v1783
        %v2010 = vmax.f32 %v1980, %v1784
        %v2011 = vmax.f32 %v1981, %v1785
        %v2012 = vmax.f32 %v1982, %v1786
        %v2013 = vmax.f32 %v1983, %v1787
        %v2014 = vmax.f32 %v1984, %v1788
        %v2015 = vmax.f32 %v1985, %v1789
        %v2016 = vmax.f32 %v1986, %v1790
        %v2017 = vmax.f32 %v1987, %v1791
        %v2018 = vmax.f32 %v1988, %v1792
        %v2019 = vmax.f32 %v1989, %v1793
        %v2020 = vmax.f32 %v1990, %v1794
        %v2021 = vmax.f32 %v1991, %v1795
        %v2022 = vmax.f32 %v1992, %v1796
        %v2023 = vmax.f32 %v1993, %v1797
        %v2024 = vmax.f32 %v1994, %v1798
        %v2025 = vmax.f32 %v1995, %v1799
        %v2026 = vmax.f32 %v1996, %v1800
        %v2027 = vmax.f32 %v1997, %v1801
        %v2028 = vmax.f32 %v1998, %v1802
        %v2029 = vmax.f32 %v1999, %v1803
        %v2030 = vmax.f32 %v2000, %v1804
        %v2031 = vmax.f32 %v2001, %v1805
        %v2032 = vmax.f32 %v2002, %v1806
        %v2033 = vmax.f32 %v2003, %v1807
        %v2034 = vmax.f32 %v2004, %v1808
        %v2035 = vmax.f32 %v2005, %v1809
        %v2036 = vmax.f32 %v2006, %v1810
        %v2037 = vmax.f32 %v2007, %v1811
        %v2038 = vmax.f32 %v2008, %v1812
        %v2039 = vmax.f32 %v2009, %v1813
        %v2040 = vmax.f32 %v2010, %v1814
        %v2041 = vmax.f32 %v2011, %v1815
        %v2042 = vmax.f32 %v2012, %v1816
        %v2043 = vmax.f32 %v2013, %v1817
        %v2044 = vmax.f32 %v2014, %v1818
        %v2045 = vmax.f32 %v2015, %v1819
        %v2046 = vmax.f32 %v2016, %v1820
        %v2047 = vmax.f32 %v2017, %v1821
        %v2048 = vmax.f32 %v2018, %v1822
        %v2049 = vmax.f32 %v2019, %v1823
        %v2050 = vmax.f32 %v2020, %v1824
        %v2051 = vmax.f32 %v2021, %v1825
        %v2052 = vmax.f32 %v2022, %v1826
        %v2053 = vmax.f32 %v2023, %v1827
        %v2054 = vmax.f32 %v2024, %v1828
        %v2055 = vmax.f32 %v2025, %v1829
        %v2056 = vmax.f32 %v2026, %v1830
        %v2057 = vmax.f32 %v2027, %v1831
        %v2058 = vmax.f32 %v2028, %v1832
        %v2059 = vmax.f32 %v2029, %v1833
        %v2060 = vmax.f32 %v2030, %v1834
        %v2061 = vmax.f32 %v2031, %v1835
        %v2062 = vmax.f32 %v2032, %v1836
        %v2093 = vrot.slane %v1777, 1
        %v2094 = vrot.slane %v1778, 1
        %v2095 = vsel %vm1897, %v2093, %v2094
        %v2096 = vrot.slane %v1779, 1
        %v2097 = vrot.slane %v1780, 1
        %v2098 = vsel %vm1897, %v2096, %v2097
        %v2099 = vrot.slane %v1781, 1
        %v2100 = vrot.slane %v1782, 1
        %v2101 = vsel %vm1897, %v2099, %v2100
        %v2102 = vrot.slane %v1783, 1
        %v2103 = vrot.slane %v1784, 1
        %v2104 = vsel %vm1897, %v2102, %v2103
        %v2105 = vrot.slane %v1785, 1
        %v2106 = vrot.slane %v1786, 1
        %v2107 = vsel %vm1897, %v2105, %v2106
        %v2108 = vrot.slane %v1787, 1
        %v2109 = vrot.slane %v1788, 1
        %v2110 = vsel %vm1897, %v2108, %v2109
        %v2111 = vrot.slane %v1789, 1
        %v2112 = vrot.slane %v1790, 1
        %v2113 = vsel %vm1897, %v2111, %v2112
        %v2114 = vrot.slane %v1791, 1
        %v2115 = vrot.slane %v1792, 1
        %v2116 = vsel %vm1897, %v2114, %v2115
        %v2117 = vrot.slane %v1793, 1
        %v2118 = vrot.slane %v1794, 1
        %v2119 = vsel %vm1897, %v2117, %v2118
        %v2120 = vrot.slane %v1795, 1
        %v2121 = vrot.slane %v1796, 1
        %v2122 = vsel %vm1897, %v2120, %v2121
        %v2123 = vrot.slane %v1797, 1
        %v2124 = vrot.slane %v1798, 1
        %v2125 = vsel %vm1897, %v2123, %v2124
        %v2126 = vrot.slane %v1799, 1
        %v2127 = vrot.slane %v1800, 1
        %v2128 = vsel %vm1897, %v2126, %v2127
        %v2129 = vrot.slane %v1801, 1
        %v2130 = vrot.slane %v1802, 1
        %v2131 = vsel %vm1897, %v2129, %v2130
        %v2132 = vrot.slane %v1803, 1
        %v2133 = vrot.slane %v1804, 1
        %v2134 = vsel %vm1897, %v2132, %v2133
        %v2135 = vrot.slane %v1805, 1
        %v2136 = vrot.slane %v1806, 1
        %v2137 = vsel %vm1897, %v2135, %v2136
        %v2168 = vmax.f32 %v2033, %v2095
        %v2169 = vmax.f32 %v2034, %v2094
        %v2170 = vmax.f32 %v2035, %v2098
        %v2171 = vmax.f32 %v2036, %v2097
        %v2172 = vmax.f32 %v2037, %v2101
        %v2173 = vmax.f32 %v2038, %v2100
        %v2174 = vmax.f32 %v2039, %v2104
        %v2175 = vmax.f32 %v2040, %v2103
        %v2176 = vmax.f32 %v2041, %v2107
        %v2177 = vmax.f32 %v2042, %v2106
        %v2178 = vmax.f32 %v2043, %v2110
        %v2179 = vmax.f32 %v2044, %v2109
        %v2180 = vmax.f32 %v2045, %v2113
        %v2181 = vmax.f32 %v2046, %v2112
        %v2182 = vmax.f32 %v2047, %v2116
        %v2183 = vmax.f32 %v2048, %v2115
        %v2184 = vmax.f32 %v2049, %v2119
        %v2185 = vmax.f32 %v2050, %v2118
        %v2186 = vmax.f32 %v2051, %v2122
        %v2187 = vmax.f32 %v2052, %v2121
        %v2188 = vmax.f32 %v2053, %v2125
        %v2189 = vmax.f32 %v2054, %v2124
        %v2190 = vmax.f32 %v2055, %v2128
        %v2191 = vmax.f32 %v2056, %v2127
        %v2192 = vmax.f32 %v2057, %v2131
        %v2193 = vmax.f32 %v2058, %v2130
        %v2194 = vmax.f32 %v2059, %v2134
        %v2195 = vmax.f32 %v2060, %v2133
        %v2196 = vmax.f32 %v2061, %v2137
        %v2197 = vmax.f32 %v2062, %v2136
        %v2198 = vmax.f32 %v2168, %v1715
        %v2199 = vmax.f32 %v2169, %v1716
        %v2200 = vmax.f32 %v2170, %v1717
        %v2201 = vmax.f32 %v2171, %v1718
        %v2202 = vmax.f32 %v2172, %v1719
        %v2203 = vmax.f32 %v2173, %v1720
        %v2204 = vmax.f32 %v2174, %v1721
        %v2205 = vmax.f32 %v2175, %v1722
        %v2206 = vmax.f32 %v2176, %v1723
        %v2207 = vmax.f32 %v2177, %v1724
        %v2208 = vmax.f32 %v2178, %v1725
        %v2209 = vmax.f32 %v2179, %v1726
        %v2210 = vmax.f32 %v2180, %v1727
        %v2211 = vmax.f32 %v2181, %v1728
        %v2212 = vmax.f32 %v2182, %v1729
        %v2213 = vmax.f32 %v2183, %v1730
        %v2214 = vmax.f32 %v2184, %v1731
        %v2215 = vmax.f32 %v2185, %v1732
        %v2216 = vmax.f32 %v2186, %v1733
        %v2217 = vmax.f32 %v2187, %v1734
        %v2218 = vmax.f32 %v2188, %v1735
        %v2219 = vmax.f32 %v2189, %v1736
        %v2220 = vmax.f32 %v2190, %v1737
        %v2221 = vmax.f32 %v2191, %v1738
        %v2222 = vmax.f32 %v2192, %v1739
        %v2223 = vmax.f32 %v2193, %v1740
        %v2224 = vmax.f32 %v2194, %v1741
        %v2225 = vmax.f32 %v2195, %v1742
        %v2226 = vmax.f32 %v2196, %v1743
        %v2227 = vmax.f32 %v2197, %v1744
        %v2228 = vmax.f32 %v2198, %v1747
        %v2229 = vmax.f32 %v2199, %v1748
        %v2230 = vmax.f32 %v2200, %v1749
        %v2231 = vmax.f32 %v2201, %v1750
        %v2232 = vmax.f32 %v2202, %v1751
        %v2233 = vmax.f32 %v2203, %v1752
        %v2234 = vmax.f32 %v2204, %v1753
        %v2235 = vmax.f32 %v2205, %v1754
        %v2236 = vmax.f32 %v2206, %v1755
        %v2237 = vmax.f32 %v2207, %v1756
        %v2238 = vmax.f32 %v2208, %v1757
        %v2239 = vmax.f32 %v2209, %v1758
        %v2240 = vmax.f32 %v2210, %v1759
        %v2241 = vmax.f32 %v2211, %v1760
        %v2242 = vmax.f32 %v2212, %v1761
        %v2243 = vmax.f32 %v2213, %v1762
        %v2244 = vmax.f32 %v2214, %v1763
        %v2245 = vmax.f32 %v2215, %v1764
        %v2246 = vmax.f32 %v2216, %v1765
        %v2247 = vmax.f32 %v2217, %v1766
        %v2248 = vmax.f32 %v2218, %v1767
        %v2249 = vmax.f32 %v2219, %v1768
        %v2250 = vmax.f32 %v2220, %v1769
        %v2251 = vmax.f32 %v2221, %v1770
        %v2252 = vmax.f32 %v2222, %v1771
        %v2253 = vmax.f32 %v2223, %v1772
        %v2254 = vmax.f32 %v2224, %v1773
        %v2255 = vmax.f32 %v2225, %v1774
        %v2256 = vmax.f32 %v2226, %v1775
        %v2257 = vmax.f32 %v2227, %v1776
        %v2260 = vrot.slane %v1743, 1
        %v2261 = vrot.slane %v1744, 1
        %v2262 = vsel %vm1897, %v2260, %v2261
        %v2265 = vmax.f32 %v2228, %v1903
        %v2266 = vmax.f32 %v2229, %v1902
        %v2267 = vmax.f32 %v2230, %v1906
        %v2268 = vmax.f32 %v2231, %v1905
        %v2269 = vmax.f32 %v2232, %v1909
        %v2270 = vmax.f32 %v2233, %v1908
        %v2271 = vmax.f32 %v2234, %v1912
        %v2272 = vmax.f32 %v2235, %v1911
        %v2273 = vmax.f32 %v2236, %v1915
        %v2274 = vmax.f32 %v2237, %v1914
        %v2275 = vmax.f32 %v2238, %v1918
        %v2276 = vmax.f32 %v2239, %v1917
        %v2277 = vmax.f32 %v2240, %v1921
        %v2278 = vmax.f32 %v2241, %v1920
        %v2279 = vmax.f32 %v2242, %v1924
        %v2280 = vmax.f32 %v2243, %v1923
        %v2281 = vmax.f32 %v2244, %v1927
        %v2282 = vmax.f32 %v2245, %v1926
        %v2283 = vmax.f32 %v2246, %v1930
        %v2284 = vmax.f32 %v2247, %v1929
        %v2285 = vmax.f32 %v2248, %v1933
        %v2286 = vmax.f32 %v2249, %v1932
        %v2287 = vmax.f32 %v2250, %v1936
        %v2288 = vmax.f32 %v2251, %v1935
        %v2289 = vmax.f32 %v2252, %v1939
        %v2290 = vmax.f32 %v2253, %v1938
        %v2291 = vmax.f32 %v2254, %v1942
        %v2292 = vmax.f32 %v2255, %v1941
        %v2293 = vmax.f32 %v2256, %v2262
        %v2294 = vmax.f32 %v2257, %v2261
        %s2295 = scalar_lea.vmem [#allocation2], 24
        %2296 = vst.msk [vmem:[%s2295 + $0x1] sm:$0xff] %vm385, %v2265
        %vm2297 = vcmask 129024
        %2298 = vst.msk [vmem:[%s2295 + $0x9] sm:$0x7f] %vm2297, %v2266
        %2299 = vst.msk [vmem:[%s2295 + $0x19] sm:$0xff] %vm385, %v2267
        %2300 = vst.msk [vmem:[%s2295 + $0x21] sm:$0x7f] %vm2297, %v2268
        %2301 = vst.msk [vmem:[%s2295 + $0x31] sm:$0xff] %vm385, %v2269
        %2302 = vst.msk [vmem:[%s2295 + $0x39] sm:$0x7f] %vm2297, %v2270
        %2303 = vst.msk [vmem:[%s2295 + $0x49] sm:$0xff] %vm385, %v2271
        %2304 = vst.msk [vmem:[%s2295 + $0x51] sm:$0x7f] %vm2297, %v2272
        %2305 = vst.msk [vmem:[%s2295 + $0x61] sm:$0xff] %vm385, %v2273
        %2306 = vst.msk [vmem:[%s2295 + $0x69] sm:$0x7f] %vm2297, %v2274
        %2307 = vst.msk [vmem:[%s2295 + $0x79] sm:$0xff] %vm385, %v2275
        %2308 = vst.msk [vmem:[%s2295 + $0x81] sm:$0x7f] %vm2297, %v2276
        %2309 = vst.msk [vmem:[%s2295 + $0x91] sm:$0xff] %vm385, %v2277
        %2310 = vst.msk [vmem:[%s2295 + $0x99] sm:$0x7f] %vm2297, %v2278
        %2311 = vst.msk [vmem:[%s2295 + $0xa9] sm:$0xff] %vm385, %v2279
        %2312 = vst.msk [vmem:[%s2295 + $0xb1] sm:$0x7f] %vm2297, %v2280
        %2313 = vst.msk [vmem:[%s2295 + $0xc1] sm:$0xff] %vm385, %v2281
        %2314 = vst.msk [vmem:[%s2295 + $0xc9] sm:$0x7f] %vm2297, %v2282
        %2315 = vst.msk [vmem:[%s2295 + $0xd9] sm:$0xff] %vm385, %v2283
        %2316 = vst.msk [vmem:[%s2295 + $0xe1] sm:$0x7f] %vm2297, %v2284
        %2317 = vst.msk [vmem:[%s2295 + $0xf1] sm:$0xff] %vm385, %v2285
        %2318 = vst.msk [vmem:[%s2295 + $0xf9] sm:$0x7f] %vm2297, %v2286
        %2319 = vst.msk [vmem:[%s2295 + $0x109] sm:$0xff] %vm385, %v2287
        %2320 = vst.msk [vmem:[%s2295 + $0x111] sm:$0x7f] %vm2297, %v2288
        %2321 = vst.msk [vmem:[%s2295 + $0x121] sm:$0xff] %vm385, %v2289
        %2322 = vst.msk [vmem:[%s2295 + $0x129] sm:$0x7f] %vm2297, %v2290
        %2323 = vst.msk [vmem:[%s2295 + $0x139] sm:$0xff] %vm385, %v2291
        %2324 = vst.msk [vmem:[%s2295 + $0x141] sm:$0x7f] %vm2297, %v2292
        %2325 = vst.msk [vmem:[%s2295 + $0x151] sm:$0xff] %vm385, %v2293
        %2326 = vst.msk [vmem:[%s2295 + $0x159] sm:$0x7f] %vm2297, %v2294
        %v2327 = vld [vmem:[#allocation2] ss:$2 sm:$0xff]
        %s2328 = scalar_lea.vmem [#allocation2], 48
        %v2329 = vld [vmem:[%s2328] ss:$2 sm:$0xff]
        %s2330 = scalar_lea.vmem [#allocation2], 96
        %v2331 = vld [vmem:[%s2330] ss:$2 sm:$0xff]
        %s2332 = scalar_lea.vmem [#allocation2], 144
        %v2333 = vld [vmem:[%s2332] ss:$2 sm:$0xff]
        %s2334 = scalar_lea.vmem [#allocation2], 192
        %v2335 = vld [vmem:[%s2334] ss:$2 sm:$0xff]
        %s2336 = scalar_lea.vmem [#allocation2], 240
        %v2337 = vld [vmem:[%s2336] ss:$2 sm:$0xff]
        %s2338 = scalar_lea.vmem [#allocation2], 288
        %v2339 = vld [vmem:[%s2338] ss:$2 sm:$0xff]
        %s2340 = scalar_lea.vmem [#allocation2], 336
        %v2341 = vld [vmem:[%s2340] ss:$2 sm:$0xff]
        %v2342 = vpack.c.bf16 %v2329, %v2327
        %v2343 = vpack.c.bf16 %v2333, %v2331
        %v2344 = vpack.c.bf16 %v2337, %v2335
        %v2345 = vpack.c.bf16 %v2341, %v2339
        %v2346 = vld [vmem:[%s2] sm:$0xf]
        %v2347 = vld [vmem:[%s2 + $0x4] sm:$0xf]
        %s2348 = scalar_lea.vmem [#allocation2], 1
        %v2349 = vld [vmem:[%s2348] ss:$2 sm:$0xff]
        %s2350 = scalar_lea.vmem [#allocation2], 49
        %v2351 = vld [vmem:[%s2350] ss:$2 sm:$0xff]
        %s2352 = scalar_lea.vmem [#allocation2], 97
        %v2353 = vld [vmem:[%s2352] ss:$2 sm:$0xff]
        %s2354 = scalar_lea.vmem [#allocation2], 145
        %v2355 = vld [vmem:[%s2354] ss:$2 sm:$0xff]
        %s2356 = scalar_lea.vmem [#allocation2], 193
        %v2357 = vld [vmem:[%s2356] ss:$2 sm:$0xff]
        %s2358 = scalar_lea.vmem [#allocation2], 241
        %v2359 = vld [vmem:[%s2358] ss:$2 sm:$0xff]
        %s2360 = scalar_lea.vmem [#allocation2], 289
        %v2361 = vld [vmem:[%s2360] ss:$2 sm:$0xff]
        %s2362 = scalar_lea.vmem [#allocation2], 337
        %v2363 = vld [vmem:[%s2362] ss:$2 sm:$0xff]
        %v2364 = vpack.c.bf16 %v2351, %v2349
        %v2365 = vpack.c.bf16 %v2355, %v2353
        %v2366 = vpack.c.bf16 %v2359, %v2357
        %v2367 = vpack.c.bf16 %v2363, %v2361
        %s2368 = scalar_lea.vmem %s2, 8
        %v2369 = vld [vmem:[%s2368] sm:$0xf]
        %v2370 = vld [vmem:[%s2368 + $0x4] sm:$0xf]
        %v2373 = vunpack.c.l.b16 %v2369
        %v2374 = vunpack.c.l.b16 %v2370
        %v2375 = vpack.c.b16 %v2374, %v2373
        %v2378 = vsel %vm385, %v2364, 0
        %v2381 = vsel %vm385, %v2365, 0
        %v2384 = vsel %vm385, %v2366, 0
        %v2387 = vsel %vm385, %v2367, 0
        %2389 = vmatprep.subr.bf16.mxu0 0
        %2390 = vmatpush1.bf16.msra.mxu0 %v2375
        %2391 = vmatprep.subr.bf16.mxu0 0
        %2392 = vmatpush1.bf16.msra.mxu0 0
        %2393 = vmatprep.subr.bf16.mxu0 0
        %2394 = vmatpush1.bf16.msra.mxu0 0
        %2395 = vmatprep.subr.bf16.mxu0 0
        %2396 = vmatpush1.bf16.msra.mxu0 0
        %2397 = vmatprep.subr.bf16.mxu0 0
        %2398 = vmatpush1.bf16.msra.mxu0 0
        %2399 = vmatprep.subr.bf16.mxu0 0
        %2400 = vmatpush1.bf16.msra.mxu0 0
        %2401 = vmatprep.subr.bf16.mxu0 0
        %2402 = vmatpush1.bf16.msra.mxu0 0
        %2403 = vmatprep.subr.bf16.mxu0 0
        %2404 = vmatpush1.bf16.msra.mxu0 0
        %2405 = vmatprep.subr.bf16.mxu0 0
        %2406 = vmatpush1.bf16.msra.mxu0 0
        %2407 = vmatprep.subr.bf16.mxu0 0
        %2408 = vmatpush1.bf16.msra.mxu0 0
        %2409 = vmatprep.subr.bf16.mxu0 0
        %2410 = vmatpush1.bf16.msra.mxu0 0
        %2411 = vmatprep.subr.bf16.mxu0 0
        %2412 = vmatpush1.bf16.msra.mxu0 0
        %2413 = vmatprep.subr.bf16.mxu0 0
        %2414 = vmatpush1.bf16.msra.mxu0 0
        %2415 = vmatprep.subr.bf16.mxu0 0
        %2416 = vmatpush1.bf16.msra.mxu0 0
        %2417 = vmatprep.subr.bf16.mxu0 0
        %2418 = vmatpush1.bf16.msra.mxu0 0
        %2419 = vmatprep.subr.bf16.mxu0 0
        %2420 = vmatpush1.bf16.msra.mxu0 0
        %2421 = vmatprep.mubr.bf16.mxu0 0
        %2422 = vmatmul.mubr.bf16.gmra.mrb[0].mxu0 %v2378
        %v2423 = vpop.f32.mrb[0].mxu0
        %v2424 = vadd.f32 0.0, %v2423
        %v2425 = vpop.f32.mrb[0].mxu0
        %v2426 = vpop.f32.mrb[0].mxu0
        %v2427 = vadd.f32 0.0, %v2426
        %v2428 = vpop.f32.mrb[0].mxu0
        %2429 = vmatprep.mubr.bf16.mxu0 0
        %2430 = vmatmul.mubr.bf16.gmra.mrb[0].mxu0 %v2381
        %v2431 = vpop.f32.mrb[0].mxu0
        %v2432 = vadd.f32 0.0, %v2431
        %v2433 = vpop.f32.mrb[0].mxu0
        %v2434 = vpop.f32.mrb[0].mxu0
        %v2435 = vadd.f32 0.0, %v2434
        %v2436 = vpop.f32.mrb[0].mxu0
        %2437 = vmatprep.mubr.bf16.mxu0 0
        %2438 = vmatmul.mubr.bf16.gmra.mrb[0].mxu0 %v2384
        %v2439 = vpop.f32.mrb[0].mxu0
        %v2440 = vadd.f32 0.0, %v2439
        %v2441 = vpop.f32.mrb[0].mxu0
        %v2442 = vpop.f32.mrb[0].mxu0
        %v2443 = vadd.f32 0.0, %v2442
        %v2444 = vpop.f32.mrb[0].mxu0
        %2445 = vmatprep.mubr.bf16.mxu0 0
        %2446 = vmatmul.mubr.bf16.gmra.mrb[0].mxu0 %v2387
        %v2447 = vpop.f32.mrb[0].mxu0
        %v2448 = vadd.f32 0.0, %v2447
        %v2449 = vpop.f32.mrb[0].mxu0
        %v2450 = vpop.f32.mrb[0].mxu0
        %v2451 = vadd.f32 0.0, %v2450
        %v2452 = vpop.f32.mrb[0].mxu0
        %2453 = vdwg.mxu0
        %v2456 = vunpack.c.l.b16 %v2346
        %v2457 = vunpack.c.l.b16 %v2347
        %v2458 = vpack.c.b16 %v2457, %v2456
        %v2461 = vsel %vm385, %v2342, 0
        %v2464 = vsel %vm385, %v2343, 0
        %v2467 = vsel %vm385, %v2344, 0
        %v2470 = vsel %vm385, %v2345, 0
        %2472 = vmatprep.subr.bf16.mxu0 0
        %2473 = vmatpush1.bf16.msra.mxu0 %v2458
        %2474 = vmatprep.subr.bf16.mxu0 0
        %2475 = vmatpush1.bf16.msra.mxu0 0
        %2476 = vmatprep.subr.bf16.mxu0 0
        %2477 = vmatpush1.bf16.msra.mxu0 0
        %2478 = vmatprep.subr.bf16.mxu0 0
        %2479 = vmatpush1.bf16.msra.mxu0 0
        %2480 = vmatprep.subr.bf16.mxu0 0
        %2481 = vmatpush1.bf16.msra.mxu0 0
        %2482 = vmatprep.subr.bf16.mxu0 0
        %2483 = vmatpush1.bf16.msra.mxu0 0
        %2484 = vmatprep.subr.bf16.mxu0 0
        %2485 = vmatpush1.bf16.msra.mxu0 0
        %2486 = vmatprep.subr.bf16.mxu0 0
        %2487 = vmatpush1.bf16.msra.mxu0 0
        %2488 = vmatprep.subr.bf16.mxu0 0
        %2489 = vmatpush1.bf16.msra.mxu0 0
        %2490 = vmatprep.subr.bf16.mxu0 0
        %2491 = vmatpush1.bf16.msra.mxu0 0
        %2492 = vmatprep.subr.bf16.mxu0 0
        %2493 = vmatpush1.bf16.msra.mxu0 0
        %2494 = vmatprep.subr.bf16.mxu0 0
        %2495 = vmatpush1.bf16.msra.mxu0 0
        %2496 = vmatprep.subr.bf16.mxu0 0
        %2497 = vmatpush1.bf16.msra.mxu0 0
        %2498 = vmatprep.subr.bf16.mxu0 0
        %2499 = vmatpush1.bf16.msra.mxu0 0
        %2500 = vmatprep.subr.bf16.mxu0 0
        %2501 = vmatpush1.bf16.msra.mxu0 0
        %2502 = vmatprep.subr.bf16.mxu0 0
        %2503 = vmatpush1.bf16.msra.mxu0 0
        %2504 = vmatprep.mubr.bf16.mxu0 0
        %2505 = vmatmul.mubr.bf16.gmra.mrb[0].mxu0 %v2461
        %v2506 = vpop.f32.mrb[0].mxu0
        %v2507 = vadd.f32 %v2424, %v2506
        %v2508 = vpop.f32.mrb[0].mxu0
        %v2509 = vpop.f32.mrb[0].mxu0
        %v2510 = vadd.f32 %v2427, %v2509
        %v2511 = vpop.f32.mrb[0].mxu0
        %2512 = vmatprep.mubr.bf16.mxu0 0
        %2513 = vmatmul.mubr.bf16.gmra.mrb[0].mxu0 %v2464
        %v2514 = vpop.f32.mrb[0].mxu0
        %v2515 = vadd.f32 %v2432, %v2514
        %v2516 = vpop.f32.mrb[0].mxu0
        %v2517 = vpop.f32.mrb[0].mxu0
        %v2518 = vadd.f32 %v2435, %v2517
        %v2519 = vpop.f32.mrb[0].mxu0
        %2520 = vmatprep.mubr.bf16.mxu0 0
        %2521 = vmatmul.mubr.bf16.gmra.mrb[0].mxu0 %v2467
        %v2522 = vpop.f32.mrb[0].mxu0
        %v2523 = vadd.f32 %v2440, %v2522
        %v2524 = vpop.f32.mrb[0].mxu0
        %v2525 = vpop.f32.mrb[0].mxu0
        %v2526 = vadd.f32 %v2443, %v2525
        %v2527 = vpop.f32.mrb[0].mxu0
        %2528 = vmatprep.mubr.bf16.mxu0 0
        %2529 = vmatmul.mubr.bf16.gmra.mrb[0].mxu0 %v2470
        %v2530 = vpop.f32.mrb[0].mxu0
        %v2531 = vadd.f32 %v2448, %v2530
        %v2532 = vpop.f32.mrb[0].mxu0
        %v2533 = vpop.f32.mrb[0].mxu0
        %v2534 = vadd.f32 %v2451, %v2533
        %v2535 = vpop.f32.mrb[0].mxu0
        %2536 = vdwg.mxu0
        %s2537 = scalar_lea.vmem [#allocation2], 2
        %v2538 = vld [vmem:[%s2537] ss:$2 sm:$0xff]
        %s2539 = scalar_lea.vmem [#allocation2], 50
        %v2540 = vld [vmem:[%s2539] ss:$2 sm:$0xff]
        %s2541 = scalar_lea.vmem [#allocation2], 98
        %v2542 = vld [vmem:[%s2541] ss:$2 sm:$0xff]
        %s2543 = scalar_lea.vmem [#allocation2], 146
        %v2544 = vld [vmem:[%s2543] ss:$2 sm:$0xff]
        %s2545 = scalar_lea.vmem [#allocation2], 194
        %v2546 = vld [vmem:[%s2545] ss:$2 sm:$0xff]
        %s2547 = scalar_lea.vmem [#allocation2], 242
        %v2548 = vld [vmem:[%s2547] ss:$2 sm:$0xff]
        %s2549 = scalar_lea.vmem [#allocation2], 290
        %v2550 = vld [vmem:[%s2549] ss:$2 sm:$0xff]
        %s2551 = scalar_lea.vmem [#allocation2], 338
        %v2552 = vld [vmem:[%s2551] ss:$2 sm:$0xff]
        %v2553 = vpack.c.bf16 %v2540, %v2538
        %v2554 = vpack.c.bf16 %v2544, %v2542
        %v2555 = vpack.c.bf16 %v2548, %v2546
        %v2556 = vpack.c.bf16 %v2552, %v2550
        %s2557 = scalar_lea.vmem %s2, 16
        %v2558 = vld [vmem:[%s2557] sm:$0xf]
        %v2559 = vld [vmem:[%s2557 + $0x4] sm:$0xf]
        %v2562 = vunpack.c.l.b16 %v2558
        %v2563 = vunpack.c.l.b16 %v2559
        %v2564 = vpack.c.b16 %v2563, %v2562
        %v2567 = vsel %vm385, %v2553, 0
        %v2570 = vsel %vm385, %v2554, 0
        %v2573 = vsel %vm385, %v2555, 0
        %v2576 = vsel %vm385, %v2556, 0
        %2578 = vmatprep.subr.bf16.mxu0 0
        %2579 = vmatpush1.bf16.msra.mxu0 %v2564
        %2580 = vmatprep.subr.bf16.mxu0 0
        %2581 = vmatpush1.bf16.msra.mxu0 0
        %2582 = vmatprep.subr.bf16.mxu0 0
        %2583 = vmatpush1.bf16.msra.mxu0 0
        %2584 = vmatprep.subr.bf16.mxu0 0
        %2585 = vmatpush1.bf16.msra.mxu0 0
        %2586 = vmatprep.subr.bf16.mxu0 0
        %2587 = vmatpush1.bf16.msra.mxu0 0
        %2588 = vmatprep.subr.bf16.mxu0 0
        %2589 = vmatpush1.bf16.msra.mxu0 0
        %2590 = vmatprep.subr.bf16.mxu0 0
        %2591 = vmatpush1.bf16.msra.mxu0 0
        %2592 = vmatprep.subr.bf16.mxu0 0
        %2593 = vmatpush1.bf16.msra.mxu0 0
        %2594 = vmatprep.subr.bf16.mxu0 0
        %2595 = vmatpush1.bf16.msra.mxu0 0
        %2596 = vmatprep.subr.bf16.mxu0 0
        %2597 = vmatpush1.bf16.msra.mxu0 0
        %2598 = vmatprep.subr.bf16.mxu0 0
        %2599 = vmatpush1.bf16.msra.mxu0 0
        %2600 = vmatprep.subr.bf16.mxu0 0
        %2601 = vmatpush1.bf16.msra.mxu0 0
        %2602 = vmatprep.subr.bf16.mxu0 0
        %2603 = vmatpush1.bf16.msra.mxu0 0
        %2604 = vmatprep.subr.bf16.mxu0 0
        %2605 = vmatpush1.bf16.msra.mxu0 0
        %2606 = vmatprep.subr.bf16.mxu0 0
        %2607 = vmatpush1.bf16.msra.mxu0 0
        %2608 = vmatprep.subr.bf16.mxu0 0
        %2609 = vmatpush1.bf16.msra.mxu0 0
        %2610 = vmatprep.mubr.bf16.mxu0 0
        %2611 = vmatmul.mubr.bf16.gmra.mrb[0].mxu0 %v2567
        %v2612 = vpop.f32.mrb[0].mxu0
        %v2613 = vadd.f32 0.0, %v2612
        %v2614 = vpop.f32.mrb[0].mxu0
        %v2615 = vpop.f32.mrb[0].mxu0
        %v2616 = vadd.f32 0.0, %v2615
        %v2617 = vpop.f32.mrb[0].mxu0
        %2618 = vmatprep.mubr.bf16.mxu0 0
        %2619 = vmatmul.mubr.bf16.gmra.mrb[0].mxu0 %v2570
        %v2620 = vpop.f32.mrb[0].mxu0
        %v2621 = vadd.f32 0.0, %v2620
        %v2622 = vpop.f32.mrb[0].mxu0
        %v2623 = vpop.f32.mrb[0].mxu0
        %v2624 = vadd.f32 0.0, %v2623
        %v2625 = vpop.f32.mrb[0].mxu0
        %2626 = vmatprep.mubr.bf16.mxu0 0
        %2627 = vmatmul.mubr.bf16.gmra.mrb[0].mxu0 %v2573
        %v2628 = vpop.f32.mrb[0].mxu0
        %v2629 = vadd.f32 0.0, %v2628
        %v2630 = vpop.f32.mrb[0].mxu0
        %v2631 = vpop.f32.mrb[0].mxu0
        %v2632 = vadd.f32 0.0, %v2631
        %v2633 = vpop.f32.mrb[0].mxu0
        %2634 = vmatprep.mubr.bf16.mxu0 0
        %2635 = vmatmul.mubr.bf16.gmra.mrb[0].mxu0 %v2576
        %v2636 = vpop.f32.mrb[0].mxu0
        %v2637 = vadd.f32 0.0, %v2636
        %v2638 = vpop.f32.mrb[0].mxu0
        %v2639 = vpop.f32.mrb[0].mxu0
        %v2640 = vadd.f32 0.0, %v2639
        %v2641 = vpop.f32.mrb[0].mxu0
        %2642 = vdwg.mxu0
        %v2643 = vadd.f32 %v2507, %v2613
        %v2644 = vadd.f32 %v2510, %v2616
        %v2645 = vadd.f32 %v2515, %v2621
        %v2646 = vadd.f32 %v2518, %v2624
        %v2647 = vadd.f32 %v2523, %v2629
        %v2648 = vadd.f32 %v2526, %v2632
        %v2649 = vadd.f32 %v2531, %v2637
        %v2650 = vadd.f32 %v2534, %v2640
        %v2651 = vld [vmem:[%s2295] ss:$2 sm:$0xff]
        %s2652 = scalar_lea.vmem %s2295, 48 [#allocation2]
        %v2653 = vld [vmem:[%s2652] ss:$2 sm:$0xff]
        %s2654 = scalar_lea.vmem %s2295, 96 [#allocation2]
        %v2655 = vld [vmem:[%s2654] ss:$2 sm:$0xff]
        %s2656 = scalar_lea.vmem %s2295, 144 [#allocation2]
        %v2657 = vld [vmem:[%s2656] ss:$2 sm:$0xff]
        %s2658 = scalar_lea.vmem %s2295, 192 [#allocation2]
        %v2659 = vld [vmem:[%s2658] ss:$2 sm:$0xff]
        %s2660 = scalar_lea.vmem %s2295, 240 [#allocation2]
        %v2661 = vld [vmem:[%s2660] ss:$2 sm:$0xff]
        %s2662 = scalar_lea.vmem %s2295, 288 [#allocation2]
        %v2663 = vld [vmem:[%s2662] ss:$2 sm:$0xff]
        %s2664 = scalar_lea.vmem %s2295, 336 [#allocation2]
        %v2665 = vld [vmem:[%s2664] ss:$2 sm:$0xff]
        %v2666 = vpack.c.bf16 %v2653, %v2651
        %v2667 = vpack.c.bf16 %v2657, %v2655
        %v2668 = vpack.c.bf16 %v2661, %v2659
        %v2669 = vpack.c.bf16 %v2665, %v2663
        %s2670 = scalar_lea.vmem %s2, 24
        %v2671 = vld [vmem:[%s2670] sm:$0xf]
        %v2672 = vld [vmem:[%s2670 + $0x4] sm:$0xf]
        %v2675 = vunpack.c.l.b16 %v2671
        %v2676 = vunpack.c.l.b16 %v2672
        %v2677 = vpack.c.b16 %v2676, %v2675
        %v2680 = vsel %vm385, %v2666, 0
        %v2683 = vsel %vm385, %v2667, 0
        %v2686 = vsel %vm385, %v2668, 0
        %v2689 = vsel %vm385, %v2669, 0
        %2691 = vmatprep.subr.bf16.mxu0 0
        %2692 = vmatpush1.bf16.msra.mxu0 %v2677
        %2693 = vmatprep.subr.bf16.mxu0 0
        %2694 = vmatpush1.bf16.msra.mxu0 0
        %2695 = vmatprep.subr.bf16.mxu0 0
        %2696 = vmatpush1.bf16.msra.mxu0 0
        %2697 = vmatprep.subr.bf16.mxu0 0
        %2698 = vmatpush1.bf16.msra.mxu0 0
        %2699 = vmatprep.subr.bf16.mxu0 0
        %2700 = vmatpush1.bf16.msra.mxu0 0
        %2701 = vmatprep.subr.bf16.mxu0 0
        %2702 = vmatpush1.bf16.msra.mxu0 0
        %2703 = vmatprep.subr.bf16.mxu0 0
        %2704 = vmatpush1.bf16.msra.mxu0 0
        %2705 = vmatprep.subr.bf16.mxu0 0
        %2706 = vmatpush1.bf16.msra.mxu0 0
        %2707 = vmatprep.subr.bf16.mxu0 0
        %2708 = vmatpush1.bf16.msra.mxu0 0
        %2709 = vmatprep.subr.bf16.mxu0 0
        %2710 = vmatpush1.bf16.msra.mxu0 0
        %2711 = vmatprep.subr.bf16.mxu0 0
        %2712 = vmatpush1.bf16.msra.mxu0 0
        %2713 = vmatprep.subr.bf16.mxu0 0
        %2714 = vmatpush1.bf16.msra.mxu0 0
        %2715 = vmatprep.subr.bf16.mxu0 0
        %2716 = vmatpush1.bf16.msra.mxu0 0
        %2717 = vmatprep.subr.bf16.mxu0 0
        %2718 = vmatpush1.bf16.msra.mxu0 0
        %2719 = vmatprep.subr.bf16.mxu0 0
        %2720 = vmatpush1.bf16.msra.mxu0 0
        %2721 = vmatprep.subr.bf16.mxu0 0
        %2722 = vmatpush1.bf16.msra.mxu0 0
        %2723 = vmatprep.mubr.bf16.mxu0 0
        %2724 = vmatmul.mubr.bf16.gmra.mrb[0].mxu0 %v2680
        %v2725 = vpop.f32.mrb[0].mxu0
        %v2726 = vadd.f32 0.0, %v2725
        %v2727 = vpop.f32.mrb[0].mxu0
        %v2728 = vpop.f32.mrb[0].mxu0
        %v2729 = vadd.f32 0.0, %v2728
        %v2730 = vpop.f32.mrb[0].mxu0
        %2731 = vmatprep.mubr.bf16.mxu0 0
        %2732 = vmatmul.mubr.bf16.gmra.mrb[0].mxu0 %v2683
        %v2733 = vpop.f32.mrb[0].mxu0
        %v2734 = vadd.f32 0.0, %v2733
        %v2735 = vpop.f32.mrb[0].mxu0
        %v2736 = vpop.f32.mrb[0].mxu0
        %v2737 = vadd.f32 0.0, %v2736
        %v2738 = vpop.f32.mrb[0].mxu0
        %2739 = vmatprep.mubr.bf16.mxu0 0
        %2740 = vmatmul.mubr.bf16.gmra.mrb[0].mxu0 %v2686
        %v2741 = vpop.f32.mrb[0].mxu0
        %v2742 = vadd.f32 0.0, %v2741
        %v2743 = vpop.f32.mrb[0].mxu0
        %v2744 = vpop.f32.mrb[0].mxu0
        %v2745 = vadd.f32 0.0, %v2744
        %v2746 = vpop.f32.mrb[0].mxu0
        %2747 = vmatprep.mubr.bf16.mxu0 0
        %2748 = vmatmul.mubr.bf16.gmra.mrb[0].mxu0 %v2689
        %v2749 = vpop.f32.mrb[0].mxu0
        %v2750 = vadd.f32 0.0, %v2749
        %v2751 = vpop.f32.mrb[0].mxu0
        %v2752 = vpop.f32.mrb[0].mxu0
        %v2753 = vadd.f32 0.0, %v2752
        %v2754 = vpop.f32.mrb[0].mxu0
        %2755 = vdwg.mxu0
        %v2756 = vadd.f32 %v2643, %v2726
        %v2757 = vadd.f32 %v2644, %v2729
        %v2758 = vadd.f32 %v2645, %v2734
        %v2759 = vadd.f32 %v2646, %v2737
        %v2760 = vadd.f32 %v2647, %v2742
        %v2761 = vadd.f32 %v2648, %v2745
        %v2762 = vadd.f32 %v2649, %v2750
        %v2763 = vadd.f32 %v2650, %v2753
        %s2764 = scalar_lea.vmem %s2295, 1 [#allocation2]
        %v2765 = vld [vmem:[%s2764] ss:$2 sm:$0xff]
        %s2766 = scalar_lea.vmem %s2295, 49 [#allocation2]
        %v2767 = vld [vmem:[%s2766] ss:$2 sm:$0xff]
        %s2768 = scalar_lea.vmem %s2295, 97 [#allocation2]
        %v2769 = vld [vmem:[%s2768] ss:$2 sm:$0xff]
        %s2770 = scalar_lea.vmem %s2295, 145 [#allocation2]
        %v2771 = vld [vmem:[%s2770] ss:$2 sm:$0xff]
        %s2772 = scalar_lea.vmem %s2295, 193 [#allocation2]
        %v2773 = vld [vmem:[%s2772] ss:$2 sm:$0xff]
        %s2774 = scalar_lea.vmem %s2295, 241 [#allocation2]
        %v2775 = vld [vmem:[%s2774] ss:$2 sm:$0xff]
        %s2776 = scalar_lea.vmem %s2295, 289 [#allocation2]
        %v2777 = vld [vmem:[%s2776] ss:$2 sm:$0xff]
        %s2778 = scalar_lea.vmem %s2295, 337 [#allocation2]
        %v2779 = vld [vmem:[%s2778] ss:$2 sm:$0xff]
        %v2780 = vpack.c.bf16 %v2767, %v2765
        %v2781 = vpack.c.bf16 %v2771, %v2769
        %v2782 = vpack.c.bf16 %v2775, %v2773
        %v2783 = vpack.c.bf16 %v2779, %v2777
        %s2784 = scalar_lea.vmem %s2, 32
        %v2785 = vld [vmem:[%s2784] sm:$0xf]
        %v2786 = vld [vmem:[%s2784 + $0x4] sm:$0xf]
        %v2789 = vunpack.c.l.b16 %v2785
        %v2790 = vunpack.c.l.b16 %v2786
        %v2791 = vpack.c.b16 %v2790, %v2789
        %v2794 = vsel %vm385, %v2780, 0
        %v2797 = vsel %vm385, %v2781, 0
        %v2800 = vsel %vm385, %v2782, 0
        %v2803 = vsel %vm385, %v2783, 0
        %2805 = vmatprep.subr.bf16.mxu0 0
        %2806 = vmatpush1.bf16.msra.mxu0 %v2791
        %2807 = vmatprep.subr.bf16.mxu0 0
        %2808 = vmatpush1.bf16.msra.mxu0 0
        %2809 = vmatprep.subr.bf16.mxu0 0
        %2810 = vmatpush1.bf16.msra.mxu0 0
        %2811 = vmatprep.subr.bf16.mxu0 0
        %2812 = vmatpush1.bf16.msra.mxu0 0
        %2813 = vmatprep.subr.bf16.mxu0 0
        %2814 = vmatpush1.bf16.msra.mxu0 0
        %2815 = vmatprep.subr.bf16.mxu0 0
        %2816 = vmatpush1.bf16.msra.mxu0 0
        %2817 = vmatprep.subr.bf16.mxu0 0
        %2818 = vmatpush1.bf16.msra.mxu0 0
        %2819 = vmatprep.subr.bf16.mxu0 0
        %2820 = vmatpush1.bf16.msra.mxu0 0
        %2821 = vmatprep.subr.bf16.mxu0 0
        %2822 = vmatpush1.bf16.msra.mxu0 0
        %2823 = vmatprep.subr.bf16.mxu0 0
        %2824 = vmatpush1.bf16.msra.mxu0 0
        %2825 = vmatprep.subr.bf16.mxu0 0
        %2826 = vmatpush1.bf16.msra.mxu0 0
        %2827 = vmatprep.subr.bf16.mxu0 0
        %2828 = vmatpush1.bf16.msra.mxu0 0
        %2829 = vmatprep.subr.bf16.mxu0 0
        %2830 = vmatpush1.bf16.msra.mxu0 0
        %2831 = vmatprep.subr.bf16.mxu0 0
        %2832 = vmatpush1.bf16.msra.mxu0 0
        %2833 = vmatprep.subr.bf16.mxu0 0
        %2834 = vmatpush1.bf16.msra.mxu0 0
        %2835 = vmatprep.subr.bf16.mxu0 0
        %2836 = vmatpush1.bf16.msra.mxu0 0
        %2837 = vmatprep.mubr.bf16.mxu0 0
        %2838 = vmatmul.mubr.bf16.gmra.mrb[0].mxu0 %v2794
        %v2839 = vpop.f32.mrb[0].mxu0
        %v2840 = vadd.f32 0.0, %v2839
        %v2841 = vpop.f32.mrb[0].mxu0
        %v2842 = vpop.f32.mrb[0].mxu0
        %v2843 = vadd.f32 0.0, %v2842
        %v2844 = vpop.f32.mrb[0].mxu0
        %2845 = vmatprep.mubr.bf16.mxu0 0
        %2846 = vmatmul.mubr.bf16.gmra.mrb[0].mxu0 %v2797
        %v2847 = vpop.f32.mrb[0].mxu0
        %v2848 = vadd.f32 0.0, %v2847
        %v2849 = vpop.f32.mrb[0].mxu0
        %v2850 = vpop.f32.mrb[0].mxu0
        %v2851 = vadd.f32 0.0, %v2850
        %v2852 = vpop.f32.mrb[0].mxu0
        %2853 = vmatprep.mubr.bf16.mxu0 0
        %2854 = vmatmul.mubr.bf16.gmra.mrb[0].mxu0 %v2800
        %v2855 = vpop.f32.mrb[0].mxu0
        %v2856 = vadd.f32 0.0, %v2855
        %v2857 = vpop.f32.mrb[0].mxu0
        %v2858 = vpop.f32.mrb[0].mxu0
        %v2859 = vadd.f32 0.0, %v2858
        %v2860 = vpop.f32.mrb[0].mxu0
        %2861 = vmatprep.mubr.bf16.mxu0 0
        %2862 = vmatmul.mubr.bf16.gmra.mrb[0].mxu0 %v2803
        %v2863 = vpop.f32.mrb[0].mxu0
        %v2864 = vadd.f32 0.0, %v2863
        %v2865 = vpop.f32.mrb[0].mxu0
        %v2866 = vpop.f32.mrb[0].mxu0
        %v2867 = vadd.f32 0.0, %v2866
        %v2868 = vpop.f32.mrb[0].mxu0
        %2869 = vdwg.mxu0
        %v2870 = vadd.f32 %v2756, %v2840
        %v2871 = vadd.f32 %v2757, %v2843
        %v2872 = vadd.f32 %v2758, %v2848
        %v2873 = vadd.f32 %v2759, %v2851
        %v2874 = vadd.f32 %v2760, %v2856
        %v2875 = vadd.f32 %v2761, %v2859
        %v2876 = vadd.f32 %v2762, %v2864
        %v2877 = vadd.f32 %v2763, %v2867
        %s2878 = scalar_lea.vmem %s2295, 2 [#allocation2]
        %v2879 = vld [vmem:[%s2878] ss:$2 sm:$0xff]
        %s2880 = scalar_lea.vmem %s2295, 50 [#allocation2]
        %v2881 = vld [vmem:[%s2880] ss:$2 sm:$0xff]
        %s2882 = scalar_lea.vmem %s2295, 98 [#allocation2]
        %v2883 = vld [vmem:[%s2882] ss:$2 sm:$0xff]
        %s2884 = scalar_lea.vmem %s2295, 146 [#allocation2]
        %v2885 = vld [vmem:[%s2884] ss:$2 sm:$0xff]
        %s2886 = scalar_lea.vmem %s2295, 194 [#allocation2]
        %v2887 = vld [vmem:[%s2886] ss:$2 sm:$0xff]
        %s2888 = scalar_lea.vmem %s2295, 242 [#allocation2]
        %v2889 = vld [vmem:[%s2888] ss:$2 sm:$0xff]
        %s2890 = scalar_lea.vmem %s2295, 290 [#allocation2]
        %v2891 = vld [vmem:[%s2890] ss:$2 sm:$0xff]
        %s2892 = scalar_lea.vmem %s2295, 338 [#allocation2]
        %v2893 = vld [vmem:[%s2892] ss:$2 sm:$0xff]
        %v2894 = vpack.c.bf16 %v2881, %v2879
        %v2895 = vpack.c.bf16 %v2885, %v2883
        %v2896 = vpack.c.bf16 %v2889, %v2887
        %v2897 = vpack.c.bf16 %v2893, %v2891
        %s2898 = scalar_lea.vmem %s2, 40
        %v2899 = vld [vmem:[%s2898] sm:$0xf]
        %v2900 = vld [vmem:[%s2898 + $0x4] sm:$0xf]
        %v2903 = vunpack.c.l.b16 %v2899
        %v2904 = vunpack.c.l.b16 %v2900
        %v2905 = vpack.c.b16 %v2904, %v2903
        %v2908 = vsel %vm385, %v2894, 0
        %v2911 = vsel %vm385, %v2895, 0
        %v2914 = vsel %vm385, %v2896, 0
        %v2917 = vsel %vm385, %v2897, 0
        %2919 = vmatprep.subr.bf16.mxu0 0
        %2920 = vmatpush1.bf16.msra.mxu0 %v2905
        %2921 = vmatprep.subr.bf16.mxu0 0
        %2922 = vmatpush1.bf16.msra.mxu0 0
        %2923 = vmatprep.subr.bf16.mxu0 0
        %2924 = vmatpush1.bf16.msra.mxu0 0
        %2925 = vmatprep.subr.bf16.mxu0 0
        %2926 = vmatpush1.bf16.msra.mxu0 0
        %2927 = vmatprep.subr.bf16.mxu0 0
        %2928 = vmatpush1.bf16.msra.mxu0 0
        %2929 = vmatprep.subr.bf16.mxu0 0
        %2930 = vmatpush1.bf16.msra.mxu0 0
        %2931 = vmatprep.subr.bf16.mxu0 0
        %2932 = vmatpush1.bf16.msra.mxu0 0
        %2933 = vmatprep.subr.bf16.mxu0 0
        %2934 = vmatpush1.bf16.msra.mxu0 0
        %2935 = vmatprep.subr.bf16.mxu0 0
        %2936 = vmatpush1.bf16.msra.mxu0 0
        %2937 = vmatprep.subr.bf16.mxu0 0
        %2938 = vmatpush1.bf16.msra.mxu0 0
        %2939 = vmatprep.subr.bf16.mxu0 0
        %2940 = vmatpush1.bf16.msra.mxu0 0
        %2941 = vmatprep.subr.bf16.mxu0 0
        %2942 = vmatpush1.bf16.msra.mxu0 0
        %2943 = vmatprep.subr.bf16.mxu0 0
        %2944 = vmatpush1.bf16.msra.mxu0 0
        %2945 = vmatprep.subr.bf16.mxu0 0
        %2946 = vmatpush1.bf16.msra.mxu0 0
        %2947 = vmatprep.subr.bf16.mxu0 0
        %2948 = vmatpush1.bf16.msra.mxu0 0
        %2949 = vmatprep.subr.bf16.mxu0 0
        %2950 = vmatpush1.bf16.msra.mxu0 0
        %2951 = vmatprep.mubr.bf16.mxu0 0
        %2952 = vmatmul.mubr.bf16.gmra.mrb[0].mxu0 %v2908
        %v2953 = vpop.f32.mrb[0].mxu0
        %v2954 = vadd.f32 0.0, %v2953
        %v2955 = vpop.f32.mrb[0].mxu0
        %v2956 = vpop.f32.mrb[0].mxu0
        %v2957 = vadd.f32 0.0, %v2956
        %v2958 = vpop.f32.mrb[0].mxu0
        %2959 = vmatprep.mubr.bf16.mxu0 0
        %2960 = vmatmul.mubr.bf16.gmra.mrb[0].mxu0 %v2911
        %v2961 = vpop.f32.mrb[0].mxu0
        %v2962 = vadd.f32 0.0, %v2961
        %v2963 = vpop.f32.mrb[0].mxu0
        %v2964 = vpop.f32.mrb[0].mxu0
        %v2965 = vadd.f32 0.0, %v2964
        %v2966 = vpop.f32.mrb[0].mxu0
        %2967 = vmatprep.mubr.bf16.mxu0 0
        %2968 = vmatmul.mubr.bf16.gmra.mrb[0].mxu0 %v2914
        %v2969 = vpop.f32.mrb[0].mxu0
        %v2970 = vadd.f32 0.0, %v2969
        %v2971 = vpop.f32.mrb[0].mxu0
        %v2972 = vpop.f32.mrb[0].mxu0
        %v2973 = vadd.f32 0.0, %v2972
        %v2974 = vpop.f32.mrb[0].mxu0
        %2975 = vmatprep.mubr.bf16.mxu0 0
        %2976 = vmatmul.mubr.bf16.gmra.mrb[0].mxu0 %v2917
        %v2977 = vpop.f32.mrb[0].mxu0
        %v2978 = vadd.f32 0.0, %v2977
        %v2979 = vpop.f32.mrb[0].mxu0
        %v2980 = vpop.f32.mrb[0].mxu0
        %v2981 = vadd.f32 0.0, %v2980
        %v2982 = vpop.f32.mrb[0].mxu0
        %2983 = vdwg.mxu0
        %v2984 = vadd.f32 %v2870, %v2954
        %v2985 = vadd.f32 %v2871, %v2957
        %v2986 = vadd.f32 %v2872, %v2962
        %v2987 = vadd.f32 %v2873, %v2965
        %v2988 = vadd.f32 %v2874, %v2970
        %v2989 = vadd.f32 %v2875, %v2973
        %v2990 = vadd.f32 %v2876, %v2978
        %v2991 = vadd.f32 %v2877, %v2981
        %s2992 = scalar_lea.vmem [#allocation2], 48
        %v2993 = vld [vmem:[%s2992] ss:$2 sm:$0xff]
        %s2994 = scalar_lea.vmem %s2992, 48 [#allocation2]
        %v2995 = vld [vmem:[%s2994] ss:$2 sm:$0xff]
        %s2996 = scalar_lea.vmem %s2992, 96 [#allocation2]
        %v2997 = vld [vmem:[%s2996] ss:$2 sm:$0xff]
        %s2998 = scalar_lea.vmem %s2992, 144 [#allocation2]
        %v2999 = vld [vmem:[%s2998] ss:$2 sm:$0xff]
        %s3000 = scalar_lea.vmem %s2992, 192 [#allocation2]
        %v3001 = vld [vmem:[%s3000] ss:$2 sm:$0xff]
        %s3002 = scalar_lea.vmem %s2992, 240 [#allocation2]
        %v3003 = vld [vmem:[%s3002] ss:$2 sm:$0xff]
        %s3004 = scalar_lea.vmem %s2992, 288 [#allocation2]
        %v3005 = vld [vmem:[%s3004] ss:$2 sm:$0xff]
        %s3006 = scalar_lea.vmem %s2992, 336 [#allocation2]
        %v3007 = vld [vmem:[%s3006] ss:$2 sm:$0xff]
        %v3008 = vpack.c.bf16 %v2995, %v2993
        %v3009 = vpack.c.bf16 %v2999, %v2997
        %v3010 = vpack.c.bf16 %v3003, %v3001
        %v3011 = vpack.c.bf16 %v3007, %v3005
        %s3012 = scalar_lea.vmem %s2, 48
        %v3013 = vld [vmem:[%s3012] sm:$0xf]
        %v3014 = vld [vmem:[%s3012 + $0x4] sm:$0xf]
        %v3017 = vunpack.c.l.b16 %v3013
        %v3018 = vunpack.c.l.b16 %v3014
        %v3019 = vpack.c.b16 %v3018, %v3017
        %v3022 = vsel %vm385, %v3008, 0
        %v3025 = vsel %vm385, %v3009, 0
        %v3028 = vsel %vm385, %v3010, 0
        %v3031 = vsel %vm385, %v3011, 0
        %3033 = vmatprep.subr.bf16.mxu0 0
        %3034 = vmatpush1.bf16.msra.mxu0 %v3019
        %3035 = vmatprep.subr.bf16.mxu0 0
        %3036 = vmatpush1.bf16.msra.mxu0 0
        %3037 = vmatprep.subr.bf16.mxu0 0
        %3038 = vmatpush1.bf16.msra.mxu0 0
        %3039 = vmatprep.subr.bf16.mxu0 0
        %3040 = vmatpush1.bf16.msra.mxu0 0
        %3041 = vmatprep.subr.bf16.mxu0 0
        %3042 = vmatpush1.bf16.msra.mxu0 0
        %3043 = vmatprep.subr.bf16.mxu0 0
        %3044 = vmatpush1.bf16.msra.mxu0 0
        %3045 = vmatprep.subr.bf16.mxu0 0
        %3046 = vmatpush1.bf16.msra.mxu0 0
        %3047 = vmatprep.subr.bf16.mxu0 0
        %3048 = vmatpush1.bf16.msra.mxu0 0
        %3049 = vmatprep.subr.bf16.mxu0 0
        %3050 = vmatpush1.bf16.msra.mxu0 0
        %3051 = vmatprep.subr.bf16.mxu0 0
        %3052 = vmatpush1.bf16.msra.mxu0 0
        %3053 = vmatprep.subr.bf16.mxu0 0
        %3054 = vmatpush1.bf16.msra.mxu0 0
        %3055 = vmatprep.subr.bf16.mxu0 0
        %3056 = vmatpush1.bf16.msra.mxu0 0
        %3057 = vmatprep.subr.bf16.mxu0 0
        %3058 = vmatpush1.bf16.msra.mxu0 0
        %3059 = vmatprep.subr.bf16.mxu0 0
        %3060 = vmatpush1.bf16.msra.mxu0 0
        %3061 = vmatprep.subr.bf16.mxu0 0
        %3062 = vmatpush1.bf16.msra.mxu0 0
        %3063 = vmatprep.subr.bf16.mxu0 0
        %3064 = vmatpush1.bf16.msra.mxu0 0
        %3065 = vmatprep.mubr.bf16.mxu0 0
        %3066 = vmatmul.mubr.bf16.gmra.mrb[0].mxu0 %v3022
        %v3067 = vpop.f32.mrb[0].mxu0
        %v3068 = vadd.f32 0.0, %v3067
        %v3069 = vpop.f32.mrb[0].mxu0
        %v3070 = vpop.f32.mrb[0].mxu0
        %v3071 = vadd.f32 0.0, %v3070
        %v3072 = vpop.f32.mrb[0].mxu0
        %3073 = vmatprep.mubr.bf16.mxu0 0
        %3074 = vmatmul.mubr.bf16.gmra.mrb[0].mxu0 %v3025
        %v3075 = vpop.f32.mrb[0].mxu0
        %v3076 = vadd.f32 0.0, %v3075
        %v3077 = vpop.f32.mrb[0].mxu0
        %v3078 = vpop.f32.mrb[0].mxu0
        %v3079 = vadd.f32 0.0, %v3078
        %v3080 = vpop.f32.mrb[0].mxu0
        %3081 = vmatprep.mubr.bf16.mxu0 0
        %3082 = vmatmul.mubr.bf16.gmra.mrb[0].mxu0 %v3028
        %v3083 = vpop.f32.mrb[0].mxu0
        %v3084 = vadd.f32 0.0, %v3083
        %v3085 = vpop.f32.mrb[0].mxu0
        %v3086 = vpop.f32.mrb[0].mxu0
        %v3087 = vadd.f32 0.0, %v3086
        %v3088 = vpop.f32.mrb[0].mxu0
        %3089 = vmatprep.mubr.bf16.mxu0 0
        %3090 = vmatmul.mubr.bf16.gmra.mrb[0].mxu0 %v3031
        %v3091 = vpop.f32.mrb[0].mxu0
        %v3092 = vadd.f32 0.0, %v3091
        %v3093 = vpop.f32.mrb[0].mxu0
        %v3094 = vpop.f32.mrb[0].mxu0
        %v3095 = vadd.f32 0.0, %v3094
        %v3096 = vpop.f32.mrb[0].mxu0
        %3097 = vdwg.mxu0
        %v3098 = vadd.f32 %v2984, %v3068
        %v3099 = vadd.f32 %v2985, %v3071
        %v3100 = vadd.f32 %v2986, %v3076
        %v3101 = vadd.f32 %v2987, %v3079
        %v3102 = vadd.f32 %v2988, %v3084
        %v3103 = vadd.f32 %v2989, %v3087
        %v3104 = vadd.f32 %v2990, %v3092
        %v3105 = vadd.f32 %v2991, %v3095
        %s3106 = scalar_lea.vmem %s2992, 1 [#allocation2]
        %v3107 = vld [vmem:[%s3106] ss:$2 sm:$0xff]
        %s3108 = scalar_lea.vmem %s2992, 49 [#allocation2]
        %v3109 = vld [vmem:[%s3108] ss:$2 sm:$0xff]
        %s3110 = scalar_lea.vmem %s2992, 97 [#allocation2]
        %v3111 = vld [vmem:[%s3110] ss:$2 sm:$0xff]
        %s3112 = scalar_lea.vmem %s2992, 145 [#allocation2]
        %v3113 = vld [vmem:[%s3112] ss:$2 sm:$0xff]
        %s3114 = scalar_lea.vmem %s2992, 193 [#allocation2]
        %v3115 = vld [vmem:[%s3114] ss:$2 sm:$0xff]
        %s3116 = scalar_lea.vmem %s2992, 241 [#allocation2]
        %v3117 = vld [vmem:[%s3116] ss:$2 sm:$0xff]
        %s3118 = scalar_lea.vmem %s2992, 289 [#allocation2]
        %v3119 = vld [vmem:[%s3118] ss:$2 sm:$0xff]
        %s3120 = scalar_lea.vmem %s2992, 337 [#allocation2]
        %v3121 = vld [vmem:[%s3120] ss:$2 sm:$0xff]
        %v3122 = vpack.c.bf16 %v3109, %v3107
        %v3123 = vpack.c.bf16 %v3113, %v3111
        %v3124 = vpack.c.bf16 %v3117, %v3115
        %v3125 = vpack.c.bf16 %v3121, %v3119
        %s3126 = scalar_lea.vmem %s2, 56
        %v3127 = vld [vmem:[%s3126] sm:$0xf]
        %v3128 = vld [vmem:[%s3126 + $0x4] sm:$0xf]
        %v3131 = vunpack.c.l.b16 %v3127
        %v3132 = vunpack.c.l.b16 %v3128
        %v3133 = vpack.c.b16 %v3132, %v3131
        %v3136 = vsel %vm385, %v3122, 0
        %v3139 = vsel %vm385, %v3123, 0
        %v3142 = vsel %vm385, %v3124, 0
        %v3145 = vsel %vm385, %v3125, 0
        %3147 = vmatprep.subr.bf16.mxu0 0
        %3148 = vmatpush1.bf16.msra.mxu0 %v3133
        %3149 = vmatprep.subr.bf16.mxu0 0
        %3150 = vmatpush1.bf16.msra.mxu0 0
        %3151 = vmatprep.subr.bf16.mxu0 0
        %3152 = vmatpush1.bf16.msra.mxu0 0
        %3153 = vmatprep.subr.bf16.mxu0 0
        %3154 = vmatpush1.bf16.msra.mxu0 0
        %3155 = vmatprep.subr.bf16.mxu0 0
        %3156 = vmatpush1.bf16.msra.mxu0 0
        %3157 = vmatprep.subr.bf16.mxu0 0
        %3158 = vmatpush1.bf16.msra.mxu0 0
        %3159 = vmatprep.subr.bf16.mxu0 0
        %3160 = vmatpush1.bf16.msra.mxu0 0
        %3161 = vmatprep.subr.bf16.mxu0 0
        %3162 = vmatpush1.bf16.msra.mxu0 0
        %3163 = vmatprep.subr.bf16.mxu0 0
        %3164 = vmatpush1.bf16.msra.mxu0 0
        %3165 = vmatprep.subr.bf16.mxu0 0
        %3166 = vmatpush1.bf16.msra.mxu0 0
        %3167 = vmatprep.subr.bf16.mxu0 0
        %3168 = vmatpush1.bf16.msra.mxu0 0
        %3169 = vmatprep.subr.bf16.mxu0 0
        %3170 = vmatpush1.bf16.msra.mxu0 0
        %3171 = vmatprep.subr.bf16.mxu0 0
        %3172 = vmatpush1.bf16.msra.mxu0 0
        %3173 = vmatprep.subr.bf16.mxu0 0
        %3174 = vmatpush1.bf16.msra.mxu0 0
        %3175 = vmatprep.subr.bf16.mxu0 0
        %3176 = vmatpush1.bf16.msra.mxu0 0
        %3177 = vmatprep.subr.bf16.mxu0 0
        %3178 = vmatpush1.bf16.msra.mxu0 0
        %3179 = vmatprep.mubr.bf16.mxu0 0
        %3180 = vmatmul.mubr.bf16.gmra.mrb[0].mxu0 %v3136
        %v3181 = vpop.f32.mrb[0].mxu0
        %v3182 = vadd.f32 0.0, %v3181
        %v3183 = vpop.f32.mrb[0].mxu0
        %v3184 = vpop.f32.mrb[0].mxu0
        %v3185 = vadd.f32 0.0, %v3184
        %v3186 = vpop.f32.mrb[0].mxu0
        %3187 = vmatprep.mubr.bf16.mxu0 0
        %3188 = vmatmul.mubr.bf16.gmra.mrb[0].mxu0 %v3139
        %v3189 = vpop.f32.mrb[0].mxu0
        %v3190 = vadd.f32 0.0, %v3189
        %v3191 = vpop.f32.mrb[0].mxu0
        %v3192 = vpop.f32.mrb[0].mxu0
        %v3193 = vadd.f32 0.0, %v3192
        %v3194 = vpop.f32.mrb[0].mxu0
        %3195 = vmatprep.mubr.bf16.mxu0 0
        %3196 = vmatmul.mubr.bf16.gmra.mrb[0].mxu0 %v3142
        %v3197 = vpop.f32.mrb[0].mxu0
        %v3198 = vadd.f32 0.0, %v3197
        %v3199 = vpop.f32.mrb[0].mxu0
        %v3200 = vpop.f32.mrb[0].mxu0
        %v3201 = vadd.f32 0.0, %v3200
        %v3202 = vpop.f32.mrb[0].mxu0
        %3203 = vmatprep.mubr.bf16.mxu0 0
        %3204 = vmatmul.mubr.bf16.gmra.mrb[0].mxu0 %v3145
        %v3205 = vpop.f32.mrb[0].mxu0
        %v3206 = vadd.f32 0.0, %v3205
        %v3207 = vpop.f32.mrb[0].mxu0
        %v3208 = vpop.f32.mrb[0].mxu0
        %v3209 = vadd.f32 0.0, %v3208
        %v3210 = vpop.f32.mrb[0].mxu0
        %3211 = vdwg.mxu0
        %v3212 = vadd.f32 %v3098, %v3182
        %v3213 = vadd.f32 %v3099, %v3185
        %v3214 = vadd.f32 %v3100, %v3190
        %v3215 = vadd.f32 %v3101, %v3193
        %v3216 = vadd.f32 %v3102, %v3198
        %v3217 = vadd.f32 %v3103, %v3201
        %v3218 = vadd.f32 %v3104, %v3206
        %v3219 = vadd.f32 %v3105, %v3209
        %s3220 = scalar_lea.vmem %s2992, 2 [#allocation2]
        %v3221 = vld [vmem:[%s3220] ss:$2 sm:$0xff]
        %s3222 = scalar_lea.vmem %s2992, 50 [#allocation2]
        %v3223 = vld [vmem:[%s3222] ss:$2 sm:$0xff]
        %s3224 = scalar_lea.vmem %s2992, 98 [#allocation2]
        %v3225 = vld [vmem:[%s3224] ss:$2 sm:$0xff]
        %s3226 = scalar_lea.vmem %s2992, 146 [#allocation2]
        %v3227 = vld [vmem:[%s3226] ss:$2 sm:$0xff]
        %s3228 = scalar_lea.vmem %s2992, 194 [#allocation2]
        %v3229 = vld [vmem:[%s3228] ss:$2 sm:$0xff]
        %s3230 = scalar_lea.vmem %s2992, 242 [#allocation2]
        %v3231 = vld [vmem:[%s3230] ss:$2 sm:$0xff]
        %s3232 = scalar_lea.vmem %s2992, 290 [#allocation2]
        %v3233 = vld [vmem:[%s3232] ss:$2 sm:$0xff]
        %s3234 = scalar_lea.vmem %s2992, 338 [#allocation2]
        %v3235 = vld [vmem:[%s3234] ss:$2 sm:$0xff]
        %v3236 = vpack.c.bf16 %v3223, %v3221
        %v3237 = vpack.c.bf16 %v3227, %v3225
        %v3238 = vpack.c.bf16 %v3231, %v3229
        %v3239 = vpack.c.bf16 %v3235, %v3233
        %s3240 = scalar_lea.vmem %s2, 64
        %v3241 = vld [vmem:[%s3240] sm:$0xf]
        %v3242 = vld [vmem:[%s3240 + $0x4] sm:$0xf]
        %v3245 = vunpack.c.l.b16 %v3241
        %v3246 = vunpack.c.l.b16 %v3242
        %v3247 = vpack.c.b16 %v3246, %v3245
        %v3250 = vsel %vm385, %v3236, 0
        %v3253 = vsel %vm385, %v3237, 0
        %v3256 = vsel %vm385, %v3238, 0
        %v3259 = vsel %vm385, %v3239, 0
        %3261 = vmatprep.subr.bf16.mxu0 0
        %3262 = vmatpush1.bf16.msra.mxu0 %v3247
        %3263 = vmatprep.subr.bf16.mxu0 0
        %3264 = vmatpush1.bf16.msra.mxu0 0
        %3265 = vmatprep.subr.bf16.mxu0 0
        %3266 = vmatpush1.bf16.msra.mxu0 0
        %3267 = vmatprep.subr.bf16.mxu0 0
        %3268 = vmatpush1.bf16.msra.mxu0 0
        %3269 = vmatprep.subr.bf16.mxu0 0
        %3270 = vmatpush1.bf16.msra.mxu0 0
        %3271 = vmatprep.subr.bf16.mxu0 0
        %3272 = vmatpush1.bf16.msra.mxu0 0
        %3273 = vmatprep.subr.bf16.mxu0 0
        %3274 = vmatpush1.bf16.msra.mxu0 0
        %3275 = vmatprep.subr.bf16.mxu0 0
        %3276 = vmatpush1.bf16.msra.mxu0 0
        %3277 = vmatprep.subr.bf16.mxu0 0
        %3278 = vmatpush1.bf16.msra.mxu0 0
        %3279 = vmatprep.subr.bf16.mxu0 0
        %3280 = vmatpush1.bf16.msra.mxu0 0
        %3281 = vmatprep.subr.bf16.mxu0 0
        %3282 = vmatpush1.bf16.msra.mxu0 0
        %3283 = vmatprep.subr.bf16.mxu0 0
        %3284 = vmatpush1.bf16.msra.mxu0 0
        %3285 = vmatprep.subr.bf16.mxu0 0
        %3286 = vmatpush1.bf16.msra.mxu0 0
        %3287 = vmatprep.subr.bf16.mxu0 0
        %3288 = vmatpush1.bf16.msra.mxu0 0
        %3289 = vmatprep.subr.bf16.mxu0 0
        %3290 = vmatpush1.bf16.msra.mxu0 0
        %3291 = vmatprep.subr.bf16.mxu0 0
        %3292 = vmatpush1.bf16.msra.mxu0 0
        %3293 = vmatprep.mubr.bf16.mxu0 0
        %3294 = vmatmul.mubr.bf16.gmra.mrb[0].mxu0 %v3250
        %v3295 = vpop.f32.mrb[0].mxu0
        %v3296 = vadd.f32 0.0, %v3295
        %v3297 = vpop.f32.mrb[0].mxu0
        %v3298 = vpop.f32.mrb[0].mxu0
        %v3299 = vadd.f32 0.0, %v3298
        %v3300 = vpop.f32.mrb[0].mxu0
        %3301 = vmatprep.mubr.bf16.mxu0 0
        %3302 = vmatmul.mubr.bf16.gmra.mrb[0].mxu0 %v3253
        %v3303 = vpop.f32.mrb[0].mxu0
        %v3304 = vadd.f32 0.0, %v3303
        %v3305 = vpop.f32.mrb[0].mxu0
        %v3306 = vpop.f32.mrb[0].mxu0
        %v3307 = vadd.f32 0.0, %v3306
        %v3308 = vpop.f32.mrb[0].mxu0
        %3309 = vmatprep.mubr.bf16.mxu0 0
        %3310 = vmatmul.mubr.bf16.gmra.mrb[0].mxu0 %v3256
        %v3311 = vpop.f32.mrb[0].mxu0
        %v3312 = vadd.f32 0.0, %v3311
        %v3313 = vpop.f32.mrb[0].mxu0
        %v3314 = vpop.f32.mrb[0].mxu0
        %v3315 = vadd.f32 0.0, %v3314
        %v3316 = vpop.f32.mrb[0].mxu0
        %3317 = vmatprep.mubr.bf16.mxu0 0
        %3318 = vmatmul.mubr.bf16.gmra.mrb[0].mxu0 %v3259
        %v3319 = vpop.f32.mrb[0].mxu0
        %v3320 = vadd.f32 0.0, %v3319
        %v3321 = vpop.f32.mrb[0].mxu0
        %v3322 = vpop.f32.mrb[0].mxu0
        %v3323 = vadd.f32 0.0, %v3322
        %v3324 = vpop.f32.mrb[0].mxu0
        %3325 = vdwg.mxu0
        %v3326 = vadd.f32 %v3212, %v3296
        %v3327 = vadd.f32 %v3213, %v3299
        %v3328 = vadd.f32 %v3214, %v3304
        %v3329 = vadd.f32 %v3215, %v3307
        %v3330 = vadd.f32 %v3216, %v3312
        %v3331 = vadd.f32 %v3217, %v3315
        %v3332 = vadd.f32 %v3218, %v3320
        %v3333 = vadd.f32 %v3219, %v3323
        %v3334 = vmax.f32 %v3326, 0.0
        %v3335 = vmax.f32 %v3327, 0.0
        %v3336 = vmax.f32 %v3328, 0.0
        %v3337 = vmax.f32 %v3329, 0.0
        %v3338 = vmax.f32 %v3330, 0.0
        %v3339 = vmax.f32 %v3331, 0.0
        %v3340 = vmax.f32 %v3332, 0.0
        %v3341 = vmax.f32 %v3333, 0.0
        %s3342 = scalar_lea.vmem [#allocation3], 16
        %3343 = vst.msk [vmem:[%s3342 + $0x1] sm:$0xff] %vm438, %v3334
        %3344 = vst.msk [vmem:[%s3342 + $0x11] sm:$0xff] %vm438, %v3335
        %3345 = vst.msk [vmem:[%s3342 + $0x21] sm:$0xff] %vm438, %v3336
        %3346 = vst.msk [vmem:[%s3342 + $0x31] sm:$0xff] %vm438, %v3337
        %3347 = vst.msk [vmem:[%s3342 + $0x41] sm:$0xff] %vm438, %v3338
        %3348 = vst.msk [vmem:[%s3342 + $0x51] sm:$0xff] %vm438, %v3339
        %3349 = vst.msk [vmem:[%s3342 + $0x61] sm:$0xff] %vm438, %v3340
        %3350 = vst.msk [vmem:[%s3342 + $0x71] sm:$0xff] %vm438, %v3341
        %v3351 = vld [vmem:[#allocation3] sm:$0xff]
        %v3352 = vld [vmem:[#allocation3 + $0x10] sm:$0xff]
        %v3353 = vld [vmem:[#allocation3 + $0x20] sm:$0xff]
        %v3354 = vld [vmem:[#allocation3 + $0x30] sm:$0xff]
        %v3355 = vld [vmem:[#allocation3 + $0x40] sm:$0xff]
        %v3356 = vld [vmem:[#allocation3 + $0x50] sm:$0xff]
        %v3357 = vld [vmem:[#allocation3 + $0x60] sm:$0xff]
        %v3358 = vld [vmem:[#allocation3 + $0x70] sm:$0xff]
        %v3359 = vpack.c.bf16 %v3352, %v3351
        %v3360 = vpack.c.bf16 %v3354, %v3353
        %v3361 = vpack.c.bf16 %v3356, %v3355
        %v3362 = vpack.c.bf16 %v3358, %v3357
        %v3363 = vld [vmem:[%s3] sm:$0xf]
        %v3364 = vld [vmem:[%s3 + $0x4] sm:$0xf]
        %v3365 = vld [vmem:[%s3 + $0x8] sm:$0xf]
        %v3366 = vld [vmem:[%s3 + $0xc] sm:$0xf]
        %v3367 = vld [vmem:[#allocation3 + $0x1] sm:$0xff]
        %v3368 = vld [vmem:[#allocation3 + $0x11] sm:$0xff]
        %v3369 = vld [vmem:[#allocation3 + $0x21] sm:$0xff]
        %v3370 = vld [vmem:[#allocation3 + $0x31] sm:$0xff]
        %v3371 = vld [vmem:[#allocation3 + $0x41] sm:$0xff]
        %v3372 = vld [vmem:[#allocation3 + $0x51] sm:$0xff]
        %v3373 = vld [vmem:[#allocation3 + $0x61] sm:$0xff]
        %v3374 = vld [vmem:[#allocation3 + $0x71] sm:$0xff]
        %v3375 = vpack.c.bf16 %v3368, %v3367
        %v3376 = vpack.c.bf16 %v3370, %v3369
        %v3377 = vpack.c.bf16 %v3372, %v3371
        %v3378 = vpack.c.bf16 %v3374, %v3373
        %s3379 = scalar_lea.vmem %s3, 16
        %v3380 = vld [vmem:[%s3379] sm:$0xf]
        %v3381 = vld [vmem:[%s3379 + $0x4] sm:$0xf]
        %v3382 = vld [vmem:[%s3379 + $0x8] sm:$0xf]
        %v3383 = vld [vmem:[%s3379 + $0xc] sm:$0xf]
        %v3388 = vunpack.c.l.b16 %v3380
        %v3389 = vunpack.c.l.b16 %v3381
        %v3390 = vunpack.c.l.b16 %v3382
        %v3391 = vunpack.c.l.b16 %v3383
        %v3392 = vpack.c.b16 %v3389, %v3388
        %v3393 = vpack.c.b16 %v3391, %v3390
        %v3397 = vsel %vm438, %v3375, 0
        %v3400 = vsel %vm438, %v3376, 0
        %v3403 = vsel %vm438, %v3377, 0
        %v3406 = vsel %vm438, %v3378, 0
        %3408 = vmatprep.subr.bf16.mxu0 0
        %3409 = vmatpush1.bf16.msra.mxu0 %v3392
        %3410 = vmatprep.subr.bf16.mxu0 0
        %3411 = vmatpush1.bf16.msra.mxu0 %v3393
        %3412 = vmatprep.subr.bf16.mxu0 0
        %3413 = vmatpush1.bf16.msra.mxu0 0
        %3414 = vmatprep.subr.bf16.mxu0 0
        %3415 = vmatpush1.bf16.msra.mxu0 0
        %3416 = vmatprep.subr.bf16.mxu0 0
        %3417 = vmatpush1.bf16.msra.mxu0 0
        %3418 = vmatprep.subr.bf16.mxu0 0
        %3419 = vmatpush1.bf16.msra.mxu0 0
        %3420 = vmatprep.subr.bf16.mxu0 0
        %3421 = vmatpush1.bf16.msra.mxu0 0
        %3422 = vmatprep.subr.bf16.mxu0 0
        %3423 = vmatpush1.bf16.msra.mxu0 0
        %3424 = vmatprep.subr.bf16.mxu0 0
        %3425 = vmatpush1.bf16.msra.mxu0 0
        %3426 = vmatprep.subr.bf16.mxu0 0
        %3427 = vmatpush1.bf16.msra.mxu0 0
        %3428 = vmatprep.subr.bf16.mxu0 0
        %3429 = vmatpush1.bf16.msra.mxu0 0
        %3430 = vmatprep.subr.bf16.mxu0 0
        %3431 = vmatpush1.bf16.msra.mxu0 0
        %3432 = vmatprep.subr.bf16.mxu0 0
        %3433 = vmatpush1.bf16.msra.mxu0 0
        %3434 = vmatprep.subr.bf16.mxu0 0
        %3435 = vmatpush1.bf16.msra.mxu0 0
        %3436 = vmatprep.subr.bf16.mxu0 0
        %3437 = vmatpush1.bf16.msra.mxu0 0
        %3438 = vmatprep.subr.bf16.mxu0 0
        %3439 = vmatpush1.bf16.msra.mxu0 0
        %3440 = vmatprep.mubr.bf16.mxu0 0
        %3441 = vmatmul.mubr.bf16.gmra.mrb[0].mxu0 %v3397
        %v3442 = vpop.f32.mrb[0].mxu0
        %v3443 = vadd.f32 0.0, %v3442
        %v3444 = vpop.f32.mrb[0].mxu0
        %v3445 = vpop.f32.mrb[0].mxu0
        %v3446 = vadd.f32 0.0, %v3445
        %v3447 = vpop.f32.mrb[0].mxu0
        %3448 = vmatprep.mubr.bf16.mxu0 0
        %3449 = vmatmul.mubr.bf16.gmra.mrb[0].mxu0 %v3400
        %v3450 = vpop.f32.mrb[0].mxu0
        %v3451 = vadd.f32 0.0, %v3450
        %v3452 = vpop.f32.mrb[0].mxu0
        %v3453 = vpop.f32.mrb[0].mxu0
        %v3454 = vadd.f32 0.0, %v3453
        %v3455 = vpop.f32.mrb[0].mxu0
        %3456 = vmatprep.mubr.bf16.mxu0 0
        %3457 = vmatmul.mubr.bf16.gmra.mrb[0].mxu0 %v3403
        %v3458 = vpop.f32.mrb[0].mxu0
        %v3459 = vadd.f32 0.0, %v3458
        %v3460 = vpop.f32.mrb[0].mxu0
        %v3461 = vpop.f32.mrb[0].mxu0
        %v3462 = vadd.f32 0.0, %v3461
        %v3463 = vpop.f32.mrb[0].mxu0
        %3464 = vmatprep.mubr.bf16.mxu0 0
        %3465 = vmatmul.mubr.bf16.gmra.mrb[0].mxu0 %v3406
        %v3466 = vpop.f32.mrb[0].mxu0
        %v3467 = vadd.f32 0.0, %v3466
        %v3468 = vpop.f32.mrb[0].mxu0
        %v3469 = vpop.f32.mrb[0].mxu0
        %v3470 = vadd.f32 0.0, %v3469
        %v3471 = vpop.f32.mrb[0].mxu0
        %3472 = vdwg.mxu0
        %v3477 = vunpack.c.l.b16 %v3363
        %v3478 = vunpack.c.l.b16 %v3364
        %v3479 = vunpack.c.l.b16 %v3365
        %v3480 = vunpack.c.l.b16 %v3366
        %v3481 = vpack.c.b16 %v3478, %v3477
        %v3482 = vpack.c.b16 %v3480, %v3479
        %v3486 = vsel %vm438, %v3359, 0
        %v3489 = vsel %vm438, %v3360, 0
        %v3492 = vsel %vm438, %v3361, 0
        %v3495 = vsel %vm438, %v3362, 0
        %3497 = vmatprep.subr.bf16.mxu0 0
        %3498 = vmatpush1.bf16.msra.mxu0 %v3481
        %3499 = vmatprep.subr.bf16.mxu0 0
        %3500 = vmatpush1.bf16.msra.mxu0 %v3482
        %3501 = vmatprep.subr.bf16.mxu0 0
        %3502 = vmatpush1.bf16.msra.mxu0 0
        %3503 = vmatprep.subr.bf16.mxu0 0
        %3504 = vmatpush1.bf16.msra.mxu0 0
        %3505 = vmatprep.subr.bf16.mxu0 0
        %3506 = vmatpush1.bf16.msra.mxu0 0
        %3507 = vmatprep.subr.bf16.mxu0 0
        %3508 = vmatpush1.bf16.msra.mxu0 0
        %3509 = vmatprep.subr.bf16.mxu0 0
        %3510 = vmatpush1.bf16.msra.mxu0 0
        %3511 = vmatprep.subr.bf16.mxu0 0
        %3512 = vmatpush1.bf16.msra.mxu0 0
        %3513 = vmatprep.subr.bf16.mxu0 0
        %3514 = vmatpush1.bf16.msra.mxu0 0
        %3515 = vmatprep.subr.bf16.mxu0 0
        %3516 = vmatpush1.bf16.msra.mxu0 0
        %3517 = vmatprep.subr.bf16.mxu0 0
        %3518 = vmatpush1.bf16.msra.mxu0 0
        %3519 = vmatprep.subr.bf16.mxu0 0
        %3520 = vmatpush1.bf16.msra.mxu0 0
        %3521 = vmatprep.subr.bf16.mxu0 0
        %3522 = vmatpush1.bf16.msra.mxu0 0
        %3523 = vmatprep.subr.bf16.mxu0 0
        %3524 = vmatpush1.bf16.msra.mxu0 0
        %3525 = vmatprep.subr.bf16.mxu0 0
        %3526 = vmatpush1.bf16.msra.mxu0 0
        %3527 = vmatprep.subr.bf16.mxu0 0
        %3528 = vmatpush1.bf16.msra.mxu0 0
        %3529 = vmatprep.mubr.bf16.mxu0 0
        %3530 = vmatmul.mubr.bf16.gmra.mrb[0].mxu0 %v3486
        %v3531 = vpop.f32.mrb[0].mxu0
        %v3532 = vadd.f32 %v3443, %v3531
        %v3533 = vpop.f32.mrb[0].mxu0
        %v3534 = vpop.f32.mrb[0].mxu0
        %v3535 = vadd.f32 %v3446, %v3534
        %v3536 = vpop.f32.mrb[0].mxu0
        %3537 = vmatprep.mubr.bf16.mxu0 0
        %3538 = vmatmul.mubr.bf16.gmra.mrb[0].mxu0 %v3489
        %v3539 = vpop.f32.mrb[0].mxu0
        %v3540 = vadd.f32 %v3451, %v3539
        %v3541 = vpop.f32.mrb[0].mxu0
        %v3542 = vpop.f32.mrb[0].mxu0
        %v3543 = vadd.f32 %v3454, %v3542
        %v3544 = vpop.f32.mrb[0].mxu0
        %3545 = vmatprep.mubr.bf16.mxu0 0
        %3546 = vmatmul.mubr.bf16.gmra.mrb[0].mxu0 %v3492
        %v3547 = vpop.f32.mrb[0].mxu0
        %v3548 = vadd.f32 %v3459, %v3547
        %v3549 = vpop.f32.mrb[0].mxu0
        %v3550 = vpop.f32.mrb[0].mxu0
        %v3551 = vadd.f32 %v3462, %v3550
        %v3552 = vpop.f32.mrb[0].mxu0
        %3553 = vmatprep.mubr.bf16.mxu0 0
        %3554 = vmatmul.mubr.bf16.gmra.mrb[0].mxu0 %v3495
        %v3555 = vpop.f32.mrb[0].mxu0
        %v3556 = vadd.f32 %v3467, %v3555
        %v3557 = vpop.f32.mrb[0].mxu0
        %v3558 = vpop.f32.mrb[0].mxu0
        %v3559 = vadd.f32 %v3470, %v3558
        %v3560 = vpop.f32.mrb[0].mxu0
        %3561 = vdwg.mxu0
        %v3562 = vld [vmem:[#allocation3 + $0x2] sm:$0xff]
        %v3563 = vld [vmem:[#allocation3 + $0x12] sm:$0xff]
        %v3564 = vld [vmem:[#allocation3 + $0x22] sm:$0xff]
        %v3565 = vld [vmem:[#allocation3 + $0x32] sm:$0xff]
        %v3566 = vld [vmem:[#allocation3 + $0x42] sm:$0xff]
        %v3567 = vld [vmem:[#allocation3 + $0x52] sm:$0xff]
        %v3568 = vld [vmem:[#allocation3 + $0x62] sm:$0xff]
        %v3569 = vld [vmem:[#allocation3 + $0x72] sm:$0xff]
        %v3570 = vpack.c.bf16 %v3563, %v3562
        %v3571 = vpack.c.bf16 %v3565, %v3564
        %v3572 = vpack.c.bf16 %v3567, %v3566
        %v3573 = vpack.c.bf16 %v3569, %v3568
        %s3574 = scalar_lea.vmem %s3, 32
        %v3575 = vld [vmem:[%s3574] sm:$0xf]
        %v3576 = vld [vmem:[%s3574 + $0x4] sm:$0xf]
        %v3577 = vld [vmem:[%s3574 + $0x8] sm:$0xf]
        %v3578 = vld [vmem:[%s3574 + $0xc] sm:$0xf]
        %v3583 = vunpack.c.l.b16 %v3575
        %v3584 = vunpack.c.l.b16 %v3576
        %v3585 = vunpack.c.l.b16 %v3577
        %v3586 = vunpack.c.l.b16 %v3578
        %v3587 = vpack.c.b16 %v3584, %v3583
        %v3588 = vpack.c.b16 %v3586, %v3585
        %v3592 = vsel %vm438, %v3570, 0
        %v3595 = vsel %vm438, %v3571, 0
        %v3598 = vsel %vm438, %v3572, 0
        %v3601 = vsel %vm438, %v3573, 0
        %3603 = vmatprep.subr.bf16.mxu0 0
        %3604 = vmatpush1.bf16.msra.mxu0 %v3587
        %3605 = vmatprep.subr.bf16.mxu0 0
        %3606 = vmatpush1.bf16.msra.mxu0 %v3588
        %3607 = vmatprep.subr.bf16.mxu0 0
        %3608 = vmatpush1.bf16.msra.mxu0 0
        %3609 = vmatprep.subr.bf16.mxu0 0
        %3610 = vmatpush1.bf16.msra.mxu0 0
        %3611 = vmatprep.subr.bf16.mxu0 0
        %3612 = vmatpush1.bf16.msra.mxu0 0
        %3613 = vmatprep.subr.bf16.mxu0 0
        %3614 = vmatpush1.bf16.msra.mxu0 0
        %3615 = vmatprep.subr.bf16.mxu0 0
        %3616 = vmatpush1.bf16.msra.mxu0 0
        %3617 = vmatprep.subr.bf16.mxu0 0
        %3618 = vmatpush1.bf16.msra.mxu0 0
        %3619 = vmatprep.subr.bf16.mxu0 0
        %3620 = vmatpush1.bf16.msra.mxu0 0
        %3621 = vmatprep.subr.bf16.mxu0 0
        %3622 = vmatpush1.bf16.msra.mxu0 0
        %3623 = vmatprep.subr.bf16.mxu0 0
        %3624 = vmatpush1.bf16.msra.mxu0 0
        %3625 = vmatprep.subr.bf16.mxu0 0
        %3626 = vmatpush1.bf16.msra.mxu0 0
        %3627 = vmatprep.subr.bf16.mxu0 0
        %3628 = vmatpush1.bf16.msra.mxu0 0
        %3629 = vmatprep.subr.bf16.mxu0 0
        %3630 = vmatpush1.bf16.msra.mxu0 0
        %3631 = vmatprep.subr.bf16.mxu0 0
        %3632 = vmatpush1.bf16.msra.mxu0 0
        %3633 = vmatprep.subr.bf16.mxu0 0
        %3634 = vmatpush1.bf16.msra.mxu0 0
        %3635 = vmatprep.mubr.bf16.mxu0 0
        %3636 = vmatmul.mubr.bf16.gmra.mrb[0].mxu0 %v3592
        %v3637 = vpop.f32.mrb[0].mxu0
        %v3638 = vadd.f32 0.0, %v3637
        %v3639 = vpop.f32.mrb[0].mxu0
        %v3640 = vpop.f32.mrb[0].mxu0
        %v3641 = vadd.f32 0.0, %v3640
        %v3642 = vpop.f32.mrb[0].mxu0
        %3643 = vmatprep.mubr.bf16.mxu0 0
        %3644 = vmatmul.mubr.bf16.gmra.mrb[0].mxu0 %v3595
        %v3645 = vpop.f32.mrb[0].mxu0
        %v3646 = vadd.f32 0.0, %v3645
        %v3647 = vpop.f32.mrb[0].mxu0
        %v3648 = vpop.f32.mrb[0].mxu0
        %v3649 = vadd.f32 0.0, %v3648
        %v3650 = vpop.f32.mrb[0].mxu0
        %3651 = vmatprep.mubr.bf16.mxu0 0
        %3652 = vmatmul.mubr.bf16.gmra.mrb[0].mxu0 %v3598
        %v3653 = vpop.f32.mrb[0].mxu0
        %v3654 = vadd.f32 0.0, %v3653
        %v3655 = vpop.f32.mrb[0].mxu0
        %v3656 = vpop.f32.mrb[0].mxu0
        %v3657 = vadd.f32 0.0, %v3656
        %v3658 = vpop.f32.mrb[0].mxu0
        %3659 = vmatprep.mubr.bf16.mxu0 0
        %3660 = vmatmul.mubr.bf16.gmra.mrb[0].mxu0 %v3601
        %v3661 = vpop.f32.mrb[0].mxu0
        %v3662 = vadd.f32 0.0, %v3661
        %v3663 = vpop.f32.mrb[0].mxu0
        %v3664 = vpop.f32.mrb[0].mxu0
        %v3665 = vadd.f32 0.0, %v3664
        %v3666 = vpop.f32.mrb[0].mxu0
        %3667 = vdwg.mxu0
        %v3668 = vadd.f32 %v3532, %v3638
        %v3669 = vadd.f32 %v3535, %v3641
        %v3670 = vadd.f32 %v3540, %v3646
        %v3671 = vadd.f32 %v3543, %v3649
        %v3672 = vadd.f32 %v3548, %v3654
        %v3673 = vadd.f32 %v3551, %v3657
        %v3674 = vadd.f32 %v3556, %v3662
        %v3675 = vadd.f32 %v3559, %v3665
        %v3676 = vld [vmem:[%s3342] sm:$0xff]
        %v3677 = vld [vmem:[%s3342 + $0x10] sm:$0xff]
        %v3678 = vld [vmem:[%s3342 + $0x20] sm:$0xff]
        %v3679 = vld [vmem:[%s3342 + $0x30] sm:$0xff]
        %v3680 = vld [vmem:[%s3342 + $0x40] sm:$0xff]
        %v3681 = vld [vmem:[%s3342 + $0x50] sm:$0xff]
        %v3682 = vld [vmem:[%s3342 + $0x60] sm:$0xff]
        %v3683 = vld [vmem:[%s3342 + $0x70] sm:$0xff]
        %v3684 = vpack.c.bf16 %v3677, %v3676
        %v3685 = vpack.c.bf16 %v3679, %v3678
        %v3686 = vpack.c.bf16 %v3681, %v3680
        %v3687 = vpack.c.bf16 %v3683, %v3682
        %s3688 = scalar_lea.vmem %s3, 48
        %v3689 = vld [vmem:[%s3688] sm:$0xf]
        %v3690 = vld [vmem:[%s3688 + $0x4] sm:$0xf]
        %v3691 = vld [vmem:[%s3688 + $0x8] sm:$0xf]
        %v3692 = vld [vmem:[%s3688 + $0xc] sm:$0xf]
        %v3697 = vunpack.c.l.b16 %v3689
        %v3698 = vunpack.c.l.b16 %v3690
        %v3699 = vunpack.c.l.b16 %v3691
        %v3700 = vunpack.c.l.b16 %v3692
        %v3701 = vpack.c.b16 %v3698, %v3697
        %v3702 = vpack.c.b16 %v3700, %v3699
        %v3706 = vsel %vm438, %v3684, 0
        %v3709 = vsel %vm438, %v3685, 0
        %v3712 = vsel %vm438, %v3686, 0
        %v3715 = vsel %vm438, %v3687, 0
        %3717 = vmatprep.subr.bf16.mxu0 0
        %3718 = vmatpush1.bf16.msra.mxu0 %v3701
        %3719 = vmatprep.subr.bf16.mxu0 0
        %3720 = vmatpush1.bf16.msra.mxu0 %v3702
        %3721 = vmatprep.subr.bf16.mxu0 0
        %3722 = vmatpush1.bf16.msra.mxu0 0
        %3723 = vmatprep.subr.bf16.mxu0 0
        %3724 = vmatpush1.bf16.msra.mxu0 0
        %3725 = vmatprep.subr.bf16.mxu0 0
        %3726 = vmatpush1.bf16.msra.mxu0 0
        %3727 = vmatprep.subr.bf16.mxu0 0
        %3728 = vmatpush1.bf16.msra.mxu0 0
        %3729 = vmatprep.subr.bf16.mxu0 0
        %3730 = vmatpush1.bf16.msra.mxu0 0
        %3731 = vmatprep.subr.bf16.mxu0 0
        %3732 = vmatpush1.bf16.msra.mxu0 0
        %3733 = vmatprep.subr.bf16.mxu0 0
        %3734 = vmatpush1.bf16.msra.mxu0 0
        %3735 = vmatprep.subr.bf16.mxu0 0
        %3736 = vmatpush1.bf16.msra.mxu0 0
        %3737 = vmatprep.subr.bf16.mxu0 0
        %3738 = vmatpush1.bf16.msra.mxu0 0
        %3739 = vmatprep.subr.bf16.mxu0 0
        %3740 = vmatpush1.bf16.msra.mxu0 0
        %3741 = vmatprep.subr.bf16.mxu0 0
        %3742 = vmatpush1.bf16.msra.mxu0 0
        %3743 = vmatprep.subr.bf16.mxu0 0
        %3744 = vmatpush1.bf16.msra.mxu0 0
        %3745 = vmatprep.subr.bf16.mxu0 0
        %3746 = vmatpush1.bf16.msra.mxu0 0
        %3747 = vmatprep.subr.bf16.mxu0 0
        %3748 = vmatpush1.bf16.msra.mxu0 0
        %3749 = vmatprep.mubr.bf16.mxu0 0
        %3750 = vmatmul.mubr.bf16.gmra.mrb[0].mxu0 %v3706
        %v3751 = vpop.f32.mrb[0].mxu0
        %v3752 = vadd.f32 0.0, %v3751
        %v3753 = vpop.f32.mrb[0].mxu0
        %v3754 = vpop.f32.mrb[0].mxu0
        %v3755 = vadd.f32 0.0, %v3754
        %v3756 = vpop.f32.mrb[0].mxu0
        %3757 = vmatprep.mubr.bf16.mxu0 0
        %3758 = vmatmul.mubr.bf16.gmra.mrb[0].mxu0 %v3709
        %v3759 = vpop.f32.mrb[0].mxu0
        %v3760 = vadd.f32 0.0, %v3759
        %v3761 = vpop.f32.mrb[0].mxu0
        %v3762 = vpop.f32.mrb[0].mxu0
        %v3763 = vadd.f32 0.0, %v3762
        %v3764 = vpop.f32.mrb[0].mxu0
        %3765 = vmatprep.mubr.bf16.mxu0 0
        %3766 = vmatmul.mubr.bf16.gmra.mrb[0].mxu0 %v3712
        %v3767 = vpop.f32.mrb[0].mxu0
        %v3768 = vadd.f32 0.0, %v3767
        %v3769 = vpop.f32.mrb[0].mxu0
        %v3770 = vpop.f32.mrb[0].mxu0
        %v3771 = vadd.f32 0.0, %v3770
        %v3772 = vpop.f32.mrb[0].mxu0
        %3773 = vmatprep.mubr.bf16.mxu0 0
        %3774 = vmatmul.mubr.bf16.gmra.mrb[0].mxu0 %v3715
        %v3775 = vpop.f32.mrb[0].mxu0
        %v3776 = vadd.f32 0.0, %v3775
        %v3777 = vpop.f32.mrb[0].mxu0
        %v3778 = vpop.f32.mrb[0].mxu0
        %v3779 = vadd.f32 0.0, %v3778
        %v3780 = vpop.f32.mrb[0].mxu0
        %3781 = vdwg.mxu0
        %v3782 = vadd.f32 %v3668, %v3752
        %v3783 = vadd.f32 %v3669, %v3755
        %v3784 = vadd.f32 %v3670, %v3760
        %v3785 = vadd.f32 %v3671, %v3763
        %v3786 = vadd.f32 %v3672, %v3768
        %v3787 = vadd.f32 %v3673, %v3771
        %v3788 = vadd.f32 %v3674, %v3776
        %v3789 = vadd.f32 %v3675, %v3779
        %v3790 = vld [vmem:[%s3342 + $0x1] sm:$0xff]
        %v3791 = vld [vmem:[%s3342 + $0x11] sm:$0xff]
        %v3792 = vld [vmem:[%s3342 + $0x21] sm:$0xff]
        %v3793 = vld [vmem:[%s3342 + $0x31] sm:$0xff]
        %v3794 = vld [vmem:[%s3342 + $0x41] sm:$0xff]
        %v3795 = vld [vmem:[%s3342 + $0x51] sm:$0xff]
        %v3796 = vld [vmem:[%s3342 + $0x61] sm:$0xff]
        %v3797 = vld [vmem:[%s3342 + $0x71] sm:$0xff]
        %v3798 = vpack.c.bf16 %v3791, %v3790
        %v3799 = vpack.c.bf16 %v3793, %v3792
        %v3800 = vpack.c.bf16 %v3795, %v3794
        %v3801 = vpack.c.bf16 %v3797, %v3796
        %s3802 = scalar_lea.vmem %s3, 64
        %v3803 = vld [vmem:[%s3802] sm:$0xf]
        %v3804 = vld [vmem:[%s3802 + $0x4] sm:$0xf]
        %v3805 = vld [vmem:[%s3802 + $0x8] sm:$0xf]
        %v3806 = vld [vmem:[%s3802 + $0xc] sm:$0xf]
        %v3811 = vunpack.c.l.b16 %v3803
        %v3812 = vunpack.c.l.b16 %v3804
        %v3813 = vunpack.c.l.b16 %v3805
        %v3814 = vunpack.c.l.b16 %v3806
        %v3815 = vpack.c.b16 %v3812, %v3811
        %v3816 = vpack.c.b16 %v3814, %v3813
        %v3820 = vsel %vm438, %v3798, 0
        %v3823 = vsel %vm438, %v3799, 0
        %v3826 = vsel %vm438, %v3800, 0
        %v3829 = vsel %vm438, %v3801, 0
        %3831 = vmatprep.subr.bf16.mxu0 0
        %3832 = vmatpush1.bf16.msra.mxu0 %v3815
        %3833 = vmatprep.subr.bf16.mxu0 0
        %3834 = vmatpush1.bf16.msra.mxu0 %v3816
        %3835 = vmatprep.subr.bf16.mxu0 0
        %3836 = vmatpush1.bf16.msra.mxu0 0
        %3837 = vmatprep.subr.bf16.mxu0 0
        %3838 = vmatpush1.bf16.msra.mxu0 0
        %3839 = vmatprep.subr.bf16.mxu0 0
        %3840 = vmatpush1.bf16.msra.mxu0 0
        %3841 = vmatprep.subr.bf16.mxu0 0
        %3842 = vmatpush1.bf16.msra.mxu0 0
        %3843 = vmatprep.subr.bf16.mxu0 0
        %3844 = vmatpush1.bf16.msra.mxu0 0
        %3845 = vmatprep.subr.bf16.mxu0 0
        %3846 = vmatpush1.bf16.msra.mxu0 0
        %3847 = vmatprep.subr.bf16.mxu0 0
        %3848 = vmatpush1.bf16.msra.mxu0 0
        %3849 = vmatprep.subr.bf16.mxu0 0
        %3850 = vmatpush1.bf16.msra.mxu0 0
        %3851 = vmatprep.subr.bf16.mxu0 0
        %3852 = vmatpush1.bf16.msra.mxu0 0
        %3853 = vmatprep.subr.bf16.mxu0 0
        %3854 = vmatpush1.bf16.msra.mxu0 0
        %3855 = vmatprep.subr.bf16.mxu0 0
        %3856 = vmatpush1.bf16.msra.mxu0 0
        %3857 = vmatprep.subr.bf16.mxu0 0
        %3858 = vmatpush1.bf16.msra.mxu0 0
        %3859 = vmatprep.subr.bf16.mxu0 0
        %3860 = vmatpush1.bf16.msra.mxu0 0
        %3861 = vmatprep.subr.bf16.mxu0 0
        %3862 = vmatpush1.bf16.msra.mxu0 0
        %3863 = vmatprep.mubr.bf16.mxu0 0
        %3864 = vmatmul.mubr.bf16.gmra.mrb[0].mxu0 %v3820
        %v3865 = vpop.f32.mrb[0].mxu0
        %v3866 = vadd.f32 0.0, %v3865
        %v3867 = vpop.f32.mrb[0].mxu0
        %v3868 = vpop.f32.mrb[0].mxu0
        %v3869 = vadd.f32 0.0, %v3868
        %v3870 = vpop.f32.mrb[0].mxu0
        %3871 = vmatprep.mubr.bf16.mxu0 0
        %3872 = vmatmul.mubr.bf16.gmra.mrb[0].mxu0 %v3823
        %v3873 = vpop.f32.mrb[0].mxu0
        %v3874 = vadd.f32 0.0, %v3873
        %v3875 = vpop.f32.mrb[0].mxu0
        %v3876 = vpop.f32.mrb[0].mxu0
        %v3877 = vadd.f32 0.0, %v3876
        %v3878 = vpop.f32.mrb[0].mxu0
        %3879 = vmatprep.mubr.bf16.mxu0 0
        %3880 = vmatmul.mubr.bf16.gmra.mrb[0].mxu0 %v3826
        %v3881 = vpop.f32.mrb[0].mxu0
        %v3882 = vadd.f32 0.0, %v3881
        %v3883 = vpop.f32.mrb[0].mxu0
        %v3884 = vpop.f32.mrb[0].mxu0
        %v3885 = vadd.f32 0.0, %v3884
        %v3886 = vpop.f32.mrb[0].mxu0
        %3887 = vmatprep.mubr.bf16.mxu0 0
        %3888 = vmatmul.mubr.bf16.gmra.mrb[0].mxu0 %v3829
        %v3889 = vpop.f32.mrb[0].mxu0
        %v3890 = vadd.f32 0.0, %v3889
        %v3891 = vpop.f32.mrb[0].mxu0
        %v3892 = vpop.f32.mrb[0].mxu0
        %v3893 = vadd.f32 0.0, %v3892
        %v3894 = vpop.f32.mrb[0].mxu0
        %3895 = vdwg.mxu0
        %v3896 = vadd.f32 %v3782, %v3866
        %v3897 = vadd.f32 %v3783, %v3869
        %v3898 = vadd.f32 %v3784, %v3874
        %v3899 = vadd.f32 %v3785, %v3877
        %v3900 = vadd.f32 %v3786, %v3882
        %v3901 = vadd.f32 %v3787, %v3885
        %v3902 = vadd.f32 %v3788, %v3890
        %v3903 = vadd.f32 %v3789, %v3893
        %v3904 = vld [vmem:[%s3342 + $0x2] sm:$0xff]
        %v3905 = vld [vmem:[%s3342 + $0x12] sm:$0xff]
        %v3906 = vld [vmem:[%s3342 + $0x22] sm:$0xff]
        %v3907 = vld [vmem:[%s3342 + $0x32] sm:$0xff]
        %v3908 = vld [vmem:[%s3342 + $0x42] sm:$0xff]
        %v3909 = vld [vmem:[%s3342 + $0x52] sm:$0xff]
        %v3910 = vld [vmem:[%s3342 + $0x62] sm:$0xff]
        %v3911 = vld [vmem:[%s3342 + $0x72] sm:$0xff]
        %v3912 = vpack.c.bf16 %v3905, %v3904
        %v3913 = vpack.c.bf16 %v3907, %v3906
        %v3914 = vpack.c.bf16 %v3909, %v3908
        %v3915 = vpack.c.bf16 %v3911, %v3910
        %s3916 = scalar_lea.vmem %s3, 80
        %v3917 = vld [vmem:[%s3916] sm:$0xf]
        %v3918 = vld [vmem:[%s3916 + $0x4] sm:$0xf]
        %v3919 = vld [vmem:[%s3916 + $0x8] sm:$0xf]
        %v3920 = vld [vmem:[%s3916 + $0xc] sm:$0xf]
        %v3925 = vunpack.c.l.b16 %v3917
        %v3926 = vunpack.c.l.b16 %v3918
        %v3927 = vunpack.c.l.b16 %v3919
        %v3928 = vunpack.c.l.b16 %v3920
        %v3929 = vpack.c.b16 %v3926, %v3925
        %v3930 = vpack.c.b16 %v3928, %v3927
        %v3934 = vsel %vm438, %v3912, 0
        %v3937 = vsel %vm438, %v3913, 0
        %v3940 = vsel %vm438, %v3914, 0
        %v3943 = vsel %vm438, %v3915, 0
        %3945 = vmatprep.subr.bf16.mxu0 0
        %3946 = vmatpush1.bf16.msra.mxu0 %v3929
        %3947 = vmatprep.subr.bf16.mxu0 0
        %3948 = vmatpush1.bf16.msra.mxu0 %v3930
        %3949 = vmatprep.subr.bf16.mxu0 0
        %3950 = vmatpush1.bf16.msra.mxu0 0
        %3951 = vmatprep.subr.bf16.mxu0 0
        %3952 = vmatpush1.bf16.msra.mxu0 0
        %3953 = vmatprep.subr.bf16.mxu0 0
        %3954 = vmatpush1.bf16.msra.mxu0 0
        %3955 = vmatprep.subr.bf16.mxu0 0
        %3956 = vmatpush1.bf16.msra.mxu0 0
        %3957 = vmatprep.subr.bf16.mxu0 0
        %3958 = vmatpush1.bf16.msra.mxu0 0
        %3959 = vmatprep.subr.bf16.mxu0 0
        %3960 = vmatpush1.bf16.msra.mxu0 0
        %3961 = vmatprep.subr.bf16.mxu0 0
        %3962 = vmatpush1.bf16.msra.mxu0 0
        %3963 = vmatprep.subr.bf16.mxu0 0
        %3964 = vmatpush1.bf16.msra.mxu0 0
        %3965 = vmatprep.subr.bf16.mxu0 0
        %3966 = vmatpush1.bf16.msra.mxu0 0
        %3967 = vmatprep.subr.bf16.mxu0 0
        %3968 = vmatpush1.bf16.msra.mxu0 0
        %3969 = vmatprep.subr.bf16.mxu0 0
        %3970 = vmatpush1.bf16.msra.mxu0 0
        %3971 = vmatprep.subr.bf16.mxu0 0
        %3972 = vmatpush1.bf16.msra.mxu0 0
        %3973 = vmatprep.subr.bf16.mxu0 0
        %3974 = vmatpush1.bf16.msra.mxu0 0
        %3975 = vmatprep.subr.bf16.mxu0 0
        %3976 = vmatpush1.bf16.msra.mxu0 0
        %3977 = vmatprep.mubr.bf16.mxu0 0
        %3978 = vmatmul.mubr.bf16.gmra.mrb[0].mxu0 %v3934
        %v3979 = vpop.f32.mrb[0].mxu0
        %v3980 = vadd.f32 0.0, %v3979
        %v3981 = vpop.f32.mrb[0].mxu0
        %v3982 = vpop.f32.mrb[0].mxu0
        %v3983 = vadd.f32 0.0, %v3982
        %v3984 = vpop.f32.mrb[0].mxu0
        %3985 = vmatprep.mubr.bf16.mxu0 0
        %3986 = vmatmul.mubr.bf16.gmra.mrb[0].mxu0 %v3937
        %v3987 = vpop.f32.mrb[0].mxu0
        %v3988 = vadd.f32 0.0, %v3987
        %v3989 = vpop.f32.mrb[0].mxu0
        %v3990 = vpop.f32.mrb[0].mxu0
        %v3991 = vadd.f32 0.0, %v3990
        %v3992 = vpop.f32.mrb[0].mxu0
        %3993 = vmatprep.mubr.bf16.mxu0 0
        %3994 = vmatmul.mubr.bf16.gmra.mrb[0].mxu0 %v3940
        %v3995 = vpop.f32.mrb[0].mxu0
        %v3996 = vadd.f32 0.0, %v3995
        %v3997 = vpop.f32.mrb[0].mxu0
        %v3998 = vpop.f32.mrb[0].mxu0
        %v3999 = vadd.f32 0.0, %v3998
        %v4000 = vpop.f32.mrb[0].mxu0
        %4001 = vmatprep.mubr.bf16.mxu0 0
        %4002 = vmatmul.mubr.bf16.gmra.mrb[0].mxu0 %v3943
        %v4003 = vpop.f32.mrb[0].mxu0
        %v4004 = vadd.f32 0.0, %v4003
        %v4005 = vpop.f32.mrb[0].mxu0
        %v4006 = vpop.f32.mrb[0].mxu0
        %v4007 = vadd.f32 0.0, %v4006
        %v4008 = vpop.f32.mrb[0].mxu0
        %4009 = vdwg.mxu0
        %v4010 = vadd.f32 %v3896, %v3980
        %v4011 = vadd.f32 %v3897, %v3983
        %v4012 = vadd.f32 %v3898, %v3988
        %v4013 = vadd.f32 %v3899, %v3991
        %v4014 = vadd.f32 %v3900, %v3996
        %v4015 = vadd.f32 %v3901, %v3999
        %v4016 = vadd.f32 %v3902, %v4004
        %v4017 = vadd.f32 %v3903, %v4007
        %s4018 = scalar_lea.vmem [#allocation3], 32
        %v4019 = vld [vmem:[%s4018] sm:$0xff]
        %v4020 = vld [vmem:[%s4018 + $0x10] sm:$0xff]
        %v4021 = vld [vmem:[%s4018 + $0x20] sm:$0xff]
        %v4022 = vld [vmem:[%s4018 + $0x30] sm:$0xff]
        %v4023 = vld [vmem:[%s4018 + $0x40] sm:$0xff]
        %v4024 = vld [vmem:[%s4018 + $0x50] sm:$0xff]
        %v4025 = vld [vmem:[%s4018 + $0x60] sm:$0xff]
        %v4026 = vld [vmem:[%s4018 + $0x70] sm:$0xff]
        %v4027 = vpack.c.bf16 %v4020, %v4019
        %v4028 = vpack.c.bf16 %v4022, %v4021
        %v4029 = vpack.c.bf16 %v4024, %v4023
        %v4030 = vpack.c.bf16 %v4026, %v4025
        %s4031 = scalar_lea.vmem %s3, 96
        %v4032 = vld [vmem:[%s4031] sm:$0xf]
        %v4033 = vld [vmem:[%s4031 + $0x4] sm:$0xf]
        %v4034 = vld [vmem:[%s4031 + $0x8] sm:$0xf]
        %v4035 = vld [vmem:[%s4031 + $0xc] sm:$0xf]
        %v4040 = vunpack.c.l.b16 %v4032
        %v4041 = vunpack.c.l.b16 %v4033
        %v4042 = vunpack.c.l.b16 %v4034
        %v4043 = vunpack.c.l.b16 %v4035
        %v4044 = vpack.c.b16 %v4041, %v4040
        %v4045 = vpack.c.b16 %v4043, %v4042
        %v4049 = vsel %vm438, %v4027, 0
        %v4052 = vsel %vm438, %v4028, 0
        %v4055 = vsel %vm438, %v4029, 0
        %v4058 = vsel %vm438, %v4030, 0
        %4060 = vmatprep.subr.bf16.mxu0 0
        %4061 = vmatpush1.bf16.msra.mxu0 %v4044
        %4062 = vmatprep.subr.bf16.mxu0 0
        %4063 = vmatpush1.bf16.msra.mxu0 %v4045
        %4064 = vmatprep.subr.bf16.mxu0 0
        %4065 = vmatpush1.bf16.msra.mxu0 0
        %4066 = vmatprep.subr.bf16.mxu0 0
        %4067 = vmatpush1.bf16.msra.mxu0 0
        %4068 = vmatprep.subr.bf16.mxu0 0
        %4069 = vmatpush1.bf16.msra.mxu0 0
        %4070 = vmatprep.subr.bf16.mxu0 0
        %4071 = vmatpush1.bf16.msra.mxu0 0
        %4072 = vmatprep.subr.bf16.mxu0 0
        %4073 = vmatpush1.bf16.msra.mxu0 0
        %4074 = vmatprep.subr.bf16.mxu0 0
        %4075 = vmatpush1.bf16.msra.mxu0 0
        %4076 = vmatprep.subr.bf16.mxu0 0
        %4077 = vmatpush1.bf16.msra.mxu0 0
        %4078 = vmatprep.subr.bf16.mxu0 0
        %4079 = vmatpush1.bf16.msra.mxu0 0
        %4080 = vmatprep.subr.bf16.mxu0 0
        %4081 = vmatpush1.bf16.msra.mxu0 0
        %4082 = vmatprep.subr.bf16.mxu0 0
        %4083 = vmatpush1.bf16.msra.mxu0 0
        %4084 = vmatprep.subr.bf16.mxu0 0
        %4085 = vmatpush1.bf16.msra.mxu0 0
        %4086 = vmatprep.subr.bf16.mxu0 0
        %4087 = vmatpush1.bf16.msra.mxu0 0
        %4088 = vmatprep.subr.bf16.mxu0 0
        %4089 = vmatpush1.bf16.msra.mxu0 0
        %4090 = vmatprep.subr.bf16.mxu0 0
        %4091 = vmatpush1.bf16.msra.mxu0 0
        %4092 = vmatprep.mubr.bf16.mxu0 0
        %4093 = vmatmul.mubr.bf16.gmra.mrb[0].mxu0 %v4049
        %v4094 = vpop.f32.mrb[0].mxu0
        %v4095 = vadd.f32 0.0, %v4094
        %v4096 = vpop.f32.mrb[0].mxu0
        %v4097 = vpop.f32.mrb[0].mxu0
        %v4098 = vadd.f32 0.0, %v4097
        %v4099 = vpop.f32.mrb[0].mxu0
        %4100 = vmatprep.mubr.bf16.mxu0 0
        %4101 = vmatmul.mubr.bf16.gmra.mrb[0].mxu0 %v4052
        %v4102 = vpop.f32.mrb[0].mxu0
        %v4103 = vadd.f32 0.0, %v4102
        %v4104 = vpop.f32.mrb[0].mxu0
        %v4105 = vpop.f32.mrb[0].mxu0
        %v4106 = vadd.f32 0.0, %v4105
        %v4107 = vpop.f32.mrb[0].mxu0
        %4108 = vmatprep.mubr.bf16.mxu0 0
        %4109 = vmatmul.mubr.bf16.gmra.mrb[0].mxu0 %v4055
        %v4110 = vpop.f32.mrb[0].mxu0
        %v4111 = vadd.f32 0.0, %v4110
        %v4112 = vpop.f32.mrb[0].mxu0
        %v4113 = vpop.f32.mrb[0].mxu0
        %v4114 = vadd.f32 0.0, %v4113
        %v4115 = vpop.f32.mrb[0].mxu0
        %4116 = vmatprep.mubr.bf16.mxu0 0
        %4117 = vmatmul.mubr.bf16.gmra.mrb[0].mxu0 %v4058
        %v4118 = vpop.f32.mrb[0].mxu0
        %v4119 = vadd.f32 0.0, %v4118
        %v4120 = vpop.f32.mrb[0].mxu0
        %v4121 = vpop.f32.mrb[0].mxu0
        %v4122 = vadd.f32 0.0, %v4121
        %v4123 = vpop.f32.mrb[0].mxu0
        %4124 = vdwg.mxu0
        %v4125 = vadd.f32 %v4010, %v4095
        %v4126 = vadd.f32 %v4011, %v4098
        %v4127 = vadd.f32 %v4012, %v4103
        %v4128 = vadd.f32 %v4013, %v4106
        %v4129 = vadd.f32 %v4014, %v4111
        %v4130 = vadd.f32 %v4015, %v4114
        %v4131 = vadd.f32 %v4016, %v4119
        %v4132 = vadd.f32 %v4017, %v4122
        %v4133 = vld [vmem:[%s4018 + $0x1] sm:$0xff]
        %v4134 = vld [vmem:[%s4018 + $0x11] sm:$0xff]
        %v4135 = vld [vmem:[%s4018 + $0x21] sm:$0xff]
        %v4136 = vld [vmem:[%s4018 + $0x31] sm:$0xff]
        %v4137 = vld [vmem:[%s4018 + $0x41] sm:$0xff]
        %v4138 = vld [vmem:[%s4018 + $0x51] sm:$0xff]
        %v4139 = vld [vmem:[%s4018 + $0x61] sm:$0xff]
        %v4140 = vld [vmem:[%s4018 + $0x71] sm:$0xff]
        %v4141 = vpack.c.bf16 %v4134, %v4133
        %v4142 = vpack.c.bf16 %v4136, %v4135
        %v4143 = vpack.c.bf16 %v4138, %v4137
        %v4144 = vpack.c.bf16 %v4140, %v4139
        %s4145 = scalar_lea.vmem %s3, 112
        %v4146 = vld [vmem:[%s4145] sm:$0xf]
        %v4147 = vld [vmem:[%s4145 + $0x4] sm:$0xf]
        %v4148 = vld [vmem:[%s4145 + $0x8] sm:$0xf]
        %v4149 = vld [vmem:[%s4145 + $0xc] sm:$0xf]
        %v4154 = vunpack.c.l.b16 %v4146
        %v4155 = vunpack.c.l.b16 %v4147
        %v4156 = vunpack.c.l.b16 %v4148
        %v4157 = vunpack.c.l.b16 %v4149
        %v4158 = vpack.c.b16 %v4155, %v4154
        %v4159 = vpack.c.b16 %v4157, %v4156
        %v4163 = vsel %vm438, %v4141, 0
        %v4166 = vsel %vm438, %v4142, 0
        %v4169 = vsel %vm438, %v4143, 0
        %v4172 = vsel %vm438, %v4144, 0
        %4174 = vmatprep.subr.bf16.mxu0 0
        %4175 = vmatpush1.bf16.msra.mxu0 %v4158
        %4176 = vmatprep.subr.bf16.mxu0 0
        %4177 = vmatpush1.bf16.msra.mxu0 %v4159
        %4178 = vmatprep.subr.bf16.mxu0 0
        %4179 = vmatpush1.bf16.msra.mxu0 0
        %4180 = vmatprep.subr.bf16.mxu0 0
        %4181 = vmatpush1.bf16.msra.mxu0 0
        %4182 = vmatprep.subr.bf16.mxu0 0
        %4183 = vmatpush1.bf16.msra.mxu0 0
        %4184 = vmatprep.subr.bf16.mxu0 0
        %4185 = vmatpush1.bf16.msra.mxu0 0
        %4186 = vmatprep.subr.bf16.mxu0 0
        %4187 = vmatpush1.bf16.msra.mxu0 0
        %4188 = vmatprep.subr.bf16.mxu0 0
        %4189 = vmatpush1.bf16.msra.mxu0 0
        %4190 = vmatprep.subr.bf16.mxu0 0
        %4191 = vmatpush1.bf16.msra.mxu0 0
        %4192 = vmatprep.subr.bf16.mxu0 0
        %4193 = vmatpush1.bf16.msra.mxu0 0
        %4194 = vmatprep.subr.bf16.mxu0 0
        %4195 = vmatpush1.bf16.msra.mxu0 0
        %4196 = vmatprep.subr.bf16.mxu0 0
        %4197 = vmatpush1.bf16.msra.mxu0 0
        %4198 = vmatprep.subr.bf16.mxu0 0
        %4199 = vmatpush1.bf16.msra.mxu0 0
        %4200 = vmatprep.subr.bf16.mxu0 0
        %4201 = vmatpush1.bf16.msra.mxu0 0
        %4202 = vmatprep.subr.bf16.mxu0 0
        %4203 = vmatpush1.bf16.msra.mxu0 0
        %4204 = vmatprep.subr.bf16.mxu0 0
        %4205 = vmatpush1.bf16.msra.mxu0 0
        %4206 = vmatprep.mubr.bf16.mxu0 0
        %4207 = vmatmul.mubr.bf16.gmra.mrb[0].mxu0 %v4163
        %v4208 = vpop.f32.mrb[0].mxu0
        %v4209 = vadd.f32 0.0, %v4208
        %v4210 = vpop.f32.mrb[0].mxu0
        %v4211 = vpop.f32.mrb[0].mxu0
        %v4212 = vadd.f32 0.0, %v4211
        %v4213 = vpop.f32.mrb[0].mxu0
        %4214 = vmatprep.mubr.bf16.mxu0 0
        %4215 = vmatmul.mubr.bf16.gmra.mrb[0].mxu0 %v4166
        %v4216 = vpop.f32.mrb[0].mxu0
        %v4217 = vadd.f32 0.0, %v4216
        %v4218 = vpop.f32.mrb[0].mxu0
        %v4219 = vpop.f32.mrb[0].mxu0
        %v4220 = vadd.f32 0.0, %v4219
        %v4221 = vpop.f32.mrb[0].mxu0
        %4222 = vmatprep.mubr.bf16.mxu0 0
        %4223 = vmatmul.mubr.bf16.gmra.mrb[0].mxu0 %v4169
        %v4224 = vpop.f32.mrb[0].mxu0
        %v4225 = vadd.f32 0.0, %v4224
        %v4226 = vpop.f32.mrb[0].mxu0
        %v4227 = vpop.f32.mrb[0].mxu0
        %v4228 = vadd.f32 0.0, %v4227
        %v4229 = vpop.f32.mrb[0].mxu0
        %4230 = vmatprep.mubr.bf16.mxu0 0
        %4231 = vmatmul.mubr.bf16.gmra.mrb[0].mxu0 %v4172
        %v4232 = vpop.f32.mrb[0].mxu0
        %v4233 = vadd.f32 0.0, %v4232
        %v4234 = vpop.f32.mrb[0].mxu0
        %v4235 = vpop.f32.mrb[0].mxu0
        %v4236 = vadd.f32 0.0, %v4235
        %v4237 = vpop.f32.mrb[0].mxu0
        %4238 = vdwg.mxu0
        %v4239 = vadd.f32 %v4125, %v4209
        %v4240 = vadd.f32 %v4126, %v4212
        %v4241 = vadd.f32 %v4127, %v4217
        %v4242 = vadd.f32 %v4128, %v4220
        %v4243 = vadd.f32 %v4129, %v4225
        %v4244 = vadd.f32 %v4130, %v4228
        %v4245 = vadd.f32 %v4131, %v4233
        %v4246 = vadd.f32 %v4132, %v4236
        %v4247 = vld [vmem:[%s4018 + $0x2] sm:$0xff]
        %v4248 = vld [vmem:[%s4018 + $0x12] sm:$0xff]
        %v4249 = vld [vmem:[%s4018 + $0x22] sm:$0xff]
        %v4250 = vld [vmem:[%s4018 + $0x32] sm:$0xff]
        %v4251 = vld [vmem:[%s4018 + $0x42] sm:$0xff]
        %v4252 = vld [vmem:[%s4018 + $0x52] sm:$0xff]
        %v4253 = vld [vmem:[%s4018 + $0x62] sm:$0xff]
        %v4254 = vld [vmem:[%s4018 + $0x72] sm:$0xff]
        %v4255 = vpack.c.bf16 %v4248, %v4247
        %v4256 = vpack.c.bf16 %v4250, %v4249
        %v4257 = vpack.c.bf16 %v4252, %v4251
        %v4258 = vpack.c.bf16 %v4254, %v4253
        %s4259 = scalar_lea.vmem %s3, 128
        %v4260 = vld [vmem:[%s4259] sm:$0xf]
        %v4261 = vld [vmem:[%s4259 + $0x4] sm:$0xf]
        %v4262 = vld [vmem:[%s4259 + $0x8] sm:$0xf]
        %v4263 = vld [vmem:[%s4259 + $0xc] sm:$0xf]
        %v4268 = vunpack.c.l.b16 %v4260
        %v4269 = vunpack.c.l.b16 %v4261
        %v4270 = vunpack.c.l.b16 %v4262
        %v4271 = vunpack.c.l.b16 %v4263
        %v4272 = vpack.c.b16 %v4269, %v4268
        %v4273 = vpack.c.b16 %v4271, %v4270
        %v4277 = vsel %vm438, %v4255, 0
        %v4280 = vsel %vm438, %v4256, 0
        %v4283 = vsel %vm438, %v4257, 0
        %v4286 = vsel %vm438, %v4258, 0
        %4288 = vmatprep.subr.bf16.mxu0 0
        %4289 = vmatpush1.bf16.msra.mxu0 %v4272
        %4290 = vmatprep.subr.bf16.mxu0 0
        %4291 = vmatpush1.bf16.msra.mxu0 %v4273
        %4292 = vmatprep.subr.bf16.mxu0 0
        %4293 = vmatpush1.bf16.msra.mxu0 0
        %4294 = vmatprep.subr.bf16.mxu0 0
        %4295 = vmatpush1.bf16.msra.mxu0 0
        %4296 = vmatprep.subr.bf16.mxu0 0
        %4297 = vmatpush1.bf16.msra.mxu0 0
        %4298 = vmatprep.subr.bf16.mxu0 0
        %4299 = vmatpush1.bf16.msra.mxu0 0
        %4300 = vmatprep.subr.bf16.mxu0 0
        %4301 = vmatpush1.bf16.msra.mxu0 0
        %4302 = vmatprep.subr.bf16.mxu0 0
        %4303 = vmatpush1.bf16.msra.mxu0 0
        %4304 = vmatprep.subr.bf16.mxu0 0
        %4305 = vmatpush1.bf16.msra.mxu0 0
        %4306 = vmatprep.subr.bf16.mxu0 0
        %4307 = vmatpush1.bf16.msra.mxu0 0
        %4308 = vmatprep.subr.bf16.mxu0 0
        %4309 = vmatpush1.bf16.msra.mxu0 0
        %4310 = vmatprep.subr.bf16.mxu0 0
        %4311 = vmatpush1.bf16.msra.mxu0 0
        %4312 = vmatprep.subr.bf16.mxu0 0
        %4313 = vmatpush1.bf16.msra.mxu0 0
        %4314 = vmatprep.subr.bf16.mxu0 0
        %4315 = vmatpush1.bf16.msra.mxu0 0
        %4316 = vmatprep.subr.bf16.mxu0 0
        %4317 = vmatpush1.bf16.msra.mxu0 0
        %4318 = vmatprep.subr.bf16.mxu0 0
        %4319 = vmatpush1.bf16.msra.mxu0 0
        %4320 = vmatprep.mubr.bf16.mxu0 0
        %4321 = vmatmul.mubr.bf16.gmra.mrb[0].mxu0 %v4277
        %v4322 = vpop.f32.mrb[0].mxu0
        %v4323 = vadd.f32 0.0, %v4322
        %v4324 = vpop.f32.mrb[0].mxu0
        %v4325 = vpop.f32.mrb[0].mxu0
        %v4326 = vadd.f32 0.0, %v4325
        %v4327 = vpop.f32.mrb[0].mxu0
        %4328 = vmatprep.mubr.bf16.mxu0 0
        %4329 = vmatmul.mubr.bf16.gmra.mrb[0].mxu0 %v4280
        %v4330 = vpop.f32.mrb[0].mxu0
        %v4331 = vadd.f32 0.0, %v4330
        %v4332 = vpop.f32.mrb[0].mxu0
        %v4333 = vpop.f32.mrb[0].mxu0
        %v4334 = vadd.f32 0.0, %v4333
        %v4335 = vpop.f32.mrb[0].mxu0
        %4336 = vmatprep.mubr.bf16.mxu0 0
        %4337 = vmatmul.mubr.bf16.gmra.mrb[0].mxu0 %v4283
        %v4338 = vpop.f32.mrb[0].mxu0
        %v4339 = vadd.f32 0.0, %v4338
        %v4340 = vpop.f32.mrb[0].mxu0
        %v4341 = vpop.f32.mrb[0].mxu0
        %v4342 = vadd.f32 0.0, %v4341
        %v4343 = vpop.f32.mrb[0].mxu0
        %4344 = vmatprep.mubr.bf16.mxu0 0
        %4345 = vmatmul.mubr.bf16.gmra.mrb[0].mxu0 %v4286
        %v4346 = vpop.f32.mrb[0].mxu0
        %v4347 = vadd.f32 0.0, %v4346
        %v4348 = vpop.f32.mrb[0].mxu0
        %v4349 = vpop.f32.mrb[0].mxu0
        %v4350 = vadd.f32 0.0, %v4349
        %v4351 = vpop.f32.mrb[0].mxu0
        %4352 = vdwg.mxu0
        %v4353 = vadd.f32 %v4239, %v4323
        %v4354 = vadd.f32 %v4240, %v4326
        %v4355 = vadd.f32 %v4241, %v4331
        %v4356 = vadd.f32 %v4242, %v4334
        %v4357 = vadd.f32 %v4243, %v4339
        %v4358 = vadd.f32 %v4244, %v4342
        %v4359 = vadd.f32 %v4245, %v4347
        %v4360 = vadd.f32 %v4246, %v4350
        %v4361 = vld [vmem:[%s2764] ss:$2 sm:$0xff]
        %v4362 = vld [vmem:[%s2766] ss:$2 sm:$0xff]
        %v4363 = vld [vmem:[%s2768] ss:$2 sm:$0xff]
        %v4364 = vld [vmem:[%s2770] ss:$2 sm:$0xff]
        %v4365 = vld [vmem:[%s2772] ss:$2 sm:$0xff]
        %v4366 = vld [vmem:[%s2774] ss:$2 sm:$0xff]
        %v4367 = vld [vmem:[%s2776] ss:$2 sm:$0xff]
        %v4368 = vld [vmem:[%s2778] ss:$2 sm:$0xff]
        %v4369 = vpack.c.bf16 %v4362, %v4361
        %v4370 = vpack.c.bf16 %v4364, %v4363
        %v4371 = vpack.c.bf16 %v4366, %v4365
        %v4372 = vpack.c.bf16 %v4368, %v4367
        %v4373 = vld [vmem:[%s4] sm:$0xf]
        %v4374 = vld [vmem:[%s4 + $0x4] sm:$0xf]
        %v4377 = vunpack.c.l.b16 %v4373
        %v4378 = vunpack.c.l.b16 %v4374
        %v4379 = vpack.c.b16 %v4378, %v4377
        %v4382 = vsel %vm385, %v4369, 0
        %v4385 = vsel %vm385, %v4370, 0
        %v4388 = vsel %vm385, %v4371, 0
        %v4391 = vsel %vm385, %v4372, 0
        %4393 = vmatprep.subr.bf16.mxu0 0
        %4394 = vmatpush1.bf16.msra.mxu0 %v4379
        %4395 = vmatprep.subr.bf16.mxu0 0
        %4396 = vmatpush1.bf16.msra.mxu0 0
        %4397 = vmatprep.subr.bf16.mxu0 0
        %4398 = vmatpush1.bf16.msra.mxu0 0
        %4399 = vmatprep.subr.bf16.mxu0 0
        %4400 = vmatpush1.bf16.msra.mxu0 0
        %4401 = vmatprep.subr.bf16.mxu0 0
        %4402 = vmatpush1.bf16.msra.mxu0 0
        %4403 = vmatprep.subr.bf16.mxu0 0
        %4404 = vmatpush1.bf16.msra.mxu0 0
        %4405 = vmatprep.subr.bf16.mxu0 0
        %4406 = vmatpush1.bf16.msra.mxu0 0
        %4407 = vmatprep.subr.bf16.mxu0 0
        %4408 = vmatpush1.bf16.msra.mxu0 0
        %4409 = vmatprep.subr.bf16.mxu0 0
        %4410 = vmatpush1.bf16.msra.mxu0 0
        %4411 = vmatprep.subr.bf16.mxu0 0
        %4412 = vmatpush1.bf16.msra.mxu0 0
        %4413 = vmatprep.subr.bf16.mxu0 0
        %4414 = vmatpush1.bf16.msra.mxu0 0
        %4415 = vmatprep.subr.bf16.mxu0 0
        %4416 = vmatpush1.bf16.msra.mxu0 0
        %4417 = vmatprep.subr.bf16.mxu0 0
        %4418 = vmatpush1.bf16.msra.mxu0 0
        %4419 = vmatprep.subr.bf16.mxu0 0
        %4420 = vmatpush1.bf16.msra.mxu0 0
        %4421 = vmatprep.subr.bf16.mxu0 0
        %4422 = vmatpush1.bf16.msra.mxu0 0
        %4423 = vmatprep.subr.bf16.mxu0 0
        %4424 = vmatpush1.bf16.msra.mxu0 0
        %4425 = vmatprep.mubr.bf16.mxu0 0
        %4426 = vmatmul.mubr.bf16.gmra.mrb[0].mxu0 %v4382
        %v4427 = vpop.f32.mrb[0].mxu0
        %v4428 = vadd.f32 0.0, %v4427
        %v4429 = vpop.f32.mrb[0].mxu0
        %v4430 = vpop.f32.mrb[0].mxu0
        %v4431 = vadd.f32 0.0, %v4430
        %v4432 = vpop.f32.mrb[0].mxu0
        %4433 = vmatprep.mubr.bf16.mxu0 0
        %4434 = vmatmul.mubr.bf16.gmra.mrb[0].mxu0 %v4385
        %v4435 = vpop.f32.mrb[0].mxu0
        %v4436 = vadd.f32 0.0, %v4435
        %v4437 = vpop.f32.mrb[0].mxu0
        %v4438 = vpop.f32.mrb[0].mxu0
        %v4439 = vadd.f32 0.0, %v4438
        %v4440 = vpop.f32.mrb[0].mxu0
        %4441 = vmatprep.mubr.bf16.mxu0 0
        %4442 = vmatmul.mubr.bf16.gmra.mrb[0].mxu0 %v4388
        %v4443 = vpop.f32.mrb[0].mxu0
        %v4444 = vadd.f32 0.0, %v4443
        %v4445 = vpop.f32.mrb[0].mxu0
        %v4446 = vpop.f32.mrb[0].mxu0
        %v4447 = vadd.f32 0.0, %v4446
        %v4448 = vpop.f32.mrb[0].mxu0
        %4449 = vmatprep.mubr.bf16.mxu0 0
        %4450 = vmatmul.mubr.bf16.gmra.mrb[0].mxu0 %v4391
        %v4451 = vpop.f32.mrb[0].mxu0
        %v4452 = vadd.f32 0.0, %v4451
        %v4453 = vpop.f32.mrb[0].mxu0
        %v4454 = vpop.f32.mrb[0].mxu0
        %v4455 = vadd.f32 0.0, %v4454
        %v4456 = vpop.f32.mrb[0].mxu0
        %4457 = vdwg.mxu0
        %v4458 = vadd.f32 %v4353, %v4428
        %v4459 = vadd.f32 %v4354, %v4431
        %v4460 = vadd.f32 %v4355, %v4436
        %v4461 = vadd.f32 %v4356, %v4439
        %v4462 = vadd.f32 %v4357, %v4444
        %v4463 = vadd.f32 %v4358, %v4447
        %v4464 = vadd.f32 %v4359, %v4452
        %v4465 = vadd.f32 %v4360, %v4455
        %v4466 = vmax.f32 %v4458, 0.0
        %v4467 = vmax.f32 %v4459, 0.0
        %v4468 = vmax.f32 %v4460, 0.0
        %v4469 = vmax.f32 %v4461, 0.0
        %v4470 = vmax.f32 %v4462, 0.0
        %v4471 = vmax.f32 %v4463, 0.0
        %v4472 = vmax.f32 %v4464, 0.0
        %v4473 = vmax.f32 %v4465, 0.0
        %s4474 = scalar_lea.vmem [#allocation4], 16
        %4475 = vst.msk [vmem:[%s4474 + $0x1] sm:$0xff] %vm438, %v4466
        %4476 = vst.msk [vmem:[%s4474 + $0x11] sm:$0xff] %vm438, %v4467
        %4477 = vst.msk [vmem:[%s4474 + $0x21] sm:$0xff] %vm438, %v4468
        %4478 = vst.msk [vmem:[%s4474 + $0x31] sm:$0xff] %vm438, %v4469
        %4479 = vst.msk [vmem:[%s4474 + $0x41] sm:$0xff] %vm438, %v4470
        %4480 = vst.msk [vmem:[%s4474 + $0x51] sm:$0xff] %vm438, %v4471
        %4481 = vst.msk [vmem:[%s4474 + $0x61] sm:$0xff] %vm438, %v4472
        %4482 = vst.msk [vmem:[%s4474 + $0x71] sm:$0xff] %vm438, %v4473
        %v4483 = vld [vmem:[#allocation4] ss:$2 sm:$0xf]
        %s4484 = scalar_lea.vmem [#allocation4], 32
        %v4485 = vld [vmem:[%s4484] ss:$2 sm:$0xf]
        %s4486 = scalar_lea.vmem [#allocation4], 64
        %v4487 = vld [vmem:[%s4486] ss:$2 sm:$0xf]
        %s4488 = scalar_lea.vmem [#allocation4], 96
        %v4489 = vld [vmem:[%s4488] ss:$2 sm:$0xf]
        %v4494 = vcombine.low %v4483, %v4485
        %v4495 = vcombine.low %v4487, %v4489
        %v4498 = vpack.c.bf16 %v4495, %v4494
        %v4499 = vld [vmem:[%s5] sm:$0xf]
        %v4500 = vld [vmem:[%s5 + $0x4] sm:$0xf]
        %v4501 = vld [vmem:[%s5 + $0x8] sm:$0xf]
        %v4502 = vld [vmem:[%s5 + $0xc] sm:$0xf]
        %s4503 = scalar_lea.vmem [#allocation4], 1
        %v4504 = vld [vmem:[%s4503] ss:$2 sm:$0xf]
        %s4505 = scalar_lea.vmem [#allocation4], 33
        %v4506 = vld [vmem:[%s4505] ss:$2 sm:$0xf]
        %s4507 = scalar_lea.vmem [#allocation4], 65
        %v4508 = vld [vmem:[%s4507] ss:$2 sm:$0xf]
        %s4509 = scalar_lea.vmem [#allocation4], 97
        %v4510 = vld [vmem:[%s4509] ss:$2 sm:$0xf]
        %v4515 = vcombine.low %v4504, %v4506
        %v4516 = vcombine.low %v4508, %v4510
        %v4519 = vpack.c.bf16 %v4516, %v4515
        %s4520 = scalar_lea.vmem %s5, 16
        %v4521 = vld [vmem:[%s4520] sm:$0xf]
        %v4522 = vld [vmem:[%s4520 + $0x4] sm:$0xf]
        %v4523 = vld [vmem:[%s4520 + $0x8] sm:$0xf]
        %v4524 = vld [vmem:[%s4520 + $0xc] sm:$0xf]
        %v4529 = vunpack.c.l.b16 %v4521
        %v4530 = vunpack.c.l.b16 %v4522
        %v4531 = vunpack.c.l.b16 %v4523
        %v4532 = vunpack.c.l.b16 %v4524
        %v4533 = vpack.c.b16 %v4530, %v4529
        %v4534 = vpack.c.b16 %v4532, %v4531
        %v4538 = vsel %vm438, %v4519, 0
        %4540 = vmatprep.subr.bf16.mxu0 0
        %4541 = vmatpush1.bf16.msra.mxu0 %v4533
        %4542 = vmatprep.subr.bf16.mxu0 0
        %4543 = vmatpush1.bf16.msra.mxu0 %v4534
        %4544 = vmatprep.subr.bf16.mxu0 0
        %4545 = vmatpush1.bf16.msra.mxu0 0
        %4546 = vmatprep.subr.bf16.mxu0 0
        %4547 = vmatpush1.bf16.msra.mxu0 0
        %4548 = vmatprep.subr.bf16.mxu0 0
        %4549 = vmatpush1.bf16.msra.mxu0 0
        %4550 = vmatprep.subr.bf16.mxu0 0
        %4551 = vmatpush1.bf16.msra.mxu0 0
        %4552 = vmatprep.subr.bf16.mxu0 0
        %4553 = vmatpush1.bf16.msra.mxu0 0
        %4554 = vmatprep.subr.bf16.mxu0 0
        %4555 = vmatpush1.bf16.msra.mxu0 0
        %4556 = vmatprep.subr.bf16.mxu0 0
        %4557 = vmatpush1.bf16.msra.mxu0 0
        %4558 = vmatprep.subr.bf16.mxu0 0
        %4559 = vmatpush1.bf16.msra.mxu0 0
        %4560 = vmatprep.subr.bf16.mxu0 0
        %4561 = vmatpush1.bf16.msra.mxu0 0
        %4562 = vmatprep.subr.bf16.mxu0 0
        %4563 = vmatpush1.bf16.msra.mxu0 0
        %4564 = vmatprep.subr.bf16.mxu0 0
        %4565 = vmatpush1.bf16.msra.mxu0 0
        %4566 = vmatprep.subr.bf16.mxu0 0
        %4567 = vmatpush1.bf16.msra.mxu0 0
        %4568 = vmatprep.subr.bf16.mxu0 0
        %4569 = vmatpush1.bf16.msra.mxu0 0
        %4570 = vmatprep.subr.bf16.mxu0 0
        %4571 = vmatpush1.bf16.msra.mxu0 0
        %4572 = vmatprep.mubr.bf16.mxu0 0
        %4573 = vmatmul.mubr.bf16.gmra.mrb[0].mxu0 %v4538
        %v4574 = vpop.f32.mrb[0].mxu0
        %v4575 = vadd.f32 0.0, %v4574
        %v4576 = vpop.f32.mrb[0].mxu0
        %v4577 = vpop.f32.mrb[0].mxu0
        %v4578 = vadd.f32 0.0, %v4577
        %v4579 = vpop.f32.mrb[0].mxu0
        %4580 = vdwg.mxu0
        %v4585 = vunpack.c.l.b16 %v4499
        %v4586 = vunpack.c.l.b16 %v4500
        %v4587 = vunpack.c.l.b16 %v4501
        %v4588 = vunpack.c.l.b16 %v4502
        %v4589 = vpack.c.b16 %v4586, %v4585
        %v4590 = vpack.c.b16 %v4588, %v4587
        %v4594 = vsel %vm438, %v4498, 0
        %4596 = vmatprep.subr.bf16.mxu0 0
        %4597 = vmatpush1.bf16.msra.mxu0 %v4589
        %4598 = vmatprep.subr.bf16.mxu0 0
        %4599 = vmatpush1.bf16.msra.mxu0 %v4590
        %4600 = vmatprep.subr.bf16.mxu0 0
        %4601 = vmatpush1.bf16.msra.mxu0 0
        %4602 = vmatprep.subr.bf16.mxu0 0
        %4603 = vmatpush1.bf16.msra.mxu0 0
        %4604 = vmatprep.subr.bf16.mxu0 0
        %4605 = vmatpush1.bf16.msra.mxu0 0
        %4606 = vmatprep.subr.bf16.mxu0 0
        %4607 = vmatpush1.bf16.msra.mxu0 0
        %4608 = vmatprep.subr.bf16.mxu0 0
        %4609 = vmatpush1.bf16.msra.mxu0 0
        %4610 = vmatprep.subr.bf16.mxu0 0
        %4611 = vmatpush1.bf16.msra.mxu0 0
        %4612 = vmatprep.subr.bf16.mxu0 0
        %4613 = vmatpush1.bf16.msra.mxu0 0
        %4614 = vmatprep.subr.bf16.mxu0 0
        %4615 = vmatpush1.bf16.msra.mxu0 0
        %4616 = vmatprep.subr.bf16.mxu0 0
        %4617 = vmatpush1.bf16.msra.mxu0 0
        %4618 = vmatprep.subr.bf16.mxu0 0
        %4619 = vmatpush1.bf16.msra.mxu0 0
        %4620 = vmatprep.subr.bf16.mxu0 0
        %4621 = vmatpush1.bf16.msra.mxu0 0
        %4622 = vmatprep.subr.bf16.mxu0 0
        %4623 = vmatpush1.bf16.msra.mxu0 0
        %4624 = vmatprep.subr.bf16.mxu0 0
        %4625 = vmatpush1.bf16.msra.mxu0 0
        %4626 = vmatprep.subr.bf16.mxu0 0
        %4627 = vmatpush1.bf16.msra.mxu0 0
        %4628 = vmatprep.mubr.bf16.mxu0 0
        %4629 = vmatmul.mubr.bf16.gmra.mrb[0].mxu0 %v4594
        %v4630 = vpop.f32.mrb[0].mxu0
        %v4631 = vadd.f32 %v4575, %v4630
        %v4632 = vpop.f32.mrb[0].mxu0
        %v4633 = vpop.f32.mrb[0].mxu0
        %v4634 = vadd.f32 %v4578, %v4633
        %v4635 = vpop.f32.mrb[0].mxu0
        %4636 = vdwg.mxu0
        %s4637 = scalar_lea.vmem [#allocation4], 2
        %v4638 = vld [vmem:[%s4637] ss:$2 sm:$0xf]
        %s4639 = scalar_lea.vmem [#allocation4], 34
        %v4640 = vld [vmem:[%s4639] ss:$2 sm:$0xf]
        %s4641 = scalar_lea.vmem [#allocation4], 66
        %v4642 = vld [vmem:[%s4641] ss:$2 sm:$0xf]
        %s4643 = scalar_lea.vmem [#allocation4], 98
        %v4644 = vld [vmem:[%s4643] ss:$2 sm:$0xf]
        %v4649 = vcombine.low %v4638, %v4640
        %v4650 = vcombine.low %v4642, %v4644
        %v4653 = vpack.c.bf16 %v4650, %v4649
        %s4654 = scalar_lea.vmem %s5, 32
        %v4655 = vld [vmem:[%s4654] sm:$0xf]
        %v4656 = vld [vmem:[%s4654 + $0x4] sm:$0xf]
        %v4657 = vld [vmem:[%s4654 + $0x8] sm:$0xf]
        %v4658 = vld [vmem:[%s4654 + $0xc] sm:$0xf]
        %v4663 = vunpack.c.l.b16 %v4655
        %v4664 = vunpack.c.l.b16 %v4656
        %v4665 = vunpack.c.l.b16 %v4657
        %v4666 = vunpack.c.l.b16 %v4658
        %v4667 = vpack.c.b16 %v4664, %v4663
        %v4668 = vpack.c.b16 %v4666, %v4665
        %v4672 = vsel %vm438, %v4653, 0
        %4674 = vmatprep.subr.bf16.mxu0 0
        %4675 = vmatpush1.bf16.msra.mxu0 %v4667
        %4676 = vmatprep.subr.bf16.mxu0 0
        %4677 = vmatpush1.bf16.msra.mxu0 %v4668
        %4678 = vmatprep.subr.bf16.mxu0 0
        %4679 = vmatpush1.bf16.msra.mxu0 0
        %4680 = vmatprep.subr.bf16.mxu0 0
        %4681 = vmatpush1.bf16.msra.mxu0 0
        %4682 = vmatprep.subr.bf16.mxu0 0
        %4683 = vmatpush1.bf16.msra.mxu0 0
        %4684 = vmatprep.subr.bf16.mxu0 0
        %4685 = vmatpush1.bf16.msra.mxu0 0
        %4686 = vmatprep.subr.bf16.mxu0 0
        %4687 = vmatpush1.bf16.msra.mxu0 0
        %4688 = vmatprep.subr.bf16.mxu0 0
        %4689 = vmatpush1.bf16.msra.mxu0 0
        %4690 = vmatprep.subr.bf16.mxu0 0
        %4691 = vmatpush1.bf16.msra.mxu0 0
        %4692 = vmatprep.subr.bf16.mxu0 0
        %4693 = vmatpush1.bf16.msra.mxu0 0
        %4694 = vmatprep.subr.bf16.mxu0 0
        %4695 = vmatpush1.bf16.msra.mxu0 0
        %4696 = vmatprep.subr.bf16.mxu0 0
        %4697 = vmatpush1.bf16.msra.mxu0 0
        %4698 = vmatprep.subr.bf16.mxu0 0
        %4699 = vmatpush1.bf16.msra.mxu0 0
        %4700 = vmatprep.subr.bf16.mxu0 0
        %4701 = vmatpush1.bf16.msra.mxu0 0
        %4702 = vmatprep.subr.bf16.mxu0 0
        %4703 = vmatpush1.bf16.msra.mxu0 0
        %4704 = vmatprep.subr.bf16.mxu0 0
        %4705 = vmatpush1.bf16.msra.mxu0 0
        %4706 = vmatprep.mubr.bf16.mxu0 0
        %4707 = vmatmul.mubr.bf16.gmra.mrb[0].mxu0 %v4672
        %v4708 = vpop.f32.mrb[0].mxu0
        %v4709 = vadd.f32 0.0, %v4708
        %v4710 = vpop.f32.mrb[0].mxu0
        %v4711 = vpop.f32.mrb[0].mxu0
        %v4712 = vadd.f32 0.0, %v4711
        %v4713 = vpop.f32.mrb[0].mxu0
        %4714 = vdwg.mxu0
        %v4715 = vadd.f32 %v4631, %v4709
        %v4716 = vadd.f32 %v4634, %v4712
        %v4717 = vld [vmem:[%s4474] ss:$2 sm:$0xf]
        %s4718 = scalar_lea.vmem %s4474, 32 [#allocation4]
        %v4719 = vld [vmem:[%s4718] ss:$2 sm:$0xf]
        %s4720 = scalar_lea.vmem %s4474, 64 [#allocation4]
        %v4721 = vld [vmem:[%s4720] ss:$2 sm:$0xf]
        %s4722 = scalar_lea.vmem %s4474, 96 [#allocation4]
        %v4723 = vld [vmem:[%s4722] ss:$2 sm:$0xf]
        %v4728 = vcombine.low %v4717, %v4719
        %v4729 = vcombine.low %v4721, %v4723
        %v4732 = vpack.c.bf16 %v4729, %v4728
        %s4733 = scalar_lea.vmem %s5, 48
        %v4734 = vld [vmem:[%s4733] sm:$0xf]
        %v4735 = vld [vmem:[%s4733 + $0x4] sm:$0xf]
        %v4736 = vld [vmem:[%s4733 + $0x8] sm:$0xf]
        %v4737 = vld [vmem:[%s4733 + $0xc] sm:$0xf]
        %v4742 = vunpack.c.l.b16 %v4734
        %v4743 = vunpack.c.l.b16 %v4735
        %v4744 = vunpack.c.l.b16 %v4736
        %v4745 = vunpack.c.l.b16 %v4737
        %v4746 = vpack.c.b16 %v4743, %v4742
        %v4747 = vpack.c.b16 %v4745, %v4744
        %v4751 = vsel %vm438, %v4732, 0
        %4753 = vmatprep.subr.bf16.mxu0 0
        %4754 = vmatpush1.bf16.msra.mxu0 %v4746
        %4755 = vmatprep.subr.bf16.mxu0 0
        %4756 = vmatpush1.bf16.msra.mxu0 %v4747
        %4757 = vmatprep.subr.bf16.mxu0 0
        %4758 = vmatpush1.bf16.msra.mxu0 0
        %4759 = vmatprep.subr.bf16.mxu0 0
        %4760 = vmatpush1.bf16.msra.mxu0 0
        %4761 = vmatprep.subr.bf16.mxu0 0
        %4762 = vmatpush1.bf16.msra.mxu0 0
        %4763 = vmatprep.subr.bf16.mxu0 0
        %4764 = vmatpush1.bf16.msra.mxu0 0
        %4765 = vmatprep.subr.bf16.mxu0 0
        %4766 = vmatpush1.bf16.msra.mxu0 0
        %4767 = vmatprep.subr.bf16.mxu0 0
        %4768 = vmatpush1.bf16.msra.mxu0 0
        %4769 = vmatprep.subr.bf16.mxu0 0
        %4770 = vmatpush1.bf16.msra.mxu0 0
        %4771 = vmatprep.subr.bf16.mxu0 0
        %4772 = vmatpush1.bf16.msra.mxu0 0
        %4773 = vmatprep.subr.bf16.mxu0 0
        %4774 = vmatpush1.bf16.msra.mxu0 0
        %4775 = vmatprep.subr.bf16.mxu0 0
        %4776 = vmatpush1.bf16.msra.mxu0 0
        %4777 = vmatprep.subr.bf16.mxu0 0
        %4778 = vmatpush1.bf16.msra.mxu0 0
        %4779 = vmatprep.subr.bf16.mxu0 0
        %4780 = vmatpush1.bf16.msra.mxu0 0
        %4781 = vmatprep.subr.bf16.mxu0 0
        %4782 = vmatpush1.bf16.msra.mxu0 0
        %4783 = vmatprep.subr.bf16.mxu0 0
        %4784 = vmatpush1.bf16.msra.mxu0 0
        %4785 = vmatprep.mubr.bf16.mxu0 0
        %4786 = vmatmul.mubr.bf16.gmra.mrb[0].mxu0 %v4751
        %v4787 = vpop.f32.mrb[0].mxu0
        %v4788 = vadd.f32 0.0, %v4787
        %v4789 = vpop.f32.mrb[0].mxu0
        %v4790 = vpop.f32.mrb[0].mxu0
        %v4791 = vadd.f32 0.0, %v4790
        %v4792 = vpop.f32.mrb[0].mxu0
        %4793 = vdwg.mxu0
        %v4794 = vadd.f32 %v4715, %v4788
        %v4795 = vadd.f32 %v4716, %v4791
        %s4796 = scalar_lea.vmem %s4474, 1 [#allocation4]
        %v4797 = vld [vmem:[%s4796] ss:$2 sm:$0xf]
        %s4798 = scalar_lea.vmem %s4474, 33 [#allocation4]
        %v4799 = vld [vmem:[%s4798] ss:$2 sm:$0xf]
        %s4800 = scalar_lea.vmem %s4474, 65 [#allocation4]
        %v4801 = vld [vmem:[%s4800] ss:$2 sm:$0xf]
        %s4802 = scalar_lea.vmem %s4474, 97 [#allocation4]
        %v4803 = vld [vmem:[%s4802] ss:$2 sm:$0xf]
        %v4808 = vcombine.low %v4797, %v4799
        %v4809 = vcombine.low %v4801, %v4803
        %v4812 = vpack.c.bf16 %v4809, %v4808
        %s4813 = scalar_lea.vmem %s5, 64
        %v4814 = vld [vmem:[%s4813] sm:$0xf]
        %v4815 = vld [vmem:[%s4813 + $0x4] sm:$0xf]
        %v4816 = vld [vmem:[%s4813 + $0x8] sm:$0xf]
        %v4817 = vld [vmem:[%s4813 + $0xc] sm:$0xf]
        %v4822 = vunpack.c.l.b16 %v4814
        %v4823 = vunpack.c.l.b16 %v4815
        %v4824 = vunpack.c.l.b16 %v4816
        %v4825 = vunpack.c.l.b16 %v4817
        %v4826 = vpack.c.b16 %v4823, %v4822
        %v4827 = vpack.c.b16 %v4825, %v4824
        %v4831 = vsel %vm438, %v4812, 0
        %4833 = vmatprep.subr.bf16.mxu0 0
        %4834 = vmatpush1.bf16.msra.mxu0 %v4826
        %4835 = vmatprep.subr.bf16.mxu0 0
        %4836 = vmatpush1.bf16.msra.mxu0 %v4827
        %4837 = vmatprep.subr.bf16.mxu0 0
        %4838 = vmatpush1.bf16.msra.mxu0 0
        %4839 = vmatprep.subr.bf16.mxu0 0
        %4840 = vmatpush1.bf16.msra.mxu0 0
        %4841 = vmatprep.subr.bf16.mxu0 0
        %4842 = vmatpush1.bf16.msra.mxu0 0
        %4843 = vmatprep.subr.bf16.mxu0 0
        %4844 = vmatpush1.bf16.msra.mxu0 0
        %4845 = vmatprep.subr.bf16.mxu0 0
        %4846 = vmatpush1.bf16.msra.mxu0 0
        %4847 = vmatprep.subr.bf16.mxu0 0
        %4848 = vmatpush1.bf16.msra.mxu0 0
        %4849 = vmatprep.subr.bf16.mxu0 0
        %4850 = vmatpush1.bf16.msra.mxu0 0
        %4851 = vmatprep.subr.bf16.mxu0 0
        %4852 = vmatpush1.bf16.msra.mxu0 0
        %4853 = vmatprep.subr.bf16.mxu0 0
        %4854 = vmatpush1.bf16.msra.mxu0 0
        %4855 = vmatprep.subr.bf16.mxu0 0
        %4856 = vmatpush1.bf16.msra.mxu0 0
        %4857 = vmatprep.subr.bf16.mxu0 0
        %4858 = vmatpush1.bf16.msra.mxu0 0
        %4859 = vmatprep.subr.bf16.mxu0 0
        %4860 = vmatpush1.bf16.msra.mxu0 0
        %4861 = vmatprep.subr.bf16.mxu0 0
        %4862 = vmatpush1.bf16.msra.mxu0 0
        %4863 = vmatprep.subr.bf16.mxu0 0
        %4864 = vmatpush1.bf16.msra.mxu0 0
        %4865 = vmatprep.mubr.bf16.mxu0 0
        %4866 = vmatmul.mubr.bf16.gmra.mrb[0].mxu0 %v4831
        %v4867 = vpop.f32.mrb[0].mxu0
        %v4868 = vadd.f32 0.0, %v4867
        %v4869 = vpop.f32.mrb[0].mxu0
        %v4870 = vpop.f32.mrb[0].mxu0
        %v4871 = vadd.f32 0.0, %v4870
        %v4872 = vpop.f32.mrb[0].mxu0
        %4873 = vdwg.mxu0
        %v4874 = vadd.f32 %v4794, %v4868
        %v4875 = vadd.f32 %v4795, %v4871
        %s4876 = scalar_lea.vmem %s4474, 2 [#allocation4]
        %v4877 = vld [vmem:[%s4876] ss:$2 sm:$0xf]
        %s4878 = scalar_lea.vmem %s4474, 34 [#allocation4]
        %v4879 = vld [vmem:[%s4878] ss:$2 sm:$0xf]
        %s4880 = scalar_lea.vmem %s4474, 66 [#allocation4]
        %v4881 = vld [vmem:[%s4880] ss:$2 sm:$0xf]
        %s4882 = scalar_lea.vmem %s4474, 98 [#allocation4]
        %v4883 = vld [vmem:[%s4882] ss:$2 sm:$0xf]
        %v4888 = vcombine.low %v4877, %v4879
        %v4889 = vcombine.low %v4881, %v4883
        %v4892 = vpack.c.bf16 %v4889, %v4888
        %s4893 = scalar_lea.vmem %s5, 80
        %v4894 = vld [vmem:[%s4893] sm:$0xf]
        %v4895 = vld [vmem:[%s4893 + $0x4] sm:$0xf]
        %v4896 = vld [vmem:[%s4893 + $0x8] sm:$0xf]
        %v4897 = vld [vmem:[%s4893 + $0xc] sm:$0xf]
        %v4902 = vunpack.c.l.b16 %v4894
        %v4903 = vunpack.c.l.b16 %v4895
        %v4904 = vunpack.c.l.b16 %v4896
        %v4905 = vunpack.c.l.b16 %v4897
        %v4906 = vpack.c.b16 %v4903, %v4902
        %v4907 = vpack.c.b16 %v4905, %v4904
        %v4911 = vsel %vm438, %v4892, 0
        %4913 = vmatprep.subr.bf16.mxu0 0
        %4914 = vmatpush1.bf16.msra.mxu0 %v4906
        %4915 = vmatprep.subr.bf16.mxu0 0
        %4916 = vmatpush1.bf16.msra.mxu0 %v4907
        %4917 = vmatprep.subr.bf16.mxu0 0
        %4918 = vmatpush1.bf16.msra.mxu0 0
        %4919 = vmatprep.subr.bf16.mxu0 0
        %4920 = vmatpush1.bf16.msra.mxu0 0
        %4921 = vmatprep.subr.bf16.mxu0 0
        %4922 = vmatpush1.bf16.msra.mxu0 0
        %4923 = vmatprep.subr.bf16.mxu0 0
        %4924 = vmatpush1.bf16.msra.mxu0 0
        %4925 = vmatprep.subr.bf16.mxu0 0
        %4926 = vmatpush1.bf16.msra.mxu0 0
        %4927 = vmatprep.subr.bf16.mxu0 0
        %4928 = vmatpush1.bf16.msra.mxu0 0
        %4929 = vmatprep.subr.bf16.mxu0 0
        %4930 = vmatpush1.bf16.msra.mxu0 0
        %4931 = vmatprep.subr.bf16.mxu0 0
        %4932 = vmatpush1.bf16.msra.mxu0 0
        %4933 = vmatprep.subr.bf16.mxu0 0
        %4934 = vmatpush1.bf16.msra.mxu0 0
        %4935 = vmatprep.subr.bf16.mxu0 0
        %4936 = vmatpush1.bf16.msra.mxu0 0
        %4937 = vmatprep.subr.bf16.mxu0 0
        %4938 = vmatpush1.bf16.msra.mxu0 0
        %4939 = vmatprep.subr.bf16.mxu0 0
        %4940 = vmatpush1.bf16.msra.mxu0 0
        %4941 = vmatprep.subr.bf16.mxu0 0
        %4942 = vmatpush1.bf16.msra.mxu0 0
        %4943 = vmatprep.subr.bf16.mxu0 0
        %4944 = vmatpush1.bf16.msra.mxu0 0
        %4945 = vmatprep.mubr.bf16.mxu0 0
        %4946 = vmatmul.mubr.bf16.gmra.mrb[0].mxu0 %v4911
        %v4947 = vpop.f32.mrb[0].mxu0
        %v4948 = vadd.f32 0.0, %v4947
        %v4949 = vpop.f32.mrb[0].mxu0
        %v4950 = vpop.f32.mrb[0].mxu0
        %v4951 = vadd.f32 0.0, %v4950
        %v4952 = vpop.f32.mrb[0].mxu0
        %4953 = vdwg.mxu0
        %v4954 = vadd.f32 %v4874, %v4948
        %v4955 = vadd.f32 %v4875, %v4951
        %s4956 = scalar_lea.vmem [#allocation4], 32
        %v4957 = vld [vmem:[%s4956] ss:$2 sm:$0xf]
        %s4958 = scalar_lea.vmem %s4956, 32 [#allocation4]
        %v4959 = vld [vmem:[%s4958] ss:$2 sm:$0xf]
        %s4960 = scalar_lea.vmem %s4956, 64 [#allocation4]
        %v4961 = vld [vmem:[%s4960] ss:$2 sm:$0xf]
        %s4962 = scalar_lea.vmem %s4956, 96 [#allocation4]
        %v4963 = vld [vmem:[%s4962] ss:$2 sm:$0xf]
        %v4968 = vcombine.low %v4957, %v4959
        %v4969 = vcombine.low %v4961, %v4963
        %v4972 = vpack.c.bf16 %v4969, %v4968
        %s4973 = scalar_lea.vmem %s5, 96
        %v4974 = vld [vmem:[%s4973] sm:$0xf]
        %v4975 = vld [vmem:[%s4973 + $0x4] sm:$0xf]
        %v4976 = vld [vmem:[%s4973 + $0x8] sm:$0xf]
        %v4977 = vld [vmem:[%s4973 + $0xc] sm:$0xf]
        %v4982 = vunpack.c.l.b16 %v4974
        %v4983 = vunpack.c.l.b16 %v4975
        %v4984 = vunpack.c.l.b16 %v4976
        %v4985 = vunpack.c.l.b16 %v4977
        %v4986 = vpack.c.b16 %v4983, %v4982
        %v4987 = vpack.c.b16 %v4985, %v4984
        %v4991 = vsel %vm438, %v4972, 0
        %4993 = vmatprep.subr.bf16.mxu0 0
        %4994 = vmatpush1.bf16.msra.mxu0 %v4986
        %4995 = vmatprep.subr.bf16.mxu0 0
        %4996 = vmatpush1.bf16.msra.mxu0 %v4987
        %4997 = vmatprep.subr.bf16.mxu0 0
        %4998 = vmatpush1.bf16.msra.mxu0 0
        %4999 = vmatprep.subr.bf16.mxu0 0
        %5000 = vmatpush1.bf16.msra.mxu0 0
        %5001 = vmatprep.subr.bf16.mxu0 0
        %5002 = vmatpush1.bf16.msra.mxu0 0
        %5003 = vmatprep.subr.bf16.mxu0 0
        %5004 = vmatpush1.bf16.msra.mxu0 0
        %5005 = vmatprep.subr.bf16.mxu0 0
        %5006 = vmatpush1.bf16.msra.mxu0 0
        %5007 = vmatprep.subr.bf16.mxu0 0
        %5008 = vmatpush1.bf16.msra.mxu0 0
        %5009 = vmatprep.subr.bf16.mxu0 0
        %5010 = vmatpush1.bf16.msra.mxu0 0
        %5011 = vmatprep.subr.bf16.mxu0 0
        %5012 = vmatpush1.bf16.msra.mxu0 0
        %5013 = vmatprep.subr.bf16.mxu0 0
        %5014 = vmatpush1.bf16.msra.mxu0 0
        %5015 = vmatprep.subr.bf16.mxu0 0
        %5016 = vmatpush1.bf16.msra.mxu0 0
        %5017 = vmatprep.subr.bf16.mxu0 0
        %5018 = vmatpush1.bf16.msra.mxu0 0
        %5019 = vmatprep.subr.bf16.mxu0 0
        %5020 = vmatpush1.bf16.msra.mxu0 0
        %5021 = vmatprep.subr.bf16.mxu0 0
        %5022 = vmatpush1.bf16.msra.mxu0 0
        %5023 = vmatprep.subr.bf16.mxu0 0
        %5024 = vmatpush1.bf16.msra.mxu0 0
        %5025 = vmatprep.mubr.bf16.mxu0 0
        %5026 = vmatmul.mubr.bf16.gmra.mrb[0].mxu0 %v4991
        %v5027 = vpop.f32.mrb[0].mxu0
        %v5028 = vadd.f32 0.0, %v5027
        %v5029 = vpop.f32.mrb[0].mxu0
        %v5030 = vpop.f32.mrb[0].mxu0
        %v5031 = vadd.f32 0.0, %v5030
        %v5032 = vpop.f32.mrb[0].mxu0
        %5033 = vdwg.mxu0
        %v5034 = vadd.f32 %v4954, %v5028
        %v5035 = vadd.f32 %v4955, %v5031
        %s5036 = scalar_lea.vmem %s4956, 1 [#allocation4]
        %v5037 = vld [vmem:[%s5036] ss:$2 sm:$0xf]
        %s5038 = scalar_lea.vmem %s4956, 33 [#allocation4]
        %v5039 = vld [vmem:[%s5038] ss:$2 sm:$0xf]
        %s5040 = scalar_lea.vmem %s4956, 65 [#allocation4]
        %v5041 = vld [vmem:[%s5040] ss:$2 sm:$0xf]
        %s5042 = scalar_lea.vmem %s4956, 97 [#allocation4]
        %v5043 = vld [vmem:[%s5042] ss:$2 sm:$0xf]
        %v5048 = vcombine.low %v5037, %v5039
        %v5049 = vcombine.low %v5041, %v5043
        %v5052 = vpack.c.bf16 %v5049, %v5048
        %s5053 = scalar_lea.vmem %s5, 112
        %v5054 = vld [vmem:[%s5053] sm:$0xf]
        %v5055 = vld [vmem:[%s5053 + $0x4] sm:$0xf]
        %v5056 = vld [vmem:[%s5053 + $0x8] sm:$0xf]
        %v5057 = vld [vmem:[%s5053 + $0xc] sm:$0xf]
        %v5062 = vunpack.c.l.b16 %v5054
        %v5063 = vunpack.c.l.b16 %v5055
        %v5064 = vunpack.c.l.b16 %v5056
        %v5065 = vunpack.c.l.b16 %v5057
        %v5066 = vpack.c.b16 %v5063, %v5062
        %v5067 = vpack.c.b16 %v5065, %v5064
        %v5071 = vsel %vm438, %v5052, 0
        %5073 = vmatprep.subr.bf16.mxu0 0
        %5074 = vmatpush1.bf16.msra.mxu0 %v5066
        %5075 = vmatprep.subr.bf16.mxu0 0
        %5076 = vmatpush1.bf16.msra.mxu0 %v5067
        %5077 = vmatprep.subr.bf16.mxu0 0
        %5078 = vmatpush1.bf16.msra.mxu0 0
        %5079 = vmatprep.subr.bf16.mxu0 0
        %5080 = vmatpush1.bf16.msra.mxu0 0
        %5081 = vmatprep.subr.bf16.mxu0 0
        %5082 = vmatpush1.bf16.msra.mxu0 0
        %5083 = vmatprep.subr.bf16.mxu0 0
        %5084 = vmatpush1.bf16.msra.mxu0 0
        %5085 = vmatprep.subr.bf16.mxu0 0
        %5086 = vmatpush1.bf16.msra.mxu0 0
        %5087 = vmatprep.subr.bf16.mxu0 0
        %5088 = vmatpush1.bf16.msra.mxu0 0
        %5089 = vmatprep.subr.bf16.mxu0 0
        %5090 = vmatpush1.bf16.msra.mxu0 0
        %5091 = vmatprep.subr.bf16.mxu0 0
        %5092 = vmatpush1.bf16.msra.mxu0 0
        %5093 = vmatprep.subr.bf16.mxu0 0
        %5094 = vmatpush1.bf16.msra.mxu0 0
        %5095 = vmatprep.subr.bf16.mxu0 0
        %5096 = vmatpush1.bf16.msra.mxu0 0
        %5097 = vmatprep.subr.bf16.mxu0 0
        %5098 = vmatpush1.bf16.msra.mxu0 0
        %5099 = vmatprep.subr.bf16.mxu0 0
        %5100 = vmatpush1.bf16.msra.mxu0 0
        %5101 = vmatprep.subr.bf16.mxu0 0
        %5102 = vmatpush1.bf16.msra.mxu0 0
        %5103 = vmatprep.subr.bf16.mxu0 0
        %5104 = vmatpush1.bf16.msra.mxu0 0
        %5105 = vmatprep.mubr.bf16.mxu0 0
        %5106 = vmatmul.mubr.bf16.gmra.mrb[0].mxu0 %v5071
        %v5107 = vpop.f32.mrb[0].mxu0
        %v5108 = vadd.f32 0.0, %v5107
        %v5109 = vpop.f32.mrb[0].mxu0
        %v5110 = vpop.f32.mrb[0].mxu0
        %v5111 = vadd.f32 0.0, %v5110
        %v5112 = vpop.f32.mrb[0].mxu0
        %5113 = vdwg.mxu0
        %v5114 = vadd.f32 %v5034, %v5108
        %v5115 = vadd.f32 %v5035, %v5111
        %s5116 = scalar_lea.vmem %s4956, 2 [#allocation4]
        %v5117 = vld [vmem:[%s5116] ss:$2 sm:$0xf]
        %s5118 = scalar_lea.vmem %s4956, 34 [#allocation4]
        %v5119 = vld [vmem:[%s5118] ss:$2 sm:$0xf]
        %s5120 = scalar_lea.vmem %s4956, 66 [#allocation4]
        %v5121 = vld [vmem:[%s5120] ss:$2 sm:$0xf]
        %s5122 = scalar_lea.vmem %s4956, 98 [#allocation4]
        %v5123 = vld [vmem:[%s5122] ss:$2 sm:$0xf]
        %v5128 = vcombine.low %v5117, %v5119
        %v5129 = vcombine.low %v5121, %v5123
        %v5132 = vpack.c.bf16 %v5129, %v5128
        %s5133 = scalar_lea.vmem %s5, 128
        %v5134 = vld [vmem:[%s5133] sm:$0xf]
        %v5135 = vld [vmem:[%s5133 + $0x4] sm:$0xf]
        %v5136 = vld [vmem:[%s5133 + $0x8] sm:$0xf]
        %v5137 = vld [vmem:[%s5133 + $0xc] sm:$0xf]
        %v5142 = vunpack.c.l.b16 %v5134
        %v5143 = vunpack.c.l.b16 %v5135
        %v5144 = vunpack.c.l.b16 %v5136
        %v5145 = vunpack.c.l.b16 %v5137
        %v5146 = vpack.c.b16 %v5143, %v5142
        %v5147 = vpack.c.b16 %v5145, %v5144
        %v5151 = vsel %vm438, %v5132, 0
        %5153 = vmatprep.subr.bf16.mxu0 0
        %5154 = vmatpush1.bf16.msra.mxu0 %v5146
        %5155 = vmatprep.subr.bf16.mxu0 0
        %5156 = vmatpush1.bf16.msra.mxu0 %v5147
        %5157 = vmatprep.subr.bf16.mxu0 0
        %5158 = vmatpush1.bf16.msra.mxu0 0
        %5159 = vmatprep.subr.bf16.mxu0 0
        %5160 = vmatpush1.bf16.msra.mxu0 0
        %5161 = vmatprep.subr.bf16.mxu0 0
        %5162 = vmatpush1.bf16.msra.mxu0 0
        %5163 = vmatprep.subr.bf16.mxu0 0
        %5164 = vmatpush1.bf16.msra.mxu0 0
        %5165 = vmatprep.subr.bf16.mxu0 0
        %5166 = vmatpush1.bf16.msra.mxu0 0
        %5167 = vmatprep.subr.bf16.mxu0 0
        %5168 = vmatpush1.bf16.msra.mxu0 0
        %5169 = vmatprep.subr.bf16.mxu0 0
        %5170 = vmatpush1.bf16.msra.mxu0 0
        %5171 = vmatprep.subr.bf16.mxu0 0
        %5172 = vmatpush1.bf16.msra.mxu0 0
        %5173 = vmatprep.subr.bf16.mxu0 0
        %5174 = vmatpush1.bf16.msra.mxu0 0
        %5175 = vmatprep.subr.bf16.mxu0 0
        %5176 = vmatpush1.bf16.msra.mxu0 0
        %5177 = vmatprep.subr.bf16.mxu0 0
        %5178 = vmatpush1.bf16.msra.mxu0 0
        %5179 = vmatprep.subr.bf16.mxu0 0
        %5180 = vmatpush1.bf16.msra.mxu0 0
        %5181 = vmatprep.subr.bf16.mxu0 0
        %5182 = vmatpush1.bf16.msra.mxu0 0
        %5183 = vmatprep.subr.bf16.mxu0 0
        %5184 = vmatpush1.bf16.msra.mxu0 0
        %5185 = vmatprep.mubr.bf16.mxu0 0
        %5186 = vmatmul.mubr.bf16.gmra.mrb[0].mxu0 %v5151
        %v5187 = vpop.f32.mrb[0].mxu0
        %v5188 = vadd.f32 0.0, %v5187
        %v5189 = vpop.f32.mrb[0].mxu0
        %v5190 = vpop.f32.mrb[0].mxu0
        %v5191 = vadd.f32 0.0, %v5190
        %v5192 = vpop.f32.mrb[0].mxu0
        %5193 = vdwg.mxu0
        %v5194 = vadd.f32 %v5114, %v5188
        %v5195 = vadd.f32 %v5115, %v5191
        %v5196 = vmax.f32 %v5194, 0.0
        %v5197 = vmax.f32 %v5195, 0.0
        %v5200 = vcombine.high %v5196, %v5196
        %v5201 = vcombine.high %v5197, %v5197
        %s5204 = scalar_lea.vmem [#allocation5], 8
        %vm5205 = vcmask 519168
        %5206 = vst.msk [vmem:[%s5204 + $0x1] sm:$0xf] %vm5205, %v5196
        %5207 = vst.msk [vmem:[%s5204 + $0x9] sm:$0xf] %vm5205, %v5200
        %5208 = vst.msk [vmem:[%s5204 + $0x11] sm:$0xf] %vm5205, %v5197
        %5209 = vst.msk [vmem:[%s5204 + $0x19] sm:$0xf] %vm5205, %v5201
        %v5210 = vld [vmem:[#allocation5] sm:$0xf]
        %v5211 = vld [vmem:[#allocation5 + $0x8] sm:$0xf]
        %v5212 = vld [vmem:[#allocation5 + $0x10] sm:$0xf]
        %v5213 = vld [vmem:[#allocation5 + $0x18] sm:$0xf]
        %v5218 = vcombine.low %v5210, %v5211
        %v5219 = vcombine.low %v5212, %v5213
        %v5222 = vpack.c.bf16 %v5219, %v5218
        %v5223 = vld [vmem:[%s6] sm:$0xf]
        %v5224 = vld [vmem:[%s6 + $0x4] sm:$0xf]
        %v5225 = vld [vmem:[%s6 + $0x8] sm:$0xf]
        %v5226 = vld [vmem:[%s6 + $0xc] sm:$0xf]
        %v5227 = vld [vmem:[%s6 + $0x10] sm:$0xf]
        %v5228 = vld [vmem:[%s6 + $0x14] sm:$0xf]
        %v5229 = vld [vmem:[%s6 + $0x18] sm:$0xf]
        %v5230 = vld [vmem:[%s6 + $0x1c] sm:$0xf]
        %v5231 = vld [vmem:[#allocation5 + $0x1] sm:$0xf]
        %v5232 = vld [vmem:[#allocation5 + $0x9] sm:$0xf]
        %v5233 = vld [vmem:[#allocation5 + $0x11] sm:$0xf]
        %v5234 = vld [vmem:[#allocation5 + $0x19] sm:$0xf]
        %v5239 = vcombine.low %v5231, %v5232
        %v5240 = vcombine.low %v5233, %v5234
        %v5243 = vpack.c.bf16 %v5240, %v5239
        %s5244 = scalar_lea.vmem %s6, 32
        %v5245 = vld [vmem:[%s5244] sm:$0xf]
        %v5246 = vld [vmem:[%s5244 + $0x4] sm:$0xf]
        %v5247 = vld [vmem:[%s5244 + $0x8] sm:$0xf]
        %v5248 = vld [vmem:[%s5244 + $0xc] sm:$0xf]
        %v5249 = vld [vmem:[%s5244 + $0x10] sm:$0xf]
        %v5250 = vld [vmem:[%s5244 + $0x14] sm:$0xf]
        %v5251 = vld [vmem:[%s5244 + $0x18] sm:$0xf]
        %v5252 = vld [vmem:[%s5244 + $0x1c] sm:$0xf]
        %v5261 = vunpack.c.l.b16 %v5245
        %v5262 = vunpack.c.l.b16 %v5246
        %v5263 = vunpack.c.l.b16 %v5247
        %v5264 = vunpack.c.l.b16 %v5248
        %v5265 = vunpack.c.l.b16 %v5249
        %v5266 = vunpack.c.l.b16 %v5250
        %v5267 = vunpack.c.l.b16 %v5251
        %v5268 = vunpack.c.l.b16 %v5252
        %v5269 = vpack.c.b16 %v5262, %v5261
        %v5270 = vpack.c.b16 %v5264, %v5263
        %v5271 = vpack.c.b16 %v5266, %v5265
        %v5272 = vpack.c.b16 %v5268, %v5267
        %vm5277 = vcmask 523264
        %v5279 = vsel %vm5277, %v5243, 0
        %5281 = vmatprep.subr.bf16.mxu0 0
        %5282 = vmatpush1.bf16.msra.mxu0 %v5269
        %5283 = vmatprep.subr.bf16.mxu0 0
        %5284 = vmatpush1.bf16.msra.mxu0 %v5270
        %5285 = vmatprep.subr.bf16.mxu0 0
        %5286 = vmatpush1.bf16.msra.mxu0 %v5271
        %5287 = vmatprep.subr.bf16.mxu0 0
        %5288 = vmatpush1.bf16.msra.mxu0 %v5272
        %5289 = vmatprep.subr.bf16.mxu0 0
        %5290 = vmatpush1.bf16.msra.mxu0 0
        %5291 = vmatprep.subr.bf16.mxu0 0
        %5292 = vmatpush1.bf16.msra.mxu0 0
        %5293 = vmatprep.subr.bf16.mxu0 0
        %5294 = vmatpush1.bf16.msra.mxu0 0
        %5295 = vmatprep.subr.bf16.mxu0 0
        %5296 = vmatpush1.bf16.msra.mxu0 0
        %5297 = vmatprep.subr.bf16.mxu0 0
        %5298 = vmatpush1.bf16.msra.mxu0 0
        %5299 = vmatprep.subr.bf16.mxu0 0
        %5300 = vmatpush1.bf16.msra.mxu0 0
        %5301 = vmatprep.subr.bf16.mxu0 0
        %5302 = vmatpush1.bf16.msra.mxu0 0
        %5303 = vmatprep.subr.bf16.mxu0 0
        %5304 = vmatpush1.bf16.msra.mxu0 0
        %5305 = vmatprep.subr.bf16.mxu0 0
        %5306 = vmatpush1.bf16.msra.mxu0 0
        %5307 = vmatprep.subr.bf16.mxu0 0
        %5308 = vmatpush1.bf16.msra.mxu0 0
        %5309 = vmatprep.subr.bf16.mxu0 0
        %5310 = vmatpush1.bf16.msra.mxu0 0
        %5311 = vmatprep.subr.bf16.mxu0 0
        %5312 = vmatpush1.bf16.msra.mxu0 0
        %5313 = vmatprep.mubr.bf16.mxu0 0
        %5314 = vmatmul.mubr.bf16.gmra.mrb[0].mxu0 %v5279
        %v5315 = vpop.f32.mrb[0].mxu0
        %v5316 = vadd.f32 0.0, %v5315
        %v5317 = vpop.f32.mrb[0].mxu0
        %v5318 = vpop.f32.mrb[0].mxu0
        %v5319 = vadd.f32 0.0, %v5318
        %v5320 = vpop.f32.mrb[0].mxu0
        %5321 = vdwg.mxu0
        %v5330 = vunpack.c.l.b16 %v5223
        %v5331 = vunpack.c.l.b16 %v5224
        %v5332 = vunpack.c.l.b16 %v5225
        %v5333 = vunpack.c.l.b16 %v5226
        %v5334 = vunpack.c.l.b16 %v5227
        %v5335 = vunpack.c.l.b16 %v5228
        %v5336 = vunpack.c.l.b16 %v5229
        %v5337 = vunpack.c.l.b16 %v5230
        %v5338 = vpack.c.b16 %v5331, %v5330
        %v5339 = vpack.c.b16 %v5333, %v5332
        %v5340 = vpack.c.b16 %v5335, %v5334
        %v5341 = vpack.c.b16 %v5337, %v5336
        %v5347 = vsel %vm5277, %v5222, 0
        %5349 = vmatprep.subr.bf16.mxu0 0
        %5350 = vmatpush1.bf16.msra.mxu0 %v5338
        %5351 = vmatprep.subr.bf16.mxu0 0
        %5352 = vmatpush1.bf16.msra.mxu0 %v5339
        %5353 = vmatprep.subr.bf16.mxu0 0
        %5354 = vmatpush1.bf16.msra.mxu0 %v5340
        %5355 = vmatprep.subr.bf16.mxu0 0
        %5356 = vmatpush1.bf16.msra.mxu0 %v5341
        %5357 = vmatprep.subr.bf16.mxu0 0
        %5358 = vmatpush1.bf16.msra.mxu0 0
        %5359 = vmatprep.subr.bf16.mxu0 0
        %5360 = vmatpush1.bf16.msra.mxu0 0
        %5361 = vmatprep.subr.bf16.mxu0 0
        %5362 = vmatpush1.bf16.msra.mxu0 0
        %5363 = vmatprep.subr.bf16.mxu0 0
        %5364 = vmatpush1.bf16.msra.mxu0 0
        %5365 = vmatprep.subr.bf16.mxu0 0
        %5366 = vmatpush1.bf16.msra.mxu0 0
        %5367 = vmatprep.subr.bf16.mxu0 0
        %5368 = vmatpush1.bf16.msra.mxu0 0
        %5369 = vmatprep.subr.bf16.mxu0 0
        %5370 = vmatpush1.bf16.msra.mxu0 0
        %5371 = vmatprep.subr.bf16.mxu0 0
        %5372 = vmatpush1.bf16.msra.mxu0 0
        %5373 = vmatprep.subr.bf16.mxu0 0
        %5374 = vmatpush1.bf16.msra.mxu0 0
        %5375 = vmatprep.subr.bf16.mxu0 0
        %5376 = vmatpush1.bf16.msra.mxu0 0
        %5377 = vmatprep.subr.bf16.mxu0 0
        %5378 = vmatpush1.bf16.msra.mxu0 0
        %5379 = vmatprep.subr.bf16.mxu0 0
        %5380 = vmatpush1.bf16.msra.mxu0 0
        %5381 = vmatprep.mubr.bf16.mxu0 0
        %5382 = vmatmul.mubr.bf16.gmra.mrb[0].mxu0 %v5347
        %v5383 = vpop.f32.mrb[0].mxu0
        %v5384 = vadd.f32 %v5316, %v5383
        %v5385 = vpop.f32.mrb[0].mxu0
        %v5386 = vpop.f32.mrb[0].mxu0
        %v5387 = vadd.f32 %v5319, %v5386
        %v5388 = vpop.f32.mrb[0].mxu0
        %5389 = vdwg.mxu0
        %v5390 = vld [vmem:[#allocation5 + $0x2] sm:$0xf]
        %v5391 = vld [vmem:[#allocation5 + $0xa] sm:$0xf]
        %v5392 = vld [vmem:[#allocation5 + $0x12] sm:$0xf]
        %v5393 = vld [vmem:[#allocation5 + $0x1a] sm:$0xf]
        %v5398 = vcombine.low %v5390, %v5391
        %v5399 = vcombine.low %v5392, %v5393
        %v5402 = vpack.c.bf16 %v5399, %v5398
        %s5403 = scalar_lea.vmem %s6, 64
        %v5404 = vld [vmem:[%s5403] sm:$0xf]
        %v5405 = vld [vmem:[%s5403 + $0x4] sm:$0xf]
        %v5406 = vld [vmem:[%s5403 + $0x8] sm:$0xf]
        %v5407 = vld [vmem:[%s5403 + $0xc] sm:$0xf]
        %v5408 = vld [vmem:[%s5403 + $0x10] sm:$0xf]
        %v5409 = vld [vmem:[%s5403 + $0x14] sm:$0xf]
        %v5410 = vld [vmem:[%s5403 + $0x18] sm:$0xf]
        %v5411 = vld [vmem:[%s5403 + $0x1c] sm:$0xf]
        %v5420 = vunpack.c.l.b16 %v5404
        %v5421 = vunpack.c.l.b16 %v5405
        %v5422 = vunpack.c.l.b16 %v5406
        %v5423 = vunpack.c.l.b16 %v5407
        %v5424 = vunpack.c.l.b16 %v5408
        %v5425 = vunpack.c.l.b16 %v5409
        %v5426 = vunpack.c.l.b16 %v5410
        %v5427 = vunpack.c.l.b16 %v5411
        %v5428 = vpack.c.b16 %v5421, %v5420
        %v5429 = vpack.c.b16 %v5423, %v5422
        %v5430 = vpack.c.b16 %v5425, %v5424
        %v5431 = vpack.c.b16 %v5427, %v5426
        %v5437 = vsel %vm5277, %v5402, 0
        %5439 = vmatprep.subr.bf16.mxu0 0
        %5440 = vmatpush1.bf16.msra.mxu0 %v5428
        %5441 = vmatprep.subr.bf16.mxu0 0
        %5442 = vmatpush1.bf16.msra.mxu0 %v5429
        %5443 = vmatprep.subr.bf16.mxu0 0
        %5444 = vmatpush1.bf16.msra.mxu0 %v5430
        %5445 = vmatprep.subr.bf16.mxu0 0
        %5446 = vmatpush1.bf16.msra.mxu0 %v5431
        %5447 = vmatprep.subr.bf16.mxu0 0
        %5448 = vmatpush1.bf16.msra.mxu0 0
        %5449 = vmatprep.subr.bf16.mxu0 0
        %5450 = vmatpush1.bf16.msra.mxu0 0
        %5451 = vmatprep.subr.bf16.mxu0 0
        %5452 = vmatpush1.bf16.msra.mxu0 0
        %5453 = vmatprep.subr.bf16.mxu0 0
        %5454 = vmatpush1.bf16.msra.mxu0 0
        %5455 = vmatprep.subr.bf16.mxu0 0
        %5456 = vmatpush1.bf16.msra.mxu0 0
        %5457 = vmatprep.subr.bf16.mxu0 0
        %5458 = vmatpush1.bf16.msra.mxu0 0
        %5459 = vmatprep.subr.bf16.mxu0 0
        %5460 = vmatpush1.bf16.msra.mxu0 0
        %5461 = vmatprep.subr.bf16.mxu0 0
        %5462 = vmatpush1.bf16.msra.mxu0 0
        %5463 = vmatprep.subr.bf16.mxu0 0
        %5464 = vmatpush1.bf16.msra.mxu0 0
        %5465 = vmatprep.subr.bf16.mxu0 0
        %5466 = vmatpush1.bf16.msra.mxu0 0
        %5467 = vmatprep.subr.bf16.mxu0 0
        %5468 = vmatpush1.bf16.msra.mxu0 0
        %5469 = vmatprep.subr.bf16.mxu0 0
        %5470 = vmatpush1.bf16.msra.mxu0 0
        %5471 = vmatprep.mubr.bf16.mxu0 0
        %5472 = vmatmul.mubr.bf16.gmra.mrb[0].mxu0 %v5437
        %v5473 = vpop.f32.mrb[0].mxu0
        %v5474 = vadd.f32 0.0, %v5473
        %v5475 = vpop.f32.mrb[0].mxu0
        %v5476 = vpop.f32.mrb[0].mxu0
        %v5477 = vadd.f32 0.0, %v5476
        %v5478 = vpop.f32.mrb[0].mxu0
        %5479 = vdwg.mxu0
        %v5480 = vadd.f32 %v5384, %v5474
        %v5481 = vadd.f32 %v5387, %v5477
        %v5482 = vld [vmem:[%s5204] sm:$0xf]
        %v5483 = vld [vmem:[%s5204 + $0x8] sm:$0xf]
        %v5484 = vld [vmem:[%s5204 + $0x10] sm:$0xf]
        %v5485 = vld [vmem:[%s5204 + $0x18] sm:$0xf]
        %v5490 = vcombine.low %v5482, %v5483
        %v5491 = vcombine.low %v5484, %v5485
        %v5494 = vpack.c.bf16 %v5491, %v5490
        %s5495 = scalar_lea.vmem %s6, 96
        %v5496 = vld [vmem:[%s5495] sm:$0xf]
        %v5497 = vld [vmem:[%s5495 + $0x4] sm:$0xf]
        %v5498 = vld [vmem:[%s5495 + $0x8] sm:$0xf]
        %v5499 = vld [vmem:[%s5495 + $0xc] sm:$0xf]
        %v5500 = vld [vmem:[%s5495 + $0x10] sm:$0xf]
        %v5501 = vld [vmem:[%s5495 + $0x14] sm:$0xf]
        %v5502 = vld [vmem:[%s5495 + $0x18] sm:$0xf]
        %v5503 = vld [vmem:[%s5495 + $0x1c] sm:$0xf]
        %v5512 = vunpack.c.l.b16 %v5496
        %v5513 = vunpack.c.l.b16 %v5497
        %v5514 = vunpack.c.l.b16 %v5498
        %v5515 = vunpack.c.l.b16 %v5499
        %v5516 = vunpack.c.l.b16 %v5500
        %v5517 = vunpack.c.l.b16 %v5501
        %v5518 = vunpack.c.l.b16 %v5502
        %v5519 = vunpack.c.l.b16 %v5503
        %v5520 = vpack.c.b16 %v5513, %v5512
        %v5521 = vpack.c.b16 %v5515, %v5514
        %v5522 = vpack.c.b16 %v5517, %v5516
        %v5523 = vpack.c.b16 %v5519, %v5518
        %v5529 = vsel %vm5277, %v5494, 0
        %5531 = vmatprep.subr.bf16.mxu0 0
        %5532 = vmatpush1.bf16.msra.mxu0 %v5520
        %5533 = vmatprep.subr.bf16.mxu0 0
        %5534 = vmatpush1.bf16.msra.mxu0 %v5521
        %5535 = vmatprep.subr.bf16.mxu0 0
        %5536 = vmatpush1.bf16.msra.mxu0 %v5522
        %5537 = vmatprep.subr.bf16.mxu0 0
        %5538 = vmatpush1.bf16.msra.mxu0 %v5523
        %5539 = vmatprep.subr.bf16.mxu0 0
        %5540 = vmatpush1.bf16.msra.mxu0 0
        %5541 = vmatprep.subr.bf16.mxu0 0
        %5542 = vmatpush1.bf16.msra.mxu0 0
        %5543 = vmatprep.subr.bf16.mxu0 0
        %5544 = vmatpush1.bf16.msra.mxu0 0
        %5545 = vmatprep.subr.bf16.mxu0 0
        %5546 = vmatpush1.bf16.msra.mxu0 0
        %5547 = vmatprep.subr.bf16.mxu0 0
        %5548 = vmatpush1.bf16.msra.mxu0 0
        %5549 = vmatprep.subr.bf16.mxu0 0
        %5550 = vmatpush1.bf16.msra.mxu0 0
        %5551 = vmatprep.subr.bf16.mxu0 0
        %5552 = vmatpush1.bf16.msra.mxu0 0
        %5553 = vmatprep.subr.bf16.mxu0 0
        %5554 = vmatpush1.bf16.msra.mxu0 0
        %5555 = vmatprep.subr.bf16.mxu0 0
        %5556 = vmatpush1.bf16.msra.mxu0 0
        %5557 = vmatprep.subr.bf16.mxu0 0
        %5558 = vmatpush1.bf16.msra.mxu0 0
        %5559 = vmatprep.subr.bf16.mxu0 0
        %5560 = vmatpush1.bf16.msra.mxu0 0
        %5561 = vmatprep.subr.bf16.mxu0 0
        %5562 = vmatpush1.bf16.msra.mxu0 0
        %5563 = vmatprep.mubr.bf16.mxu0 0
        %5564 = vmatmul.mubr.bf16.gmra.mrb[0].mxu0 %v5529
        %v5565 = vpop.f32.mrb[0].mxu0
        %v5566 = vadd.f32 0.0, %v5565
        %v5567 = vpop.f32.mrb[0].mxu0
        %v5568 = vpop.f32.mrb[0].mxu0
        %v5569 = vadd.f32 0.0, %v5568
        %v5570 = vpop.f32.mrb[0].mxu0
        %5571 = vdwg.mxu0
        %v5572 = vadd.f32 %v5480, %v5566
        %v5573 = vadd.f32 %v5481, %v5569
        %v5574 = vld [vmem:[%s5204 + $0x1] sm:$0xf]
        %v5575 = vld [vmem:[%s5204 + $0x9] sm:$0xf]
        %v5576 = vld [vmem:[%s5204 + $0x11] sm:$0xf]
        %v5577 = vld [vmem:[%s5204 + $0x19] sm:$0xf]
        %v5582 = vcombine.low %v5574, %v5575
        %v5583 = vcombine.low %v5576, %v5577
        %v5586 = vpack.c.bf16 %v5583, %v5582
        %s5587 = scalar_lea.vmem %s6, 128
        %v5588 = vld [vmem:[%s5587] sm:$0xf]
        %v5589 = vld [vmem:[%s5587 + $0x4] sm:$0xf]
        %v5590 = vld [vmem:[%s5587 + $0x8] sm:$0xf]
        %v5591 = vld [vmem:[%s5587 + $0xc] sm:$0xf]
        %v5592 = vld [vmem:[%s5587 + $0x10] sm:$0xf]
        %v5593 = vld [vmem:[%s5587 + $0x14] sm:$0xf]
        %v5594 = vld [vmem:[%s5587 + $0x18] sm:$0xf]
        %v5595 = vld [vmem:[%s5587 + $0x1c] sm:$0xf]
        %v5604 = vunpack.c.l.b16 %v5588
        %v5605 = vunpack.c.l.b16 %v5589
        %v5606 = vunpack.c.l.b16 %v5590
        %v5607 = vunpack.c.l.b16 %v5591
        %v5608 = vunpack.c.l.b16 %v5592
        %v5609 = vunpack.c.l.b16 %v5593
        %v5610 = vunpack.c.l.b16 %v5594
        %v5611 = vunpack.c.l.b16 %v5595
        %v5612 = vpack.c.b16 %v5605, %v5604
        %v5613 = vpack.c.b16 %v5607, %v5606
        %v5614 = vpack.c.b16 %v5609, %v5608
        %v5615 = vpack.c.b16 %v5611, %v5610
        %v5621 = vsel %vm5277, %v5586, 0
        %5623 = vmatprep.subr.bf16.mxu0 0
        %5624 = vmatpush1.bf16.msra.mxu0 %v5612
        %5625 = vmatprep.subr.bf16.mxu0 0
        %5626 = vmatpush1.bf16.msra.mxu0 %v5613
        %5627 = vmatprep.subr.bf16.mxu0 0
        %5628 = vmatpush1.bf16.msra.mxu0 %v5614
        %5629 = vmatprep.subr.bf16.mxu0 0
        %5630 = vmatpush1.bf16.msra.mxu0 %v5615
        %5631 = vmatprep.subr.bf16.mxu0 0
        %5632 = vmatpush1.bf16.msra.mxu0 0
        %5633 = vmatprep.subr.bf16.mxu0 0
        %5634 = vmatpush1.bf16.msra.mxu0 0
        %5635 = vmatprep.subr.bf16.mxu0 0
        %5636 = vmatpush1.bf16.msra.mxu0 0
        %5637 = vmatprep.subr.bf16.mxu0 0
        %5638 = vmatpush1.bf16.msra.mxu0 0
        %5639 = vmatprep.subr.bf16.mxu0 0
        %5640 = vmatpush1.bf16.msra.mxu0 0
        %5641 = vmatprep.subr.bf16.mxu0 0
        %5642 = vmatpush1.bf16.msra.mxu0 0
        %5643 = vmatprep.subr.bf16.mxu0 0
        %5644 = vmatpush1.bf16.msra.mxu0 0
        %5645 = vmatprep.subr.bf16.mxu0 0
        %5646 = vmatpush1.bf16.msra.mxu0 0
        %5647 = vmatprep.subr.bf16.mxu0 0
        %5648 = vmatpush1.bf16.msra.mxu0 0
        %5649 = vmatprep.subr.bf16.mxu0 0
        %5650 = vmatpush1.bf16.msra.mxu0 0
        %5651 = vmatprep.subr.bf16.mxu0 0
        %5652 = vmatpush1.bf16.msra.mxu0 0
        %5653 = vmatprep.subr.bf16.mxu0 0
        %5654 = vmatpush1.bf16.msra.mxu0 0
        %5655 = vmatprep.mubr.bf16.mxu0 0
        %5656 = vmatmul.mubr.bf16.gmra.mrb[0].mxu0 %v5621
        %v5657 = vpop.f32.mrb[0].mxu0
        %v5658 = vadd.f32 0.0, %v5657
        %v5659 = vpop.f32.mrb[0].mxu0
        %v5660 = vpop.f32.mrb[0].mxu0
        %v5661 = vadd.f32 0.0, %v5660
        %v5662 = vpop.f32.mrb[0].mxu0
        %5663 = vdwg.mxu0
        %v5664 = vadd.f32 %v5572, %v5658
        %v5665 = vadd.f32 %v5573, %v5661
        %v5666 = vld [vmem:[%s5204 + $0x2] sm:$0xf]
        %v5667 = vld [vmem:[%s5204 + $0xa] sm:$0xf]
        %v5668 = vld [vmem:[%s5204 + $0x12] sm:$0xf]
        %v5669 = vld [vmem:[%s5204 + $0x1a] sm:$0xf]
        %v5674 = vcombine.low %v5666, %v5667
        %v5675 = vcombine.low %v5668, %v5669
        %v5678 = vpack.c.bf16 %v5675, %v5674
        %s5679 = scalar_lea.vmem %s6, 160
        %v5680 = vld [vmem:[%s5679] sm:$0xf]
        %v5681 = vld [vmem:[%s5679 + $0x4] sm:$0xf]
        %v5682 = vld [vmem:[%s5679 + $0x8] sm:$0xf]
        %v5683 = vld [vmem:[%s5679 + $0xc] sm:$0xf]
        %v5684 = vld [vmem:[%s5679 + $0x10] sm:$0xf]
        %v5685 = vld [vmem:[%s5679 + $0x14] sm:$0xf]
        %v5686 = vld [vmem:[%s5679 + $0x18] sm:$0xf]
        %v5687 = vld [vmem:[%s5679 + $0x1c] sm:$0xf]
        %v5696 = vunpack.c.l.b16 %v5680
        %v5697 = vunpack.c.l.b16 %v5681
        %v5698 = vunpack.c.l.b16 %v5682
        %v5699 = vunpack.c.l.b16 %v5683
        %v5700 = vunpack.c.l.b16 %v5684
        %v5701 = vunpack.c.l.b16 %v5685
        %v5702 = vunpack.c.l.b16 %v5686
        %v5703 = vunpack.c.l.b16 %v5687
        %v5704 = vpack.c.b16 %v5697, %v5696
        %v5705 = vpack.c.b16 %v5699, %v5698
        %v5706 = vpack.c.b16 %v5701, %v5700
        %v5707 = vpack.c.b16 %v5703, %v5702
        %v5713 = vsel %vm5277, %v5678, 0
        %5715 = vmatprep.subr.bf16.mxu0 0
        %5716 = vmatpush1.bf16.msra.mxu0 %v5704
        %5717 = vmatprep.subr.bf16.mxu0 0
        %5718 = vmatpush1.bf16.msra.mxu0 %v5705
        %5719 = vmatprep.subr.bf16.mxu0 0
        %5720 = vmatpush1.bf16.msra.mxu0 %v5706
        %5721 = vmatprep.subr.bf16.mxu0 0
        %5722 = vmatpush1.bf16.msra.mxu0 %v5707
        %5723 = vmatprep.subr.bf16.mxu0 0
        %5724 = vmatpush1.bf16.msra.mxu0 0
        %5725 = vmatprep.subr.bf16.mxu0 0
        %5726 = vmatpush1.bf16.msra.mxu0 0
        %5727 = vmatprep.subr.bf16.mxu0 0
        %5728 = vmatpush1.bf16.msra.mxu0 0
        %5729 = vmatprep.subr.bf16.mxu0 0
        %5730 = vmatpush1.bf16.msra.mxu0 0
        %5731 = vmatprep.subr.bf16.mxu0 0
        %5732 = vmatpush1.bf16.msra.mxu0 0
        %5733 = vmatprep.subr.bf16.mxu0 0
        %5734 = vmatpush1.bf16.msra.mxu0 0
        %5735 = vmatprep.subr.bf16.mxu0 0
        %5736 = vmatpush1.bf16.msra.mxu0 0
        %5737 = vmatprep.subr.bf16.mxu0 0
        %5738 = vmatpush1.bf16.msra.mxu0 0
        %5739 = vmatprep.subr.bf16.mxu0 0
        %5740 = vmatpush1.bf16.msra.mxu0 0
        %5741 = vmatprep.subr.bf16.mxu0 0
        %5742 = vmatpush1.bf16.msra.mxu0 0
        %5743 = vmatprep.subr.bf16.mxu0 0
        %5744 = vmatpush1.bf16.msra.mxu0 0
        %5745 = vmatprep.subr.bf16.mxu0 0
        %5746 = vmatpush1.bf16.msra.mxu0 0
        %5747 = vmatprep.mubr.bf16.mxu0 0
        %5748 = vmatmul.mubr.bf16.gmra.mrb[0].mxu0 %v5713
        %v5749 = vpop.f32.mrb[0].mxu0
        %v5750 = vadd.f32 0.0, %v5749
        %v5751 = vpop.f32.mrb[0].mxu0
        %v5752 = vpop.f32.mrb[0].mxu0
        %v5753 = vadd.f32 0.0, %v5752
        %v5754 = vpop.f32.mrb[0].mxu0
        %5755 = vdwg.mxu0
        %v5756 = vadd.f32 %v5664, %v5750
        %v5757 = vadd.f32 %v5665, %v5753
        %s5758 = scalar_lea.vmem [#allocation5], 16
        %v5759 = vld [vmem:[%s5758] sm:$0xf]
        %v5760 = vld [vmem:[%s5758 + $0x8] sm:$0xf]
        %v5761 = vld [vmem:[%s5758 + $0x10] sm:$0xf]
        %v5762 = vld [vmem:[%s5758 + $0x18] sm:$0xf]
        %v5767 = vcombine.low %v5759, %v5760
        %v5768 = vcombine.low %v5761, %v5762
        %v5771 = vpack.c.bf16 %v5768, %v5767
        %s5772 = scalar_lea.vmem %s6, 192
        %v5773 = vld [vmem:[%s5772] sm:$0xf]
        %v5774 = vld [vmem:[%s5772 + $0x4] sm:$0xf]
        %v5775 = vld [vmem:[%s5772 + $0x8] sm:$0xf]
        %v5776 = vld [vmem:[%s5772 + $0xc] sm:$0xf]
        %v5777 = vld [vmem:[%s5772 + $0x10] sm:$0xf]
        %v5778 = vld [vmem:[%s5772 + $0x14] sm:$0xf]
        %v5779 = vld [vmem:[%s5772 + $0x18] sm:$0xf]
        %v5780 = vld [vmem:[%s5772 + $0x1c] sm:$0xf]
        %v5789 = vunpack.c.l.b16 %v5773
        %v5790 = vunpack.c.l.b16 %v5774
        %v5791 = vunpack.c.l.b16 %v5775
        %v5792 = vunpack.c.l.b16 %v5776
        %v5793 = vunpack.c.l.b16 %v5777
        %v5794 = vunpack.c.l.b16 %v5778
        %v5795 = vunpack.c.l.b16 %v5779
        %v5796 = vunpack.c.l.b16 %v5780
        %v5797 = vpack.c.b16 %v5790, %v5789
        %v5798 = vpack.c.b16 %v5792, %v5791
        %v5799 = vpack.c.b16 %v5794, %v5793
        %v5800 = vpack.c.b16 %v5796, %v5795
        %v5806 = vsel %vm5277, %v5771, 0
        %5808 = vmatprep.subr.bf16.mxu0 0
        %5809 = vmatpush1.bf16.msra.mxu0 %v5797
        %5810 = vmatprep.subr.bf16.mxu0 0
        %5811 = vmatpush1.bf16.msra.mxu0 %v5798
        %5812 = vmatprep.subr.bf16.mxu0 0
        %5813 = vmatpush1.bf16.msra.mxu0 %v5799
        %5814 = vmatprep.subr.bf16.mxu0 0
        %5815 = vmatpush1.bf16.msra.mxu0 %v5800
        %5816 = vmatprep.subr.bf16.mxu0 0
        %5817 = vmatpush1.bf16.msra.mxu0 0
        %5818 = vmatprep.subr.bf16.mxu0 0
        %5819 = vmatpush1.bf16.msra.mxu0 0
        %5820 = vmatprep.subr.bf16.mxu0 0
        %5821 = vmatpush1.bf16.msra.mxu0 0
        %5822 = vmatprep.subr.bf16.mxu0 0
        %5823 = vmatpush1.bf16.msra.mxu0 0
        %5824 = vmatprep.subr.bf16.mxu0 0
        %5825 = vmatpush1.bf16.msra.mxu0 0
        %5826 = vmatprep.subr.bf16.mxu0 0
        %5827 = vmatpush1.bf16.msra.mxu0 0
        %5828 = vmatprep.subr.bf16.mxu0 0
        %5829 = vmatpush1.bf16.msra.mxu0 0
        %5830 = vmatprep.subr.bf16.mxu0 0
        %5831 = vmatpush1.bf16.msra.mxu0 0
        %5832 = vmatprep.subr.bf16.mxu0 0
        %5833 = vmatpush1.bf16.msra.mxu0 0
        %5834 = vmatprep.subr.bf16.mxu0 0
        %5835 = vmatpush1.bf16.msra.mxu0 0
        %5836 = vmatprep.subr.bf16.mxu0 0
        %5837 = vmatpush1.bf16.msra.mxu0 0
        %5838 = vmatprep.subr.bf16.mxu0 0
        %5839 = vmatpush1.bf16.msra.mxu0 0
        %5840 = vmatprep.mubr.bf16.mxu0 0
        %5841 = vmatmul.mubr.bf16.gmra.mrb[0].mxu0 %v5806
        %v5842 = vpop.f32.mrb[0].mxu0
        %v5843 = vadd.f32 0.0, %v5842
        %v5844 = vpop.f32.mrb[0].mxu0
        %v5845 = vpop.f32.mrb[0].mxu0
        %v5846 = vadd.f32 0.0, %v5845
        %v5847 = vpop.f32.mrb[0].mxu0
        %5848 = vdwg.mxu0
        %v5849 = vadd.f32 %v5756, %v5843
        %v5850 = vadd.f32 %v5757, %v5846
        %v5851 = vld [vmem:[%s5758 + $0x1] sm:$0xf]
        %v5852 = vld [vmem:[%s5758 + $0x9] sm:$0xf]
        %v5853 = vld [vmem:[%s5758 + $0x11] sm:$0xf]
        %v5854 = vld [vmem:[%s5758 + $0x19] sm:$0xf]
        %v5859 = vcombine.low %v5851, %v5852
        %v5860 = vcombine.low %v5853, %v5854
        %v5863 = vpack.c.bf16 %v5860, %v5859
        %s5864 = scalar_lea.vmem %s6, 224
        %v5865 = vld [vmem:[%s5864] sm:$0xf]
        %v5866 = vld [vmem:[%s5864 + $0x4] sm:$0xf]
        %v5867 = vld [vmem:[%s5864 + $0x8] sm:$0xf]
        %v5868 = vld [vmem:[%s5864 + $0xc] sm:$0xf]
        %v5869 = vld [vmem:[%s5864 + $0x10] sm:$0xf]
        %v5870 = vld [vmem:[%s5864 + $0x14] sm:$0xf]
        %v5871 = vld [vmem:[%s5864 + $0x18] sm:$0xf]
        %v5872 = vld [vmem:[%s5864 + $0x1c] sm:$0xf]
        %v5881 = vunpack.c.l.b16 %v5865
        %v5882 = vunpack.c.l.b16 %v5866
        %v5883 = vunpack.c.l.b16 %v5867
        %v5884 = vunpack.c.l.b16 %v5868
        %v5885 = vunpack.c.l.b16 %v5869
        %v5886 = vunpack.c.l.b16 %v5870
        %v5887 = vunpack.c.l.b16 %v5871
        %v5888 = vunpack.c.l.b16 %v5872
        %v5889 = vpack.c.b16 %v5882, %v5881
        %v5890 = vpack.c.b16 %v5884, %v5883
        %v5891 = vpack.c.b16 %v5886, %v5885
        %v5892 = vpack.c.b16 %v5888, %v5887
        %v5898 = vsel %vm5277, %v5863, 0
        %5900 = vmatprep.subr.bf16.mxu0 0
        %5901 = vmatpush1.bf16.msra.mxu0 %v5889
        %5902 = vmatprep.subr.bf16.mxu0 0
        %5903 = vmatpush1.bf16.msra.mxu0 %v5890
        %5904 = vmatprep.subr.bf16.mxu0 0
        %5905 = vmatpush1.bf16.msra.mxu0 %v5891
        %5906 = vmatprep.subr.bf16.mxu0 0
        %5907 = vmatpush1.bf16.msra.mxu0 %v5892
        %5908 = vmatprep.subr.bf16.mxu0 0
        %5909 = vmatpush1.bf16.msra.mxu0 0
        %5910 = vmatprep.subr.bf16.mxu0 0
        %5911 = vmatpush1.bf16.msra.mxu0 0
        %5912 = vmatprep.subr.bf16.mxu0 0
        %5913 = vmatpush1.bf16.msra.mxu0 0
        %5914 = vmatprep.subr.bf16.mxu0 0
        %5915 = vmatpush1.bf16.msra.mxu0 0
        %5916 = vmatprep.subr.bf16.mxu0 0
        %5917 = vmatpush1.bf16.msra.mxu0 0
        %5918 = vmatprep.subr.bf16.mxu0 0
        %5919 = vmatpush1.bf16.msra.mxu0 0
        %5920 = vmatprep.subr.bf16.mxu0 0
        %5921 = vmatpush1.bf16.msra.mxu0 0
        %5922 = vmatprep.subr.bf16.mxu0 0
        %5923 = vmatpush1.bf16.msra.mxu0 0
        %5924 = vmatprep.subr.bf16.mxu0 0
        %5925 = vmatpush1.bf16.msra.mxu0 0
        %5926 = vmatprep.subr.bf16.mxu0 0
        %5927 = vmatpush1.bf16.msra.mxu0 0
        %5928 = vmatprep.subr.bf16.mxu0 0
        %5929 = vmatpush1.bf16.msra.mxu0 0
        %5930 = vmatprep.subr.bf16.mxu0 0
        %5931 = vmatpush1.bf16.msra.mxu0 0
        %5932 = vmatprep.mubr.bf16.mxu0 0
        %5933 = vmatmul.mubr.bf16.gmra.mrb[0].mxu0 %v5898
        %v5934 = vpop.f32.mrb[0].mxu0
        %v5935 = vadd.f32 0.0, %v5934
        %v5936 = vpop.f32.mrb[0].mxu0
        %v5937 = vpop.f32.mrb[0].mxu0
        %v5938 = vadd.f32 0.0, %v5937
        %v5939 = vpop.f32.mrb[0].mxu0
        %5940 = vdwg.mxu0
        %v5941 = vadd.f32 %v5849, %v5935
        %v5942 = vadd.f32 %v5850, %v5938
        %v5943 = vld [vmem:[%s5758 + $0x2] sm:$0xf]
        %v5944 = vld [vmem:[%s5758 + $0xa] sm:$0xf]
        %v5945 = vld [vmem:[%s5758 + $0x12] sm:$0xf]
        %v5946 = vld [vmem:[%s5758 + $0x1a] sm:$0xf]
        %v5951 = vcombine.low %v5943, %v5944
        %v5952 = vcombine.low %v5945, %v5946
        %v5955 = vpack.c.bf16 %v5952, %v5951
        %s5956 = scalar_lea.vmem %s6, 256
        %v5957 = vld [vmem:[%s5956] sm:$0xf]
        %v5958 = vld [vmem:[%s5956 + $0x4] sm:$0xf]
        %v5959 = vld [vmem:[%s5956 + $0x8] sm:$0xf]
        %v5960 = vld [vmem:[%s5956 + $0xc] sm:$0xf]
        %v5961 = vld [vmem:[%s5956 + $0x10] sm:$0xf]
        %v5962 = vld [vmem:[%s5956 + $0x14] sm:$0xf]
        %v5963 = vld [vmem:[%s5956 + $0x18] sm:$0xf]
        %v5964 = vld [vmem:[%s5956 + $0x1c] sm:$0xf]
        %v5973 = vunpack.c.l.b16 %v5957
        %v5974 = vunpack.c.l.b16 %v5958
        %v5975 = vunpack.c.l.b16 %v5959
        %v5976 = vunpack.c.l.b16 %v5960
        %v5977 = vunpack.c.l.b16 %v5961
        %v5978 = vunpack.c.l.b16 %v5962
        %v5979 = vunpack.c.l.b16 %v5963
        %v5980 = vunpack.c.l.b16 %v5964
        %v5981 = vpack.c.b16 %v5974, %v5973
        %v5982 = vpack.c.b16 %v5976, %v5975
        %v5983 = vpack.c.b16 %v5978, %v5977
        %v5984 = vpack.c.b16 %v5980, %v5979
        %v5990 = vsel %vm5277, %v5955, 0
        %5992 = vmatprep.subr.bf16.mxu0 0
        %5993 = vmatpush1.bf16.msra.mxu0 %v5981
        %5994 = vmatprep.subr.bf16.mxu0 0
        %5995 = vmatpush1.bf16.msra.mxu0 %v5982
        %5996 = vmatprep.subr.bf16.mxu0 0
        %5997 = vmatpush1.bf16.msra.mxu0 %v5983
        %5998 = vmatprep.subr.bf16.mxu0 0
        %5999 = vmatpush1.bf16.msra.mxu0 %v5984
        %6000 = vmatprep.subr.bf16.mxu0 0
        %6001 = vmatpush1.bf16.msra.mxu0 0
        %6002 = vmatprep.subr.bf16.mxu0 0
        %6003 = vmatpush1.bf16.msra.mxu0 0
        %6004 = vmatprep.subr.bf16.mxu0 0
        %6005 = vmatpush1.bf16.msra.mxu0 0
        %6006 = vmatprep.subr.bf16.mxu0 0
        %6007 = vmatpush1.bf16.msra.mxu0 0
        %6008 = vmatprep.subr.bf16.mxu0 0
        %6009 = vmatpush1.bf16.msra.mxu0 0
        %6010 = vmatprep.subr.bf16.mxu0 0
        %6011 = vmatpush1.bf16.msra.mxu0 0
        %6012 = vmatprep.subr.bf16.mxu0 0
        %6013 = vmatpush1.bf16.msra.mxu0 0
        %6014 = vmatprep.subr.bf16.mxu0 0
        %6015 = vmatpush1.bf16.msra.mxu0 0
        %6016 = vmatprep.subr.bf16.mxu0 0
        %6017 = vmatpush1.bf16.msra.mxu0 0
        %6018 = vmatprep.subr.bf16.mxu0 0
        %6019 = vmatpush1.bf16.msra.mxu0 0
        %6020 = vmatprep.subr.bf16.mxu0 0
        %6021 = vmatpush1.bf16.msra.mxu0 0
        %6022 = vmatprep.subr.bf16.mxu0 0
        %6023 = vmatpush1.bf16.msra.mxu0 0
        %6024 = vmatprep.mubr.bf16.mxu0 0
        %6025 = vmatmul.mubr.bf16.gmra.mrb[0].mxu0 %v5990
        %v6026 = vpop.f32.mrb[0].mxu0
        %v6027 = vadd.f32 0.0, %v6026
        %v6028 = vpop.f32.mrb[0].mxu0
        %v6029 = vpop.f32.mrb[0].mxu0
        %v6030 = vadd.f32 0.0, %v6029
        %v6031 = vpop.f32.mrb[0].mxu0
        %6032 = vdwg.mxu0
        %v6033 = vadd.f32 %v5941, %v6027
        %v6034 = vadd.f32 %v5942, %v6030
        %v6035 = vld [vmem:[%s4796] ss:$2 sm:$0xf]
        %v6036 = vld [vmem:[%s4798] ss:$2 sm:$0xf]
        %v6037 = vld [vmem:[%s4800] ss:$2 sm:$0xf]
        %v6038 = vld [vmem:[%s4802] ss:$2 sm:$0xf]
        %v6043 = vcombine.low %v6035, %v6036
        %v6044 = vcombine.low %v6037, %v6038
        %v6047 = vpack.c.bf16 %v6044, %v6043
        %v6048 = vld [vmem:[%s7] sm:$0xf]
        %v6049 = vld [vmem:[%s7 + $0x4] sm:$0xf]
        %v6050 = vld [vmem:[%s7 + $0x8] sm:$0xf]
        %v6051 = vld [vmem:[%s7 + $0xc] sm:$0xf]
        %v6056 = vunpack.c.l.b16 %v6048
        %v6057 = vunpack.c.l.b16 %v6049
        %v6058 = vunpack.c.l.b16 %v6050
        %v6059 = vunpack.c.l.b16 %v6051
        %v6060 = vpack.c.b16 %v6057, %v6056
        %v6061 = vpack.c.b16 %v6059, %v6058
        %v6065 = vsel %vm438, %v6047, 0
        %6067 = vmatprep.subr.bf16.mxu0 0
        %6068 = vmatpush1.bf16.msra.mxu0 %v6060
        %6069 = vmatprep.subr.bf16.mxu0 0
        %6070 = vmatpush1.bf16.msra.mxu0 %v6061
        %6071 = vmatprep.subr.bf16.mxu0 0
        %6072 = vmatpush1.bf16.msra.mxu0 0
        %6073 = vmatprep.subr.bf16.mxu0 0
        %6074 = vmatpush1.bf16.msra.mxu0 0
        %6075 = vmatprep.subr.bf16.mxu0 0
        %6076 = vmatpush1.bf16.msra.mxu0 0
        %6077 = vmatprep.subr.bf16.mxu0 0
        %6078 = vmatpush1.bf16.msra.mxu0 0
        %6079 = vmatprep.subr.bf16.mxu0 0
        %6080 = vmatpush1.bf16.msra.mxu0 0
        %6081 = vmatprep.subr.bf16.mxu0 0
        %6082 = vmatpush1.bf16.msra.mxu0 0
        %6083 = vmatprep.subr.bf16.mxu0 0
        %6084 = vmatpush1.bf16.msra.mxu0 0
        %6085 = vmatprep.subr.bf16.mxu0 0
        %6086 = vmatpush1.bf16.msra.mxu0 0
        %6087 = vmatprep.subr.bf16.mxu0 0
        %6088 = vmatpush1.bf16.msra.mxu0 0
        %6089 = vmatprep.subr.bf16.mxu0 0
        %6090 = vmatpush1.bf16.msra.mxu0 0
        %6091 = vmatprep.subr.bf16.mxu0 0
        %6092 = vmatpush1.bf16.msra.mxu0 0
        %6093 = vmatprep.subr.bf16.mxu0 0
        %6094 = vmatpush1.bf16.msra.mxu0 0
        %6095 = vmatprep.subr.bf16.mxu0 0
        %6096 = vmatpush1.bf16.msra.mxu0 0
        %6097 = vmatprep.subr.bf16.mxu0 0
        %6098 = vmatpush1.bf16.msra.mxu0 0
        %6099 = vmatprep.mubr.bf16.mxu0 0
        %6100 = vmatmul.mubr.bf16.gmra.mrb[0].mxu0 %v6065
        %v6101 = vpop.f32.mrb[0].mxu0
        %v6102 = vadd.f32 0.0, %v6101
        %v6103 = vpop.f32.mrb[0].mxu0
        %v6104 = vpop.f32.mrb[0].mxu0
        %v6105 = vadd.f32 0.0, %v6104
        %v6106 = vpop.f32.mrb[0].mxu0
        %6107 = vdwg.mxu0
        %v6108 = vadd.f32 %v6033, %v6102
        %v6109 = vadd.f32 %v6034, %v6105
        %v6110 = vmax.f32 %v6108, 0.0
        %v6111 = vmax.f32 %v6109, 0.0
        %v6114 = vcombine.high %v6110, %v6110
        %v6115 = vcombine.high %v6111, %v6111
        %s6118 = scalar_lea.vmem [#allocation6], 8
        %6119 = vst.msk [vmem:[%s6118 + $0x1] sm:$0xf] %vm5205, %v6110
        %6120 = vst.msk [vmem:[%s6118 + $0x9] sm:$0xf] %vm5205, %v6114
        %6121 = vst.msk [vmem:[%s6118 + $0x11] sm:$0xf] %vm5205, %v6111
        %6122 = vst.msk [vmem:[%s6118 + $0x19] sm:$0xf] %vm5205, %v6115
        %v6123 = vld [vmem:[#allocation6] ss:$2 sm:$0x3]
        %s6124 = scalar_lea.vmem [#allocation6], 16
        %v6125 = vld [vmem:[%s6124] ss:$2 sm:$0x3]
        %v6128 = vcombine.low %v6123, %v6125
        %v6130 = vunpack.c.l.s4 1983009808
        %v6131 = vunpack.c.0.s8 %v6130
        %v6132 = vlaneseq
        %v6133 = vshrl.u32 %v6132, 7
        %v6134 = vsub.s32 %v6131, %v6133
        %v6135 = vrot.slane %v6128, %v6134
        %v6137 = vpack.c.bf16 %v6135, %v6135
        %v6138 = vld [vmem:[%s8] sm:$0xf]
        %v6139 = vld [vmem:[%s8 + $0x4] sm:$0xf]
        %v6140 = vld [vmem:[%s8 + $0x8] sm:$0xf]
        %v6141 = vld [vmem:[%s8 + $0xc] sm:$0xf]
        %v6142 = vld [vmem:[%s8 + $0x10] sm:$0xf]
        %v6143 = vld [vmem:[%s8 + $0x14] sm:$0xf]
        %v6144 = vld [vmem:[%s8 + $0x18] sm:$0xf]
        %v6145 = vld [vmem:[%s8 + $0x1c] sm:$0xf]
        %s6146 = scalar_lea.vmem [#allocation6], 1
        %v6147 = vld [vmem:[%s6146] ss:$2 sm:$0x3]
        %s6148 = scalar_lea.vmem [#allocation6], 17
        %v6149 = vld [vmem:[%s6148] ss:$2 sm:$0x3]
        %v6152 = vcombine.low %v6147, %v6149
        %v6154 = vunpack.c.l.s4 1983009808
        %v6155 = vunpack.c.0.s8 %v6154
        %v6156 = vlaneseq
        %v6157 = vshrl.u32 %v6156, 7
        %v6158 = vsub.s32 %v6155, %v6157
        %v6159 = vrot.slane %v6152, %v6158
        %v6161 = vpack.c.bf16 %v6159, %v6159
        %s6162 = scalar_lea.vmem %s8, 32
        %v6163 = vld [vmem:[%s6162] sm:$0xf]
        %v6164 = vld [vmem:[%s6162 + $0x4] sm:$0xf]
        %v6165 = vld [vmem:[%s6162 + $0x8] sm:$0xf]
        %v6166 = vld [vmem:[%s6162 + $0xc] sm:$0xf]
        %v6167 = vld [vmem:[%s6162 + $0x10] sm:$0xf]
        %v6168 = vld [vmem:[%s6162 + $0x14] sm:$0xf]
        %v6169 = vld [vmem:[%s6162 + $0x18] sm:$0xf]
        %v6170 = vld [vmem:[%s6162 + $0x1c] sm:$0xf]
        %v6179 = vunpack.c.l.b16 %v6163
        %v6180 = vunpack.c.l.b16 %v6164
        %v6181 = vunpack.c.l.b16 %v6165
        %v6182 = vunpack.c.l.b16 %v6166
        %v6183 = vunpack.c.l.b16 %v6167
        %v6184 = vunpack.c.l.b16 %v6168
        %v6185 = vunpack.c.l.b16 %v6169
        %v6186 = vunpack.c.l.b16 %v6170
        %v6187 = vpack.c.b16 %v6180, %v6179
        %v6188 = vpack.c.b16 %v6182, %v6181
        %v6189 = vpack.c.b16 %v6184, %v6183
        %v6190 = vpack.c.b16 %v6186, %v6185
        %v6196 = vsel %vm5277, %v6161, 0
        %6198 = vmatprep.subr.bf16.mxu0 0
        %6199 = vmatpush1.bf16.msra.mxu0 %v6187
        %6200 = vmatprep.subr.bf16.mxu0 0
        %6201 = vmatpush1.bf16.msra.mxu0 %v6188
        %6202 = vmatprep.subr.bf16.mxu0 0
        %6203 = vmatpush1.bf16.msra.mxu0 %v6189
        %6204 = vmatprep.subr.bf16.mxu0 0
        %6205 = vmatpush1.bf16.msra.mxu0 %v6190
        %6206 = vmatprep.subr.bf16.mxu0 0
        %6207 = vmatpush1.bf16.msra.mxu0 0
        %6208 = vmatprep.subr.bf16.mxu0 0
        %6209 = vmatpush1.bf16.msra.mxu0 0
        %6210 = vmatprep.subr.bf16.mxu0 0
        %6211 = vmatpush1.bf16.msra.mxu0 0
        %6212 = vmatprep.subr.bf16.mxu0 0
        %6213 = vmatpush1.bf16.msra.mxu0 0
        %6214 = vmatprep.subr.bf16.mxu0 0
        %6215 = vmatpush1.bf16.msra.mxu0 0
        %6216 = vmatprep.subr.bf16.mxu0 0
        %6217 = vmatpush1.bf16.msra.mxu0 0
        %6218 = vmatprep.subr.bf16.mxu0 0
        %6219 = vmatpush1.bf16.msra.mxu0 0
        %6220 = vmatprep.subr.bf16.mxu0 0
        %6221 = vmatpush1.bf16.msra.mxu0 0
        %6222 = vmatprep.subr.bf16.mxu0 0
        %6223 = vmatpush1.bf16.msra.mxu0 0
        %6224 = vmatprep.subr.bf16.mxu0 0
        %6225 = vmatpush1.bf16.msra.mxu0 0
        %6226 = vmatprep.subr.bf16.mxu0 0
        %6227 = vmatpush1.bf16.msra.mxu0 0
        %6228 = vmatprep.subr.bf16.mxu0 0
        %6229 = vmatpush1.bf16.msra.mxu0 0
        %6230 = vmatprep.mubr.bf16.mxu0 0
        %6231 = vmatmul.mubr.bf16.gmra.mrb[0].mxu0 %v6196
        %v6232 = vpop.f32.mrb[0].mxu0
        %v6233 = vadd.f32 0.0, %v6232
        %v6234 = vpop.f32.mrb[0].mxu0
        %v6235 = vpop.f32.mrb[0].mxu0
        %v6236 = vpop.f32.mrb[0].mxu0
        %6237 = vdwg.mxu0
        %v6246 = vunpack.c.l.b16 %v6138
        %v6247 = vunpack.c.l.b16 %v6139
        %v6248 = vunpack.c.l.b16 %v6140
        %v6249 = vunpack.c.l.b16 %v6141
        %v6250 = vunpack.c.l.b16 %v6142
        %v6251 = vunpack.c.l.b16 %v6143
        %v6252 = vunpack.c.l.b16 %v6144
        %v6253 = vunpack.c.l.b16 %v6145
        %v6254 = vpack.c.b16 %v6247, %v6246
        %v6255 = vpack.c.b16 %v6249, %v6248
        %v6256 = vpack.c.b16 %v6251, %v6250
        %v6257 = vpack.c.b16 %v6253, %v6252
        %v6263 = vsel %vm5277, %v6137, 0
        %6265 = vmatprep.subr.bf16.mxu0 0
        %6266 = vmatpush1.bf16.msra.mxu0 %v6254
        %6267 = vmatprep.subr.bf16.mxu0 0
        %6268 = vmatpush1.bf16.msra.mxu0 %v6255
        %6269 = vmatprep.subr.bf16.mxu0 0
        %6270 = vmatpush1.bf16.msra.mxu0 %v6256
        %6271 = vmatprep.subr.bf16.mxu0 0
        %6272 = vmatpush1.bf16.msra.mxu0 %v6257
        %6273 = vmatprep.subr.bf16.mxu0 0
        %6274 = vmatpush1.bf16.msra.mxu0 0
        %6275 = vmatprep.subr.bf16.mxu0 0
        %6276 = vmatpush1.bf16.msra.mxu0 0
        %6277 = vmatprep.subr.bf16.mxu0 0
        %6278 = vmatpush1.bf16.msra.mxu0 0
        %6279 = vmatprep.subr.bf16.mxu0 0
        %6280 = vmatpush1.bf16.msra.mxu0 0
        %6281 = vmatprep.subr.bf16.mxu0 0
        %6282 = vmatpush1.bf16.msra.mxu0 0
        %6283 = vmatprep.subr.bf16.mxu0 0
        %6284 = vmatpush1.bf16.msra.mxu0 0
        %6285 = vmatprep.subr.bf16.mxu0 0
        %6286 = vmatpush1.bf16.msra.mxu0 0
        %6287 = vmatprep.subr.bf16.mxu0 0
        %6288 = vmatpush1.bf16.msra.mxu0 0
        %6289 = vmatprep.subr.bf16.mxu0 0
        %6290 = vmatpush1.bf16.msra.mxu0 0
        %6291 = vmatprep.subr.bf16.mxu0 0
        %6292 = vmatpush1.bf16.msra.mxu0 0
        %6293 = vmatprep.subr.bf16.mxu0 0
        %6294 = vmatpush1.bf16.msra.mxu0 0
        %6295 = vmatprep.subr.bf16.mxu0 0
        %6296 = vmatpush1.bf16.msra.mxu0 0
        %6297 = vmatprep.mubr.bf16.mxu0 0
        %6298 = vmatmul.mubr.bf16.gmra.mrb[0].mxu0 %v6263
        %v6299 = vpop.f32.mrb[0].mxu0
        %v6300 = vadd.f32 %v6233, %v6299
        %v6301 = vpop.f32.mrb[0].mxu0
        %v6302 = vpop.f32.mrb[0].mxu0
        %v6303 = vpop.f32.mrb[0].mxu0
        %6304 = vdwg.mxu0
        %s6305 = scalar_lea.vmem [#allocation6], 2
        %v6306 = vld [vmem:[%s6305] ss:$2 sm:$0x3]
        %s6307 = scalar_lea.vmem [#allocation6], 18
        %v6308 = vld [vmem:[%s6307] ss:$2 sm:$0x3]
        %v6311 = vcombine.low %v6306, %v6308
        %v6313 = vunpack.c.l.s4 1983009808
        %v6314 = vunpack.c.0.s8 %v6313
        %v6315 = vlaneseq
        %v6316 = vshrl.u32 %v6315, 7
        %v6317 = vsub.s32 %v6314, %v6316
        %v6318 = vrot.slane %v6311, %v6317
        %v6320 = vpack.c.bf16 %v6318, %v6318
        %s6321 = scalar_lea.vmem %s8, 64
        %v6322 = vld [vmem:[%s6321] sm:$0xf]
        %v6323 = vld [vmem:[%s6321 + $0x4] sm:$0xf]
        %v6324 = vld [vmem:[%s6321 + $0x8] sm:$0xf]
        %v6325 = vld [vmem:[%s6321 + $0xc] sm:$0xf]
        %v6326 = vld [vmem:[%s6321 + $0x10] sm:$0xf]
        %v6327 = vld [vmem:[%s6321 + $0x14] sm:$0xf]
        %v6328 = vld [vmem:[%s6321 + $0x18] sm:$0xf]
        %v6329 = vld [vmem:[%s6321 + $0x1c] sm:$0xf]
        %v6338 = vunpack.c.l.b16 %v6322
        %v6339 = vunpack.c.l.b16 %v6323
        %v6340 = vunpack.c.l.b16 %v6324
        %v6341 = vunpack.c.l.b16 %v6325
        %v6342 = vunpack.c.l.b16 %v6326
        %v6343 = vunpack.c.l.b16 %v6327
        %v6344 = vunpack.c.l.b16 %v6328
        %v6345 = vunpack.c.l.b16 %v6329
        %v6346 = vpack.c.b16 %v6339, %v6338
        %v6347 = vpack.c.b16 %v6341, %v6340
        %v6348 = vpack.c.b16 %v6343, %v6342
        %v6349 = vpack.c.b16 %v6345, %v6344
        %v6355 = vsel %vm5277, %v6320, 0
        %6357 = vmatprep.subr.bf16.mxu0 0
        %6358 = vmatpush1.bf16.msra.mxu0 %v6346
        %6359 = vmatprep.subr.bf16.mxu0 0
        %6360 = vmatpush1.bf16.msra.mxu0 %v6347
        %6361 = vmatprep.subr.bf16.mxu0 0
        %6362 = vmatpush1.bf16.msra.mxu0 %v6348
        %6363 = vmatprep.subr.bf16.mxu0 0
        %6364 = vmatpush1.bf16.msra.mxu0 %v6349
        %6365 = vmatprep.subr.bf16.mxu0 0
        %6366 = vmatpush1.bf16.msra.mxu0 0
        %6367 = vmatprep.subr.bf16.mxu0 0
        %6368 = vmatpush1.bf16.msra.mxu0 0
        %6369 = vmatprep.subr.bf16.mxu0 0
        %6370 = vmatpush1.bf16.msra.mxu0 0
        %6371 = vmatprep.subr.bf16.mxu0 0
        %6372 = vmatpush1.bf16.msra.mxu0 0
        %6373 = vmatprep.subr.bf16.mxu0 0
        %6374 = vmatpush1.bf16.msra.mxu0 0
        %6375 = vmatprep.subr.bf16.mxu0 0
        %6376 = vmatpush1.bf16.msra.mxu0 0
        %6377 = vmatprep.subr.bf16.mxu0 0
        %6378 = vmatpush1.bf16.msra.mxu0 0
        %6379 = vmatprep.subr.bf16.mxu0 0
        %6380 = vmatpush1.bf16.msra.mxu0 0
        %6381 = vmatprep.subr.bf16.mxu0 0
        %6382 = vmatpush1.bf16.msra.mxu0 0
        %6383 = vmatprep.subr.bf16.mxu0 0
        %6384 = vmatpush1.bf16.msra.mxu0 0
        %6385 = vmatprep.subr.bf16.mxu0 0
        %6386 = vmatpush1.bf16.msra.mxu0 0
        %6387 = vmatprep.subr.bf16.mxu0 0
        %6388 = vmatpush1.bf16.msra.mxu0 0
        %6389 = vmatprep.mubr.bf16.mxu0 0
        %6390 = vmatmul.mubr.bf16.gmra.mrb[0].mxu0 %v6355
        %v6391 = vpop.f32.mrb[0].mxu0
        %v6392 = vadd.f32 0.0, %v6391
        %v6393 = vpop.f32.mrb[0].mxu0
        %v6394 = vpop.f32.mrb[0].mxu0
        %v6395 = vpop.f32.mrb[0].mxu0
        %6396 = vdwg.mxu0
        %v6397 = vadd.f32 %v6300, %v6392
        %v6398 = vld [vmem:[%s6118] ss:$2 sm:$0x3]
        %s6399 = scalar_lea.vmem %s6118, 16 [#allocation6]
        %v6400 = vld [vmem:[%s6399] ss:$2 sm:$0x3]
        %v6403 = vcombine.low %v6398, %v6400
        %v6405 = vunpack.c.l.s4 1983009808
        %v6406 = vunpack.c.0.s8 %v6405
        %v6407 = vlaneseq
        %v6408 = vshrl.u32 %v6407, 7
        %v6409 = vsub.s32 %v6406, %v6408
        %v6410 = vrot.slane %v6403, %v6409
        %v6412 = vpack.c.bf16 %v6410, %v6410
        %s6413 = scalar_lea.vmem %s8, 96
        %v6414 = vld [vmem:[%s6413] sm:$0xf]
        %v6415 = vld [vmem:[%s6413 + $0x4] sm:$0xf]
        %v6416 = vld [vmem:[%s6413 + $0x8] sm:$0xf]
        %v6417 = vld [vmem:[%s6413 + $0xc] sm:$0xf]
        %v6418 = vld [vmem:[%s6413 + $0x10] sm:$0xf]
        %v6419 = vld [vmem:[%s6413 + $0x14] sm:$0xf]
        %v6420 = vld [vmem:[%s6413 + $0x18] sm:$0xf]
        %v6421 = vld [vmem:[%s6413 + $0x1c] sm:$0xf]
        %v6430 = vunpack.c.l.b16 %v6414
        %v6431 = vunpack.c.l.b16 %v6415
        %v6432 = vunpack.c.l.b16 %v6416
        %v6433 = vunpack.c.l.b16 %v6417
        %v6434 = vunpack.c.l.b16 %v6418
        %v6435 = vunpack.c.l.b16 %v6419
        %v6436 = vunpack.c.l.b16 %v6420
        %v6437 = vunpack.c.l.b16 %v6421
        %v6438 = vpack.c.b16 %v6431, %v6430
        %v6439 = vpack.c.b16 %v6433, %v6432
        %v6440 = vpack.c.b16 %v6435, %v6434
        %v6441 = vpack.c.b16 %v6437, %v6436
        %v6447 = vsel %vm5277, %v6412, 0
        %6449 = vmatprep.subr.bf16.mxu0 0
        %6450 = vmatpush1.bf16.msra.mxu0 %v6438
        %6451 = vmatprep.subr.bf16.mxu0 0
        %6452 = vmatpush1.bf16.msra.mxu0 %v6439
        %6453 = vmatprep.subr.bf16.mxu0 0
        %6454 = vmatpush1.bf16.msra.mxu0 %v6440
        %6455 = vmatprep.subr.bf16.mxu0 0
        %6456 = vmatpush1.bf16.msra.mxu0 %v6441
        %6457 = vmatprep.subr.bf16.mxu0 0
        %6458 = vmatpush1.bf16.msra.mxu0 0
        %6459 = vmatprep.subr.bf16.mxu0 0
        %6460 = vmatpush1.bf16.msra.mxu0 0
        %6461 = vmatprep.subr.bf16.mxu0 0
        %6462 = vmatpush1.bf16.msra.mxu0 0
        %6463 = vmatprep.subr.bf16.mxu0 0
        %6464 = vmatpush1.bf16.msra.mxu0 0
        %6465 = vmatprep.subr.bf16.mxu0 0
        %6466 = vmatpush1.bf16.msra.mxu0 0
        %6467 = vmatprep.subr.bf16.mxu0 0
        %6468 = vmatpush1.bf16.msra.mxu0 0
        %6469 = vmatprep.subr.bf16.mxu0 0
        %6470 = vmatpush1.bf16.msra.mxu0 0
        %6471 = vmatprep.subr.bf16.mxu0 0
        %6472 = vmatpush1.bf16.msra.mxu0 0
        %6473 = vmatprep.subr.bf16.mxu0 0
        %6474 = vmatpush1.bf16.msra.mxu0 0
        %6475 = vmatprep.subr.bf16.mxu0 0
        %6476 = vmatpush1.bf16.msra.mxu0 0
        %6477 = vmatprep.subr.bf16.mxu0 0
        %6478 = vmatpush1.bf16.msra.mxu0 0
        %6479 = vmatprep.subr.bf16.mxu0 0
        %6480 = vmatpush1.bf16.msra.mxu0 0
        %6481 = vmatprep.mubr.bf16.mxu0 0
        %6482 = vmatmul.mubr.bf16.gmra.mrb[0].mxu0 %v6447
        %v6483 = vpop.f32.mrb[0].mxu0
        %v6484 = vadd.f32 0.0, %v6483
        %v6485 = vpop.f32.mrb[0].mxu0
        %v6486 = vpop.f32.mrb[0].mxu0
        %v6487 = vpop.f32.mrb[0].mxu0
        %6488 = vdwg.mxu0
        %v6489 = vadd.f32 %v6397, %v6484
        %s6490 = scalar_lea.vmem %s6118, 1 [#allocation6]
        %v6491 = vld [vmem:[%s6490] ss:$2 sm:$0x3]
        %s6492 = scalar_lea.vmem %s6118, 17 [#allocation6]
        %v6493 = vld [vmem:[%s6492] ss:$2 sm:$0x3]
        %v6496 = vcombine.low %v6491, %v6493
        %v6498 = vunpack.c.l.s4 1983009808
        %v6499 = vunpack.c.0.s8 %v6498
        %v6500 = vlaneseq
        %v6501 = vshrl.u32 %v6500, 7
        %v6502 = vsub.s32 %v6499, %v6501
        %v6503 = vrot.slane %v6496, %v6502
        %v6505 = vpack.c.bf16 %v6503, %v6503
        %s6506 = scalar_lea.vmem %s8, 128
        %v6507 = vld [vmem:[%s6506] sm:$0xf]
        %v6508 = vld [vmem:[%s6506 + $0x4] sm:$0xf]
        %v6509 = vld [vmem:[%s6506 + $0x8] sm:$0xf]
        %v6510 = vld [vmem:[%s6506 + $0xc] sm:$0xf]
        %v6511 = vld [vmem:[%s6506 + $0x10] sm:$0xf]
        %v6512 = vld [vmem:[%s6506 + $0x14] sm:$0xf]
        %v6513 = vld [vmem:[%s6506 + $0x18] sm:$0xf]
        %v6514 = vld [vmem:[%s6506 + $0x1c] sm:$0xf]
        %v6523 = vunpack.c.l.b16 %v6507
        %v6524 = vunpack.c.l.b16 %v6508
        %v6525 = vunpack.c.l.b16 %v6509
        %v6526 = vunpack.c.l.b16 %v6510
        %v6527 = vunpack.c.l.b16 %v6511
        %v6528 = vunpack.c.l.b16 %v6512
        %v6529 = vunpack.c.l.b16 %v6513
        %v6530 = vunpack.c.l.b16 %v6514
        %v6531 = vpack.c.b16 %v6524, %v6523
        %v6532 = vpack.c.b16 %v6526, %v6525
        %v6533 = vpack.c.b16 %v6528, %v6527
        %v6534 = vpack.c.b16 %v6530, %v6529
        %v6540 = vsel %vm5277, %v6505, 0
        %6542 = vmatprep.subr.bf16.mxu0 0
        %6543 = vmatpush1.bf16.msra.mxu0 %v6531
        %6544 = vmatprep.subr.bf16.mxu0 0
        %6545 = vmatpush1.bf16.msra.mxu0 %v6532
        %6546 = vmatprep.subr.bf16.mxu0 0
        %6547 = vmatpush1.bf16.msra.mxu0 %v6533
        %6548 = vmatprep.subr.bf16.mxu0 0
        %6549 = vmatpush1.bf16.msra.mxu0 %v6534
        %6550 = vmatprep.subr.bf16.mxu0 0
        %6551 = vmatpush1.bf16.msra.mxu0 0
        %6552 = vmatprep.subr.bf16.mxu0 0
        %6553 = vmatpush1.bf16.msra.mxu0 0
        %6554 = vmatprep.subr.bf16.mxu0 0
        %6555 = vmatpush1.bf16.msra.mxu0 0
        %6556 = vmatprep.subr.bf16.mxu0 0
        %6557 = vmatpush1.bf16.msra.mxu0 0
        %6558 = vmatprep.subr.bf16.mxu0 0
        %6559 = vmatpush1.bf16.msra.mxu0 0
        %6560 = vmatprep.subr.bf16.mxu0 0
        %6561 = vmatpush1.bf16.msra.mxu0 0
        %6562 = vmatprep.subr.bf16.mxu0 0
        %6563 = vmatpush1.bf16.msra.mxu0 0
        %6564 = vmatprep.subr.bf16.mxu0 0
        %6565 = vmatpush1.bf16.msra.mxu0 0
        %6566 = vmatprep.subr.bf16.mxu0 0
        %6567 = vmatpush1.bf16.msra.mxu0 0
        %6568 = vmatprep.subr.bf16.mxu0 0
        %6569 = vmatpush1.bf16.msra.mxu0 0
        %6570 = vmatprep.subr.bf16.mxu0 0
        %6571 = vmatpush1.bf16.msra.mxu0 0
        %6572 = vmatprep.subr.bf16.mxu0 0
        %6573 = vmatpush1.bf16.msra.mxu0 0
        %6574 = vmatprep.mubr.bf16.mxu0 0
        %6575 = vmatmul.mubr.bf16.gmra.mrb[0].mxu0 %v6540
        %v6576 = vpop.f32.mrb[0].mxu0
        %v6577 = vadd.f32 0.0, %v6576
        %v6578 = vpop.f32.mrb[0].mxu0
        %v6579 = vpop.f32.mrb[0].mxu0
        %v6580 = vpop.f32.mrb[0].mxu0
        %6581 = vdwg.mxu0
        %v6582 = vadd.f32 %v6489, %v6577
        %s6583 = scalar_lea.vmem %s6118, 2 [#allocation6]
        %v6584 = vld [vmem:[%s6583] ss:$2 sm:$0x3]
        %s6585 = scalar_lea.vmem %s6118, 18 [#allocation6]
        %v6586 = vld [vmem:[%s6585] ss:$2 sm:$0x3]
        %v6589 = vcombine.low %v6584, %v6586
        %v6591 = vunpack.c.l.s4 1983009808
        %v6592 = vunpack.c.0.s8 %v6591
        %v6593 = vlaneseq
        %v6594 = vshrl.u32 %v6593, 7
        %v6595 = vsub.s32 %v6592, %v6594
        %v6596 = vrot.slane %v6589, %v6595
        %v6598 = vpack.c.bf16 %v6596, %v6596
        %s6599 = scalar_lea.vmem %s8, 160
        %v6600 = vld [vmem:[%s6599] sm:$0xf]
        %v6601 = vld [vmem:[%s6599 + $0x4] sm:$0xf]
        %v6602 = vld [vmem:[%s6599 + $0x8] sm:$0xf]
        %v6603 = vld [vmem:[%s6599 + $0xc] sm:$0xf]
        %v6604 = vld [vmem:[%s6599 + $0x10] sm:$0xf]
        %v6605 = vld [vmem:[%s6599 + $0x14] sm:$0xf]
        %v6606 = vld [vmem:[%s6599 + $0x18] sm:$0xf]
        %v6607 = vld [vmem:[%s6599 + $0x1c] sm:$0xf]
        %v6616 = vunpack.c.l.b16 %v6600
        %v6617 = vunpack.c.l.b16 %v6601
        %v6618 = vunpack.c.l.b16 %v6602
        %v6619 = vunpack.c.l.b16 %v6603
        %v6620 = vunpack.c.l.b16 %v6604
        %v6621 = vunpack.c.l.b16 %v6605
        %v6622 = vunpack.c.l.b16 %v6606
        %v6623 = vunpack.c.l.b16 %v6607
        %v6624 = vpack.c.b16 %v6617, %v6616
        %v6625 = vpack.c.b16 %v6619, %v6618
        %v6626 = vpack.c.b16 %v6621, %v6620
        %v6627 = vpack.c.b16 %v6623, %v6622
        %v6633 = vsel %vm5277, %v6598, 0
        %6635 = vmatprep.subr.bf16.mxu0 0
        %6636 = vmatpush1.bf16.msra.mxu0 %v6624
        %6637 = vmatprep.subr.bf16.mxu0 0
        %6638 = vmatpush1.bf16.msra.mxu0 %v6625
        %6639 = vmatprep.subr.bf16.mxu0 0
        %6640 = vmatpush1.bf16.msra.mxu0 %v6626
        %6641 = vmatprep.subr.bf16.mxu0 0
        %6642 = vmatpush1.bf16.msra.mxu0 %v6627
        %6643 = vmatprep.subr.bf16.mxu0 0
        %6644 = vmatpush1.bf16.msra.mxu0 0
        %6645 = vmatprep.subr.bf16.mxu0 0
        %6646 = vmatpush1.bf16.msra.mxu0 0
        %6647 = vmatprep.subr.bf16.mxu0 0
        %6648 = vmatpush1.bf16.msra.mxu0 0
        %6649 = vmatprep.subr.bf16.mxu0 0
        %6650 = vmatpush1.bf16.msra.mxu0 0
        %6651 = vmatprep.subr.bf16.mxu0 0
        %6652 = vmatpush1.bf16.msra.mxu0 0
        %6653 = vmatprep.subr.bf16.mxu0 0
        %6654 = vmatpush1.bf16.msra.mxu0 0
        %6655 = vmatprep.subr.bf16.mxu0 0
        %6656 = vmatpush1.bf16.msra.mxu0 0
        %6657 = vmatprep.subr.bf16.mxu0 0
        %6658 = vmatpush1.bf16.msra.mxu0 0
        %6659 = vmatprep.subr.bf16.mxu0 0
        %6660 = vmatpush1.bf16.msra.mxu0 0
        %6661 = vmatprep.subr.bf16.mxu0 0
        %6662 = vmatpush1.bf16.msra.mxu0 0
        %6663 = vmatprep.subr.bf16.mxu0 0
        %6664 = vmatpush1.bf16.msra.mxu0 0
        %6665 = vmatprep.subr.bf16.mxu0 0
        %6666 = vmatpush1.bf16.msra.mxu0 0
        %6667 = vmatprep.mubr.bf16.mxu0 0
        %6668 = vmatmul.mubr.bf16.gmra.mrb[0].mxu0 %v6633
        %v6669 = vpop.f32.mrb[0].mxu0
        %v6670 = vadd.f32 0.0, %v6669
        %v6671 = vpop.f32.mrb[0].mxu0
        %v6672 = vpop.f32.mrb[0].mxu0
        %v6673 = vpop.f32.mrb[0].mxu0
        %6674 = vdwg.mxu0
        %v6675 = vadd.f32 %v6582, %v6670
        %s6676 = scalar_lea.vmem [#allocation6], 16
        %v6677 = vld [vmem:[%s6676] ss:$2 sm:$0x3]
        %s6678 = scalar_lea.vmem %s6676, 16 [#allocation6]
        %v6679 = vld [vmem:[%s6678] ss:$2 sm:$0x3]
        %v6682 = vcombine.low %v6677, %v6679
        %v6684 = vunpack.c.l.s4 1983009808
        %v6685 = vunpack.c.0.s8 %v6684
        %v6686 = vlaneseq
        %v6687 = vshrl.u32 %v6686, 7
        %v6688 = vsub.s32 %v6685, %v6687
        %v6689 = vrot.slane %v6682, %v6688
        %v6691 = vpack.c.bf16 %v6689, %v6689
        %s6692 = scalar_lea.vmem %s8, 192
        %v6693 = vld [vmem:[%s6692] sm:$0xf]
        %v6694 = vld [vmem:[%s6692 + $0x4] sm:$0xf]
        %v6695 = vld [vmem:[%s6692 + $0x8] sm:$0xf]
        %v6696 = vld [vmem:[%s6692 + $0xc] sm:$0xf]
        %v6697 = vld [vmem:[%s6692 + $0x10] sm:$0xf]
        %v6698 = vld [vmem:[%s6692 + $0x14] sm:$0xf]
        %v6699 = vld [vmem:[%s6692 + $0x18] sm:$0xf]
        %v6700 = vld [vmem:[%s6692 + $0x1c] sm:$0xf]
        %v6709 = vunpack.c.l.b16 %v6693
        %v6710 = vunpack.c.l.b16 %v6694
        %v6711 = vunpack.c.l.b16 %v6695
        %v6712 = vunpack.c.l.b16 %v6696
        %v6713 = vunpack.c.l.b16 %v6697
        %v6714 = vunpack.c.l.b16 %v6698
        %v6715 = vunpack.c.l.b16 %v6699
        %v6716 = vunpack.c.l.b16 %v6700
        %v6717 = vpack.c.b16 %v6710, %v6709
        %v6718 = vpack.c.b16 %v6712, %v6711
        %v6719 = vpack.c.b16 %v6714, %v6713
        %v6720 = vpack.c.b16 %v6716, %v6715
        %v6726 = vsel %vm5277, %v6691, 0
        %6728 = vmatprep.subr.bf16.mxu0 0
        %6729 = vmatpush1.bf16.msra.mxu0 %v6717
        %6730 = vmatprep.subr.bf16.mxu0 0
        %6731 = vmatpush1.bf16.msra.mxu0 %v6718
        %6732 = vmatprep.subr.bf16.mxu0 0
        %6733 = vmatpush1.bf16.msra.mxu0 %v6719
        %6734 = vmatprep.subr.bf16.mxu0 0
        %6735 = vmatpush1.bf16.msra.mxu0 %v6720
        %6736 = vmatprep.subr.bf16.mxu0 0
        %6737 = vmatpush1.bf16.msra.mxu0 0
        %6738 = vmatprep.subr.bf16.mxu0 0
        %6739 = vmatpush1.bf16.msra.mxu0 0
        %6740 = vmatprep.subr.bf16.mxu0 0
        %6741 = vmatpush1.bf16.msra.mxu0 0
        %6742 = vmatprep.subr.bf16.mxu0 0
        %6743 = vmatpush1.bf16.msra.mxu0 0
        %6744 = vmatprep.subr.bf16.mxu0 0
        %6745 = vmatpush1.bf16.msra.mxu0 0
        %6746 = vmatprep.subr.bf16.mxu0 0
        %6747 = vmatpush1.bf16.msra.mxu0 0
        %6748 = vmatprep.subr.bf16.mxu0 0
        %6749 = vmatpush1.bf16.msra.mxu0 0
        %6750 = vmatprep.subr.bf16.mxu0 0
        %6751 = vmatpush1.bf16.msra.mxu0 0
        %6752 = vmatprep.subr.bf16.mxu0 0
        %6753 = vmatpush1.bf16.msra.mxu0 0
        %6754 = vmatprep.subr.bf16.mxu0 0
        %6755 = vmatpush1.bf16.msra.mxu0 0
        %6756 = vmatprep.subr.bf16.mxu0 0
        %6757 = vmatpush1.bf16.msra.mxu0 0
        %6758 = vmatprep.subr.bf16.mxu0 0
        %6759 = vmatpush1.bf16.msra.mxu0 0
        %6760 = vmatprep.mubr.bf16.mxu0 0
        %6761 = vmatmul.mubr.bf16.gmra.mrb[0].mxu0 %v6726
        %v6762 = vpop.f32.mrb[0].mxu0
        %v6763 = vadd.f32 0.0, %v6762
        %v6764 = vpop.f32.mrb[0].mxu0
        %v6765 = vpop.f32.mrb[0].mxu0
        %v6766 = vpop.f32.mrb[0].mxu0
        %6767 = vdwg.mxu0
        %v6768 = vadd.f32 %v6675, %v6763
        %s6769 = scalar_lea.vmem %s6676, 1 [#allocation6]
        %v6770 = vld [vmem:[%s6769] ss:$2 sm:$0x3]
        %s6771 = scalar_lea.vmem %s6676, 17 [#allocation6]
        %v6772 = vld [vmem:[%s6771] ss:$2 sm:$0x3]
        %v6775 = vcombine.low %v6770, %v6772
        %v6777 = vunpack.c.l.s4 1983009808
        %v6778 = vunpack.c.0.s8 %v6777
        %v6779 = vlaneseq
        %v6780 = vshrl.u32 %v6779, 7
        %v6781 = vsub.s32 %v6778, %v6780
        %v6782 = vrot.slane %v6775, %v6781
        %v6784 = vpack.c.bf16 %v6782, %v6782
        %s6785 = scalar_lea.vmem %s8, 224
        %v6786 = vld [vmem:[%s6785] sm:$0xf]
        %v6787 = vld [vmem:[%s6785 + $0x4] sm:$0xf]
        %v6788 = vld [vmem:[%s6785 + $0x8] sm:$0xf]
        %v6789 = vld [vmem:[%s6785 + $0xc] sm:$0xf]
        %v6790 = vld [vmem:[%s6785 + $0x10] sm:$0xf]
        %v6791 = vld [vmem:[%s6785 + $0x14] sm:$0xf]
        %v6792 = vld [vmem:[%s6785 + $0x18] sm:$0xf]
        %v6793 = vld [vmem:[%s6785 + $0x1c] sm:$0xf]
        %v6802 = vunpack.c.l.b16 %v6786
        %v6803 = vunpack.c.l.b16 %v6787
        %v6804 = vunpack.c.l.b16 %v6788
        %v6805 = vunpack.c.l.b16 %v6789
        %v6806 = vunpack.c.l.b16 %v6790
        %v6807 = vunpack.c.l.b16 %v6791
        %v6808 = vunpack.c.l.b16 %v6792
        %v6809 = vunpack.c.l.b16 %v6793
        %v6810 = vpack.c.b16 %v6803, %v6802
        %v6811 = vpack.c.b16 %v6805, %v6804
        %v6812 = vpack.c.b16 %v6807, %v6806
        %v6813 = vpack.c.b16 %v6809, %v6808
        %v6819 = vsel %vm5277, %v6784, 0
        %6821 = vmatprep.subr.bf16.mxu0 0
        %6822 = vmatpush1.bf16.msra.mxu0 %v6810
        %6823 = vmatprep.subr.bf16.mxu0 0
        %6824 = vmatpush1.bf16.msra.mxu0 %v6811
        %6825 = vmatprep.subr.bf16.mxu0 0
        %6826 = vmatpush1.bf16.msra.mxu0 %v6812
        %6827 = vmatprep.subr.bf16.mxu0 0
        %6828 = vmatpush1.bf16.msra.mxu0 %v6813
        %6829 = vmatprep.subr.bf16.mxu0 0
        %6830 = vmatpush1.bf16.msra.mxu0 0
        %6831 = vmatprep.subr.bf16.mxu0 0
        %6832 = vmatpush1.bf16.msra.mxu0 0
        %6833 = vmatprep.subr.bf16.mxu0 0
        %6834 = vmatpush1.bf16.msra.mxu0 0
        %6835 = vmatprep.subr.bf16.mxu0 0
        %6836 = vmatpush1.bf16.msra.mxu0 0
        %6837 = vmatprep.subr.bf16.mxu0 0
        %6838 = vmatpush1.bf16.msra.mxu0 0
        %6839 = vmatprep.subr.bf16.mxu0 0
        %6840 = vmatpush1.bf16.msra.mxu0 0
        %6841 = vmatprep.subr.bf16.mxu0 0
        %6842 = vmatpush1.bf16.msra.mxu0 0
        %6843 = vmatprep.subr.bf16.mxu0 0
        %6844 = vmatpush1.bf16.msra.mxu0 0
        %6845 = vmatprep.subr.bf16.mxu0 0
        %6846 = vmatpush1.bf16.msra.mxu0 0
        %6847 = vmatprep.subr.bf16.mxu0 0
        %6848 = vmatpush1.bf16.msra.mxu0 0
        %6849 = vmatprep.subr.bf16.mxu0 0
        %6850 = vmatpush1.bf16.msra.mxu0 0
        %6851 = vmatprep.subr.bf16.mxu0 0
        %6852 = vmatpush1.bf16.msra.mxu0 0
        %6853 = vmatprep.mubr.bf16.mxu0 0
        %6854 = vmatmul.mubr.bf16.gmra.mrb[0].mxu0 %v6819
        %v6855 = vpop.f32.mrb[0].mxu0
        %v6856 = vadd.f32 0.0, %v6855
        %v6857 = vpop.f32.mrb[0].mxu0
        %v6858 = vpop.f32.mrb[0].mxu0
        %v6859 = vpop.f32.mrb[0].mxu0
        %6860 = vdwg.mxu0
        %v6861 = vadd.f32 %v6768, %v6856
        %s6862 = scalar_lea.vmem %s6676, 2 [#allocation6]
        %v6863 = vld [vmem:[%s6862] ss:$2 sm:$0x3]
        %s6864 = scalar_lea.vmem %s6676, 18 [#allocation6]
        %v6865 = vld [vmem:[%s6864] ss:$2 sm:$0x3]
        %v6868 = vcombine.low %v6863, %v6865
        %v6870 = vunpack.c.l.s4 1983009808
        %v6871 = vunpack.c.0.s8 %v6870
        %v6872 = vlaneseq
        %v6873 = vshrl.u32 %v6872, 7
        %v6874 = vsub.s32 %v6871, %v6873
        %v6875 = vrot.slane %v6868, %v6874
        %v6877 = vpack.c.bf16 %v6875, %v6875
        %s6878 = scalar_lea.vmem %s8, 256
        %v6879 = vld [vmem:[%s6878] sm:$0xf]
        %v6880 = vld [vmem:[%s6878 + $0x4] sm:$0xf]
        %v6881 = vld [vmem:[%s6878 + $0x8] sm:$0xf]
        %v6882 = vld [vmem:[%s6878 + $0xc] sm:$0xf]
        %v6883 = vld [vmem:[%s6878 + $0x10] sm:$0xf]
        %v6884 = vld [vmem:[%s6878 + $0x14] sm:$0xf]
        %v6885 = vld [vmem:[%s6878 + $0x18] sm:$0xf]
        %v6886 = vld [vmem:[%s6878 + $0x1c] sm:$0xf]
        %v6895 = vunpack.c.l.b16 %v6879
        %v6896 = vunpack.c.l.b16 %v6880
        %v6897 = vunpack.c.l.b16 %v6881
        %v6898 = vunpack.c.l.b16 %v6882
        %v6899 = vunpack.c.l.b16 %v6883
        %v6900 = vunpack.c.l.b16 %v6884
        %v6901 = vunpack.c.l.b16 %v6885
        %v6902 = vunpack.c.l.b16 %v6886
        %v6903 = vpack.c.b16 %v6896, %v6895
        %v6904 = vpack.c.b16 %v6898, %v6897
        %v6905 = vpack.c.b16 %v6900, %v6899
        %v6906 = vpack.c.b16 %v6902, %v6901
        %v6912 = vsel %vm5277, %v6877, 0
        %6914 = vmatprep.subr.bf16.mxu0 0
        %6915 = vmatpush1.bf16.msra.mxu0 %v6903
        %6916 = vmatprep.subr.bf16.mxu0 0
        %6917 = vmatpush1.bf16.msra.mxu0 %v6904
        %6918 = vmatprep.subr.bf16.mxu0 0
        %6919 = vmatpush1.bf16.msra.mxu0 %v6905
        %6920 = vmatprep.subr.bf16.mxu0 0
        %6921 = vmatpush1.bf16.msra.mxu0 %v6906
        %6922 = vmatprep.subr.bf16.mxu0 0
        %6923 = vmatpush1.bf16.msra.mxu0 0
        %6924 = vmatprep.subr.bf16.mxu0 0
        %6925 = vmatpush1.bf16.msra.mxu0 0
        %6926 = vmatprep.subr.bf16.mxu0 0
        %6927 = vmatpush1.bf16.msra.mxu0 0
        %6928 = vmatprep.subr.bf16.mxu0 0
        %6929 = vmatpush1.bf16.msra.mxu0 0
        %6930 = vmatprep.subr.bf16.mxu0 0
        %6931 = vmatpush1.bf16.msra.mxu0 0
        %6932 = vmatprep.subr.bf16.mxu0 0
        %6933 = vmatpush1.bf16.msra.mxu0 0
        %6934 = vmatprep.subr.bf16.mxu0 0
        %6935 = vmatpush1.bf16.msra.mxu0 0
        %6936 = vmatprep.subr.bf16.mxu0 0
        %6937 = vmatpush1.bf16.msra.mxu0 0
        %6938 = vmatprep.subr.bf16.mxu0 0
        %6939 = vmatpush1.bf16.msra.mxu0 0
        %6940 = vmatprep.subr.bf16.mxu0 0
        %6941 = vmatpush1.bf16.msra.mxu0 0
        %6942 = vmatprep.subr.bf16.mxu0 0
        %6943 = vmatpush1.bf16.msra.mxu0 0
        %6944 = vmatprep.subr.bf16.mxu0 0
        %6945 = vmatpush1.bf16.msra.mxu0 0
        %6946 = vmatprep.mubr.bf16.mxu0 0
        %6947 = vmatmul.mubr.bf16.gmra.mrb[0].mxu0 %v6912
        %v6948 = vpop.f32.mrb[0].mxu0
        %v6949 = vadd.f32 0.0, %v6948
        %v6950 = vpop.f32.mrb[0].mxu0
        %v6951 = vpop.f32.mrb[0].mxu0
        %v6952 = vpop.f32.mrb[0].mxu0
        %6953 = vdwg.mxu0
        %v6954 = vadd.f32 %v6861, %v6949
        %v6955 = vmax.f32 %v6954, 0.0
        %v6958 = vunpack.c.l.s4 1983009808
        %v6959 = vunpack.c.0.s8 %v6958
        %v6960 = vlaneseq
        %v6961 = vshrl.u32 %v6960, 7
        %v6962 = vsub.s32 %v6959, %v6961
        %v6963 = vrot.slane %v6955, %v6962
        %v6964 = vcombine.high %v6963, %v6963
        %s6967 = scalar_lea.vmem [#allocation7], 4
        %6968 = vst [vmem:[%s6967 + $0x1] sm:$0x3] %v6963
        %6969 = vst [vmem:[%s6967 + $0x5] sm:$0x3] %v6964
        %v6970 = vld [vmem:[#allocation7] sm:$0x3]
        %v6971 = vld [vmem:[#allocation7 + $0x4] sm:$0x3]
        %v6974 = vcombine.low %v6970, %v6971
        %v6976 = vunpack.c.l.s4 1983009808
        %v6977 = vunpack.c.0.s8 %v6976
        %v6978 = vlaneseq
        %v6979 = vshrl.u32 %v6978, 7
        %v6980 = vsub.s32 %v6977, %v6979
        %v6981 = vrot.slane %v6974, %v6980
        %v6983 = vpack.c.bf16 %v6981, %v6981
        %v6984 = vld [vmem:[%s9] sm:$0xf]
        %v6985 = vld [vmem:[%s9 + $0x4] sm:$0xf]
        %v6986 = vld [vmem:[%s9 + $0x8] sm:$0xf]
        %v6987 = vld [vmem:[%s9 + $0xc] sm:$0xf]
        %v6988 = vld [vmem:[%s9 + $0x10] sm:$0xf]
        %v6989 = vld [vmem:[%s9 + $0x14] sm:$0xf]
        %v6990 = vld [vmem:[%s9 + $0x18] sm:$0xf]
        %v6991 = vld [vmem:[%s9 + $0x1c] sm:$0xf]
        %v6992 = vld [vmem:[%s9 + $0x20] sm:$0xf]
        %v6993 = vld [vmem:[%s9 + $0x24] sm:$0xf]
        %v6994 = vld [vmem:[%s9 + $0x28] sm:$0xf]
        %v6995 = vld [vmem:[%s9 + $0x2c] sm:$0xf]
        %v6996 = vld [vmem:[%s9 + $0x30] sm:$0xf]
        %v6997 = vld [vmem:[%s9 + $0x34] sm:$0xf]
        %v6998 = vld [vmem:[%s9 + $0x38] sm:$0xf]
        %v6999 = vld [vmem:[%s9 + $0x3c] sm:$0xf]
        %v7000 = vld [vmem:[#allocation7 + $0x1] sm:$0x3]
        %v7001 = vld [vmem:[#allocation7 + $0x5] sm:$0x3]
        %v7004 = vcombine.low %v7000, %v7001
        %v7006 = vunpack.c.l.s4 1983009808
        %v7007 = vunpack.c.0.s8 %v7006
        %v7008 = vlaneseq
        %v7009 = vshrl.u32 %v7008, 7
        %v7010 = vsub.s32 %v7007, %v7009
        %v7011 = vrot.slane %v7004, %v7010
        %v7013 = vpack.c.bf16 %v7011, %v7011
        %s7014 = scalar_lea.vmem %s9, 64
        %v7015 = vld [vmem:[%s7014] sm:$0xf]
        %v7016 = vld [vmem:[%s7014 + $0x4] sm:$0xf]
        %v7017 = vld [vmem:[%s7014 + $0x8] sm:$0xf]
        %v7018 = vld [vmem:[%s7014 + $0xc] sm:$0xf]
        %v7019 = vld [vmem:[%s7014 + $0x10] sm:$0xf]
        %v7020 = vld [vmem:[%s7014 + $0x14] sm:$0xf]
        %v7021 = vld [vmem:[%s7014 + $0x18] sm:$0xf]
        %v7022 = vld [vmem:[%s7014 + $0x1c] sm:$0xf]
        %v7023 = vld [vmem:[%s7014 + $0x20] sm:$0xf]
        %v7024 = vld [vmem:[%s7014 + $0x24] sm:$0xf]
        %v7025 = vld [vmem:[%s7014 + $0x28] sm:$0xf]
        %v7026 = vld [vmem:[%s7014 + $0x2c] sm:$0xf]
        %v7027 = vld [vmem:[%s7014 + $0x30] sm:$0xf]
        %v7028 = vld [vmem:[%s7014 + $0x34] sm:$0xf]
        %v7029 = vld [vmem:[%s7014 + $0x38] sm:$0xf]
        %v7030 = vld [vmem:[%s7014 + $0x3c] sm:$0xf]
        %v7047 = vunpack.c.l.b16 %v7015
        %v7048 = vunpack.c.l.b16 %v7016
        %v7049 = vunpack.c.l.b16 %v7017
        %v7050 = vunpack.c.l.b16 %v7018
        %v7051 = vunpack.c.l.b16 %v7019
        %v7052 = vunpack.c.l.b16 %v7020
        %v7053 = vunpack.c.l.b16 %v7021
        %v7054 = vunpack.c.l.b16 %v7022
        %v7055 = vunpack.c.l.b16 %v7023
        %v7056 = vunpack.c.l.b16 %v7024
        %v7057 = vunpack.c.l.b16 %v7025
        %v7058 = vunpack.c.l.b16 %v7026
        %v7059 = vunpack.c.l.b16 %v7027
        %v7060 = vunpack.c.l.b16 %v7028
        %v7061 = vunpack.c.l.b16 %v7029
        %v7062 = vunpack.c.l.b16 %v7030
        %v7063 = vpack.c.b16 %v7048, %v7047
        %v7064 = vpack.c.b16 %v7050, %v7049
        %v7065 = vpack.c.b16 %v7052, %v7051
        %v7066 = vpack.c.b16 %v7054, %v7053
        %v7067 = vpack.c.b16 %v7056, %v7055
        %v7068 = vpack.c.b16 %v7058, %v7057
        %v7069 = vpack.c.b16 %v7060, %v7059
        %v7070 = vpack.c.b16 %v7062, %v7061
        %7079 = vmatprep.subr.bf16.mxu0 0
        %7080 = vmatpush1.bf16.msra.mxu0 %v7063
        %7081 = vmatprep.subr.bf16.mxu0 0
        %7082 = vmatpush1.bf16.msra.mxu0 %v7064
        %7083 = vmatprep.subr.bf16.mxu0 0
        %7084 = vmatpush1.bf16.msra.mxu0 %v7065
        %7085 = vmatprep.subr.bf16.mxu0 0
        %7086 = vmatpush1.bf16.msra.mxu0 %v7066
        %7087 = vmatprep.subr.bf16.mxu0 0
        %7088 = vmatpush1.bf16.msra.mxu0 %v7067
        %7089 = vmatprep.subr.bf16.mxu0 0
        %7090 = vmatpush1.bf16.msra.mxu0 %v7068
        %7091 = vmatprep.subr.bf16.mxu0 0
        %7092 = vmatpush1.bf16.msra.mxu0 %v7069
        %7093 = vmatprep.subr.bf16.mxu0 0
        %7094 = vmatpush1.bf16.msra.mxu0 %v7070
        %7095 = vmatprep.subr.bf16.mxu0 0
        %7096 = vmatpush1.bf16.msra.mxu0 0
        %7097 = vmatprep.subr.bf16.mxu0 0
        %7098 = vmatpush1.bf16.msra.mxu0 0
        %7099 = vmatprep.subr.bf16.mxu0 0
        %7100 = vmatpush1.bf16.msra.mxu0 0
        %7101 = vmatprep.subr.bf16.mxu0 0
        %7102 = vmatpush1.bf16.msra.mxu0 0
        %7103 = vmatprep.subr.bf16.mxu0 0
        %7104 = vmatpush1.bf16.msra.mxu0 0
        %7105 = vmatprep.subr.bf16.mxu0 0
        %7106 = vmatpush1.bf16.msra.mxu0 0
        %7107 = vmatprep.subr.bf16.mxu0 0
        %7108 = vmatpush1.bf16.msra.mxu0 0
        %7109 = vmatprep.subr.bf16.mxu0 0
        %7110 = vmatpush1.bf16.msra.mxu0 0
        %7111 = vmatprep.mubr.bf16.mxu0 0
        %7112 = vmatmul.mubr.bf16.gmra.mrb[0].mxu0 %v7013
        %v7113 = vpop.f32.mrb[0].mxu0
        %v7114 = vadd.f32 0.0, %v7113
        %v7115 = vpop.f32.mrb[0].mxu0
        %v7116 = vpop.f32.mrb[0].mxu0
        %v7117 = vpop.f32.mrb[0].mxu0
        %7118 = vdwg.mxu0
        %v7135 = vunpack.c.l.b16 %v6984
        %v7136 = vunpack.c.l.b16 %v6985
        %v7137 = vunpack.c.l.b16 %v6986
        %v7138 = vunpack.c.l.b16 %v6987
        %v7139 = vunpack.c.l.b16 %v6988
        %v7140 = vunpack.c.l.b16 %v6989
        %v7141 = vunpack.c.l.b16 %v6990
        %v7142 = vunpack.c.l.b16 %v6991
        %v7143 = vunpack.c.l.b16 %v6992
        %v7144 = vunpack.c.l.b16 %v6993
        %v7145 = vunpack.c.l.b16 %v6994
        %v7146 = vunpack.c.l.b16 %v6995
        %v7147 = vunpack.c.l.b16 %v6996
        %v7148 = vunpack.c.l.b16 %v6997
        %v7149 = vunpack.c.l.b16 %v6998
        %v7150 = vunpack.c.l.b16 %v6999
        %v7151 = vpack.c.b16 %v7136, %v7135
        %v7152 = vpack.c.b16 %v7138, %v7137
        %v7153 = vpack.c.b16 %v7140, %v7139
        %v7154 = vpack.c.b16 %v7142, %v7141
        %v7155 = vpack.c.b16 %v7144, %v7143
        %v7156 = vpack.c.b16 %v7146, %v7145
        %v7157 = vpack.c.b16 %v7148, %v7147
        %v7158 = vpack.c.b16 %v7150, %v7149
        %7167 = vmatprep.subr.bf16.mxu0 0
        %7168 = vmatpush1.bf16.msra.mxu0 %v7151
        %7169 = vmatprep.subr.bf16.mxu0 0
        %7170 = vmatpush1.bf16.msra.mxu0 %v7152
        %7171 = vmatprep.subr.bf16.mxu0 0
        %7172 = vmatpush1.bf16.msra.mxu0 %v7153
        %7173 = vmatprep.subr.bf16.mxu0 0
        %7174 = vmatpush1.bf16.msra.mxu0 %v7154
        %7175 = vmatprep.subr.bf16.mxu0 0
        %7176 = vmatpush1.bf16.msra.mxu0 %v7155
        %7177 = vmatprep.subr.bf16.mxu0 0
        %7178 = vmatpush1.bf16.msra.mxu0 %v7156
        %7179 = vmatprep.subr.bf16.mxu0 0
        %7180 = vmatpush1.bf16.msra.mxu0 %v7157
        %7181 = vmatprep.subr.bf16.mxu0 0
        %7182 = vmatpush1.bf16.msra.mxu0 %v7158
        %7183 = vmatprep.subr.bf16.mxu0 0
        %7184 = vmatpush1.bf16.msra.mxu0 0
        %7185 = vmatprep.subr.bf16.mxu0 0
        %7186 = vmatpush1.bf16.msra.mxu0 0
        %7187 = vmatprep.subr.bf16.mxu0 0
        %7188 = vmatpush1.bf16.msra.mxu0 0
        %7189 = vmatprep.subr.bf16.mxu0 0
        %7190 = vmatpush1.bf16.msra.mxu0 0
        %7191 = vmatprep.subr.bf16.mxu0 0
        %7192 = vmatpush1.bf16.msra.mxu0 0
        %7193 = vmatprep.subr.bf16.mxu0 0
        %7194 = vmatpush1.bf16.msra.mxu0 0
        %7195 = vmatprep.subr.bf16.mxu0 0
        %7196 = vmatpush1.bf16.msra.mxu0 0
        %7197 = vmatprep.subr.bf16.mxu0 0
        %7198 = vmatpush1.bf16.msra.mxu0 0
        %7199 = vmatprep.mubr.bf16.mxu0 0
        %7200 = vmatmul.mubr.bf16.gmra.mrb[0].mxu0 %v6983
        %v7201 = vpop.f32.mrb[0].mxu0
        %v7202 = vadd.f32 %v7114, %v7201
        %v7203 = vpop.f32.mrb[0].mxu0
        %v7204 = vpop.f32.mrb[0].mxu0
        %v7205 = vpop.f32.mrb[0].mxu0
        %7206 = vdwg.mxu0
        %v7207 = vld [vmem:[#allocation7 + $0x2] sm:$0x3]
        %v7208 = vld [vmem:[#allocation7 + $0x6] sm:$0x3]
        %v7211 = vcombine.low %v7207, %v7208
        %v7213 = vunpack.c.l.s4 1983009808
        %v7214 = vunpack.c.0.s8 %v7213
        %v7215 = vlaneseq
        %v7216 = vshrl.u32 %v7215, 7
        %v7217 = vsub.s32 %v7214, %v7216
        %v7218 = vrot.slane %v7211, %v7217
        %v7220 = vpack.c.bf16 %v7218, %v7218
        %s7221 = scalar_lea.vmem %s9, 128
        %v7222 = vld [vmem:[%s7221] sm:$0xf]
        %v7223 = vld [vmem:[%s7221 + $0x4] sm:$0xf]
        %v7224 = vld [vmem:[%s7221 + $0x8] sm:$0xf]
        %v7225 = vld [vmem:[%s7221 + $0xc] sm:$0xf]
        %v7226 = vld [vmem:[%s7221 + $0x10] sm:$0xf]
        %v7227 = vld [vmem:[%s7221 + $0x14] sm:$0xf]
        %v7228 = vld [vmem:[%s7221 + $0x18] sm:$0xf]
        %v7229 = vld [vmem:[%s7221 + $0x1c] sm:$0xf]
        %v7230 = vld [vmem:[%s7221 + $0x20] sm:$0xf]
        %v7231 = vld [vmem:[%s7221 + $0x24] sm:$0xf]
        %v7232 = vld [vmem:[%s7221 + $0x28] sm:$0xf]
        %v7233 = vld [vmem:[%s7221 + $0x2c] sm:$0xf]
        %v7234 = vld [vmem:[%s7221 + $0x30] sm:$0xf]
        %v7235 = vld [vmem:[%s7221 + $0x34] sm:$0xf]
        %v7236 = vld [vmem:[%s7221 + $0x38] sm:$0xf]
        %v7237 = vld [vmem:[%s7221 + $0x3c] sm:$0xf]
        %v7254 = vunpack.c.l.b16 %v7222
        %v7255 = vunpack.c.l.b16 %v7223
        %v7256 = vunpack.c.l.b16 %v7224
        %v7257 = vunpack.c.l.b16 %v7225
        %v7258 = vunpack.c.l.b16 %v7226
        %v7259 = vunpack.c.l.b16 %v7227
        %v7260 = vunpack.c.l.b16 %v7228
        %v7261 = vunpack.c.l.b16 %v7229
        %v7262 = vunpack.c.l.b16 %v7230
        %v7263 = vunpack.c.l.b16 %v7231
        %v7264 = vunpack.c.l.b16 %v7232
        %v7265 = vunpack.c.l.b16 %v7233
        %v7266 = vunpack.c.l.b16 %v7234
        %v7267 = vunpack.c.l.b16 %v7235
        %v7268 = vunpack.c.l.b16 %v7236
        %v7269 = vunpack.c.l.b16 %v7237
        %v7270 = vpack.c.b16 %v7255, %v7254
        %v7271 = vpack.c.b16 %v7257, %v7256
        %v7272 = vpack.c.b16 %v7259, %v7258
        %v7273 = vpack.c.b16 %v7261, %v7260
        %v7274 = vpack.c.b16 %v7263, %v7262
        %v7275 = vpack.c.b16 %v7265, %v7264
        %v7276 = vpack.c.b16 %v7267, %v7266
        %v7277 = vpack.c.b16 %v7269, %v7268
        %7286 = vmatprep.subr.bf16.mxu0 0
        %7287 = vmatpush1.bf16.msra.mxu0 %v7270
        %7288 = vmatprep.subr.bf16.mxu0 0
        %7289 = vmatpush1.bf16.msra.mxu0 %v7271
        %7290 = vmatprep.subr.bf16.mxu0 0
        %7291 = vmatpush1.bf16.msra.mxu0 %v7272
        %7292 = vmatprep.subr.bf16.mxu0 0
        %7293 = vmatpush1.bf16.msra.mxu0 %v7273
        %7294 = vmatprep.subr.bf16.mxu0 0
        %7295 = vmatpush1.bf16.msra.mxu0 %v7274
        %7296 = vmatprep.subr.bf16.mxu0 0
        %7297 = vmatpush1.bf16.msra.mxu0 %v7275
        %7298 = vmatprep.subr.bf16.mxu0 0
        %7299 = vmatpush1.bf16.msra.mxu0 %v7276
        %7300 = vmatprep.subr.bf16.mxu0 0
        %7301 = vmatpush1.bf16.msra.mxu0 %v7277
        %7302 = vmatprep.subr.bf16.mxu0 0
        %7303 = vmatpush1.bf16.msra.mxu0 0
        %7304 = vmatprep.subr.bf16.mxu0 0
        %7305 = vmatpush1.bf16.msra.mxu0 0
        %7306 = vmatprep.subr.bf16.mxu0 0
        %7307 = vmatpush1.bf16.msra.mxu0 0
        %7308 = vmatprep.subr.bf16.mxu0 0
        %7309 = vmatpush1.bf16.msra.mxu0 0
        %7310 = vmatprep.subr.bf16.mxu0 0
        %7311 = vmatpush1.bf16.msra.mxu0 0
        %7312 = vmatprep.subr.bf16.mxu0 0
        %7313 = vmatpush1.bf16.msra.mxu0 0
        %7314 = vmatprep.subr.bf16.mxu0 0
        %7315 = vmatpush1.bf16.msra.mxu0 0
        %7316 = vmatprep.subr.bf16.mxu0 0
        %7317 = vmatpush1.bf16.msra.mxu0 0
        %7318 = vmatprep.mubr.bf16.mxu0 0
        %7319 = vmatmul.mubr.bf16.gmra.mrb[0].mxu0 %v7220
        %v7320 = vpop.f32.mrb[0].mxu0
        %v7321 = vadd.f32 0.0, %v7320
        %v7322 = vpop.f32.mrb[0].mxu0
        %v7323 = vpop.f32.mrb[0].mxu0
        %v7324 = vpop.f32.mrb[0].mxu0
        %7325 = vdwg.mxu0
        %v7326 = vadd.f32 %v7202, %v7321
        %v7327 = vld [vmem:[%s6967] sm:$0x3]
        %v7328 = vld [vmem:[%s6967 + $0x4] sm:$0x3]
        %v7331 = vcombine.low %v7327, %v7328
        %v7333 = vunpack.c.l.s4 1983009808
        %v7334 = vunpack.c.0.s8 %v7333
        %v7335 = vlaneseq
        %v7336 = vshrl.u32 %v7335, 7
        %v7337 = vsub.s32 %v7334, %v7336
        %v7338 = vrot.slane %v7331, %v7337
        %v7340 = vpack.c.bf16 %v7338, %v7338
        %s7341 = scalar_lea.vmem %s9, 192
        %v7342 = vld [vmem:[%s7341] sm:$0xf]
        %v7343 = vld [vmem:[%s7341 + $0x4] sm:$0xf]
        %v7344 = vld [vmem:[%s7341 + $0x8] sm:$0xf]
        %v7345 = vld [vmem:[%s7341 + $0xc] sm:$0xf]
        %v7346 = vld [vmem:[%s7341 + $0x10] sm:$0xf]
        %v7347 = vld [vmem:[%s7341 + $0x14] sm:$0xf]
        %v7348 = vld [vmem:[%s7341 + $0x18] sm:$0xf]
        %v7349 = vld [vmem:[%s7341 + $0x1c] sm:$0xf]
        %v7350 = vld [vmem:[%s7341 + $0x20] sm:$0xf]
        %v7351 = vld [vmem:[%s7341 + $0x24] sm:$0xf]
        %v7352 = vld [vmem:[%s7341 + $0x28] sm:$0xf]
        %v7353 = vld [vmem:[%s7341 + $0x2c] sm:$0xf]
        %v7354 = vld [vmem:[%s7341 + $0x30] sm:$0xf]
        %v7355 = vld [vmem:[%s7341 + $0x34] sm:$0xf]
        %v7356 = vld [vmem:[%s7341 + $0x38] sm:$0xf]
        %v7357 = vld [vmem:[%s7341 + $0x3c] sm:$0xf]
        %v7374 = vunpack.c.l.b16 %v7342
        %v7375 = vunpack.c.l.b16 %v7343
        %v7376 = vunpack.c.l.b16 %v7344
        %v7377 = vunpack.c.l.b16 %v7345
        %v7378 = vunpack.c.l.b16 %v7346
        %v7379 = vunpack.c.l.b16 %v7347
        %v7380 = vunpack.c.l.b16 %v7348
        %v7381 = vunpack.c.l.b16 %v7349
        %v7382 = vunpack.c.l.b16 %v7350
        %v7383 = vunpack.c.l.b16 %v7351
        %v7384 = vunpack.c.l.b16 %v7352
        %v7385 = vunpack.c.l.b16 %v7353
        %v7386 = vunpack.c.l.b16 %v7354
        %v7387 = vunpack.c.l.b16 %v7355
        %v7388 = vunpack.c.l.b16 %v7356
        %v7389 = vunpack.c.l.b16 %v7357
        %v7390 = vpack.c.b16 %v7375, %v7374
        %v7391 = vpack.c.b16 %v7377, %v7376
        %v7392 = vpack.c.b16 %v7379, %v7378
        %v7393 = vpack.c.b16 %v7381, %v7380
        %v7394 = vpack.c.b16 %v7383, %v7382
        %v7395 = vpack.c.b16 %v7385, %v7384
        %v7396 = vpack.c.b16 %v7387, %v7386
        %v7397 = vpack.c.b16 %v7389, %v7388
        %7406 = vmatprep.subr.bf16.mxu0 0
        %7407 = vmatpush1.bf16.msra.mxu0 %v7390
        %7408 = vmatprep.subr.bf16.mxu0 0
        %7409 = vmatpush1.bf16.msra.mxu0 %v7391
        %7410 = vmatprep.subr.bf16.mxu0 0
        %7411 = vmatpush1.bf16.msra.mxu0 %v7392
        %7412 = vmatprep.subr.bf16.mxu0 0
        %7413 = vmatpush1.bf16.msra.mxu0 %v7393
        %7414 = vmatprep.subr.bf16.mxu0 0
        %7415 = vmatpush1.bf16.msra.mxu0 %v7394
        %7416 = vmatprep.subr.bf16.mxu0 0
        %7417 = vmatpush1.bf16.msra.mxu0 %v7395
        %7418 = vmatprep.subr.bf16.mxu0 0
        %7419 = vmatpush1.bf16.msra.mxu0 %v7396
        %7420 = vmatprep.subr.bf16.mxu0 0
        %7421 = vmatpush1.bf16.msra.mxu0 %v7397
        %7422 = vmatprep.subr.bf16.mxu0 0
        %7423 = vmatpush1.bf16.msra.mxu0 0
        %7424 = vmatprep.subr.bf16.mxu0 0
        %7425 = vmatpush1.bf16.msra.mxu0 0
        %7426 = vmatprep.subr.bf16.mxu0 0
        %7427 = vmatpush1.bf16.msra.mxu0 0
        %7428 = vmatprep.subr.bf16.mxu0 0
        %7429 = vmatpush1.bf16.msra.mxu0 0
        %7430 = vmatprep.subr.bf16.mxu0 0
        %7431 = vmatpush1.bf16.msra.mxu0 0
        %7432 = vmatprep.subr.bf16.mxu0 0
        %7433 = vmatpush1.bf16.msra.mxu0 0
        %7434 = vmatprep.subr.bf16.mxu0 0
        %7435 = vmatpush1.bf16.msra.mxu0 0
        %7436 = vmatprep.subr.bf16.mxu0 0
        %7437 = vmatpush1.bf16.msra.mxu0 0
        %7438 = vmatprep.mubr.bf16.mxu0 0
        %7439 = vmatmul.mubr.bf16.gmra.mrb[0].mxu0 %v7340
        %v7440 = vpop.f32.mrb[0].mxu0
        %v7441 = vadd.f32 0.0, %v7440
        %v7442 = vpop.f32.mrb[0].mxu0
        %v7443 = vpop.f32.mrb[0].mxu0
        %v7444 = vpop.f32.mrb[0].mxu0
        %7445 = vdwg.mxu0
        %v7446 = vadd.f32 %v7326, %v7441
        %v7447 = vld [vmem:[%s6967 + $0x1] sm:$0x3]
        %v7448 = vld [vmem:[%s6967 + $0x5] sm:$0x3]
        %v7451 = vcombine.low %v7447, %v7448
        %v7453 = vunpack.c.l.s4 1983009808
        %v7454 = vunpack.c.0.s8 %v7453
        %v7455 = vlaneseq
        %v7456 = vshrl.u32 %v7455, 7
        %v7457 = vsub.s32 %v7454, %v7456
        %v7458 = vrot.slane %v7451, %v7457
        %v7460 = vpack.c.bf16 %v7458, %v7458
        %s7461 = scalar_lea.vmem %s9, 256
        %v7462 = vld [vmem:[%s7461] sm:$0xf]
        %v7463 = vld [vmem:[%s7461 + $0x4] sm:$0xf]
        %v7464 = vld [vmem:[%s7461 + $0x8] sm:$0xf]
        %v7465 = vld [vmem:[%s7461 + $0xc] sm:$0xf]
        %v7466 = vld [vmem:[%s7461 + $0x10] sm:$0xf]
        %v7467 = vld [vmem:[%s7461 + $0x14] sm:$0xf]
        %v7468 = vld [vmem:[%s7461 + $0x18] sm:$0xf]
        %v7469 = vld [vmem:[%s7461 + $0x1c] sm:$0xf]
        %v7470 = vld [vmem:[%s7461 + $0x20] sm:$0xf]
        %v7471 = vld [vmem:[%s7461 + $0x24] sm:$0xf]
        %v7472 = vld [vmem:[%s7461 + $0x28] sm:$0xf]
        %v7473 = vld [vmem:[%s7461 + $0x2c] sm:$0xf]
        %v7474 = vld [vmem:[%s7461 + $0x30] sm:$0xf]
        %v7475 = vld [vmem:[%s7461 + $0x34] sm:$0xf]
        %v7476 = vld [vmem:[%s7461 + $0x38] sm:$0xf]
        %v7477 = vld [vmem:[%s7461 + $0x3c] sm:$0xf]
        %v7494 = vunpack.c.l.b16 %v7462
        %v7495 = vunpack.c.l.b16 %v7463
        %v7496 = vunpack.c.l.b16 %v7464
        %v7497 = vunpack.c.l.b16 %v7465
        %v7498 = vunpack.c.l.b16 %v7466
        %v7499 = vunpack.c.l.b16 %v7467
        %v7500 = vunpack.c.l.b16 %v7468
        %v7501 = vunpack.c.l.b16 %v7469
        %v7502 = vunpack.c.l.b16 %v7470
        %v7503 = vunpack.c.l.b16 %v7471
        %v7504 = vunpack.c.l.b16 %v7472
        %v7505 = vunpack.c.l.b16 %v7473
        %v7506 = vunpack.c.l.b16 %v7474
        %v7507 = vunpack.c.l.b16 %v7475
        %v7508 = vunpack.c.l.b16 %v7476
        %v7509 = vunpack.c.l.b16 %v7477
        %v7510 = vpack.c.b16 %v7495, %v7494
        %v7511 = vpack.c.b16 %v7497, %v7496
        %v7512 = vpack.c.b16 %v7499, %v7498
        %v7513 = vpack.c.b16 %v7501, %v7500
        %v7514 = vpack.c.b16 %v7503, %v7502
        %v7515 = vpack.c.b16 %v7505, %v7504
        %v7516 = vpack.c.b16 %v7507, %v7506
        %v7517 = vpack.c.b16 %v7509, %v7508
        %7526 = vmatprep.subr.bf16.mxu0 0
        %7527 = vmatpush1.bf16.msra.mxu0 %v7510
        %7528 = vmatprep.subr.bf16.mxu0 0
        %7529 = vmatpush1.bf16.msra.mxu0 %v7511
        %7530 = vmatprep.subr.bf16.mxu0 0
        %7531 = vmatpush1.bf16.msra.mxu0 %v7512
        %7532 = vmatprep.subr.bf16.mxu0 0
        %7533 = vmatpush1.bf16.msra.mxu0 %v7513
        %7534 = vmatprep.subr.bf16.mxu0 0
        %7535 = vmatpush1.bf16.msra.mxu0 %v7514
        %7536 = vmatprep.subr.bf16.mxu0 0
        %7537 = vmatpush1.bf16.msra.mxu0 %v7515
        %7538 = vmatprep.subr.bf16.mxu0 0
        %7539 = vmatpush1.bf16.msra.mxu0 %v7516
        %7540 = vmatprep.subr.bf16.mxu0 0
        %7541 = vmatpush1.bf16.msra.mxu0 %v7517
        %7542 = vmatprep.subr.bf16.mxu0 0
        %7543 = vmatpush1.bf16.msra.mxu0 0
        %7544 = vmatprep.subr.bf16.mxu0 0
        %7545 = vmatpush1.bf16.msra.mxu0 0
        %7546 = vmatprep.subr.bf16.mxu0 0
        %7547 = vmatpush1.bf16.msra.mxu0 0
        %7548 = vmatprep.subr.bf16.mxu0 0
        %7549 = vmatpush1.bf16.msra.mxu0 0
        %7550 = vmatprep.subr.bf16.mxu0 0
        %7551 = vmatpush1.bf16.msra.mxu0 0
        %7552 = vmatprep.subr.bf16.mxu0 0
        %7553 = vmatpush1.bf16.msra.mxu0 0
        %7554 = vmatprep.subr.bf16.mxu0 0
        %7555 = vmatpush1.bf16.msra.mxu0 0
        %7556 = vmatprep.subr.bf16.mxu0 0
        %7557 = vmatpush1.bf16.msra.mxu0 0
        %7558 = vmatprep.mubr.bf16.mxu0 0
        %7559 = vmatmul.mubr.bf16.gmra.mrb[0].mxu0 %v7460
        %v7560 = vpop.f32.mrb[0].mxu0
        %v7561 = vadd.f32 0.0, %v7560
        %v7562 = vpop.f32.mrb[0].mxu0
        %v7563 = vpop.f32.mrb[0].mxu0
        %v7564 = vpop.f32.mrb[0].mxu0
        %7565 = vdwg.mxu0
        %v7566 = vadd.f32 %v7446, %v7561
        %v7567 = vld [vmem:[%s6967 + $0x2] sm:$0x3]
        %v7568 = vld [vmem:[%s6967 + $0x6] sm:$0x3]
        %v7571 = vcombine.low %v7567, %v7568
        %v7573 = vunpack.c.l.s4 1983009808
        %v7574 = vunpack.c.0.s8 %v7573
        %v7575 = vlaneseq
        %v7576 = vshrl.u32 %v7575, 7
        %v7577 = vsub.s32 %v7574, %v7576
        %v7578 = vrot.slane %v7571, %v7577
        %v7580 = vpack.c.bf16 %v7578, %v7578
        %s7581 = scalar_lea.vmem %s9, 320
        %v7582 = vld [vmem:[%s7581] sm:$0xf]
        %v7583 = vld [vmem:[%s7581 + $0x4] sm:$0xf]
        %v7584 = vld [vmem:[%s7581 + $0x8] sm:$0xf]
        %v7585 = vld [vmem:[%s7581 + $0xc] sm:$0xf]
        %v7586 = vld [vmem:[%s7581 + $0x10] sm:$0xf]
        %v7587 = vld [vmem:[%s7581 + $0x14] sm:$0xf]
        %v7588 = vld [vmem:[%s7581 + $0x18] sm:$0xf]
        %v7589 = vld [vmem:[%s7581 + $0x1c] sm:$0xf]
        %v7590 = vld [vmem:[%s7581 + $0x20] sm:$0xf]
        %v7591 = vld [vmem:[%s7581 + $0x24] sm:$0xf]
        %v7592 = vld [vmem:[%s7581 + $0x28] sm:$0xf]
        %v7593 = vld [vmem:[%s7581 + $0x2c] sm:$0xf]
        %v7594 = vld [vmem:[%s7581 + $0x30] sm:$0xf]
        %v7595 = vld [vmem:[%s7581 + $0x34] sm:$0xf]
        %v7596 = vld [vmem:[%s7581 + $0x38] sm:$0xf]
        %v7597 = vld [vmem:[%s7581 + $0x3c] sm:$0xf]
        %v7614 = vunpack.c.l.b16 %v7582
        %v7615 = vunpack.c.l.b16 %v7583
        %v7616 = vunpack.c.l.b16 %v7584
        %v7617 = vunpack.c.l.b16 %v7585
        %v7618 = vunpack.c.l.b16 %v7586
        %v7619 = vunpack.c.l.b16 %v7587
        %v7620 = vunpack.c.l.b16 %v7588
        %v7621 = vunpack.c.l.b16 %v7589
        %v7622 = vunpack.c.l.b16 %v7590
        %v7623 = vunpack.c.l.b16 %v7591
        %v7624 = vunpack.c.l.b16 %v7592
        %v7625 = vunpack.c.l.b16 %v7593
        %v7626 = vunpack.c.l.b16 %v7594
        %v7627 = vunpack.c.l.b16 %v7595
        %v7628 = vunpack.c.l.b16 %v7596
        %v7629 = vunpack.c.l.b16 %v7597
        %v7630 = vpack.c.b16 %v7615, %v7614
        %v7631 = vpack.c.b16 %v7617, %v7616
        %v7632 = vpack.c.b16 %v7619, %v7618
        %v7633 = vpack.c.b16 %v7621, %v7620
        %v7634 = vpack.c.b16 %v7623, %v7622
        %v7635 = vpack.c.b16 %v7625, %v7624
        %v7636 = vpack.c.b16 %v7627, %v7626
        %v7637 = vpack.c.b16 %v7629, %v7628
        %7646 = vmatprep.subr.bf16.mxu0 0
        %7647 = vmatpush1.bf16.msra.mxu0 %v7630
        %7648 = vmatprep.subr.bf16.mxu0 0
        %7649 = vmatpush1.bf16.msra.mxu0 %v7631
        %7650 = vmatprep.subr.bf16.mxu0 0
        %7651 = vmatpush1.bf16.msra.mxu0 %v7632
        %7652 = vmatprep.subr.bf16.mxu0 0
        %7653 = vmatpush1.bf16.msra.mxu0 %v7633
        %7654 = vmatprep.subr.bf16.mxu0 0
        %7655 = vmatpush1.bf16.msra.mxu0 %v7634
        %7656 = vmatprep.subr.bf16.mxu0 0
        %7657 = vmatpush1.bf16.msra.mxu0 %v7635
        %7658 = vmatprep.subr.bf16.mxu0 0
        %7659 = vmatpush1.bf16.msra.mxu0 %v7636
        %7660 = vmatprep.subr.bf16.mxu0 0
        %7661 = vmatpush1.bf16.msra.mxu0 %v7637
        %7662 = vmatprep.subr.bf16.mxu0 0
        %7663 = vmatpush1.bf16.msra.mxu0 0
        %7664 = vmatprep.subr.bf16.mxu0 0
        %7665 = vmatpush1.bf16.msra.mxu0 0
        %7666 = vmatprep.subr.bf16.mxu0 0
        %7667 = vmatpush1.bf16.msra.mxu0 0
        %7668 = vmatprep.subr.bf16.mxu0 0
        %7669 = vmatpush1.bf16.msra.mxu0 0
        %7670 = vmatprep.subr.bf16.mxu0 0
        %7671 = vmatpush1.bf16.msra.mxu0 0
        %7672 = vmatprep.subr.bf16.mxu0 0
        %7673 = vmatpush1.bf16.msra.mxu0 0
        %7674 = vmatprep.subr.bf16.mxu0 0
        %7675 = vmatpush1.bf16.msra.mxu0 0
        %7676 = vmatprep.subr.bf16.mxu0 0
        %7677 = vmatpush1.bf16.msra.mxu0 0
        %7678 = vmatprep.mubr.bf16.mxu0 0
        %7679 = vmatmul.mubr.bf16.gmra.mrb[0].mxu0 %v7580
        %v7680 = vpop.f32.mrb[0].mxu0
        %v7681 = vadd.f32 0.0, %v7680
        %v7682 = vpop.f32.mrb[0].mxu0
        %v7683 = vpop.f32.mrb[0].mxu0
        %v7684 = vpop.f32.mrb[0].mxu0
        %7685 = vdwg.mxu0
        %v7686 = vadd.f32 %v7566, %v7681
        %s7687 = scalar_lea.vmem [#allocation7], 8
        %v7688 = vld [vmem:[%s7687] sm:$0x3]
        %v7689 = vld [vmem:[%s7687 + $0x4] sm:$0x3]
        %v7692 = vcombine.low %v7688, %v7689
        %v7694 = vunpack.c.l.s4 1983009808
        %v7695 = vunpack.c.0.s8 %v7694
        %v7696 = vlaneseq
        %v7697 = vshrl.u32 %v7696, 7
        %v7698 = vsub.s32 %v7695, %v7697
        %v7699 = vrot.slane %v7692, %v7698
        %v7701 = vpack.c.bf16 %v7699, %v7699
        %s7702 = scalar_lea.vmem %s9, 384
        %v7703 = vld [vmem:[%s7702] sm:$0xf]
        %v7704 = vld [vmem:[%s7702 + $0x4] sm:$0xf]
        %v7705 = vld [vmem:[%s7702 + $0x8] sm:$0xf]
        %v7706 = vld [vmem:[%s7702 + $0xc] sm:$0xf]
        %v7707 = vld [vmem:[%s7702 + $0x10] sm:$0xf]
        %v7708 = vld [vmem:[%s7702 + $0x14] sm:$0xf]
        %v7709 = vld [vmem:[%s7702 + $0x18] sm:$0xf]
        %v7710 = vld [vmem:[%s7702 + $0x1c] sm:$0xf]
        %v7711 = vld [vmem:[%s7702 + $0x20] sm:$0xf]
        %v7712 = vld [vmem:[%s7702 + $0x24] sm:$0xf]
        %v7713 = vld [vmem:[%s7702 + $0x28] sm:$0xf]
        %v7714 = vld [vmem:[%s7702 + $0x2c] sm:$0xf]
        %v7715 = vld [vmem:[%s7702 + $0x30] sm:$0xf]
        %v7716 = vld [vmem:[%s7702 + $0x34] sm:$0xf]
        %v7717 = vld [vmem:[%s7702 + $0x38] sm:$0xf]
        %v7718 = vld [vmem:[%s7702 + $0x3c] sm:$0xf]
        %v7735 = vunpack.c.l.b16 %v7703
        %v7736 = vunpack.c.l.b16 %v7704
        %v7737 = vunpack.c.l.b16 %v7705
        %v7738 = vunpack.c.l.b16 %v7706
        %v7739 = vunpack.c.l.b16 %v7707
        %v7740 = vunpack.c.l.b16 %v7708
        %v7741 = vunpack.c.l.b16 %v7709
        %v7742 = vunpack.c.l.b16 %v7710
        %v7743 = vunpack.c.l.b16 %v7711
        %v7744 = vunpack.c.l.b16 %v7712
        %v7745 = vunpack.c.l.b16 %v7713
        %v7746 = vunpack.c.l.b16 %v7714
        %v7747 = vunpack.c.l.b16 %v7715
        %v7748 = vunpack.c.l.b16 %v7716
        %v7749 = vunpack.c.l.b16 %v7717
        %v7750 = vunpack.c.l.b16 %v7718
        %v7751 = vpack.c.b16 %v7736, %v7735
        %v7752 = vpack.c.b16 %v7738, %v7737
        %v7753 = vpack.c.b16 %v7740, %v7739
        %v7754 = vpack.c.b16 %v7742, %v7741
        %v7755 = vpack.c.b16 %v7744, %v7743
        %v7756 = vpack.c.b16 %v7746, %v7745
        %v7757 = vpack.c.b16 %v7748, %v7747
        %v7758 = vpack.c.b16 %v7750, %v7749
        %7767 = vmatprep.subr.bf16.mxu0 0
        %7768 = vmatpush1.bf16.msra.mxu0 %v7751
        %7769 = vmatprep.subr.bf16.mxu0 0
        %7770 = vmatpush1.bf16.msra.mxu0 %v7752
        %7771 = vmatprep.subr.bf16.mxu0 0
        %7772 = vmatpush1.bf16.msra.mxu0 %v7753
        %7773 = vmatprep.subr.bf16.mxu0 0
        %7774 = vmatpush1.bf16.msra.mxu0 %v7754
        %7775 = vmatprep.subr.bf16.mxu0 0
        %7776 = vmatpush1.bf16.msra.mxu0 %v7755
        %7777 = vmatprep.subr.bf16.mxu0 0
        %7778 = vmatpush1.bf16.msra.mxu0 %v7756
        %7779 = vmatprep.subr.bf16.mxu0 0
        %7780 = vmatpush1.bf16.msra.mxu0 %v7757
        %7781 = vmatprep.subr.bf16.mxu0 0
        %7782 = vmatpush1.bf16.msra.mxu0 %v7758
        %7783 = vmatprep.subr.bf16.mxu0 0
        %7784 = vmatpush1.bf16.msra.mxu0 0
        %7785 = vmatprep.subr.bf16.mxu0 0
        %7786 = vmatpush1.bf16.msra.mxu0 0
        %7787 = vmatprep.subr.bf16.mxu0 0
        %7788 = vmatpush1.bf16.msra.mxu0 0
        %7789 = vmatprep.subr.bf16.mxu0 0
        %7790 = vmatpush1.bf16.msra.mxu0 0
        %7791 = vmatprep.subr.bf16.mxu0 0
        %7792 = vmatpush1.bf16.msra.mxu0 0
        %7793 = vmatprep.subr.bf16.mxu0 0
        %7794 = vmatpush1.bf16.msra.mxu0 0
        %7795 = vmatprep.subr.bf16.mxu0 0
        %7796 = vmatpush1.bf16.msra.mxu0 0
        %7797 = vmatprep.subr.bf16.mxu0 0
        %7798 = vmatpush1.bf16.msra.mxu0 0
        %7799 = vmatprep.mubr.bf16.mxu0 0
        %7800 = vmatmul.mubr.bf16.gmra.mrb[0].mxu0 %v7701
        %v7801 = vpop.f32.mrb[0].mxu0
        %v7802 = vadd.f32 0.0, %v7801
        %v7803 = vpop.f32.mrb[0].mxu0
        %v7804 = vpop.f32.mrb[0].mxu0
        %v7805 = vpop.f32.mrb[0].mxu0
        %7806 = vdwg.mxu0
        %v7807 = vadd.f32 %v7686, %v7802
        %v7808 = vld [vmem:[%s7687 + $0x1] sm:$0x3]
        %v7809 = vld [vmem:[%s7687 + $0x5] sm:$0x3]
        %v7812 = vcombine.low %v7808, %v7809
        %v7814 = vunpack.c.l.s4 1983009808
        %v7815 = vunpack.c.0.s8 %v7814
        %v7816 = vlaneseq
        %v7817 = vshrl.u32 %v7816, 7
        %v7818 = vsub.s32 %v7815, %v7817
        %v7819 = vrot.slane %v7812, %v7818
        %v7821 = vpack.c.bf16 %v7819, %v7819
        %s7822 = scalar_lea.vmem %s9, 448
        %v7823 = vld [vmem:[%s7822] sm:$0xf]
        %v7824 = vld [vmem:[%s7822 + $0x4] sm:$0xf]
        %v7825 = vld [vmem:[%s7822 + $0x8] sm:$0xf]
        %v7826 = vld [vmem:[%s7822 + $0xc] sm:$0xf]
        %v7827 = vld [vmem:[%s7822 + $0x10] sm:$0xf]
        %v7828 = vld [vmem:[%s7822 + $0x14] sm:$0xf]
        %v7829 = vld [vmem:[%s7822 + $0x18] sm:$0xf]
        %v7830 = vld [vmem:[%s7822 + $0x1c] sm:$0xf]
        %v7831 = vld [vmem:[%s7822 + $0x20] sm:$0xf]
        %v7832 = vld [vmem:[%s7822 + $0x24] sm:$0xf]
        %v7833 = vld [vmem:[%s7822 + $0x28] sm:$0xf]
        %v7834 = vld [vmem:[%s7822 + $0x2c] sm:$0xf]
        %v7835 = vld [vmem:[%s7822 + $0x30] sm:$0xf]
        %v7836 = vld [vmem:[%s7822 + $0x34] sm:$0xf]
        %v7837 = vld [vmem:[%s7822 + $0x38] sm:$0xf]
        %v7838 = vld [vmem:[%s7822 + $0x3c] sm:$0xf]
        %v7855 = vunpack.c.l.b16 %v7823
        %v7856 = vunpack.c.l.b16 %v7824
        %v7857 = vunpack.c.l.b16 %v7825
        %v7858 = vunpack.c.l.b16 %v7826
        %v7859 = vunpack.c.l.b16 %v7827
        %v7860 = vunpack.c.l.b16 %v7828
        %v7861 = vunpack.c.l.b16 %v7829
        %v7862 = vunpack.c.l.b16 %v7830
        %v7863 = vunpack.c.l.b16 %v7831
        %v7864 = vunpack.c.l.b16 %v7832
        %v7865 = vunpack.c.l.b16 %v7833
        %v7866 = vunpack.c.l.b16 %v7834
        %v7867 = vunpack.c.l.b16 %v7835
        %v7868 = vunpack.c.l.b16 %v7836
        %v7869 = vunpack.c.l.b16 %v7837
        %v7870 = vunpack.c.l.b16 %v7838
        %v7871 = vpack.c.b16 %v7856, %v7855
        %v7872 = vpack.c.b16 %v7858, %v7857
        %v7873 = vpack.c.b16 %v7860, %v7859
        %v7874 = vpack.c.b16 %v7862, %v7861
        %v7875 = vpack.c.b16 %v7864, %v7863
        %v7876 = vpack.c.b16 %v7866, %v7865
        %v7877 = vpack.c.b16 %v7868, %v7867
        %v7878 = vpack.c.b16 %v7870, %v7869
        %7887 = vmatprep.subr.bf16.mxu0 0
        %7888 = vmatpush1.bf16.msra.mxu0 %v7871
        %7889 = vmatprep.subr.bf16.mxu0 0
        %7890 = vmatpush1.bf16.msra.mxu0 %v7872
        %7891 = vmatprep.subr.bf16.mxu0 0
        %7892 = vmatpush1.bf16.msra.mxu0 %v7873
        %7893 = vmatprep.subr.bf16.mxu0 0
        %7894 = vmatpush1.bf16.msra.mxu0 %v7874
        %7895 = vmatprep.subr.bf16.mxu0 0
        %7896 = vmatpush1.bf16.msra.mxu0 %v7875
        %7897 = vmatprep.subr.bf16.mxu0 0
        %7898 = vmatpush1.bf16.msra.mxu0 %v7876
        %7899 = vmatprep.subr.bf16.mxu0 0
        %7900 = vmatpush1.bf16.msra.mxu0 %v7877
        %7901 = vmatprep.subr.bf16.mxu0 0
        %7902 = vmatpush1.bf16.msra.mxu0 %v7878
        %7903 = vmatprep.subr.bf16.mxu0 0
        %7904 = vmatpush1.bf16.msra.mxu0 0
        %7905 = vmatprep.subr.bf16.mxu0 0
        %7906 = vmatpush1.bf16.msra.mxu0 0
        %7907 = vmatprep.subr.bf16.mxu0 0
        %7908 = vmatpush1.bf16.msra.mxu0 0
        %7909 = vmatprep.subr.bf16.mxu0 0
        %7910 = vmatpush1.bf16.msra.mxu0 0
        %7911 = vmatprep.subr.bf16.mxu0 0
        %7912 = vmatpush1.bf16.msra.mxu0 0
        %7913 = vmatprep.subr.bf16.mxu0 0
        %7914 = vmatpush1.bf16.msra.mxu0 0
        %7915 = vmatprep.subr.bf16.mxu0 0
        %7916 = vmatpush1.bf16.msra.mxu0 0
        %7917 = vmatprep.subr.bf16.mxu0 0
        %7918 = vmatpush1.bf16.msra.mxu0 0
        %7919 = vmatprep.mubr.bf16.mxu0 0
        %7920 = vmatmul.mubr.bf16.gmra.mrb[0].mxu0 %v7821
        %v7921 = vpop.f32.mrb[0].mxu0
        %v7922 = vadd.f32 0.0, %v7921
        %v7923 = vpop.f32.mrb[0].mxu0
        %v7924 = vpop.f32.mrb[0].mxu0
        %v7925 = vpop.f32.mrb[0].mxu0
        %7926 = vdwg.mxu0
        %v7927 = vadd.f32 %v7807, %v7922
        %v7928 = vld [vmem:[%s7687 + $0x2] sm:$0x3]
        %v7929 = vld [vmem:[%s7687 + $0x6] sm:$0x3]
        %v7932 = vcombine.low %v7928, %v7929
        %v7934 = vunpack.c.l.s4 1983009808
        %v7935 = vunpack.c.0.s8 %v7934
        %v7936 = vlaneseq
        %v7937 = vshrl.u32 %v7936, 7
        %v7938 = vsub.s32 %v7935, %v7937
        %v7939 = vrot.slane %v7932, %v7938
        %v7941 = vpack.c.bf16 %v7939, %v7939
        %s7942 = scalar_lea.vmem %s9, 512
        %v7943 = vld [vmem:[%s7942] sm:$0xf]
        %v7944 = vld [vmem:[%s7942 + $0x4] sm:$0xf]
        %v7945 = vld [vmem:[%s7942 + $0x8] sm:$0xf]
        %v7946 = vld [vmem:[%s7942 + $0xc] sm:$0xf]
        %v7947 = vld [vmem:[%s7942 + $0x10] sm:$0xf]
        %v7948 = vld [vmem:[%s7942 + $0x14] sm:$0xf]
        %v7949 = vld [vmem:[%s7942 + $0x18] sm:$0xf]
        %v7950 = vld [vmem:[%s7942 + $0x1c] sm:$0xf]
        %v7951 = vld [vmem:[%s7942 + $0x20] sm:$0xf]
        %v7952 = vld [vmem:[%s7942 + $0x24] sm:$0xf]
        %v7953 = vld [vmem:[%s7942 + $0x28] sm:$0xf]
        %v7954 = vld [vmem:[%s7942 + $0x2c] sm:$0xf]
        %v7955 = vld [vmem:[%s7942 + $0x30] sm:$0xf]
        %v7956 = vld [vmem:[%s7942 + $0x34] sm:$0xf]
        %v7957 = vld [vmem:[%s7942 + $0x38] sm:$0xf]
        %v7958 = vld [vmem:[%s7942 + $0x3c] sm:$0xf]
        %v7975 = vunpack.c.l.b16 %v7943
        %v7976 = vunpack.c.l.b16 %v7944
        %v7977 = vunpack.c.l.b16 %v7945
        %v7978 = vunpack.c.l.b16 %v7946
        %v7979 = vunpack.c.l.b16 %v7947
        %v7980 = vunpack.c.l.b16 %v7948
        %v7981 = vunpack.c.l.b16 %v7949
        %v7982 = vunpack.c.l.b16 %v7950
        %v7983 = vunpack.c.l.b16 %v7951
        %v7984 = vunpack.c.l.b16 %v7952
        %v7985 = vunpack.c.l.b16 %v7953
        %v7986 = vunpack.c.l.b16 %v7954
        %v7987 = vunpack.c.l.b16 %v7955
        %v7988 = vunpack.c.l.b16 %v7956
        %v7989 = vunpack.c.l.b16 %v7957
        %v7990 = vunpack.c.l.b16 %v7958
        %v7991 = vpack.c.b16 %v7976, %v7975
        %v7992 = vpack.c.b16 %v7978, %v7977
        %v7993 = vpack.c.b16 %v7980, %v7979
        %v7994 = vpack.c.b16 %v7982, %v7981
        %v7995 = vpack.c.b16 %v7984, %v7983
        %v7996 = vpack.c.b16 %v7986, %v7985
        %v7997 = vpack.c.b16 %v7988, %v7987
        %v7998 = vpack.c.b16 %v7990, %v7989
        %8007 = vmatprep.subr.bf16.mxu0 0
        %8008 = vmatpush1.bf16.msra.mxu0 %v7991
        %8009 = vmatprep.subr.bf16.mxu0 0
        %8010 = vmatpush1.bf16.msra.mxu0 %v7992
        %8011 = vmatprep.subr.bf16.mxu0 0
        %8012 = vmatpush1.bf16.msra.mxu0 %v7993
        %8013 = vmatprep.subr.bf16.mxu0 0
        %8014 = vmatpush1.bf16.msra.mxu0 %v7994
        %8015 = vmatprep.subr.bf16.mxu0 0
        %8016 = vmatpush1.bf16.msra.mxu0 %v7995
        %8017 = vmatprep.subr.bf16.mxu0 0
        %8018 = vmatpush1.bf16.msra.mxu0 %v7996
        %8019 = vmatprep.subr.bf16.mxu0 0
        %8020 = vmatpush1.bf16.msra.mxu0 %v7997
        %8021 = vmatprep.subr.bf16.mxu0 0
        %8022 = vmatpush1.bf16.msra.mxu0 %v7998
        %8023 = vmatprep.subr.bf16.mxu0 0
        %8024 = vmatpush1.bf16.msra.mxu0 0
        %8025 = vmatprep.subr.bf16.mxu0 0
        %8026 = vmatpush1.bf16.msra.mxu0 0
        %8027 = vmatprep.subr.bf16.mxu0 0
        %8028 = vmatpush1.bf16.msra.mxu0 0
        %8029 = vmatprep.subr.bf16.mxu0 0
        %8030 = vmatpush1.bf16.msra.mxu0 0
        %8031 = vmatprep.subr.bf16.mxu0 0
        %8032 = vmatpush1.bf16.msra.mxu0 0
        %8033 = vmatprep.subr.bf16.mxu0 0
        %8034 = vmatpush1.bf16.msra.mxu0 0
        %8035 = vmatprep.subr.bf16.mxu0 0
        %8036 = vmatpush1.bf16.msra.mxu0 0
        %8037 = vmatprep.subr.bf16.mxu0 0
        %8038 = vmatpush1.bf16.msra.mxu0 0
        %8039 = vmatprep.mubr.bf16.mxu0 0
        %8040 = vmatmul.mubr.bf16.gmra.mrb[0].mxu0 %v7941
        %v8041 = vpop.f32.mrb[0].mxu0
        %v8042 = vadd.f32 0.0, %v8041
        %v8043 = vpop.f32.mrb[0].mxu0
        %v8044 = vpop.f32.mrb[0].mxu0
        %v8045 = vpop.f32.mrb[0].mxu0
        %8046 = vdwg.mxu0
        %v8047 = vadd.f32 %v7927, %v8042
        %v8048 = vld [vmem:[%s6490] ss:$2 sm:$0x3]
        %v8049 = vld [vmem:[%s6492] ss:$2 sm:$0x3]
        %v8052 = vcombine.low %v8048, %v8049
        %v8054 = vunpack.c.l.s4 1983009808
        %v8055 = vunpack.c.0.s8 %v8054
        %v8056 = vlaneseq
        %v8057 = vshrl.u32 %v8056, 7
        %v8058 = vsub.s32 %v8055, %v8057
        %v8059 = vrot.slane %v8052, %v8058
        %v8061 = vpack.c.bf16 %v8059, %v8059
        %v8062 = vld [vmem:[%s10] sm:$0xf]
        %v8063 = vld [vmem:[%s10 + $0x4] sm:$0xf]
        %v8064 = vld [vmem:[%s10 + $0x8] sm:$0xf]
        %v8065 = vld [vmem:[%s10 + $0xc] sm:$0xf]
        %v8066 = vld [vmem:[%s10 + $0x10] sm:$0xf]
        %v8067 = vld [vmem:[%s10 + $0x14] sm:$0xf]
        %v8068 = vld [vmem:[%s10 + $0x18] sm:$0xf]
        %v8069 = vld [vmem:[%s10 + $0x1c] sm:$0xf]
        %v8078 = vunpack.c.l.b16 %v8062
        %v8079 = vunpack.c.l.b16 %v8063
        %v8080 = vunpack.c.l.b16 %v8064
        %v8081 = vunpack.c.l.b16 %v8065
        %v8082 = vunpack.c.l.b16 %v8066
        %v8083 = vunpack.c.l.b16 %v8067
        %v8084 = vunpack.c.l.b16 %v8068
        %v8085 = vunpack.c.l.b16 %v8069
        %v8086 = vpack.c.b16 %v8079, %v8078
        %v8087 = vpack.c.b16 %v8081, %v8080
        %v8088 = vpack.c.b16 %v8083, %v8082
        %v8089 = vpack.c.b16 %v8085, %v8084
        %v8095 = vsel %vm5277, %v8061, 0
        %8097 = vmatprep.subr.bf16.mxu0 0
        %8098 = vmatpush1.bf16.msra.mxu0 %v8086
        %8099 = vmatprep.subr.bf16.mxu0 0
        %8100 = vmatpush1.bf16.msra.mxu0 %v8087
        %8101 = vmatprep.subr.bf16.mxu0 0
        %8102 = vmatpush1.bf16.msra.mxu0 %v8088
        %8103 = vmatprep.subr.bf16.mxu0 0
        %8104 = vmatpush1.bf16.msra.mxu0 %v8089
        %8105 = vmatprep.subr.bf16.mxu0 0
        %8106 = vmatpush1.bf16.msra.mxu0 0
        %8107 = vmatprep.subr.bf16.mxu0 0
        %8108 = vmatpush1.bf16.msra.mxu0 0
        %8109 = vmatprep.subr.bf16.mxu0 0
        %8110 = vmatpush1.bf16.msra.mxu0 0
        %8111 = vmatprep.subr.bf16.mxu0 0
        %8112 = vmatpush1.bf16.msra.mxu0 0
        %8113 = vmatprep.subr.bf16.mxu0 0
        %8114 = vmatpush1.bf16.msra.mxu0 0
        %8115 = vmatprep.subr.bf16.mxu0 0
        %8116 = vmatpush1.bf16.msra.mxu0 0
        %8117 = vmatprep.subr.bf16.mxu0 0
        %8118 = vmatpush1.bf16.msra.mxu0 0
        %8119 = vmatprep.subr.bf16.mxu0 0
        %8120 = vmatpush1.bf16.msra.mxu0 0
        %8121 = vmatprep.subr.bf16.mxu0 0
        %8122 = vmatpush1.bf16.msra.mxu0 0
        %8123 = vmatprep.subr.bf16.mxu0 0
        %8124 = vmatpush1.bf16.msra.mxu0 0
        %8125 = vmatprep.subr.bf16.mxu0 0
        %8126 = vmatpush1.bf16.msra.mxu0 0
        %8127 = vmatprep.subr.bf16.mxu0 0
        %8128 = vmatpush1.bf16.msra.mxu0 0
        %8129 = vmatprep.mubr.bf16.mxu0 0
        %8130 = vmatmul.mubr.bf16.gmra.mrb[0].mxu0 %v8095
        %v8131 = vpop.f32.mrb[0].mxu0
        %v8132 = vadd.f32 0.0, %v8131
        %v8133 = vpop.f32.mrb[0].mxu0
        %v8134 = vpop.f32.mrb[0].mxu0
        %v8135 = vpop.f32.mrb[0].mxu0
        %8136 = vdwg.mxu0
        %v8137 = vadd.f32 %v8047, %v8132
        %v8138 = vmax.f32 %v8137, 0.0
        %vm8139 = vcmask 1043456
        %v8140 = vsel %vm8139, %v8138, 0.0
        %v8141 = vrot.slane %v8140, 4
        %v8142 = vadd.f32 %v8140, %v8141
        %v8143 = vrot.slane %v8142, 2
        %v8144 = vadd.f32 %v8142, %v8143
        %v8145 = vrot.slane %v8144, 1
        %v8146 = vadd.f32 %v8144, %v8145
        %v8147 = vrcp.pop 4.0
        %v8148 = vmul.f32 %v8146, %v8147
        %8149 = vst [vmem:[%s378] sm:$0x1] %v8148
        %s8150 = sand.u32 %s269, 1
        %s8151 = scalar_lea.sflag [#allocation9], %s8150
        %s8152 = sand.u32 %s269, 1
        %s8153 = scalar_lea.vmem [#allocation8], %s8152
        // Predicated region
        $region65: #{residual_block2d_forward.1} parent=63 // pred_check
          %p8154 = pneg %p279
        $region66: #{residual_block2d_forward.1} parent=63 // pred_check_branch
          %8156 = sbr.rel (%p8154) target = $region68
        $region67: #{residual_block2d_forward.1} parent=63 // pred_region
          %s8158 = ssub.s32 16, 16
          %8159 = vsyncadd %s8151, %s8158
          %s8160 = smul.addr %s25, 16
          %s8161 = scalar_lea.hbm %s11, %s8160
          %s8163 = sshll.u32 %s8153, 4
          %s8164 = int_to_ptr.vmem [resolvable:$true] %s8163
          %8166 = dma.vmem_to_hbm [thread:$0]  %s8164, 16, %s8161, %s8151
        $region68: #{residual_block2d_forward.1} parent=63 // pred_fallthru
          _
      $region64: #{residual_block2d_forward.1} parent=5 // pred_fallthru
        _
      %p8167 = scmp.le.s32.totalorder 2, %s20
      // Predicated region
      $region69: #{residual_block2d_forward.1} parent=5 // pred_check
        %p8168 = pneg %p8167
      $region70: #{residual_block2d_forward.1} parent=5 // pred_check_branch
        %8170 = sbr.rel (%p8168) target = $region72
      $region71: #{residual_block2d_forward.1} parent=5 // pred_region
        %s8171 = ssub.s32 %s20, 2
        // Predicated region
        $region73: #{residual_block2d_forward.1} parent=71 // pred_check
          %p8172 = pneg %p285
        $region74: #{residual_block2d_forward.1} parent=71 // pred_check_branch
          %8174 = sbr.rel (%p8172) target = $region76
        $region75: #{residual_block2d_forward.1} parent=71 // pred_region
          %s8175 = sand.u32 %s270, 1
          %s8176 = scalar_lea.sflag [#allocation9], %s8175
          %s8177 = sand.u32 %s270, 1
          %s8178 = scalar_lea.vmem [#allocation8], %s8177
          %8179 = dma.done %s8176, 16
        $region76: #{residual_block2d_forward.1} parent=71 // pred_fallthru
          _
      $region72: #{residual_block2d_forward.1} parent=5 // pred_fallthru
        _
    $region6: #{residual_block2d_forward.1} parent=1 // loop_footer
      %s24 = sadd.s32 1, %s20
    $region7: #{residual_block2d_forward.1} parent=1 // loop_footer_branch
      %19 = sbr.rel target = $region3
    $region8: #{residual_block2d_forward.1} parent=1 // loop_exit
      _
    %8180 = vsyncpa [#allocation9], 1
    %s8181 = scalar_lea.sflag [#allocation9], 1
    %8182 = vsyncpa %s8181, 1

</llo_original>
